<compile_context>
chip_gen: v7x
topology: tpu7x:2x2x1
jax: 0.10.0
libtpu: 0.0.40
codegen_flags: <defaults>
</compile_context>

<pallas_src>
import functools
import math

import numpy as np
import jax
import jax.numpy as jnp
from jax.experimental import pallas as pl
from jax.experimental.pallas import tpu as pltpu


# ------------------------------ Pallas kernel ------------------------------ #
def gcn_fused_kernel(feat_ref, adj_ref, slab_ref, out_ref, *,
                     layouts, layer_ids, relu_flags, pad_f, num_rels):
    f32 = jnp.float32
    P = pad_f
    h = feat_ref[...]                     # (N, P) node features, resident across all 7 layers

    def par(d, name):                     # static slab slice -> parameter block
        r, nr, nc = d[name]
        return slab_ref[r:r + nr, :nc]

    for li, do_relu in zip(layer_ids, relu_flags):
        d = layouts[li]

        # ---- message_func (edgeNN) commuted through the source gather:
        # run both relations' shared-Linear-twice-with-ReLU directly on the
        # N node rows as one wide matmul + one block-diagonal matmul.
        be = par(d, "b_e")                                                   # (1, R*P)
        t = jnp.maximum(jnp.dot(h, par(d, "w_e1"), preferred_element_type=f32) + be, 0.0)
        t = jnp.maximum(jnp.dot(t, par(d, "w_e2"), preferred_element_type=f32) + be, 0.0)

        # ---- gcn_reduce: per-relation masked dest-sum via precomputed (N, N)
        # weighted adjacencies (relation mask + one-hot gather folded in).
        # (v7x MRB in-place accumulation is left to Mosaic; VPU add elsewhere.)
        agg = jnp.dot(adj_ref[0], t[:, 0:P], preferred_element_type=f32)
        for r in range(1, num_rels):
            agg = agg + jnp.dot(adj_ref[r], t[:, r * P:(r + 1) * P],
                                preferred_element_type=f32)

        # ---- apply_func: one LSTM step with zero (h0, c0) per node.
        # Forget gate and W_hh are dead (c0 == h0 == 0); three lane-aligned
        # (P, P) gate matmuls instead of slicing one 96-lane result.
        i_g = jax.nn.sigmoid(jnp.dot(agg, par(d, "w_i"), preferred_element_type=f32) + par(d, "b_i"))
        g_g = jnp.tanh(jnp.dot(agg, par(d, "w_g"), preferred_element_type=f32) + par(d, "b_g"))
        o_g = jax.nn.sigmoid(jnp.dot(agg, par(d, "w_o"), preferred_element_type=f32) + par(d, "b_o"))
        h = o_g * jnp.tanh(i_g * g_g)                                        # c = i * g

        # ---- global_update: Linear -> ReLU -> Linear -> ReLU -> Linear ----
        h1 = jnp.maximum(jnp.dot(h, par(d, "w_m1"), preferred_element_type=f32) + par(d, "b_m1"), 0.0)
        h2 = jnp.maximum(jnp.dot(h1, par(d, "w_m2"), preferred_element_type=f32) + par(d, "b_m2"), 0.0)
        h = jnp.dot(h2, par(d, "w_m3"), preferred_element_type=f32) + par(d, "b_m3")

        if do_relu:                       # torch.relu between GCN layers (not after conv4)
            h = jnp.maximum(h, 0.0)

    out_ref[...] = h                      # full (N, P) store; class slice done in the wrapper


# ------------------------------- JAX wrapper -------------------------------- #
def _estimate_cost(N, P, HP, R, n_apps, args, out_elems):
    per = (2 * N * P * (R * P)                 # edgeNN first app (wide concat)
           + 2 * N * (R * P) * (R * P)         # edgeNN second app (block-diag)
           + R * 2 * N * N * P                 # per-relation Adj reduce
           + 3 * 2 * N * P * P                 # i/g/o gates
           + 2 * N * P * HP + 2 * N * HP * HP + 2 * N * HP * P)   # global_update MLP
    trans = 4 * N * P                          # 2 sigmoid + 2 tanh per layer
    bytes_acc = sum(int(a.size) * a.dtype.itemsize for a in args) + out_elems * 4
    return pl.CostEstimate(flops=per * n_apps, transcendentals=trans * n_apps,
                           bytes_accessed=int(bytes_acc))


def gcn_forward(slab, feat_pad, adj, layouts, layer_ids, relu_flags,
                pad_f, hp, num_rels, num_classes):
    """Whole GCN forward (7 GCNLayer applications) as a single Pallas call."""
    N = feat_pad.shape[0]
    args = [feat_pad, adj, slab]
    ce = _estimate_cost(N, pad_f, hp, num_rels, len(layer_ids), args, N * pad_f)
    vspec = pl.BlockSpec(memory_space=pltpu.MemorySpace.VMEM)
    out = pl.pallas_call(
        functools.partial(
            gcn_fused_kernel,
            layouts=tuple(layouts),
            layer_ids=tuple(layer_ids), relu_flags=tuple(relu_flags),
            pad_f=pad_f, num_rels=num_rels),
        out_shape=jax.ShapeDtypeStruct((N, pad_f), jnp.float32),
        in_specs=[vspec] * len(args),
        out_specs=vspec,
        cost_estimate=ce,
    )(*args)
    return out[:, :num_classes]


# --------------------------- parameter slab layout --------------------------- #
def _align8(n):
    return -(-n // 8) * 8


def build_layout(num_layers, P, HP, R):
    """Row layout of the single lane-dense (rows, 128) parameter slab."""
    entries = [("w_e1", P, R * P), ("w_e2", R * P, R * P), ("b_e", 1, R * P),
               ("w_i", P, P), ("w_g", P, P), ("w_o", P, P),
               ("b_i", 1, P), ("b_g", 1, P), ("b_o", 1, P),
               ("w_m1", P, HP), ("b_m1", 1, HP),
               ("w_m2", HP, HP), ("b_m2", 1, HP),
               ("w_m3", HP, P), ("b_m3", 1, P)]
    layouts, row = [], 0
    for _ in range(num_layers):
        d = {}
        for name, nr, nc in entries:
            d[name] = (row, nr, nc)
            row += _align8(nr)             # 8-aligned row offsets (no sublane realign)
        layouts.append(d)
    return layouts, _align8(row)


def pack_params(layers, layouts, total_rows, P, HP, R, lanes=128):
    """Zero-pad every parameter and pack into one lane-dense f32 slab."""
    slab = np.zeros((total_rows, lanes), np.float32)

    def put(d, name, mat):
        r, _, _ = d[name]
        slab[r:r + mat.shape[0], :mat.shape[1]] = mat

    for li, p in enumerate(layers):
        d = layouts[li]
        F = int(p["rel"][0][0].shape[0])                      # layer in_feats

        # relation edgeNNs: W_cat = [w0 | w1] for the first application,
        # block-diag(w0, w1) for the second (same shared Linear applied twice).
        for r, (W, b) in enumerate(p["rel"]):
            Wn = np.asarray(W, np.float32); bn = np.asarray(b, np.float32)
            r0, _, _ = d["w_e1"]
            slab[r0:r0 + F, r * P:r * P + F] = Wn
            r0, _, _ = d["w_e2"]
            slab[r0 + r * P:r0 + r * P + F, r * P:r * P + F] = Wn
            r0, _, _ = d["b_e"]
            slab[r0, r * P:r * P + F] = bn[0]

        # LSTM: keep only live i/g/o gates (PyTorch order i,f,g,o); zero (h0,c0)
        # makes the f-gate and W_hh mathematically dead.
        W_ih, W_hh, b_ih, b_hh = p["lstm"]
        W_ih = np.asarray(W_ih, np.float32)
        b_all = np.asarray(b_ih, np.float32) + np.asarray(b_hh, np.float32)
        for name_w, name_b, gi in (("w_i", "b_i", 0), ("w_g", "b_g", 2), ("w_o", "b_o", 3)):
            wpad = np.zeros((P, P), np.float32)
            wpad[:F, :F] = W_ih[gi * F:(gi + 1) * F, :].T
            bpad = np.zeros((1, P), np.float32)
            bpad[0, :F] = b_all[gi * F:(gi + 1) * F]
            put(d, name_w, wpad); put(d, name_b, bpad)

        # global_update MLP: in_f -> in_f//2 -> in_f//2 -> out_f
        (W1, b1), (W2, b2), (W3, b3) = p["mlp"]
        half = int(W1.shape[1]); out_f = int(W3.shape[1])
        w1p = np.zeros((P, HP), np.float32);  w1p[:F, :half] = np.asarray(W1)
        b1p = np.zeros((1, HP), np.float32);  b1p[0, :half] = np.asarray(b1)[0]
        w2p = np.zeros((HP, HP), np.float32); w2p[:half, :half] = np.asarray(W2)
        b2p = np.zeros((1, HP), np.float32);  b2p[0, :half] = np.asarray(b2)[0]
        w3p = np.zeros((HP, P), np.float32);  w3p[:half, :out_f] = np.asarray(W3)
        b3p = np.zeros((1, P), np.float32);   b3p[0, :out_f] = np.asarray(b3)[0]
        put(d, "w_m1", w1p); put(d, "b_m1", b1p)
        put(d, "w_m2", w2p); put(d, "b_m2", b2p)
        put(d, "w_m3", w3p); put(d, "b_m3", b3p)
    return jnp.asarray(slab)


# --------------------------- parameter creation ----------------------------- #
def linear_init(key, in_dim, out_dim):
    kw, kb = jax.random.split(key)
    bound = 1.0 / math.sqrt(in_dim)
    W = jax.random.uniform(kw, (out_dim, in_dim), jnp.float32, -bound, bound)
    b = jax.random.uniform(kb, (out_dim,), jnp.float32, -bound, bound)
    return W.T, b.reshape(1, -1)            # stored pre-transposed for x @ W


def init_layer(key, in_f, out_f, num_rels=2):
    half = in_f // 2
    ks = jax.random.split(key, num_rels + 4)
    # relation edgeNNs (single shared Linear per relation, applied twice)
    rel = [linear_init(ks[r], in_f, in_f) for r in range(num_rels)]
    # nn.LSTM(in_f, in_f) default init: U(-1/sqrt(hidden), 1/sqrt(hidden)); full params kept
    bound = 1.0 / math.sqrt(in_f)
    k1, k2, k3, k4 = jax.random.split(ks[num_rels], 4)
    W_ih = jax.random.uniform(k1, (4 * in_f, in_f), jnp.float32, -bound, bound)
    W_hh = jax.random.uniform(k2, (4 * in_f, in_f), jnp.float32, -bound, bound)
    b_ih = jax.random.uniform(k3, (4 * in_f,), jnp.float32, -bound, bound)
    b_hh = jax.random.uniform(k4, (4 * in_f,), jnp.float32, -bound, bound)
    # global_update MLP: in_f -> in_f//2 -> in_f//2 -> out_f
    mlp = [linear_init(ks[num_rels + 1], in_f, half),
           linear_init(ks[num_rels + 2], half, half),
           linear_init(ks[num_rels + 3], half, out_f)]
    return {"rel": rel, "lstm": (W_ih, W_hh, b_ih, b_hh), "mlp": mlp}


# --------------------------- pure-JAX reference ----------------------------- #
def ref_forward(layers, feat, src_idx, A, rel, layer_ids, relu_flags, num_rels):
    h = feat
    for li, do_relu in zip(layer_ids, relu_flags):
        p = layers[li]
        F = h.shape[1]
        src = h[src_idx]                              # per-edge source gather
        msg = 0.0
        for r in range(num_rels):
            W, b = p["rel"][r]
            t = jnp.maximum(src @ W + b, 0.0)
            t = jnp.maximum(t @ W + b, 0.0)
            msg = msg + jnp.where((rel == r)[:, None], t, 0.0)
        agg = A @ msg                                 # dest-sum
        # FULL single-step LSTM with zero initial (h0, c0), PyTorch gate order (i,f,g,o)
        W_ih, W_hh, b_ih, b_hh = p["lstm"]
        h0 = jnp.zeros_like(agg); c0 = jnp.zeros_like(agg)
        gates = agg @ W_ih.T + b_ih + h0 @ W_hh.T + b_hh
        i = jax.nn.sigmoid(gates[:, 0:F])
        f = jax.nn.sigmoid(gates[:, F:2 * F])
        g = jnp.tanh(gates[:, 2 * F:3 * F])
        o = jax.nn.sigmoid(gates[:, 3 * F:4 * F])
        c = f * c0 + i * g
        h = o * jnp.tanh(c)
        (W1, b1), (W2, b2), (W3, b3) = p["mlp"]
        h = jnp.maximum(h @ W1 + b1, 0.0)
        h = jnp.maximum(h @ W2 + b2, 0.0)
        h = h @ W3 + b3
        if do_relu:
            h = jnp.maximum(h, 0.0)
    return h


# ----------------------------------- main ------------------------------------ #
if __name__ == "__main__":
    key = jax.random.PRNGKey(0)
    N, F_in, H, C, R = 8, 16, 32, 4, 2        # nodes, in_feats, hidden, classes, num_rels

    k_feat, k_esrc, k_edst, k_rel, k_p = jax.random.split(key, 5)

    # graph: ring (every node has >= 1 in-edge) plus 8 extra random edges
    ring_src = jnp.arange(N, dtype=jnp.int32)
    ring_dst = (ring_src + 1) % N
    ex_src = jax.random.randint(k_esrc, (8,), 0, N, dtype=jnp.int32)
    ex_dst = jax.random.randint(k_edst, (8,), 0, N, dtype=jnp.int32)
    src_idx = jnp.concatenate([ring_src, ex_src])          # (E,)
    dst_idx = jnp.concatenate([ring_dst, ex_dst])          # (E,)
    E = int(src_idx.shape[0])
    rel = jax.random.randint(k_rel, (E,), 0, R, dtype=jnp.int32)

    S = jax.nn.one_hot(src_idx, N, dtype=jnp.float32)                    # (E, N) source incidence
    A = jax.nn.one_hot(dst_idx, N, dtype=jnp.float32).T                  # (N, E) dest incidence
    # edgeNN commutes through the one-hot source gather, so gather + relation mask
    # + dest-sum collapse to precomputed per-relation (N, N) weighted adjacencies.
    Adj = jnp.stack([(A * (rel == r).astype(jnp.float32)[None, :]) @ S
                     for r in range(R)])                                 # (R, N, N)

    feat = jax.random.normal(k_feat, (N, F_in), jnp.float32)

    # layer definitions mirroring GCN.__init__
    layer_defs = [("conv1", F_in, H), ("conv2", H, H), ("conv3", H, H // 2),
                  ("conv33", H // 2, H // 2), ("conv4", H // 2, C)]
    kp = jax.random.split(k_p, len(layer_defs))
    layers = [init_layer(kp[i], fi, fo, R) for i, (_, fi, fo) in enumerate(layer_defs)]

    # GCN.forward sequence: conv1, conv2 x3 (shared weights), conv3, conv33, conv4
    layer_ids = (0, 1, 1, 1, 2, 3, 4)
    relu_flags = (True, True, True, True, True, True, False)

    P = max(max(fi, fo) for _, fi, fo in layer_defs)   # padded feature width (= 32)
    HP = max(fi // 2 for _, fi, _ in layer_defs)       # padded MLP hidden width (= 16)

    layouts, total_rows = build_layout(len(layer_defs), P, HP, R)
    slab = pack_params(layers, layouts, total_rows, P, HP, R)
    feat_pad = jnp.zeros((N, P), jnp.float32).at[:, :F_in].set(feat)

    # TODO(synk): the DGL per-node Python LSTM loop with stateful `hiddens` is
    # re-expressed as a batched single-step LSTM with zero initial state
    # (exact for num_prop=1, the module default; the dead f-gate/W_hh are dropped
    # in the kernel, while the reference runs the full 4-gate step).
    out = gcn_forward(slab, feat_pad, Adj, layouts, layer_ids, relu_flags, P, HP, R, C)
    out = jax.block_until_ready(out)

    refv = ref_forward(layers, feat, src_idx, A, rel, layer_ids, relu_flags, R)
    assert out.shape == (N, C) and out.dtype == jnp.float32
    assert bool(jnp.allclose(out, refv, rtol=5e-3, atol=5e-3)), "mismatch vs pure-JAX reference"
    print("KERNEL_OK")
</pallas_src>

<mosaic_0001>
module attributes {stable_mosaic.version = 11 : i64} {
  func.func @gcn_fused_kernel(%arg0: memref<8x32xf32, #tpu.memory_space<vmem>>, %arg1: memref<2x8x8xf32, #tpu.memory_space<vmem>>, %arg2: memref<1560x128xf32, #tpu.memory_space<vmem>>, %arg3: memref<8x32xf32, #tpu.memory_space<vmem>>) attributes {dimension_semantics = [], scalar_prefetch = 0 : i64, scratch_operands = 0 : i64, tpu.core_type = #tpu.core_type<tc>} {
    %c0 = arith.constant 0 : index
    %c0_0 = arith.constant 0 : index
    %0 = vector.load %arg0[%c0, %c0_0] : memref<8x32xf32, #tpu.memory_space<vmem>>, vector<8x32xf32>
    %c96 = arith.constant 96 : index
    %c0_1 = arith.constant 0 : index
    %1 = vector.load %arg2[%c96, %c0_1] : memref<1560x128xf32, #tpu.memory_space<vmem>>, vector<1x64xf32>
    %c0_2 = arith.constant 0 : index
    %c0_3 = arith.constant 0 : index
    %2 = vector.load %arg2[%c0_2, %c0_3] : memref<1560x128xf32, #tpu.memory_space<vmem>>, vector<32x64xf32>
    %cst = arith.constant dense<0.000000e+00> : vector<8x64xf32>
    %3 = tpu.matmul %0, %2, %cst {dimension_numbers = #tpu.dot_dimension_numbers<[1], [0], [0], [1], [0, 0, 1, 1], [], []>} : vector<8x32xf32>, vector<32x64xf32>, vector<8x64xf32> -> vector<8x64xf32>
    %4 = vector.broadcast %1 : vector<1x64xf32> to vector<8x64xf32>
    %5 = arith.addf %3, %4 : vector<8x64xf32>
    %cst_4 = arith.constant 0.000000e+00 : f32
    %6 = vector.broadcast %cst_4 : f32 to vector<8x64xf32>
    %7 = arith.maximumf %5, %6 : vector<8x64xf32>
    %c32 = arith.constant 32 : index
    %c0_5 = arith.constant 0 : index
    %8 = vector.load %arg2[%c32, %c0_5] : memref<1560x128xf32, #tpu.memory_space<vmem>>, vector<64x64xf32>
    %cst_6 = arith.constant dense<0.000000e+00> : vector<8x64xf32>
    %9 = tpu.matmul %7, %8, %cst_6 {dimension_numbers = #tpu.dot_dimension_numbers<[1], [0], [0], [1], [0, 0, 1, 1], [], []>} : vector<8x64xf32>, vector<64x64xf32>, vector<8x64xf32> -> vector<8x64xf32>
    %10 = vector.broadcast %1 : vector<1x64xf32> to vector<8x64xf32>
    %11 = arith.addf %9, %10 : vector<8x64xf32>
    %cst_7 = arith.constant 0.000000e+00 : f32
    %12 = vector.broadcast %cst_7 : f32 to vector<8x64xf32>
    %13 = arith.maximumf %11, %12 : vector<8x64xf32>
    %c0_8 = arith.constant 0 : index
    %c0_9 = arith.constant 0 : index
    %c0_10 = arith.constant 0 : index
    %14 = vector.load %arg1[%c0_8, %c0_9, %c0_10] : memref<2x8x8xf32, #tpu.memory_space<vmem>>, vector<1x8x8xf32>
    %15 = vector.shape_cast %14 : vector<1x8x8xf32> to vector<8x8xf32>
    %16 = vector.extract_strided_slice %13 {offsets = [0, 0], sizes = [8, 32], strides = [1, 1]} : vector<8x64xf32> to vector<8x32xf32>
    %cst_11 = arith.constant dense<0.000000e+00> : vector<8x32xf32>
    %17 = tpu.matmul %15, %16, %cst_11 {dimension_numbers = #tpu.dot_dimension_numbers<[1], [0], [0], [1], [0, 0, 1, 1], [], []>} : vector<8x8xf32>, vector<8x32xf32>, vector<8x32xf32> -> vector<8x32xf32>
    %c1 = arith.constant 1 : index
    %c0_12 = arith.constant 0 : index
    %c0_13 = arith.constant 0 : index
    %18 = vector.load %arg1[%c1, %c0_12, %c0_13] : memref<2x8x8xf32, #tpu.memory_space<vmem>>, vector<1x8x8xf32>
    %19 = vector.shape_cast %18 : vector<1x8x8xf32> to vector<8x8xf32>
    %20 = vector.extract_strided_slice %13 {offsets = [0, 32], sizes = [8, 32], strides = [1, 1]} : vector<8x64xf32> to vector<8x32xf32>
    %cst_14 = arith.constant dense<0.000000e+00> : vector<8x32xf32>
    %21 = tpu.matmul %19, %20, %cst_14 {dimension_numbers = #tpu.dot_dimension_numbers<[1], [0], [0], [1], [0, 0, 1, 1], [], []>} : vector<8x8xf32>, vector<8x32xf32>, vector<8x32xf32> -> vector<8x32xf32>
    %22 = arith.addf %17, %21 : vector<8x32xf32>
    %c104 = arith.constant 104 : index
    %c0_15 = arith.constant 0 : index
    %23 = vector.load %arg2[%c104, %c0_15] : memref<1560x128xf32, #tpu.memory_space<vmem>>, vector<32x32xf32>
    %cst_16 = arith.constant dense<0.000000e+00> : vector<8x32xf32>
    %24 = tpu.matmul %22, %23, %cst_16 {dimension_numbers = #tpu.dot_dimension_numbers<[1], [0], [0], [1], [0, 0, 1, 1], [], []>} : vector<8x32xf32>, vector<32x32xf32>, vector<8x32xf32> -> vector<8x32xf32>
    %c200 = arith.constant 200 : index
    %c0_17 = arith.constant 0 : index
    %25 = vector.load %arg2[%c200, %c0_17] : memref<1560x128xf32, #tpu.memory_space<vmem>>, vector<1x32xf32>
    %26 = vector.broadcast %25 : vector<1x32xf32> to vector<8x32xf32>
    %27 = arith.addf %24, %26 : vector<8x32xf32>
    %28 = arith.negf %27 : vector<8x32xf32>
    %29 = math.exp %28 : vector<8x32xf32>
    %cst_18 = arith.constant 1.000000e+00 : f32
    %30 = vector.broadcast %cst_18 : f32 to vector<8x32xf32>
    %31 = arith.addf %30, %29 : vector<8x32xf32>
    %32 = arith.divf %30, %31 : vector<8x32xf32>
    %c136 = arith.constant 136 : index
    %c0_19 = arith.constant 0 : index
    %33 = vector.load %arg2[%c136, %c0_19] : memref<1560x128xf32, #tpu.memory_space<vmem>>, vector<32x32xf32>
    %cst_20 = arith.constant dense<0.000000e+00> : vector<8x32xf32>
    %34 = tpu.matmul %22, %33, %cst_20 {dimension_numbers = #tpu.dot_dimension_numbers<[1], [0], [0], [1], [0, 0, 1, 1], [], []>} : vector<8x32xf32>, vector<32x32xf32>, vector<8x32xf32> -> vector<8x32xf32>
    %c208 = arith.constant 208 : index
    %c0_21 = arith.constant 0 : index
    %35 = vector.load %arg2[%c208, %c0_21] : memref<1560x128xf32, #tpu.memory_space<vmem>>, vector<1x32xf32>
    %36 = vector.broadcast %35 : vector<1x32xf32> to vector<8x32xf32>
    %37 = arith.addf %34, %36 : vector<8x32xf32>
    %38 = math.tanh %37 : vector<8x32xf32>
    %c168 = arith.constant 168 : index
    %c0_22 = arith.constant 0 : index
    %39 = vector.load %arg2[%c168, %c0_22] : memref<1560x128xf32, #tpu.memory_space<vmem>>, vector<32x32xf32>
    %cst_23 = arith.constant dense<0.000000e+00> : vector<8x32xf32>
    %40 = tpu.matmul %22, %39, %cst_23 {dimension_numbers = #tpu.dot_dimension_numbers<[1], [0], [0], [1], [0, 0, 1, 1], [], []>} : vector<8x32xf32>, vector<32x32xf32>, vector<8x32xf32> -> vector<8x32xf32>
    %c216 = arith.constant 216 : index
    %c0_24 = arith.constant 0 : index
    %41 = vector.load %arg2[%c216, %c0_24] : memref<1560x128xf32, #tpu.memory_space<vmem>>, vector<1x32xf32>
    %42 = vector.broadcast %41 : vector<1x32xf32> to vector<8x32xf32>
    %43 = arith.addf %40, %42 : vector<8x32xf32>
    %44 = arith.negf %43 : vector<8x32xf32>
    %45 = math.exp %44 : vector<8x32xf32>
    %cst_25 = arith.constant 1.000000e+00 : f32
    %46 = vector.broadcast %cst_25 : f32 to vector<8x32xf32>
    %47 = arith.addf %46, %45 : vector<8x32xf32>
    %48 = arith.divf %46, %47 : vector<8x32xf32>
    %49 = arith.mulf %32, %38 : vector<8x32xf32>
    %50 = math.tanh %49 : vector<8x32xf32>
    %51 = arith.mulf %48, %50 : vector<8x32xf32>
    %c224 = arith.constant 224 : index
    %c0_26 = arith.constant 0 : index
    %52 = vector.load %arg2[%c224, %c0_26] : memref<1560x128xf32, #tpu.memory_space<vmem>>, vector<32x16xf32>
    %cst_27 = arith.constant dense<0.000000e+00> : vector<8x16xf32>
    %53 = tpu.matmul %51, %52, %cst_27 {dimension_numbers = #tpu.dot_dimension_numbers<[1], [0], [0], [1], [0, 0, 1, 1], [], []>} : vector<8x32xf32>, vector<32x16xf32>, vector<8x16xf32> -> vector<8x16xf32>
    %c256 = arith.constant 256 : index
    %c0_28 = arith.constant 0 : index
    %54 = vector.load %arg2[%c256, %c0_28] : memref<1560x128xf32, #tpu.memory_space<vmem>>, vector<1x16xf32>
    %55 = vector.broadcast %54 : vector<1x16xf32> to vector<8x16xf32>
    %56 = arith.addf %53, %55 : vector<8x16xf32>
    %cst_29 = arith.constant 0.000000e+00 : f32
    %57 = vector.broadcast %cst_29 : f32 to vector<8x16xf32>
    %58 = arith.maximumf %56, %57 : vector<8x16xf32>
    %c264 = arith.constant 264 : index
    %c0_30 = arith.constant 0 : index
    %59 = vector.load %arg2[%c264, %c0_30] : memref<1560x128xf32, #tpu.memory_space<vmem>>, vector<16x16xf32>
    %cst_31 = arith.constant dense<0.000000e+00> : vector<8x16xf32>
    %60 = tpu.matmul %58, %59, %cst_31 {dimension_numbers = #tpu.dot_dimension_numbers<[1], [0], [0], [1], [0, 0, 1, 1], [], []>} : vector<8x16xf32>, vector<16x16xf32>, vector<8x16xf32> -> vector<8x16xf32>
    %c280 = arith.constant 280 : index
    %c0_32 = arith.constant 0 : index
    %61 = vector.load %arg2[%c280, %c0_32] : memref<1560x128xf32, #tpu.memory_space<vmem>>, vector<1x16xf32>
    %62 = vector.broadcast %61 : vector<1x16xf32> to vector<8x16xf32>
    %63 = arith.addf %60, %62 : vector<8x16xf32>
    %cst_33 = arith.constant 0.000000e+00 : f32
    %64 = vector.broadcast %cst_33 : f32 to vector<8x16xf32>
    %65 = arith.maximumf %63, %64 : vector<8x16xf32>
    %c288 = arith.constant 288 : index
    %c0_34 = arith.constant 0 : index
    %66 = vector.load %arg2[%c288, %c0_34] : memref<1560x128xf32, #tpu.memory_space<vmem>>, vector<16x32xf32>
    %cst_35 = arith.constant dense<0.000000e+00> : vector<8x32xf32>
    %67 = tpu.matmul %65, %66, %cst_35 {dimension_numbers = #tpu.dot_dimension_numbers<[1], [0], [0], [1], [0, 0, 1, 1], [], []>} : vector<8x16xf32>, vector<16x32xf32>, vector<8x32xf32> -> vector<8x32xf32>
    %c304 = arith.constant 304 : index
    %c0_36 = arith.constant 0 : index
    %68 = vector.load %arg2[%c304, %c0_36] : memref<1560x128xf32, #tpu.memory_space<vmem>>, vector<1x32xf32>
    %69 = vector.broadcast %68 : vector<1x32xf32> to vector<8x32xf32>
    %70 = arith.addf %67, %69 : vector<8x32xf32>
    %cst_37 = arith.constant 0.000000e+00 : f32
    %71 = vector.broadcast %cst_37 : f32 to vector<8x32xf32>
    %72 = arith.maximumf %70, %71 : vector<8x32xf32>
    %c408 = arith.constant 408 : index
    %c0_38 = arith.constant 0 : index
    %73 = vector.load %arg2[%c408, %c0_38] : memref<1560x128xf32, #tpu.memory_space<vmem>>, vector<1x64xf32>
    %c312 = arith.constant 312 : index
    %c0_39 = arith.constant 0 : index
    %74 = vector.load %arg2[%c312, %c0_39] : memref<1560x128xf32, #tpu.memory_space<vmem>>, vector<32x64xf32>
    %cst_40 = arith.constant dense<0.000000e+00> : vector<8x64xf32>
    %75 = tpu.matmul %72, %74, %cst_40 {dimension_numbers = #tpu.dot_dimension_numbers<[1], [0], [0], [1], [0, 0, 1, 1], [], []>} : vector<8x32xf32>, vector<32x64xf32>, vector<8x64xf32> -> vector<8x64xf32>
    %76 = vector.broadcast %73 : vector<1x64xf32> to vector<8x64xf32>
    %77 = arith.addf %75, %76 : vector<8x64xf32>
    %cst_41 = arith.constant 0.000000e+00 : f32
    %78 = vector.broadcast %cst_41 : f32 to vector<8x64xf32>
    %79 = arith.maximumf %77, %78 : vector<8x64xf32>
    %c344 = arith.constant 344 : index
    %c0_42 = arith.constant 0 : index
    %80 = vector.load %arg2[%c344, %c0_42] : memref<1560x128xf32, #tpu.memory_space<vmem>>, vector<64x64xf32>
    %cst_43 = arith.constant dense<0.000000e+00> : vector<8x64xf32>
    %81 = tpu.matmul %79, %80, %cst_43 {dimension_numbers = #tpu.dot_dimension_numbers<[1], [0], [0], [1], [0, 0, 1, 1], [], []>} : vector<8x64xf32>, vector<64x64xf32>, vector<8x64xf32> -> vector<8x64xf32>
    %82 = vector.broadcast %73 : vector<1x64xf32> to vector<8x64xf32>
    %83 = arith.addf %81, %82 : vector<8x64xf32>
    %cst_44 = arith.constant 0.000000e+00 : f32
    %84 = vector.broadcast %cst_44 : f32 to vector<8x64xf32>
    %85 = arith.maximumf %83, %84 : vector<8x64xf32>
    %c0_45 = arith.constant 0 : index
    %c0_46 = arith.constant 0 : index
    %c0_47 = arith.constant 0 : index
    %86 = vector.load %arg1[%c0_45, %c0_46, %c0_47] : memref<2x8x8xf32, #tpu.memory_space<vmem>>, vector<1x8x8xf32>
    %87 = vector.shape_cast %86 : vector<1x8x8xf32> to vector<8x8xf32>
    %88 = vector.extract_strided_slice %85 {offsets = [0, 0], sizes = [8, 32], strides = [1, 1]} : vector<8x64xf32> to vector<8x32xf32>
    %cst_48 = arith.constant dense<0.000000e+00> : vector<8x32xf32>
    %89 = tpu.matmul %87, %88, %cst_48 {dimension_numbers = #tpu.dot_dimension_numbers<[1], [0], [0], [1], [0, 0, 1, 1], [], []>} : vector<8x8xf32>, vector<8x32xf32>, vector<8x32xf32> -> vector<8x32xf32>
    %c1_49 = arith.constant 1 : index
    %c0_50 = arith.constant 0 : index
    %c0_51 = arith.constant 0 : index
    %90 = vector.load %arg1[%c1_49, %c0_50, %c0_51] : memref<2x8x8xf32, #tpu.memory_space<vmem>>, vector<1x8x8xf32>
    %91 = vector.shape_cast %90 : vector<1x8x8xf32> to vector<8x8xf32>
    %92 = vector.extract_strided_slice %85 {offsets = [0, 32], sizes = [8, 32], strides = [1, 1]} : vector<8x64xf32> to vector<8x32xf32>
    %cst_52 = arith.constant dense<0.000000e+00> : vector<8x32xf32>
    %93 = tpu.matmul %91, %92, %cst_52 {dimension_numbers = #tpu.dot_dimension_numbers<[1], [0], [0], [1], [0, 0, 1, 1], [], []>} : vector<8x8xf32>, vector<8x32xf32>, vector<8x32xf32> -> vector<8x32xf32>
    %94 = arith.addf %89, %93 : vector<8x32xf32>
    %c416 = arith.constant 416 : index
    %c0_53 = arith.constant 0 : index
    %95 = vector.load %arg2[%c416, %c0_53] : memref<1560x128xf32, #tpu.memory_space<vmem>>, vector<32x32xf32>
    %cst_54 = arith.constant dense<0.000000e+00> : vector<8x32xf32>
    %96 = tpu.matmul %94, %95, %cst_54 {dimension_numbers = #tpu.dot_dimension_numbers<[1], [0], [0], [1], [0, 0, 1, 1], [], []>} : vector<8x32xf32>, vector<32x32xf32>, vector<8x32xf32> -> vector<8x32xf32>
    %c512 = arith.constant 512 : index
    %c0_55 = arith.constant 0 : index
    %97 = vector.load %arg2[%c512, %c0_55] : memref<1560x128xf32, #tpu.memory_space<vmem>>, vector<1x32xf32>
    %98 = vector.broadcast %97 : vector<1x32xf32> to vector<8x32xf32>
    %99 = arith.addf %96, %98 : vector<8x32xf32>
    %100 = arith.negf %99 : vector<8x32xf32>
    %101 = math.exp %100 : vector<8x32xf32>
    %cst_56 = arith.constant 1.000000e+00 : f32
    %102 = vector.broadcast %cst_56 : f32 to vector<8x32xf32>
    %103 = arith.addf %102, %101 : vector<8x32xf32>
    %104 = arith.divf %102, %103 : vector<8x32xf32>
    %c448 = arith.constant 448 : index
    %c0_57 = arith.constant 0 : index
    %105 = vector.load %arg2[%c448, %c0_57] : memref<1560x128xf32, #tpu.memory_space<vmem>>, vector<32x32xf32>
    %cst_58 = arith.constant dense<0.000000e+00> : vector<8x32xf32>
    %106 = tpu.matmul %94, %105, %cst_58 {dimension_numbers = #tpu.dot_dimension_numbers<[1], [0], [0], [1], [0, 0, 1, 1], [], []>} : vector<8x32xf32>, vector<32x32xf32>, vector<8x32xf32> -> vector<8x32xf32>
    %c520 = arith.constant 520 : index
    %c0_59 = arith.constant 0 : index
    %107 = vector.load %arg2[%c520, %c0_59] : memref<1560x128xf32, #tpu.memory_space<vmem>>, vector<1x32xf32>
    %108 = vector.broadcast %107 : vector<1x32xf32> to vector<8x32xf32>
    %109 = arith.addf %106, %108 : vector<8x32xf32>
    %110 = math.tanh %109 : vector<8x32xf32>
    %c480 = arith.constant 480 : index
    %c0_60 = arith.constant 0 : index
    %111 = vector.load %arg2[%c480, %c0_60] : memref<1560x128xf32, #tpu.memory_space<vmem>>, vector<32x32xf32>
    %cst_61 = arith.constant dense<0.000000e+00> : vector<8x32xf32>
    %112 = tpu.matmul %94, %111, %cst_61 {dimension_numbers = #tpu.dot_dimension_numbers<[1], [0], [0], [1], [0, 0, 1, 1], [], []>} : vector<8x32xf32>, vector<32x32xf32>, vector<8x32xf32> -> vector<8x32xf32>
    %c528 = arith.constant 528 : index
    %c0_62 = arith.constant 0 : index
    %113 = vector.load %arg2[%c528, %c0_62] : memref<1560x128xf32, #tpu.memory_space<vmem>>, vector<1x32xf32>
    %114 = vector.broadcast %113 : vector<1x32xf32> to vector<8x32xf32>
    %115 = arith.addf %112, %114 : vector<8x32xf32>
    %116 = arith.negf %115 : vector<8x32xf32>
    %117 = math.exp %116 : vector<8x32xf32>
    %cst_63 = arith.constant 1.000000e+00 : f32
    %118 = vector.broadcast %cst_63 : f32 to vector<8x32xf32>
    %119 = arith.addf %118, %117 : vector<8x32xf32>
    %120 = arith.divf %118, %119 : vector<8x32xf32>
    %121 = arith.mulf %104, %110 : vector<8x32xf32>
    %122 = math.tanh %121 : vector<8x32xf32>
    %123 = arith.mulf %120, %122 : vector<8x32xf32>
    %c536 = arith.constant 536 : index
    %c0_64 = arith.constant 0 : index
    %124 = vector.load %arg2[%c536, %c0_64] : memref<1560x128xf32, #tpu.memory_space<vmem>>, vector<32x16xf32>
    %cst_65 = arith.constant dense<0.000000e+00> : vector<8x16xf32>
    %125 = tpu.matmul %123, %124, %cst_65 {dimension_numbers = #tpu.dot_dimension_numbers<[1], [0], [0], [1], [0, 0, 1, 1], [], []>} : vector<8x32xf32>, vector<32x16xf32>, vector<8x16xf32> -> vector<8x16xf32>
    %c568 = arith.constant 568 : index
    %c0_66 = arith.constant 0 : index
    %126 = vector.load %arg2[%c568, %c0_66] : memref<1560x128xf32, #tpu.memory_space<vmem>>, vector<1x16xf32>
    %127 = vector.broadcast %126 : vector<1x16xf32> to vector<8x16xf32>
    %128 = arith.addf %125, %127 : vector<8x16xf32>
    %cst_67 = arith.constant 0.000000e+00 : f32
    %129 = vector.broadcast %cst_67 : f32 to vector<8x16xf32>
    %130 = arith.maximumf %128, %129 : vector<8x16xf32>
    %c576 = arith.constant 576 : index
    %c0_68 = arith.constant 0 : index
    %131 = vector.load %arg2[%c576, %c0_68] : memref<1560x128xf32, #tpu.memory_space<vmem>>, vector<16x16xf32>
    %cst_69 = arith.constant dense<0.000000e+00> : vector<8x16xf32>
    %132 = tpu.matmul %130, %131, %cst_69 {dimension_numbers = #tpu.dot_dimension_numbers<[1], [0], [0], [1], [0, 0, 1, 1], [], []>} : vector<8x16xf32>, vector<16x16xf32>, vector<8x16xf32> -> vector<8x16xf32>
    %c592 = arith.constant 592 : index
    %c0_70 = arith.constant 0 : index
    %133 = vector.load %arg2[%c592, %c0_70] : memref<1560x128xf32, #tpu.memory_space<vmem>>, vector<1x16xf32>
    %134 = vector.broadcast %133 : vector<1x16xf32> to vector<8x16xf32>
    %135 = arith.addf %132, %134 : vector<8x16xf32>
    %cst_71 = arith.constant 0.000000e+00 : f32
    %136 = vector.broadcast %cst_71 : f32 to vector<8x16xf32>
    %137 = arith.maximumf %135, %136 : vector<8x16xf32>
    %c600 = arith.constant 600 : index
    %c0_72 = arith.constant 0 : index
    %138 = vector.load %arg2[%c600, %c0_72] : memref<1560x128xf32, #tpu.memory_space<vmem>>, vector<16x32xf32>
    %cst_73 = arith.constant dense<0.000000e+00> : vector<8x32xf32>
    %139 = tpu.matmul %137, %138, %cst_73 {dimension_numbers = #tpu.dot_dimension_numbers<[1], [0], [0], [1], [0, 0, 1, 1], [], []>} : vector<8x16xf32>, vector<16x32xf32>, vector<8x32xf32> -> vector<8x32xf32>
    %c616 = arith.constant 616 : index
    %c0_74 = arith.constant 0 : index
    %140 = vector.load %arg2[%c616, %c0_74] : memref<1560x128xf32, #tpu.memory_space<vmem>>, vector<1x32xf32>
    %141 = vector.broadcast %140 : vector<1x32xf32> to vector<8x32xf32>
    %142 = arith.addf %139, %141 : vector<8x32xf32>
    %cst_75 = arith.constant 0.000000e+00 : f32
    %143 = vector.broadcast %cst_75 : f32 to vector<8x32xf32>
    %144 = arith.maximumf %142, %143 : vector<8x32xf32>
    %c408_76 = arith.constant 408 : index
    %c0_77 = arith.constant 0 : index
    %145 = vector.load %arg2[%c408_76, %c0_77] : memref<1560x128xf32, #tpu.memory_space<vmem>>, vector<1x64xf32>
    %c312_78 = arith.constant 312 : index
    %c0_79 = arith.constant 0 : index
    %146 = vector.load %arg2[%c312_78, %c0_79] : memref<1560x128xf32, #tpu.memory_space<vmem>>, vector<32x64xf32>
    %cst_80 = arith.constant dense<0.000000e+00> : vector<8x64xf32>
    %147 = tpu.matmul %144, %146, %cst_80 {dimension_numbers = #tpu.dot_dimension_numbers<[1], [0], [0], [1], [0, 0, 1, 1], [], []>} : vector<8x32xf32>, vector<32x64xf32>, vector<8x64xf32> -> vector<8x64xf32>
    %148 = vector.broadcast %145 : vector<1x64xf32> to vector<8x64xf32>
    %149 = arith.addf %147, %148 : vector<8x64xf32>
    %cst_81 = arith.constant 0.000000e+00 : f32
    %150 = vector.broadcast %cst_81 : f32 to vector<8x64xf32>
    %151 = arith.maximumf %149, %150 : vector<8x64xf32>
    %c344_82 = arith.constant 344 : index
    %c0_83 = arith.constant 0 : index
    %152 = vector.load %arg2[%c344_82, %c0_83] : memref<1560x128xf32, #tpu.memory_space<vmem>>, vector<64x64xf32>
    %cst_84 = arith.constant dense<0.000000e+00> : vector<8x64xf32>
    %153 = tpu.matmul %151, %152, %cst_84 {dimension_numbers = #tpu.dot_dimension_numbers<[1], [0], [0], [1], [0, 0, 1, 1], [], []>} : vector<8x64xf32>, vector<64x64xf32>, vector<8x64xf32> -> vector<8x64xf32>
    %154 = vector.broadcast %145 : vector<1x64xf32> to vector<8x64xf32>
    %155 = arith.addf %153, %154 : vector<8x64xf32>
    %cst_85 = arith.constant 0.000000e+00 : f32
    %156 = vector.broadcast %cst_85 : f32 to vector<8x64xf32>
    %157 = arith.maximumf %155, %156 : vector<8x64xf32>
    %c0_86 = arith.constant 0 : index
    %c0_87 = arith.constant 0 : index
    %c0_88 = arith.constant 0 : index
    %158 = vector.load %arg1[%c0_86, %c0_87, %c0_88] : memref<2x8x8xf32, #tpu.memory_space<vmem>>, vector<1x8x8xf32>
    %159 = vector.shape_cast %158 : vector<1x8x8xf32> to vector<8x8xf32>
    %160 = vector.extract_strided_slice %157 {offsets = [0, 0], sizes = [8, 32], strides = [1, 1]} : vector<8x64xf32> to vector<8x32xf32>
    %cst_89 = arith.constant dense<0.000000e+00> : vector<8x32xf32>
    %161 = tpu.matmul %159, %160, %cst_89 {dimension_numbers = #tpu.dot_dimension_numbers<[1], [0], [0], [1], [0, 0, 1, 1], [], []>} : vector<8x8xf32>, vector<8x32xf32>, vector<8x32xf32> -> vector<8x32xf32>
    %c1_90 = arith.constant 1 : index
    %c0_91 = arith.constant 0 : index
    %c0_92 = arith.constant 0 : index
    %162 = vector.load %arg1[%c1_90, %c0_91, %c0_92] : memref<2x8x8xf32, #tpu.memory_space<vmem>>, vector<1x8x8xf32>
    %163 = vector.shape_cast %162 : vector<1x8x8xf32> to vector<8x8xf32>
    %164 = vector.extract_strided_slice %157 {offsets = [0, 32], sizes = [8, 32], strides = [1, 1]} : vector<8x64xf32> to vector<8x32xf32>
    %cst_93 = arith.constant dense<0.000000e+00> : vector<8x32xf32>
    %165 = tpu.matmul %163, %164, %cst_93 {dimension_numbers = #tpu.dot_dimension_numbers<[1], [0], [0], [1], [0, 0, 1, 1], [], []>} : vector<8x8xf32>, vector<8x32xf32>, vector<8x32xf32> -> vector<8x32xf32>
    %166 = arith.addf %161, %165 : vector<8x32xf32>
    %c416_94 = arith.constant 416 : index
    %c0_95 = arith.constant 0 : index
    %167 = vector.load %arg2[%c416_94, %c0_95] : memref<1560x128xf32, #tpu.memory_space<vmem>>, vector<32x32xf32>
    %cst_96 = arith.constant dense<0.000000e+00> : vector<8x32xf32>
    %168 = tpu.matmul %166, %167, %cst_96 {dimension_numbers = #tpu.dot_dimension_numbers<[1], [0], [0], [1], [0, 0, 1, 1], [], []>} : vector<8x32xf32>, vector<32x32xf32>, vector<8x32xf32> -> vector<8x32xf32>
    %c512_97 = arith.constant 512 : index
    %c0_98 = arith.constant 0 : index
    %169 = vector.load %arg2[%c512_97, %c0_98] : memref<1560x128xf32, #tpu.memory_space<vmem>>, vector<1x32xf32>
    %170 = vector.broadcast %169 : vector<1x32xf32> to vector<8x32xf32>
    %171 = arith.addf %168, %170 : vector<8x32xf32>
    %172 = arith.negf %171 : vector<8x32xf32>
    %173 = math.exp %172 : vector<8x32xf32>
    %cst_99 = arith.constant 1.000000e+00 : f32
    %174 = vector.broadcast %cst_99 : f32 to vector<8x32xf32>
    %175 = arith.addf %174, %173 : vector<8x32xf32>
    %176 = arith.divf %174, %175 : vector<8x32xf32>
    %c448_100 = arith.constant 448 : index
    %c0_101 = arith.constant 0 : index
    %177 = vector.load %arg2[%c448_100, %c0_101] : memref<1560x128xf32, #tpu.memory_space<vmem>>, vector<32x32xf32>
    %cst_102 = arith.constant dense<0.000000e+00> : vector<8x32xf32>
    %178 = tpu.matmul %166, %177, %cst_102 {dimension_numbers = #tpu.dot_dimension_numbers<[1], [0], [0], [1], [0, 0, 1, 1], [], []>} : vector<8x32xf32>, vector<32x32xf32>, vector<8x32xf32> -> vector<8x32xf32>
    %c520_103 = arith.constant 520 : index
    %c0_104 = arith.constant 0 : index
    %179 = vector.load %arg2[%c520_103, %c0_104] : memref<1560x128xf32, #tpu.memory_space<vmem>>, vector<1x32xf32>
    %180 = vector.broadcast %179 : vector<1x32xf32> to vector<8x32xf32>
    %181 = arith.addf %178, %180 : vector<8x32xf32>
    %182 = math.tanh %181 : vector<8x32xf32>
    %c480_105 = arith.constant 480 : index
    %c0_106 = arith.constant 0 : index
    %183 = vector.load %arg2[%c480_105, %c0_106] : memref<1560x128xf32, #tpu.memory_space<vmem>>, vector<32x32xf32>
    %cst_107 = arith.constant dense<0.000000e+00> : vector<8x32xf32>
    %184 = tpu.matmul %166, %183, %cst_107 {dimension_numbers = #tpu.dot_dimension_numbers<[1], [0], [0], [1], [0, 0, 1, 1], [], []>} : vector<8x32xf32>, vector<32x32xf32>, vector<8x32xf32> -> vector<8x32xf32>
    %c528_108 = arith.constant 528 : index
    %c0_109 = arith.constant 0 : index
    %185 = vector.load %arg2[%c528_108, %c0_109] : memref<1560x128xf32, #tpu.memory_space<vmem>>, vector<1x32xf32>
    %186 = vector.broadcast %185 : vector<1x32xf32> to vector<8x32xf32>
    %187 = arith.addf %184, %186 : vector<8x32xf32>
    %188 = arith.negf %187 : vector<8x32xf32>
    %189 = math.exp %188 : vector<8x32xf32>
    %cst_110 = arith.constant 1.000000e+00 : f32
    %190 = vector.broadcast %cst_110 : f32 to vector<8x32xf32>
    %191 = arith.addf %190, %189 : vector<8x32xf32>
    %192 = arith.divf %190, %191 : vector<8x32xf32>
    %193 = arith.mulf %176, %182 : vector<8x32xf32>
    %194 = math.tanh %193 : vector<8x32xf32>
    %195 = arith.mulf %192, %194 : vector<8x32xf32>
    %c536_111 = arith.constant 536 : index
    %c0_112 = arith.constant 0 : index
    %196 = vector.load %arg2[%c536_111, %c0_112] : memref<1560x128xf32, #tpu.memory_space<vmem>>, vector<32x16xf32>
    %cst_113 = arith.constant dense<0.000000e+00> : vector<8x16xf32>
    %197 = tpu.matmul %195, %196, %cst_113 {dimension_numbers = #tpu.dot_dimension_numbers<[1], [0], [0], [1], [0, 0, 1, 1], [], []>} : vector<8x32xf32>, vector<32x16xf32>, vector<8x16xf32> -> vector<8x16xf32>
    %c568_114 = arith.constant 568 : index
    %c0_115 = arith.constant 0 : index
    %198 = vector.load %arg2[%c568_114, %c0_115] : memref<1560x128xf32, #tpu.memory_space<vmem>>, vector<1x16xf32>
    %199 = vector.broadcast %198 : vector<1x16xf32> to vector<8x16xf32>
    %200 = arith.addf %197, %199 : vector<8x16xf32>
    %cst_116 = arith.constant 0.000000e+00 : f32
    %201 = vector.broadcast %cst_116 : f32 to vector<8x16xf32>
    %202 = arith.maximumf %200, %201 : vector<8x16xf32>
    %c576_117 = arith.constant 576 : index
    %c0_118 = arith.constant 0 : index
    %203 = vector.load %arg2[%c576_117, %c0_118] : memref<1560x128xf32, #tpu.memory_space<vmem>>, vector<16x16xf32>
    %cst_119 = arith.constant dense<0.000000e+00> : vector<8x16xf32>
    %204 = tpu.matmul %202, %203, %cst_119 {dimension_numbers = #tpu.dot_dimension_numbers<[1], [0], [0], [1], [0, 0, 1, 1], [], []>} : vector<8x16xf32>, vector<16x16xf32>, vector<8x16xf32> -> vector<8x16xf32>
    %c592_120 = arith.constant 592 : index
    %c0_121 = arith.constant 0 : index
    %205 = vector.load %arg2[%c592_120, %c0_121] : memref<1560x128xf32, #tpu.memory_space<vmem>>, vector<1x16xf32>
    %206 = vector.broadcast %205 : vector<1x16xf32> to vector<8x16xf32>
    %207 = arith.addf %204, %206 : vector<8x16xf32>
    %cst_122 = arith.constant 0.000000e+00 : f32
    %208 = vector.broadcast %cst_122 : f32 to vector<8x16xf32>
    %209 = arith.maximumf %207, %208 : vector<8x16xf32>
    %c600_123 = arith.constant 600 : index
    %c0_124 = arith.constant 0 : index
    %210 = vector.load %arg2[%c600_123, %c0_124] : memref<1560x128xf32, #tpu.memory_space<vmem>>, vector<16x32xf32>
    %cst_125 = arith.constant dense<0.000000e+00> : vector<8x32xf32>
    %211 = tpu.matmul %209, %210, %cst_125 {dimension_numbers = #tpu.dot_dimension_numbers<[1], [0], [0], [1], [0, 0, 1, 1], [], []>} : vector<8x16xf32>, vector<16x32xf32>, vector<8x32xf32> -> vector<8x32xf32>
    %c616_126 = arith.constant 616 : index
    %c0_127 = arith.constant 0 : index
    %212 = vector.load %arg2[%c616_126, %c0_127] : memref<1560x128xf32, #tpu.memory_space<vmem>>, vector<1x32xf32>
    %213 = vector.broadcast %212 : vector<1x32xf32> to vector<8x32xf32>
    %214 = arith.addf %211, %213 : vector<8x32xf32>
    %cst_128 = arith.constant 0.000000e+00 : f32
    %215 = vector.broadcast %cst_128 : f32 to vector<8x32xf32>
    %216 = arith.maximumf %214, %215 : vector<8x32xf32>
    %c408_129 = arith.constant 408 : index
    %c0_130 = arith.constant 0 : index
    %217 = vector.load %arg2[%c408_129, %c0_130] : memref<1560x128xf32, #tpu.memory_space<vmem>>, vector<1x64xf32>
    %c312_131 = arith.constant 312 : index
    %c0_132 = arith.constant 0 : index
    %218 = vector.load %arg2[%c312_131, %c0_132] : memref<1560x128xf32, #tpu.memory_space<vmem>>, vector<32x64xf32>
    %cst_133 = arith.constant dense<0.000000e+00> : vector<8x64xf32>
    %219 = tpu.matmul %216, %218, %cst_133 {dimension_numbers = #tpu.dot_dimension_numbers<[1], [0], [0], [1], [0, 0, 1, 1], [], []>} : vector<8x32xf32>, vector<32x64xf32>, vector<8x64xf32> -> vector<8x64xf32>
    %220 = vector.broadcast %217 : vector<1x64xf32> to vector<8x64xf32>
    %221 = arith.addf %219, %220 : vector<8x64xf32>
    %cst_134 = arith.constant 0.000000e+00 : f32
    %222 = vector.broadcast %cst_134 : f32 to vector<8x64xf32>
    %223 = arith.maximumf %221, %222 : vector<8x64xf32>
    %c344_135 = arith.constant 344 : index
    %c0_136 = arith.constant 0 : index
    %224 = vector.load %arg2[%c344_135, %c0_136] : memref<1560x128xf32, #tpu.memory_space<vmem>>, vector<64x64xf32>
    %cst_137 = arith.constant dense<0.000000e+00> : vector<8x64xf32>
    %225 = tpu.matmul %223, %224, %cst_137 {dimension_numbers = #tpu.dot_dimension_numbers<[1], [0], [0], [1], [0, 0, 1, 1], [], []>} : vector<8x64xf32>, vector<64x64xf32>, vector<8x64xf32> -> vector<8x64xf32>
    %226 = vector.broadcast %217 : vector<1x64xf32> to vector<8x64xf32>
    %227 = arith.addf %225, %226 : vector<8x64xf32>
    %cst_138 = arith.constant 0.000000e+00 : f32
    %228 = vector.broadcast %cst_138 : f32 to vector<8x64xf32>
    %229 = arith.maximumf %227, %228 : vector<8x64xf32>
    %c0_139 = arith.constant 0 : index
    %c0_140 = arith.constant 0 : index
    %c0_141 = arith.constant 0 : index
    %230 = vector.load %arg1[%c0_139, %c0_140, %c0_141] : memref<2x8x8xf32, #tpu.memory_space<vmem>>, vector<1x8x8xf32>
    %231 = vector.shape_cast %230 : vector<1x8x8xf32> to vector<8x8xf32>
    %232 = vector.extract_strided_slice %229 {offsets = [0, 0], sizes = [8, 32], strides = [1, 1]} : vector<8x64xf32> to vector<8x32xf32>
    %cst_142 = arith.constant dense<0.000000e+00> : vector<8x32xf32>
    %233 = tpu.matmul %231, %232, %cst_142 {dimension_numbers = #tpu.dot_dimension_numbers<[1], [0], [0], [1], [0, 0, 1, 1], [], []>} : vector<8x8xf32>, vector<8x32xf32>, vector<8x32xf32> -> vector<8x32xf32>
    %c1_143 = arith.constant 1 : index
    %c0_144 = arith.constant 0 : index
    %c0_145 = arith.constant 0 : index
    %234 = vector.load %arg1[%c1_143, %c0_144, %c0_145] : memref<2x8x8xf32, #tpu.memory_space<vmem>>, vector<1x8x8xf32>
    %235 = vector.shape_cast %234 : vector<1x8x8xf32> to vector<8x8xf32>
    %236 = vector.extract_strided_slice %229 {offsets = [0, 32], sizes = [8, 32], strides = [1, 1]} : vector<8x64xf32> to vector<8x32xf32>
    %cst_146 = arith.constant dense<0.000000e+00> : vector<8x32xf32>
    %237 = tpu.matmul %235, %236, %cst_146 {dimension_numbers = #tpu.dot_dimension_numbers<[1], [0], [0], [1], [0, 0, 1, 1], [], []>} : vector<8x8xf32>, vector<8x32xf32>, vector<8x32xf32> -> vector<8x32xf32>
    %238 = arith.addf %233, %237 : vector<8x32xf32>
    %c416_147 = arith.constant 416 : index
    %c0_148 = arith.constant 0 : index
    %239 = vector.load %arg2[%c416_147, %c0_148] : memref<1560x128xf32, #tpu.memory_space<vmem>>, vector<32x32xf32>
    %cst_149 = arith.constant dense<0.000000e+00> : vector<8x32xf32>
    %240 = tpu.matmul %238, %239, %cst_149 {dimension_numbers = #tpu.dot_dimension_numbers<[1], [0], [0], [1], [0, 0, 1, 1], [], []>} : vector<8x32xf32>, vector<32x32xf32>, vector<8x32xf32> -> vector<8x32xf32>
    %c512_150 = arith.constant 512 : index
    %c0_151 = arith.constant 0 : index
    %241 = vector.load %arg2[%c512_150, %c0_151] : memref<1560x128xf32, #tpu.memory_space<vmem>>, vector<1x32xf32>
    %242 = vector.broadcast %241 : vector<1x32xf32> to vector<8x32xf32>
    %243 = arith.addf %240, %242 : vector<8x32xf32>
    %244 = arith.negf %243 : vector<8x32xf32>
    %245 = math.exp %244 : vector<8x32xf32>
    %cst_152 = arith.constant 1.000000e+00 : f32
    %246 = vector.broadcast %cst_152 : f32 to vector<8x32xf32>
    %247 = arith.addf %246, %245 : vector<8x32xf32>
    %248 = arith.divf %246, %247 : vector<8x32xf32>
    %c448_153 = arith.constant 448 : index
    %c0_154 = arith.constant 0 : index
    %249 = vector.load %arg2[%c448_153, %c0_154] : memref<1560x128xf32, #tpu.memory_space<vmem>>, vector<32x32xf32>
    %cst_155 = arith.constant dense<0.000000e+00> : vector<8x32xf32>
    %250 = tpu.matmul %238, %249, %cst_155 {dimension_numbers = #tpu.dot_dimension_numbers<[1], [0], [0], [1], [0, 0, 1, 1], [], []>} : vector<8x32xf32>, vector<32x32xf32>, vector<8x32xf32> -> vector<8x32xf32>
    %c520_156 = arith.constant 520 : index
    %c0_157 = arith.constant 0 : index
    %251 = vector.load %arg2[%c520_156, %c0_157] : memref<1560x128xf32, #tpu.memory_space<vmem>>, vector<1x32xf32>
    %252 = vector.broadcast %251 : vector<1x32xf32> to vector<8x32xf32>
    %253 = arith.addf %250, %252 : vector<8x32xf32>
    %254 = math.tanh %253 : vector<8x32xf32>
    %c480_158 = arith.constant 480 : index
    %c0_159 = arith.constant 0 : index
    %255 = vector.load %arg2[%c480_158, %c0_159] : memref<1560x128xf32, #tpu.memory_space<vmem>>, vector<32x32xf32>
    %cst_160 = arith.constant dense<0.000000e+00> : vector<8x32xf32>
    %256 = tpu.matmul %238, %255, %cst_160 {dimension_numbers = #tpu.dot_dimension_numbers<[1], [0], [0], [1], [0, 0, 1, 1], [], []>} : vector<8x32xf32>, vector<32x32xf32>, vector<8x32xf32> -> vector<8x32xf32>
    %c528_161 = arith.constant 528 : index
    %c0_162 = arith.constant 0 : index
    %257 = vector.load %arg2[%c528_161, %c0_162] : memref<1560x128xf32, #tpu.memory_space<vmem>>, vector<1x32xf32>
    %258 = vector.broadcast %257 : vector<1x32xf32> to vector<8x32xf32>
    %259 = arith.addf %256, %258 : vector<8x32xf32>
    %260 = arith.negf %259 : vector<8x32xf32>
    %261 = math.exp %260 : vector<8x32xf32>
    %cst_163 = arith.constant 1.000000e+00 : f32
    %262 = vector.broadcast %cst_163 : f32 to vector<8x32xf32>
    %263 = arith.addf %262, %261 : vector<8x32xf32>
    %264 = arith.divf %262, %263 : vector<8x32xf32>
    %265 = arith.mulf %248, %254 : vector<8x32xf32>
    %266 = math.tanh %265 : vector<8x32xf32>
    %267 = arith.mulf %264, %266 : vector<8x32xf32>
    %c536_164 = arith.constant 536 : index
    %c0_165 = arith.constant 0 : index
    %268 = vector.load %arg2[%c536_164, %c0_165] : memref<1560x128xf32, #tpu.memory_space<vmem>>, vector<32x16xf32>
    %cst_166 = arith.constant dense<0.000000e+00> : vector<8x16xf32>
    %269 = tpu.matmul %267, %268, %cst_166 {dimension_numbers = #tpu.dot_dimension_numbers<[1], [0], [0], [1], [0, 0, 1, 1], [], []>} : vector<8x32xf32>, vector<32x16xf32>, vector<8x16xf32> -> vector<8x16xf32>
    %c568_167 = arith.constant 568 : index
    %c0_168 = arith.constant 0 : index
    %270 = vector.load %arg2[%c568_167, %c0_168] : memref<1560x128xf32, #tpu.memory_space<vmem>>, vector<1x16xf32>
    %271 = vector.broadcast %270 : vector<1x16xf32> to vector<8x16xf32>
    %272 = arith.addf %269, %271 : vector<8x16xf32>
    %cst_169 = arith.constant 0.000000e+00 : f32
    %273 = vector.broadcast %cst_169 : f32 to vector<8x16xf32>
    %274 = arith.maximumf %272, %273 : vector<8x16xf32>
    %c576_170 = arith.constant 576 : index
    %c0_171 = arith.constant 0 : index
    %275 = vector.load %arg2[%c576_170, %c0_171] : memref<1560x128xf32, #tpu.memory_space<vmem>>, vector<16x16xf32>
    %cst_172 = arith.constant dense<0.000000e+00> : vector<8x16xf32>
    %276 = tpu.matmul %274, %275, %cst_172 {dimension_numbers = #tpu.dot_dimension_numbers<[1], [0], [0], [1], [0, 0, 1, 1], [], []>} : vector<8x16xf32>, vector<16x16xf32>, vector<8x16xf32> -> vector<8x16xf32>
    %c592_173 = arith.constant 592 : index
    %c0_174 = arith.constant 0 : index
    %277 = vector.load %arg2[%c592_173, %c0_174] : memref<1560x128xf32, #tpu.memory_space<vmem>>, vector<1x16xf32>
    %278 = vector.broadcast %277 : vector<1x16xf32> to vector<8x16xf32>
    %279 = arith.addf %276, %278 : vector<8x16xf32>
    %cst_175 = arith.constant 0.000000e+00 : f32
    %280 = vector.broadcast %cst_175 : f32 to vector<8x16xf32>
    %281 = arith.maximumf %279, %280 : vector<8x16xf32>
    %c600_176 = arith.constant 600 : index
    %c0_177 = arith.constant 0 : index
    %282 = vector.load %arg2[%c600_176, %c0_177] : memref<1560x128xf32, #tpu.memory_space<vmem>>, vector<16x32xf32>
    %cst_178 = arith.constant dense<0.000000e+00> : vector<8x32xf32>
    %283 = tpu.matmul %281, %282, %cst_178 {dimension_numbers = #tpu.dot_dimension_numbers<[1], [0], [0], [1], [0, 0, 1, 1], [], []>} : vector<8x16xf32>, vector<16x32xf32>, vector<8x32xf32> -> vector<8x32xf32>
    %c616_179 = arith.constant 616 : index
    %c0_180 = arith.constant 0 : index
    %284 = vector.load %arg2[%c616_179, %c0_180] : memref<1560x128xf32, #tpu.memory_space<vmem>>, vector<1x32xf32>
    %285 = vector.broadcast %284 : vector<1x32xf32> to vector<8x32xf32>
    %286 = arith.addf %283, %285 : vector<8x32xf32>
    %cst_181 = arith.constant 0.000000e+00 : f32
    %287 = vector.broadcast %cst_181 : f32 to vector<8x32xf32>
    %288 = arith.maximumf %286, %287 : vector<8x32xf32>
    %c720 = arith.constant 720 : index
    %c0_182 = arith.constant 0 : index
    %289 = vector.load %arg2[%c720, %c0_182] : memref<1560x128xf32, #tpu.memory_space<vmem>>, vector<1x64xf32>
    %c624 = arith.constant 624 : index
    %c0_183 = arith.constant 0 : index
    %290 = vector.load %arg2[%c624, %c0_183] : memref<1560x128xf32, #tpu.memory_space<vmem>>, vector<32x64xf32>
    %cst_184 = arith.constant dense<0.000000e+00> : vector<8x64xf32>
    %291 = tpu.matmul %288, %290, %cst_184 {dimension_numbers = #tpu.dot_dimension_numbers<[1], [0], [0], [1], [0, 0, 1, 1], [], []>} : vector<8x32xf32>, vector<32x64xf32>, vector<8x64xf32> -> vector<8x64xf32>
    %292 = vector.broadcast %289 : vector<1x64xf32> to vector<8x64xf32>
    %293 = arith.addf %291, %292 : vector<8x64xf32>
    %cst_185 = arith.constant 0.000000e+00 : f32
    %294 = vector.broadcast %cst_185 : f32 to vector<8x64xf32>
    %295 = arith.maximumf %293, %294 : vector<8x64xf32>
    %c656 = arith.constant 656 : index
    %c0_186 = arith.constant 0 : index
    %296 = vector.load %arg2[%c656, %c0_186] : memref<1560x128xf32, #tpu.memory_space<vmem>>, vector<64x64xf32>
    %cst_187 = arith.constant dense<0.000000e+00> : vector<8x64xf32>
    %297 = tpu.matmul %295, %296, %cst_187 {dimension_numbers = #tpu.dot_dimension_numbers<[1], [0], [0], [1], [0, 0, 1, 1], [], []>} : vector<8x64xf32>, vector<64x64xf32>, vector<8x64xf32> -> vector<8x64xf32>
    %298 = vector.broadcast %289 : vector<1x64xf32> to vector<8x64xf32>
    %299 = arith.addf %297, %298 : vector<8x64xf32>
    %cst_188 = arith.constant 0.000000e+00 : f32
    %300 = vector.broadcast %cst_188 : f32 to vector<8x64xf32>
    %301 = arith.maximumf %299, %300 : vector<8x64xf32>
    %c0_189 = arith.constant 0 : index
    %c0_190 = arith.constant 0 : index
    %c0_191 = arith.constant 0 : index
    %302 = vector.load %arg1[%c0_189, %c0_190, %c0_191] : memref<2x8x8xf32, #tpu.memory_space<vmem>>, vector<1x8x8xf32>
    %303 = vector.shape_cast %302 : vector<1x8x8xf32> to vector<8x8xf32>
    %304 = vector.extract_strided_slice %301 {offsets = [0, 0], sizes = [8, 32], strides = [1, 1]} : vector<8x64xf32> to vector<8x32xf32>
    %cst_192 = arith.constant dense<0.000000e+00> : vector<8x32xf32>
    %305 = tpu.matmul %303, %304, %cst_192 {dimension_numbers = #tpu.dot_dimension_numbers<[1], [0], [0], [1], [0, 0, 1, 1], [], []>} : vector<8x8xf32>, vector<8x32xf32>, vector<8x32xf32> -> vector<8x32xf32>
    %c1_193 = arith.constant 1 : index
    %c0_194 = arith.constant 0 : index
    %c0_195 = arith.constant 0 : index
    %306 = vector.load %arg1[%c1_193, %c0_194, %c0_195] : memref<2x8x8xf32, #tpu.memory_space<vmem>>, vector<1x8x8xf32>
    %307 = vector.shape_cast %306 : vector<1x8x8xf32> to vector<8x8xf32>
    %308 = vector.extract_strided_slice %301 {offsets = [0, 32], sizes = [8, 32], strides = [1, 1]} : vector<8x64xf32> to vector<8x32xf32>
    %cst_196 = arith.constant dense<0.000000e+00> : vector<8x32xf32>
    %309 = tpu.matmul %307, %308, %cst_196 {dimension_numbers = #tpu.dot_dimension_numbers<[1], [0], [0], [1], [0, 0, 1, 1], [], []>} : vector<8x8xf32>, vector<8x32xf32>, vector<8x32xf32> -> vector<8x32xf32>
    %310 = arith.addf %305, %309 : vector<8x32xf32>
    %c728 = arith.constant 728 : index
    %c0_197 = arith.constant 0 : index
    %311 = vector.load %arg2[%c728, %c0_197] : memref<1560x128xf32, #tpu.memory_space<vmem>>, vector<32x32xf32>
    %cst_198 = arith.constant dense<0.000000e+00> : vector<8x32xf32>
    %312 = tpu.matmul %310, %311, %cst_198 {dimension_numbers = #tpu.dot_dimension_numbers<[1], [0], [0], [1], [0, 0, 1, 1], [], []>} : vector<8x32xf32>, vector<32x32xf32>, vector<8x32xf32> -> vector<8x32xf32>
    %c824 = arith.constant 824 : index
    %c0_199 = arith.constant 0 : index
    %313 = vector.load %arg2[%c824, %c0_199] : memref<1560x128xf32, #tpu.memory_space<vmem>>, vector<1x32xf32>
    %314 = vector.broadcast %313 : vector<1x32xf32> to vector<8x32xf32>
    %315 = arith.addf %312, %314 : vector<8x32xf32>
    %316 = arith.negf %315 : vector<8x32xf32>
    %317 = math.exp %316 : vector<8x32xf32>
    %cst_200 = arith.constant 1.000000e+00 : f32
    %318 = vector.broadcast %cst_200 : f32 to vector<8x32xf32>
    %319 = arith.addf %318, %317 : vector<8x32xf32>
    %320 = arith.divf %318, %319 : vector<8x32xf32>
    %c760 = arith.constant 760 : index
    %c0_201 = arith.constant 0 : index
    %321 = vector.load %arg2[%c760, %c0_201] : memref<1560x128xf32, #tpu.memory_space<vmem>>, vector<32x32xf32>
    %cst_202 = arith.constant dense<0.000000e+00> : vector<8x32xf32>
    %322 = tpu.matmul %310, %321, %cst_202 {dimension_numbers = #tpu.dot_dimension_numbers<[1], [0], [0], [1], [0, 0, 1, 1], [], []>} : vector<8x32xf32>, vector<32x32xf32>, vector<8x32xf32> -> vector<8x32xf32>
    %c832 = arith.constant 832 : index
    %c0_203 = arith.constant 0 : index
    %323 = vector.load %arg2[%c832, %c0_203] : memref<1560x128xf32, #tpu.memory_space<vmem>>, vector<1x32xf32>
    %324 = vector.broadcast %323 : vector<1x32xf32> to vector<8x32xf32>
    %325 = arith.addf %322, %324 : vector<8x32xf32>
    %326 = math.tanh %325 : vector<8x32xf32>
    %c792 = arith.constant 792 : index
    %c0_204 = arith.constant 0 : index
    %327 = vector.load %arg2[%c792, %c0_204] : memref<1560x128xf32, #tpu.memory_space<vmem>>, vector<32x32xf32>
    %cst_205 = arith.constant dense<0.000000e+00> : vector<8x32xf32>
    %328 = tpu.matmul %310, %327, %cst_205 {dimension_numbers = #tpu.dot_dimension_numbers<[1], [0], [0], [1], [0, 0, 1, 1], [], []>} : vector<8x32xf32>, vector<32x32xf32>, vector<8x32xf32> -> vector<8x32xf32>
    %c840 = arith.constant 840 : index
    %c0_206 = arith.constant 0 : index
    %329 = vector.load %arg2[%c840, %c0_206] : memref<1560x128xf32, #tpu.memory_space<vmem>>, vector<1x32xf32>
    %330 = vector.broadcast %329 : vector<1x32xf32> to vector<8x32xf32>
    %331 = arith.addf %328, %330 : vector<8x32xf32>
    %332 = arith.negf %331 : vector<8x32xf32>
    %333 = math.exp %332 : vector<8x32xf32>
    %cst_207 = arith.constant 1.000000e+00 : f32
    %334 = vector.broadcast %cst_207 : f32 to vector<8x32xf32>
    %335 = arith.addf %334, %333 : vector<8x32xf32>
    %336 = arith.divf %334, %335 : vector<8x32xf32>
    %337 = arith.mulf %320, %326 : vector<8x32xf32>
    %338 = math.tanh %337 : vector<8x32xf32>
    %339 = arith.mulf %336, %338 : vector<8x32xf32>
    %c848 = arith.constant 848 : index
    %c0_208 = arith.constant 0 : index
    %340 = vector.load %arg2[%c848, %c0_208] : memref<1560x128xf32, #tpu.memory_space<vmem>>, vector<32x16xf32>
    %cst_209 = arith.constant dense<0.000000e+00> : vector<8x16xf32>
    %341 = tpu.matmul %339, %340, %cst_209 {dimension_numbers = #tpu.dot_dimension_numbers<[1], [0], [0], [1], [0, 0, 1, 1], [], []>} : vector<8x32xf32>, vector<32x16xf32>, vector<8x16xf32> -> vector<8x16xf32>
    %c880 = arith.constant 880 : index
    %c0_210 = arith.constant 0 : index
    %342 = vector.load %arg2[%c880, %c0_210] : memref<1560x128xf32, #tpu.memory_space<vmem>>, vector<1x16xf32>
    %343 = vector.broadcast %342 : vector<1x16xf32> to vector<8x16xf32>
    %344 = arith.addf %341, %343 : vector<8x16xf32>
    %cst_211 = arith.constant 0.000000e+00 : f32
    %345 = vector.broadcast %cst_211 : f32 to vector<8x16xf32>
    %346 = arith.maximumf %344, %345 : vector<8x16xf32>
    %c888 = arith.constant 888 : index
    %c0_212 = arith.constant 0 : index
    %347 = vector.load %arg2[%c888, %c0_212] : memref<1560x128xf32, #tpu.memory_space<vmem>>, vector<16x16xf32>
    %cst_213 = arith.constant dense<0.000000e+00> : vector<8x16xf32>
    %348 = tpu.matmul %346, %347, %cst_213 {dimension_numbers = #tpu.dot_dimension_numbers<[1], [0], [0], [1], [0, 0, 1, 1], [], []>} : vector<8x16xf32>, vector<16x16xf32>, vector<8x16xf32> -> vector<8x16xf32>
    %c904 = arith.constant 904 : index
    %c0_214 = arith.constant 0 : index
    %349 = vector.load %arg2[%c904, %c0_214] : memref<1560x128xf32, #tpu.memory_space<vmem>>, vector<1x16xf32>
    %350 = vector.broadcast %349 : vector<1x16xf32> to vector<8x16xf32>
    %351 = arith.addf %348, %350 : vector<8x16xf32>
    %cst_215 = arith.constant 0.000000e+00 : f32
    %352 = vector.broadcast %cst_215 : f32 to vector<8x16xf32>
    %353 = arith.maximumf %351, %352 : vector<8x16xf32>
    %c912 = arith.constant 912 : index
    %c0_216 = arith.constant 0 : index
    %354 = vector.load %arg2[%c912, %c0_216] : memref<1560x128xf32, #tpu.memory_space<vmem>>, vector<16x32xf32>
    %cst_217 = arith.constant dense<0.000000e+00> : vector<8x32xf32>
    %355 = tpu.matmul %353, %354, %cst_217 {dimension_numbers = #tpu.dot_dimension_numbers<[1], [0], [0], [1], [0, 0, 1, 1], [], []>} : vector<8x16xf32>, vector<16x32xf32>, vector<8x32xf32> -> vector<8x32xf32>
    %c928 = arith.constant 928 : index
    %c0_218 = arith.constant 0 : index
    %356 = vector.load %arg2[%c928, %c0_218] : memref<1560x128xf32, #tpu.memory_space<vmem>>, vector<1x32xf32>
    %357 = vector.broadcast %356 : vector<1x32xf32> to vector<8x32xf32>
    %358 = arith.addf %355, %357 : vector<8x32xf32>
    %cst_219 = arith.constant 0.000000e+00 : f32
    %359 = vector.broadcast %cst_219 : f32 to vector<8x32xf32>
    %360 = arith.maximumf %358, %359 : vector<8x32xf32>
    %c1032 = arith.constant 1032 : index
    %c0_220 = arith.constant 0 : index
    %361 = vector.load %arg2[%c1032, %c0_220] : memref<1560x128xf32, #tpu.memory_space<vmem>>, vector<1x64xf32>
    %c936 = arith.constant 936 : index
    %c0_221 = arith.constant 0 : index
    %362 = vector.load %arg2[%c936, %c0_221] : memref<1560x128xf32, #tpu.memory_space<vmem>>, vector<32x64xf32>
    %cst_222 = arith.constant dense<0.000000e+00> : vector<8x64xf32>
    %363 = tpu.matmul %360, %362, %cst_222 {dimension_numbers = #tpu.dot_dimension_numbers<[1], [0], [0], [1], [0, 0, 1, 1], [], []>} : vector<8x32xf32>, vector<32x64xf32>, vector<8x64xf32> -> vector<8x64xf32>
    %364 = vector.broadcast %361 : vector<1x64xf32> to vector<8x64xf32>
    %365 = arith.addf %363, %364 : vector<8x64xf32>
    %cst_223 = arith.constant 0.000000e+00 : f32
    %366 = vector.broadcast %cst_223 : f32 to vector<8x64xf32>
    %367 = arith.maximumf %365, %366 : vector<8x64xf32>
    %c968 = arith.constant 968 : index
    %c0_224 = arith.constant 0 : index
    %368 = vector.load %arg2[%c968, %c0_224] : memref<1560x128xf32, #tpu.memory_space<vmem>>, vector<64x64xf32>
    %cst_225 = arith.constant dense<0.000000e+00> : vector<8x64xf32>
    %369 = tpu.matmul %367, %368, %cst_225 {dimension_numbers = #tpu.dot_dimension_numbers<[1], [0], [0], [1], [0, 0, 1, 1], [], []>} : vector<8x64xf32>, vector<64x64xf32>, vector<8x64xf32> -> vector<8x64xf32>
    %370 = vector.broadcast %361 : vector<1x64xf32> to vector<8x64xf32>
    %371 = arith.addf %369, %370 : vector<8x64xf32>
    %cst_226 = arith.constant 0.000000e+00 : f32
    %372 = vector.broadcast %cst_226 : f32 to vector<8x64xf32>
    %373 = arith.maximumf %371, %372 : vector<8x64xf32>
    %c0_227 = arith.constant 0 : index
    %c0_228 = arith.constant 0 : index
    %c0_229 = arith.constant 0 : index
    %374 = vector.load %arg1[%c0_227, %c0_228, %c0_229] : memref<2x8x8xf32, #tpu.memory_space<vmem>>, vector<1x8x8xf32>
    %375 = vector.shape_cast %374 : vector<1x8x8xf32> to vector<8x8xf32>
    %376 = vector.extract_strided_slice %373 {offsets = [0, 0], sizes = [8, 32], strides = [1, 1]} : vector<8x64xf32> to vector<8x32xf32>
    %cst_230 = arith.constant dense<0.000000e+00> : vector<8x32xf32>
    %377 = tpu.matmul %375, %376, %cst_230 {dimension_numbers = #tpu.dot_dimension_numbers<[1], [0], [0], [1], [0, 0, 1, 1], [], []>} : vector<8x8xf32>, vector<8x32xf32>, vector<8x32xf32> -> vector<8x32xf32>
    %c1_231 = arith.constant 1 : index
    %c0_232 = arith.constant 0 : index
    %c0_233 = arith.constant 0 : index
    %378 = vector.load %arg1[%c1_231, %c0_232, %c0_233] : memref<2x8x8xf32, #tpu.memory_space<vmem>>, vector<1x8x8xf32>
    %379 = vector.shape_cast %378 : vector<1x8x8xf32> to vector<8x8xf32>
    %380 = vector.extract_strided_slice %373 {offsets = [0, 32], sizes = [8, 32], strides = [1, 1]} : vector<8x64xf32> to vector<8x32xf32>
    %cst_234 = arith.constant dense<0.000000e+00> : vector<8x32xf32>
    %381 = tpu.matmul %379, %380, %cst_234 {dimension_numbers = #tpu.dot_dimension_numbers<[1], [0], [0], [1], [0, 0, 1, 1], [], []>} : vector<8x8xf32>, vector<8x32xf32>, vector<8x32xf32> -> vector<8x32xf32>
    %382 = arith.addf %377, %381 : vector<8x32xf32>
    %c1040 = arith.constant 1040 : index
    %c0_235 = arith.constant 0 : index
    %383 = vector.load %arg2[%c1040, %c0_235] : memref<1560x128xf32, #tpu.memory_space<vmem>>, vector<32x32xf32>
    %cst_236 = arith.constant dense<0.000000e+00> : vector<8x32xf32>
    %384 = tpu.matmul %382, %383, %cst_236 {dimension_numbers = #tpu.dot_dimension_numbers<[1], [0], [0], [1], [0, 0, 1, 1], [], []>} : vector<8x32xf32>, vector<32x32xf32>, vector<8x32xf32> -> vector<8x32xf32>
    %c1136 = arith.constant 1136 : index
    %c0_237 = arith.constant 0 : index
    %385 = vector.load %arg2[%c1136, %c0_237] : memref<1560x128xf32, #tpu.memory_space<vmem>>, vector<1x32xf32>
    %386 = vector.broadcast %385 : vector<1x32xf32> to vector<8x32xf32>
    %387 = arith.addf %384, %386 : vector<8x32xf32>
    %388 = arith.negf %387 : vector<8x32xf32>
    %389 = math.exp %388 : vector<8x32xf32>
    %cst_238 = arith.constant 1.000000e+00 : f32
    %390 = vector.broadcast %cst_238 : f32 to vector<8x32xf32>
    %391 = arith.addf %390, %389 : vector<8x32xf32>
    %392 = arith.divf %390, %391 : vector<8x32xf32>
    %c1072 = arith.constant 1072 : index
    %c0_239 = arith.constant 0 : index
    %393 = vector.load %arg2[%c1072, %c0_239] : memref<1560x128xf32, #tpu.memory_space<vmem>>, vector<32x32xf32>
    %cst_240 = arith.constant dense<0.000000e+00> : vector<8x32xf32>
    %394 = tpu.matmul %382, %393, %cst_240 {dimension_numbers = #tpu.dot_dimension_numbers<[1], [0], [0], [1], [0, 0, 1, 1], [], []>} : vector<8x32xf32>, vector<32x32xf32>, vector<8x32xf32> -> vector<8x32xf32>
    %c1144 = arith.constant 1144 : index
    %c0_241 = arith.constant 0 : index
    %395 = vector.load %arg2[%c1144, %c0_241] : memref<1560x128xf32, #tpu.memory_space<vmem>>, vector<1x32xf32>
    %396 = vector.broadcast %395 : vector<1x32xf32> to vector<8x32xf32>
    %397 = arith.addf %394, %396 : vector<8x32xf32>
    %398 = math.tanh %397 : vector<8x32xf32>
    %c1104 = arith.constant 1104 : index
    %c0_242 = arith.constant 0 : index
    %399 = vector.load %arg2[%c1104, %c0_242] : memref<1560x128xf32, #tpu.memory_space<vmem>>, vector<32x32xf32>
    %cst_243 = arith.constant dense<0.000000e+00> : vector<8x32xf32>
    %400 = tpu.matmul %382, %399, %cst_243 {dimension_numbers = #tpu.dot_dimension_numbers<[1], [0], [0], [1], [0, 0, 1, 1], [], []>} : vector<8x32xf32>, vector<32x32xf32>, vector<8x32xf32> -> vector<8x32xf32>
    %c1152 = arith.constant 1152 : index
    %c0_244 = arith.constant 0 : index
    %401 = vector.load %arg2[%c1152, %c0_244] : memref<1560x128xf32, #tpu.memory_space<vmem>>, vector<1x32xf32>
    %402 = vector.broadcast %401 : vector<1x32xf32> to vector<8x32xf32>
    %403 = arith.addf %400, %402 : vector<8x32xf32>
    %404 = arith.negf %403 : vector<8x32xf32>
    %405 = math.exp %404 : vector<8x32xf32>
    %cst_245 = arith.constant 1.000000e+00 : f32
    %406 = vector.broadcast %cst_245 : f32 to vector<8x32xf32>
    %407 = arith.addf %406, %405 : vector<8x32xf32>
    %408 = arith.divf %406, %407 : vector<8x32xf32>
    %409 = arith.mulf %392, %398 : vector<8x32xf32>
    %410 = math.tanh %409 : vector<8x32xf32>
    %411 = arith.mulf %408, %410 : vector<8x32xf32>
    %c1160 = arith.constant 1160 : index
    %c0_246 = arith.constant 0 : index
    %412 = vector.load %arg2[%c1160, %c0_246] : memref<1560x128xf32, #tpu.memory_space<vmem>>, vector<32x16xf32>
    %cst_247 = arith.constant dense<0.000000e+00> : vector<8x16xf32>
    %413 = tpu.matmul %411, %412, %cst_247 {dimension_numbers = #tpu.dot_dimension_numbers<[1], [0], [0], [1], [0, 0, 1, 1], [], []>} : vector<8x32xf32>, vector<32x16xf32>, vector<8x16xf32> -> vector<8x16xf32>
    %c1192 = arith.constant 1192 : index
    %c0_248 = arith.constant 0 : index
    %414 = vector.load %arg2[%c1192, %c0_248] : memref<1560x128xf32, #tpu.memory_space<vmem>>, vector<1x16xf32>
    %415 = vector.broadcast %414 : vector<1x16xf32> to vector<8x16xf32>
    %416 = arith.addf %413, %415 : vector<8x16xf32>
    %cst_249 = arith.constant 0.000000e+00 : f32
    %417 = vector.broadcast %cst_249 : f32 to vector<8x16xf32>
    %418 = arith.maximumf %416, %417 : vector<8x16xf32>
    %c1200 = arith.constant 1200 : index
    %c0_250 = arith.constant 0 : index
    %419 = vector.load %arg2[%c1200, %c0_250] : memref<1560x128xf32, #tpu.memory_space<vmem>>, vector<16x16xf32>
    %cst_251 = arith.constant dense<0.000000e+00> : vector<8x16xf32>
    %420 = tpu.matmul %418, %419, %cst_251 {dimension_numbers = #tpu.dot_dimension_numbers<[1], [0], [0], [1], [0, 0, 1, 1], [], []>} : vector<8x16xf32>, vector<16x16xf32>, vector<8x16xf32> -> vector<8x16xf32>
    %c1216 = arith.constant 1216 : index
    %c0_252 = arith.constant 0 : index
    %421 = vector.load %arg2[%c1216, %c0_252] : memref<1560x128xf32, #tpu.memory_space<vmem>>, vector<1x16xf32>
    %422 = vector.broadcast %421 : vector<1x16xf32> to vector<8x16xf32>
    %423 = arith.addf %420, %422 : vector<8x16xf32>
    %cst_253 = arith.constant 0.000000e+00 : f32
    %424 = vector.broadcast %cst_253 : f32 to vector<8x16xf32>
    %425 = arith.maximumf %423, %424 : vector<8x16xf32>
    %c1224 = arith.constant 1224 : index
    %c0_254 = arith.constant 0 : index
    %426 = vector.load %arg2[%c1224, %c0_254] : memref<1560x128xf32, #tpu.memory_space<vmem>>, vector<16x32xf32>
    %cst_255 = arith.constant dense<0.000000e+00> : vector<8x32xf32>
    %427 = tpu.matmul %425, %426, %cst_255 {dimension_numbers = #tpu.dot_dimension_numbers<[1], [0], [0], [1], [0, 0, 1, 1], [], []>} : vector<8x16xf32>, vector<16x32xf32>, vector<8x32xf32> -> vector<8x32xf32>
    %c1240 = arith.constant 1240 : index
    %c0_256 = arith.constant 0 : index
    %428 = vector.load %arg2[%c1240, %c0_256] : memref<1560x128xf32, #tpu.memory_space<vmem>>, vector<1x32xf32>
    %429 = vector.broadcast %428 : vector<1x32xf32> to vector<8x32xf32>
    %430 = arith.addf %427, %429 : vector<8x32xf32>
    %cst_257 = arith.constant 0.000000e+00 : f32
    %431 = vector.broadcast %cst_257 : f32 to vector<8x32xf32>
    %432 = arith.maximumf %430, %431 : vector<8x32xf32>
    %c1344 = arith.constant 1344 : index
    %c0_258 = arith.constant 0 : index
    %433 = vector.load %arg2[%c1344, %c0_258] : memref<1560x128xf32, #tpu.memory_space<vmem>>, vector<1x64xf32>
    %c1248 = arith.constant 1248 : index
    %c0_259 = arith.constant 0 : index
    %434 = vector.load %arg2[%c1248, %c0_259] : memref<1560x128xf32, #tpu.memory_space<vmem>>, vector<32x64xf32>
    %cst_260 = arith.constant dense<0.000000e+00> : vector<8x64xf32>
    %435 = tpu.matmul %432, %434, %cst_260 {dimension_numbers = #tpu.dot_dimension_numbers<[1], [0], [0], [1], [0, 0, 1, 1], [], []>} : vector<8x32xf32>, vector<32x64xf32>, vector<8x64xf32> -> vector<8x64xf32>
    %436 = vector.broadcast %433 : vector<1x64xf32> to vector<8x64xf32>
    %437 = arith.addf %435, %436 : vector<8x64xf32>
    %cst_261 = arith.constant 0.000000e+00 : f32
    %438 = vector.broadcast %cst_261 : f32 to vector<8x64xf32>
    %439 = arith.maximumf %437, %438 : vector<8x64xf32>
    %c1280 = arith.constant 1280 : index
    %c0_262 = arith.constant 0 : index
    %440 = vector.load %arg2[%c1280, %c0_262] : memref<1560x128xf32, #tpu.memory_space<vmem>>, vector<64x64xf32>
    %cst_263 = arith.constant dense<0.000000e+00> : vector<8x64xf32>
    %441 = tpu.matmul %439, %440, %cst_263 {dimension_numbers = #tpu.dot_dimension_numbers<[1], [0], [0], [1], [0, 0, 1, 1], [], []>} : vector<8x64xf32>, vector<64x64xf32>, vector<8x64xf32> -> vector<8x64xf32>
    %442 = vector.broadcast %433 : vector<1x64xf32> to vector<8x64xf32>
    %443 = arith.addf %441, %442 : vector<8x64xf32>
    %cst_264 = arith.constant 0.000000e+00 : f32
    %444 = vector.broadcast %cst_264 : f32 to vector<8x64xf32>
    %445 = arith.maximumf %443, %444 : vector<8x64xf32>
    %c0_265 = arith.constant 0 : index
    %c0_266 = arith.constant 0 : index
    %c0_267 = arith.constant 0 : index
    %446 = vector.load %arg1[%c0_265, %c0_266, %c0_267] : memref<2x8x8xf32, #tpu.memory_space<vmem>>, vector<1x8x8xf32>
    %447 = vector.shape_cast %446 : vector<1x8x8xf32> to vector<8x8xf32>
    %448 = vector.extract_strided_slice %445 {offsets = [0, 0], sizes = [8, 32], strides = [1, 1]} : vector<8x64xf32> to vector<8x32xf32>
    %cst_268 = arith.constant dense<0.000000e+00> : vector<8x32xf32>
    %449 = tpu.matmul %447, %448, %cst_268 {dimension_numbers = #tpu.dot_dimension_numbers<[1], [0], [0], [1], [0, 0, 1, 1], [], []>} : vector<8x8xf32>, vector<8x32xf32>, vector<8x32xf32> -> vector<8x32xf32>
    %c1_269 = arith.constant 1 : index
    %c0_270 = arith.constant 0 : index
    %c0_271 = arith.constant 0 : index
    %450 = vector.load %arg1[%c1_269, %c0_270, %c0_271] : memref<2x8x8xf32, #tpu.memory_space<vmem>>, vector<1x8x8xf32>
    %451 = vector.shape_cast %450 : vector<1x8x8xf32> to vector<8x8xf32>
    %452 = vector.extract_strided_slice %445 {offsets = [0, 32], sizes = [8, 32], strides = [1, 1]} : vector<8x64xf32> to vector<8x32xf32>
    %cst_272 = arith.constant dense<0.000000e+00> : vector<8x32xf32>
    %453 = tpu.matmul %451, %452, %cst_272 {dimension_numbers = #tpu.dot_dimension_numbers<[1], [0], [0], [1], [0, 0, 1, 1], [], []>} : vector<8x8xf32>, vector<8x32xf32>, vector<8x32xf32> -> vector<8x32xf32>
    %454 = arith.addf %449, %453 : vector<8x32xf32>
    %c1352 = arith.constant 1352 : index
    %c0_273 = arith.constant 0 : index
    %455 = vector.load %arg2[%c1352, %c0_273] : memref<1560x128xf32, #tpu.memory_space<vmem>>, vector<32x32xf32>
    %cst_274 = arith.constant dense<0.000000e+00> : vector<8x32xf32>
    %456 = tpu.matmul %454, %455, %cst_274 {dimension_numbers = #tpu.dot_dimension_numbers<[1], [0], [0], [1], [0, 0, 1, 1], [], []>} : vector<8x32xf32>, vector<32x32xf32>, vector<8x32xf32> -> vector<8x32xf32>
    %c1448 = arith.constant 1448 : index
    %c0_275 = arith.constant 0 : index
    %457 = vector.load %arg2[%c1448, %c0_275] : memref<1560x128xf32, #tpu.memory_space<vmem>>, vector<1x32xf32>
    %458 = vector.broadcast %457 : vector<1x32xf32> to vector<8x32xf32>
    %459 = arith.addf %456, %458 : vector<8x32xf32>
    %460 = arith.negf %459 : vector<8x32xf32>
    %461 = math.exp %460 : vector<8x32xf32>
    %cst_276 = arith.constant 1.000000e+00 : f32
    %462 = vector.broadcast %cst_276 : f32 to vector<8x32xf32>
    %463 = arith.addf %462, %461 : vector<8x32xf32>
    %464 = arith.divf %462, %463 : vector<8x32xf32>
    %c1384 = arith.constant 1384 : index
    %c0_277 = arith.constant 0 : index
    %465 = vector.load %arg2[%c1384, %c0_277] : memref<1560x128xf32, #tpu.memory_space<vmem>>, vector<32x32xf32>
    %cst_278 = arith.constant dense<0.000000e+00> : vector<8x32xf32>
    %466 = tpu.matmul %454, %465, %cst_278 {dimension_numbers = #tpu.dot_dimension_numbers<[1], [0], [0], [1], [0, 0, 1, 1], [], []>} : vector<8x32xf32>, vector<32x32xf32>, vector<8x32xf32> -> vector<8x32xf32>
    %c1456 = arith.constant 1456 : index
    %c0_279 = arith.constant 0 : index
    %467 = vector.load %arg2[%c1456, %c0_279] : memref<1560x128xf32, #tpu.memory_space<vmem>>, vector<1x32xf32>
    %468 = vector.broadcast %467 : vector<1x32xf32> to vector<8x32xf32>
    %469 = arith.addf %466, %468 : vector<8x32xf32>
    %470 = math.tanh %469 : vector<8x32xf32>
    %c1416 = arith.constant 1416 : index
    %c0_280 = arith.constant 0 : index
    %471 = vector.load %arg2[%c1416, %c0_280] : memref<1560x128xf32, #tpu.memory_space<vmem>>, vector<32x32xf32>
    %cst_281 = arith.constant dense<0.000000e+00> : vector<8x32xf32>
    %472 = tpu.matmul %454, %471, %cst_281 {dimension_numbers = #tpu.dot_dimension_numbers<[1], [0], [0], [1], [0, 0, 1, 1], [], []>} : vector<8x32xf32>, vector<32x32xf32>, vector<8x32xf32> -> vector<8x32xf32>
    %c1464 = arith.constant 1464 : index
    %c0_282 = arith.constant 0 : index
    %473 = vector.load %arg2[%c1464, %c0_282] : memref<1560x128xf32, #tpu.memory_space<vmem>>, vector<1x32xf32>
    %474 = vector.broadcast %473 : vector<1x32xf32> to vector<8x32xf32>
    %475 = arith.addf %472, %474 : vector<8x32xf32>
    %476 = arith.negf %475 : vector<8x32xf32>
    %477 = math.exp %476 : vector<8x32xf32>
    %cst_283 = arith.constant 1.000000e+00 : f32
    %478 = vector.broadcast %cst_283 : f32 to vector<8x32xf32>
    %479 = arith.addf %478, %477 : vector<8x32xf32>
    %480 = arith.divf %478, %479 : vector<8x32xf32>
    %481 = arith.mulf %464, %470 : vector<8x32xf32>
    %482 = math.tanh %481 : vector<8x32xf32>
    %483 = arith.mulf %480, %482 : vector<8x32xf32>
    %c1472 = arith.constant 1472 : index
    %c0_284 = arith.constant 0 : index
    %484 = vector.load %arg2[%c1472, %c0_284] : memref<1560x128xf32, #tpu.memory_space<vmem>>, vector<32x16xf32>
    %cst_285 = arith.constant dense<0.000000e+00> : vector<8x16xf32>
    %485 = tpu.matmul %483, %484, %cst_285 {dimension_numbers = #tpu.dot_dimension_numbers<[1], [0], [0], [1], [0, 0, 1, 1], [], []>} : vector<8x32xf32>, vector<32x16xf32>, vector<8x16xf32> -> vector<8x16xf32>
    %c1504 = arith.constant 1504 : index
    %c0_286 = arith.constant 0 : index
    %486 = vector.load %arg2[%c1504, %c0_286] : memref<1560x128xf32, #tpu.memory_space<vmem>>, vector<1x16xf32>
    %487 = vector.broadcast %486 : vector<1x16xf32> to vector<8x16xf32>
    %488 = arith.addf %485, %487 : vector<8x16xf32>
    %cst_287 = arith.constant 0.000000e+00 : f32
    %489 = vector.broadcast %cst_287 : f32 to vector<8x16xf32>
    %490 = arith.maximumf %488, %489 : vector<8x16xf32>
    %c1512 = arith.constant 1512 : index
    %c0_288 = arith.constant 0 : index
    %491 = vector.load %arg2[%c1512, %c0_288] : memref<1560x128xf32, #tpu.memory_space<vmem>>, vector<16x16xf32>
    %cst_289 = arith.constant dense<0.000000e+00> : vector<8x16xf32>
    %492 = tpu.matmul %490, %491, %cst_289 {dimension_numbers = #tpu.dot_dimension_numbers<[1], [0], [0], [1], [0, 0, 1, 1], [], []>} : vector<8x16xf32>, vector<16x16xf32>, vector<8x16xf32> -> vector<8x16xf32>
    %c1528 = arith.constant 1528 : index
    %c0_290 = arith.constant 0 : index
    %493 = vector.load %arg2[%c1528, %c0_290] : memref<1560x128xf32, #tpu.memory_space<vmem>>, vector<1x16xf32>
    %494 = vector.broadcast %493 : vector<1x16xf32> to vector<8x16xf32>
    %495 = arith.addf %492, %494 : vector<8x16xf32>
    %cst_291 = arith.constant 0.000000e+00 : f32
    %496 = vector.broadcast %cst_291 : f32 to vector<8x16xf32>
    %497 = arith.maximumf %495, %496 : vector<8x16xf32>
    %c1536 = arith.constant 1536 : index
    %c0_292 = arith.constant 0 : index
    %498 = vector.load %arg2[%c1536, %c0_292] : memref<1560x128xf32, #tpu.memory_space<vmem>>, vector<16x32xf32>
    %cst_293 = arith.constant dense<0.000000e+00> : vector<8x32xf32>
    %499 = tpu.matmul %497, %498, %cst_293 {dimension_numbers = #tpu.dot_dimension_numbers<[1], [0], [0], [1], [0, 0, 1, 1], [], []>} : vector<8x16xf32>, vector<16x32xf32>, vector<8x32xf32> -> vector<8x32xf32>
    %c1552 = arith.constant 1552 : index
    %c0_294 = arith.constant 0 : index
    %500 = vector.load %arg2[%c1552, %c0_294] : memref<1560x128xf32, #tpu.memory_space<vmem>>, vector<1x32xf32>
    %501 = vector.broadcast %500 : vector<1x32xf32> to vector<8x32xf32>
    %502 = arith.addf %499, %501 : vector<8x32xf32>
    %c0_295 = arith.constant 0 : index
    %c0_296 = arith.constant 0 : index
    %503 = vector.load %arg3[%c0_295, %c0_296] : memref<8x32xf32, #tpu.memory_space<vmem>>, vector<8x32xf32>
    tpu.vector_store %arg3[%c0_295, %c0_296], %502 {strides = array<i32>} : memref<8x32xf32, #tpu.memory_space<vmem>>, vector<8x32xf32>,
    return
  }
}

</mosaic_0001>

<llo_original>
// kernel: tpu_custom_call.1
$region0: #{tpu_custom_call.1}
  #allocation0 [shape = 'u32[]', space=smem, size = 0x4, offset = 0x4, fixed_abs, tag = 'smem constant byte address 0x4 - core index']
  #allocation1 [shape = 'u32[144,128]{1,0:T(1,128)}', space=vmem, size = 0x12000, scoped, tag = 'internal scratch']
  %s0 = inlined_call_operand.hbm [shape: f32[8,32], index: 0, kind: input, shape index: {}]
  %s1 = inlined_call_operand.hbm [shape: f32[2,8,8], index: 1, kind: input, shape index: {}]
  %s2 = inlined_call_operand.hbm [shape: f32[1560,128], index: 2, kind: input, shape index: {}]
  %s3 = inlined_call_operand.hbm [shape: f32[8,32], index: 3, kind: output, shape index: {}]
  %s4 = sld [smem:[#allocation0]]
  $region34: #{tpu_custom_call.1} parent=0
    _
  %s6 = ssub.s32 1, %s4
  %s7 = scalar_select 0, %s6, %s4
  $region1: #{tpu_custom_call.1} parent=0
    #allocation2 [shape = 'u8[4096]{0}', space=vmem, size = 0x1000, scoped, tag = 'input window, operand 0, single buffered']
    #allocation3 [shape = 's32[1]{0}', space=sflag, size = 0x4, scoped, tag = 'scoped memory for tpu_custom_call.1']
    #allocation4 [shape = 's32[1]{0}', space=sflag, size = 0x4, scoped, tag = 'scoped memory for tpu_custom_call.1']
    #allocation5 [shape = 'u8[8192]{0}', space=vmem, size = 0x2000, scoped, tag = 'input window, operand 1, single buffered']
    #allocation6 [shape = 's32[1]{0}', space=sflag, size = 0x4, scoped, tag = 'scoped memory for tpu_custom_call.1']
    #allocation7 [shape = 'u8[798720]{0}', space=vmem, size = 0xc3000, scoped, tag = 'input window, operand 2, single buffered']
    #allocation8 [shape = 'u8[4096]{0}', space=vmem, size = 0x1000, scoped, tag = 'output window, operand 0, single buffered']
    %8 = vsyncpa [#allocation3], 0
    %9 = vsyncpa [#allocation6], 0
    %10 = vsyncpa [#allocation4], 0
    // Predicated region
    $region2: #{tpu_custom_call.1} parent=1 // pred_check
      _
    $region3: #{tpu_custom_call.1} parent=1 // pred_check_branch
      %12 = sbr.rel (0) target = $region5
    $region4: #{tpu_custom_call.1} parent=1 // pred_region
      %s14 = ssub.s32 128, 128
      %15 = vsyncadd [#allocation3], %s14
      %s17 = sshll.u32 [#allocation2], 4
      %s18 = int_to_ptr.vmem [resolvable:$true] %s17
      %20 = dma.hbm_to_vmem [thread:$0]  %s0, 128, %s18, [#allocation3]
    $region5: #{tpu_custom_call.1} parent=1 // pred_fallthru
      _
    // Predicated region
    $region6: #{tpu_custom_call.1} parent=1 // pred_check
      _
    $region7: #{tpu_custom_call.1} parent=1 // pred_check_branch
      %22 = sbr.rel (0) target = $region9
    $region8: #{tpu_custom_call.1} parent=1 // pred_region
      %s24 = ssub.s32 256, 256
      %25 = vsyncadd [#allocation6], %s24
      %s26 = sshll.u32 [#allocation5], 4
      %s27 = int_to_ptr.vmem [resolvable:$true] %s26
      %32 = dma.hbm_to_vmem [thread:$0]  %s1, 256, %s27, [#allocation6], 128, 128, 8
    $region9: #{tpu_custom_call.1} parent=1 // pred_fallthru
      _
    // Predicated region
    $region10: #{tpu_custom_call.1} parent=1 // pred_check
      _
    $region11: #{tpu_custom_call.1} parent=1 // pred_check_branch
      %34 = sbr.rel (0) target = $region13
    $region12: #{tpu_custom_call.1} parent=1 // pred_region
      %s36 = ssub.s32 24960, 24960
      %37 = vsyncadd [#allocation6], %s36
      %s38 = sshll.u32 [#allocation7], 4
      %s39 = int_to_ptr.vmem [resolvable:$true] %s38
      %44 = dma.hbm_to_vmem [thread:$0]  %s2, 24960, %s39, [#allocation6], 128, 128, 8
    $region13: #{tpu_custom_call.1} parent=1 // pred_fallthru
      _
    // Predicated region
    $region14: #{tpu_custom_call.1} parent=1 // pred_check
      _
    $region15: #{tpu_custom_call.1} parent=1 // pred_check_branch
      %46 = sbr.rel (0) target = $region17
    $region16: #{tpu_custom_call.1} parent=1 // pred_region
      %47 = dma.done [#allocation3], 128
    $region17: #{tpu_custom_call.1} parent=1 // pred_fallthru
      _
    // Predicated region
    $region18: #{tpu_custom_call.1} parent=1 // pred_check
      _
    $region19: #{tpu_custom_call.1} parent=1 // pred_check_branch
      %49 = sbr.rel (0) target = $region21
    $region20: #{tpu_custom_call.1} parent=1 // pred_region
      %50 = dma.done [#allocation6], 256
    $region21: #{tpu_custom_call.1} parent=1 // pred_fallthru
      _
    // Predicated region
    $region22: #{tpu_custom_call.1} parent=1 // pred_check
      _
    $region23: #{tpu_custom_call.1} parent=1 // pred_check_branch
      %52 = sbr.rel (0) target = $region25
    $region24: #{tpu_custom_call.1} parent=1 // pred_region
      %53 = dma.done [#allocation6], 24960
    $region25: #{tpu_custom_call.1} parent=1 // pred_fallthru
      _
    %v54 = vld [vmem:[#allocation2] sm:$0xff]
    %v55 = vld [vmem:[#allocation7 + $0x60] sm:$0x1]
    %v56 = vld [vmem:[#allocation7] sm:$0xff]
    %v57 = vld [vmem:[#allocation7 + $0x8] sm:$0xff]
    %v58 = vld [vmem:[#allocation7 + $0x10] sm:$0xff]
    %v59 = vld [vmem:[#allocation7 + $0x18] sm:$0xff]
    %v60 = vlaneseq
    %v61 = vshrl.u32 %v60, 7
    %v62 = vsub.s32 0, %v61
    %v63 = vrot.slane %v55, %v62
    %vm64 = vcmask 261120
    %v66 = vsel %vm64, %v54, 0
    %68 = vmatprep.subr.mxu0 0.0
    %69 = vmatpush1.msra.mxu0 %v56
    %70 = vmatprep.subr.mxu0 0.0
    %71 = vmatpush1.msra.mxu0 %v57
    %72 = vmatprep.subr.mxu0 0.0
    %73 = vmatpush1.msra.mxu0 %v58
    %74 = vmatprep.subr.mxu0 0.0
    %75 = vmatpush1.msra.mxu0 %v59
    %76 = vmatprep.subr.mxu0 0.0
    %77 = vmatpush1.msra.mxu0 0.0
    %78 = vmatprep.subr.mxu0 0.0
    %79 = vmatpush1.msra.mxu0 0.0
    %80 = vmatprep.subr.mxu0 0.0
    %81 = vmatpush1.msra.mxu0 0.0
    %82 = vmatprep.subr.mxu0 0.0
    %83 = vmatpush1.msra.mxu0 0.0
    %84 = vmatprep.subr.mxu0 0.0
    %85 = vmatpush1.msra.mxu0 0.0
    %86 = vmatprep.subr.mxu0 0.0
    %87 = vmatpush1.msra.mxu0 0.0
    %88 = vmatprep.subr.mxu0 0.0
    %89 = vmatpush1.msra.mxu0 0.0
    %90 = vmatprep.subr.mxu0 0.0
    %91 = vmatpush1.msra.mxu0 0.0
    %92 = vmatprep.subr.mxu0 0.0
    %93 = vmatpush1.msra.mxu0 0.0
    %94 = vmatprep.subr.mxu0 0.0
    %95 = vmatpush1.msra.mxu0 0.0
    %96 = vmatprep.subr.mxu0 0.0
    %97 = vmatpush1.msra.mxu0 0.0
    %98 = vmatprep.subr.mxu0 0.0
    %99 = vmatpush1.msra.mxu0 0.0
    %100 = vmatprep.subr.mxu0 0.0
    %101 = vmatpush1.msra.mxu0 0.0
    %102 = vmatprep.subr.mxu0 0.0
    %103 = vmatpush1.msra.mxu0 0.0
    %104 = vmatprep.subr.mxu0 0.0
    %105 = vmatpush1.msra.mxu0 0.0
    %106 = vmatprep.subr.mxu0 0.0
    %107 = vmatpush1.msra.mxu0 0.0
    %108 = vmatprep.subr.mxu0 0.0
    %109 = vmatpush1.msra.mxu0 0.0
    %110 = vmatprep.subr.mxu0 0.0
    %111 = vmatpush1.msra.mxu0 0.0
    %112 = vmatprep.subr.mxu0 0.0
    %113 = vmatpush1.msra.mxu0 0.0
    %114 = vmatprep.subr.mxu0 0.0
    %115 = vmatpush1.msra.mxu0 0.0
    %116 = vmatprep.subr.mxu0 0.0
    %117 = vmatpush1.msra.mxu0 0.0
    %118 = vmatprep.subr.mxu0 0.0
    %119 = vmatpush1.msra.mxu0 0.0
    %120 = vmatprep.subr.mxu0 0.0
    %121 = vmatpush1.msra.mxu0 0.0
    %122 = vmatprep.subr.mxu0 0.0
    %123 = vmatpush1.msra.mxu0 0.0
    %124 = vmatprep.subr.mxu0 0.0
    %125 = vmatpush1.msra.mxu0 0.0
    %126 = vmatprep.subr.mxu0 0.0
    %127 = vmatpush1.msra.mxu0 0.0
    %128 = vmatprep.subr.mxu0 0.0
    %129 = vmatpush1.msra.mxu0 0.0
    %130 = vmatprep.subr.mxu0 0.0
    %131 = vmatpush1.msra.mxu0 0.0
    %132 = vmatprep.mubr.f32.mxu0 0.0
    %133 = vmatmul.mubr.f32.gmra.mrb[0].mxu0 %v66
    %v134 = vpop.f32.mrb[0].mxu0
    %v135 = vadd.f32 %v63, %v134
    %v136 = vpop.f32.mrb[0].mxu0
    %137 = vdwg.mxu0
    %v138 = vmax.f32 %v135, 0.0
    %v139 = vld [vmem:[#allocation7 + $0x20] sm:$0xff]
    %v140 = vld [vmem:[#allocation7 + $0x28] sm:$0xff]
    %v141 = vld [vmem:[#allocation7 + $0x30] sm:$0xff]
    %v142 = vld [vmem:[#allocation7 + $0x38] sm:$0xff]
    %v143 = vld [vmem:[#allocation7 + $0x40] sm:$0xff]
    %v144 = vld [vmem:[#allocation7 + $0x48] sm:$0xff]
    %v145 = vld [vmem:[#allocation7 + $0x50] sm:$0xff]
    %v146 = vld [vmem:[#allocation7 + $0x58] sm:$0xff]
    %vm147 = vcmask 523264
    %v149 = vsel %vm147, %v138, 0
    %151 = vmatprep.subr.mxu0 0.0
    %152 = vmatpush1.msra.mxu0 %v139
    %153 = vmatprep.subr.mxu0 0.0
    %154 = vmatpush1.msra.mxu0 %v140
    %155 = vmatprep.subr.mxu0 0.0
    %156 = vmatpush1.msra.mxu0 %v141
    %157 = vmatprep.subr.mxu0 0.0
    %158 = vmatpush1.msra.mxu0 %v142
    %159 = vmatprep.subr.mxu0 0.0
    %160 = vmatpush1.msra.mxu0 %v143
    %161 = vmatprep.subr.mxu0 0.0
    %162 = vmatpush1.msra.mxu0 %v144
    %163 = vmatprep.subr.mxu0 0.0
    %164 = vmatpush1.msra.mxu0 %v145
    %165 = vmatprep.subr.mxu0 0.0
    %166 = vmatpush1.msra.mxu0 %v146
    %167 = vmatprep.subr.mxu0 0.0
    %168 = vmatpush1.msra.mxu0 0.0
    %169 = vmatprep.subr.mxu0 0.0
    %170 = vmatpush1.msra.mxu0 0.0
    %171 = vmatprep.subr.mxu0 0.0
    %172 = vmatpush1.msra.mxu0 0.0
    %173 = vmatprep.subr.mxu0 0.0
    %174 = vmatpush1.msra.mxu0 0.0
    %175 = vmatprep.subr.mxu0 0.0
    %176 = vmatpush1.msra.mxu0 0.0
    %177 = vmatprep.subr.mxu0 0.0
    %178 = vmatpush1.msra.mxu0 0.0
    %179 = vmatprep.subr.mxu0 0.0
    %180 = vmatpush1.msra.mxu0 0.0
    %181 = vmatprep.subr.mxu0 0.0
    %182 = vmatpush1.msra.mxu0 0.0
    %183 = vmatprep.subr.mxu0 0.0
    %184 = vmatpush1.msra.mxu0 0.0
    %185 = vmatprep.subr.mxu0 0.0
    %186 = vmatpush1.msra.mxu0 0.0
    %187 = vmatprep.subr.mxu0 0.0
    %188 = vmatpush1.msra.mxu0 0.0
    %189 = vmatprep.subr.mxu0 0.0
    %190 = vmatpush1.msra.mxu0 0.0
    %191 = vmatprep.subr.mxu0 0.0
    %192 = vmatpush1.msra.mxu0 0.0
    %193 = vmatprep.subr.mxu0 0.0
    %194 = vmatpush1.msra.mxu0 0.0
    %195 = vmatprep.subr.mxu0 0.0
    %196 = vmatpush1.msra.mxu0 0.0
    %197 = vmatprep.subr.mxu0 0.0
    %198 = vmatpush1.msra.mxu0 0.0
    %199 = vmatprep.subr.mxu0 0.0
    %200 = vmatpush1.msra.mxu0 0.0
    %201 = vmatprep.subr.mxu0 0.0
    %202 = vmatpush1.msra.mxu0 0.0
    %203 = vmatprep.subr.mxu0 0.0
    %204 = vmatpush1.msra.mxu0 0.0
    %205 = vmatprep.subr.mxu0 0.0
    %206 = vmatpush1.msra.mxu0 0.0
    %207 = vmatprep.subr.mxu0 0.0
    %208 = vmatpush1.msra.mxu0 0.0
    %209 = vmatprep.subr.mxu0 0.0
    %210 = vmatpush1.msra.mxu0 0.0
    %211 = vmatprep.subr.mxu0 0.0
    %212 = vmatpush1.msra.mxu0 0.0
    %213 = vmatprep.subr.mxu0 0.0
    %214 = vmatpush1.msra.mxu0 0.0
    %215 = vmatprep.mubr.f32.mxu0 0.0
    %216 = vmatmul.mubr.f32.gmra.mrb[0].mxu0 %v149
    %v217 = vpop.f32.mrb[0].mxu0
    %v218 = vadd.f32 %v63, %v217
    %v219 = vpop.f32.mrb[0].mxu0
    %220 = vdwg.mxu0
    %v221 = vmax.f32 %v218, 0.0
    %v222 = vld [vmem:[#allocation5] sm:$0xff]
    %s223 = scalar_lea.vmem [#allocation5], 8
    %v224 = vld [vmem:[%s223] sm:$0xff]
    %226 = vrot.lane.b32.xlu0 %v221, 96
    %v227 = vpop.permute.xlu0 %226
    %vm229 = vcmask 64512
    %v231 = vsel %vm229, %v224, 0
    %233 = vmatprep.subr.mxu0 0.0
    %234 = vmatpush1.msra.mxu0 %v227
    %235 = vmatprep.subr.mxu0 0.0
    %236 = vmatpush1.msra.mxu0 0.0
    %237 = vmatprep.subr.mxu0 0.0
    %238 = vmatpush1.msra.mxu0 0.0
    %239 = vmatprep.subr.mxu0 0.0
    %240 = vmatpush1.msra.mxu0 0.0
    %241 = vmatprep.subr.mxu0 0.0
    %242 = vmatpush1.msra.mxu0 0.0
    %243 = vmatprep.subr.mxu0 0.0
    %244 = vmatpush1.msra.mxu0 0.0
    %245 = vmatprep.subr.mxu0 0.0
    %246 = vmatpush1.msra.mxu0 0.0
    %247 = vmatprep.subr.mxu0 0.0
    %248 = vmatpush1.msra.mxu0 0.0
    %249 = vmatprep.subr.mxu0 0.0
    %250 = vmatpush1.msra.mxu0 0.0
    %251 = vmatprep.subr.mxu0 0.0
    %252 = vmatpush1.msra.mxu0 0.0
    %253 = vmatprep.subr.mxu0 0.0
    %254 = vmatpush1.msra.mxu0 0.0
    %255 = vmatprep.subr.mxu0 0.0
    %256 = vmatpush1.msra.mxu0 0.0
    %257 = vmatprep.subr.mxu0 0.0
    %258 = vmatpush1.msra.mxu0 0.0
    %259 = vmatprep.subr.mxu0 0.0
    %260 = vmatpush1.msra.mxu0 0.0
    %261 = vmatprep.subr.mxu0 0.0
    %262 = vmatpush1.msra.mxu0 0.0
    %263 = vmatprep.subr.mxu0 0.0
    %264 = vmatpush1.msra.mxu0 0.0
    %265 = vmatprep.subr.mxu0 0.0
    %266 = vmatpush1.msra.mxu0 0.0
    %267 = vmatprep.subr.mxu0 0.0
    %268 = vmatpush1.msra.mxu0 0.0
    %269 = vmatprep.subr.mxu0 0.0
    %270 = vmatpush1.msra.mxu0 0.0
    %271 = vmatprep.subr.mxu0 0.0
    %272 = vmatpush1.msra.mxu0 0.0
    %273 = vmatprep.subr.mxu0 0.0
    %274 = vmatpush1.msra.mxu0 0.0
    %275 = vmatprep.subr.mxu0 0.0
    %276 = vmatpush1.msra.mxu0 0.0
    %277 = vmatprep.subr.mxu0 0.0
    %278 = vmatpush1.msra.mxu0 0.0
    %279 = vmatprep.subr.mxu0 0.0
    %280 = vmatpush1.msra.mxu0 0.0
    %281 = vmatprep.subr.mxu0 0.0
    %282 = vmatpush1.msra.mxu0 0.0
    %283 = vmatprep.subr.mxu0 0.0
    %284 = vmatpush1.msra.mxu0 0.0
    %285 = vmatprep.subr.mxu0 0.0
    %286 = vmatpush1.msra.mxu0 0.0
    %287 = vmatprep.subr.mxu0 0.0
    %288 = vmatpush1.msra.mxu0 0.0
    %289 = vmatprep.subr.mxu0 0.0
    %290 = vmatpush1.msra.mxu0 0.0
    %291 = vmatprep.subr.mxu0 0.0
    %292 = vmatpush1.msra.mxu0 0.0
    %293 = vmatprep.subr.mxu0 0.0
    %294 = vmatpush1.msra.mxu0 0.0
    %295 = vmatprep.subr.mxu0 0.0
    %296 = vmatpush1.msra.mxu0 0.0
    %297 = vmatprep.mubr.f32.mxu0 0.0
    %298 = vmatmul.mubr.f32.gmra.mrb[0].mxu0 %v231
    %v299 = vpop.f32.mrb[0].mxu0
    %v300 = vadd.f32 0.0, %v299
    %v301 = vpop.f32.mrb[0].mxu0
    %302 = vdwg.mxu0
    %v304 = vsel %vm229, %v222, 0
    %306 = vmatprep.subr.mxu0 0.0
    %307 = vmatpush1.msra.mxu0 %v221
    %308 = vmatprep.subr.mxu0 0.0
    %309 = vmatpush1.msra.mxu0 0.0
    %310 = vmatprep.subr.mxu0 0.0
    %311 = vmatpush1.msra.mxu0 0.0
    %312 = vmatprep.subr.mxu0 0.0
    %313 = vmatpush1.msra.mxu0 0.0
    %314 = vmatprep.subr.mxu0 0.0
    %315 = vmatpush1.msra.mxu0 0.0
    %316 = vmatprep.subr.mxu0 0.0
    %317 = vmatpush1.msra.mxu0 0.0
    %318 = vmatprep.subr.mxu0 0.0
    %319 = vmatpush1.msra.mxu0 0.0
    %320 = vmatprep.subr.mxu0 0.0
    %321 = vmatpush1.msra.mxu0 0.0
    %322 = vmatprep.subr.mxu0 0.0
    %323 = vmatpush1.msra.mxu0 0.0
    %324 = vmatprep.subr.mxu0 0.0
    %325 = vmatpush1.msra.mxu0 0.0
    %326 = vmatprep.subr.mxu0 0.0
    %327 = vmatpush1.msra.mxu0 0.0
    %328 = vmatprep.subr.mxu0 0.0
    %329 = vmatpush1.msra.mxu0 0.0
    %330 = vmatprep.subr.mxu0 0.0
    %331 = vmatpush1.msra.mxu0 0.0
    %332 = vmatprep.subr.mxu0 0.0
    %333 = vmatpush1.msra.mxu0 0.0
    %334 = vmatprep.subr.mxu0 0.0
    %335 = vmatpush1.msra.mxu0 0.0
    %336 = vmatprep.subr.mxu0 0.0
    %337 = vmatpush1.msra.mxu0 0.0
    %338 = vmatprep.subr.mxu0 0.0
    %339 = vmatpush1.msra.mxu0 0.0
    %340 = vmatprep.subr.mxu0 0.0
    %341 = vmatpush1.msra.mxu0 0.0
    %342 = vmatprep.subr.mxu0 0.0
    %343 = vmatpush1.msra.mxu0 0.0
    %344 = vmatprep.subr.mxu0 0.0
    %345 = vmatpush1.msra.mxu0 0.0
    %346 = vmatprep.subr.mxu0 0.0
    %347 = vmatpush1.msra.mxu0 0.0
    %348 = vmatprep.subr.mxu0 0.0
    %349 = vmatpush1.msra.mxu0 0.0
    %350 = vmatprep.subr.mxu0 0.0
    %351 = vmatpush1.msra.mxu0 0.0
    %352 = vmatprep.subr.mxu0 0.0
    %353 = vmatpush1.msra.mxu0 0.0
    %354 = vmatprep.subr.mxu0 0.0
    %355 = vmatpush1.msra.mxu0 0.0
    %356 = vmatprep.subr.mxu0 0.0
    %357 = vmatpush1.msra.mxu0 0.0
    %358 = vmatprep.subr.mxu0 0.0
    %359 = vmatpush1.msra.mxu0 0.0
    %360 = vmatprep.subr.mxu0 0.0
    %361 = vmatpush1.msra.mxu0 0.0
    %362 = vmatprep.subr.mxu0 0.0
    %363 = vmatpush1.msra.mxu0 0.0
    %364 = vmatprep.subr.mxu0 0.0
    %365 = vmatpush1.msra.mxu0 0.0
    %366 = vmatprep.subr.mxu0 0.0
    %367 = vmatpush1.msra.mxu0 0.0
    %368 = vmatprep.subr.mxu0 0.0
    %369 = vmatpush1.msra.mxu0 0.0
    %370 = vmatprep.mubr.f32.mxu0 0.0
    %371 = vmatmul.mubr.f32.gmra.mrb[0].mxu0 %v304
    %v372 = vpop.f32.mrb[0].mxu0
    %v373 = vadd.f32 %v300, %v372
    %v374 = vpop.f32.mrb[0].mxu0
    %375 = vdwg.mxu0
    %v376 = vld [vmem:[#allocation7 + $0x68] sm:$0xff]
    %v377 = vld [vmem:[#allocation7 + $0x70] sm:$0xff]
    %v378 = vld [vmem:[#allocation7 + $0x78] sm:$0xff]
    %v379 = vld [vmem:[#allocation7 + $0x80] sm:$0xff]
    %v380 = vld [vmem:[#allocation7 + $0xc8] sm:$0x1]
    %v381 = vlaneseq
    %v382 = vshrl.u32 %v381, 7
    %v383 = vsub.s32 0, %v382
    %v384 = vrot.slane %v380, %v383
    %v386 = vsel %vm64, %v373, 0
    %388 = vmatprep.subr.mxu0 0.0
    %389 = vmatpush1.msra.mxu0 %v376
    %390 = vmatprep.subr.mxu0 0.0
    %391 = vmatpush1.msra.mxu0 %v377
    %392 = vmatprep.subr.mxu0 0.0
    %393 = vmatpush1.msra.mxu0 %v378
    %394 = vmatprep.subr.mxu0 0.0
    %395 = vmatpush1.msra.mxu0 %v379
    %396 = vmatprep.subr.mxu0 0.0
    %397 = vmatpush1.msra.mxu0 0.0
    %398 = vmatprep.subr.mxu0 0.0
    %399 = vmatpush1.msra.mxu0 0.0
    %400 = vmatprep.subr.mxu0 0.0
    %401 = vmatpush1.msra.mxu0 0.0
    %402 = vmatprep.subr.mxu0 0.0
    %403 = vmatpush1.msra.mxu0 0.0
    %404 = vmatprep.subr.mxu0 0.0
    %405 = vmatpush1.msra.mxu0 0.0
    %406 = vmatprep.subr.mxu0 0.0
    %407 = vmatpush1.msra.mxu0 0.0
    %408 = vmatprep.subr.mxu0 0.0
    %409 = vmatpush1.msra.mxu0 0.0
    %410 = vmatprep.subr.mxu0 0.0
    %411 = vmatpush1.msra.mxu0 0.0
    %412 = vmatprep.subr.mxu0 0.0
    %413 = vmatpush1.msra.mxu0 0.0
    %414 = vmatprep.subr.mxu0 0.0
    %415 = vmatpush1.msra.mxu0 0.0
    %416 = vmatprep.subr.mxu0 0.0
    %417 = vmatpush1.msra.mxu0 0.0
    %418 = vmatprep.subr.mxu0 0.0
    %419 = vmatpush1.msra.mxu0 0.0
    %420 = vmatprep.subr.mxu0 0.0
    %421 = vmatpush1.msra.mxu0 0.0
    %422 = vmatprep.subr.mxu0 0.0
    %423 = vmatpush1.msra.mxu0 0.0
    %424 = vmatprep.subr.mxu0 0.0
    %425 = vmatpush1.msra.mxu0 0.0
    %426 = vmatprep.subr.mxu0 0.0
    %427 = vmatpush1.msra.mxu0 0.0
    %428 = vmatprep.subr.mxu0 0.0
    %429 = vmatpush1.msra.mxu0 0.0
    %430 = vmatprep.subr.mxu0 0.0
    %431 = vmatpush1.msra.mxu0 0.0
    %432 = vmatprep.subr.mxu0 0.0
    %433 = vmatpush1.msra.mxu0 0.0
    %434 = vmatprep.subr.mxu0 0.0
    %435 = vmatpush1.msra.mxu0 0.0
    %436 = vmatprep.subr.mxu0 0.0
    %437 = vmatpush1.msra.mxu0 0.0
    %438 = vmatprep.subr.mxu0 0.0
    %439 = vmatpush1.msra.mxu0 0.0
    %440 = vmatprep.subr.mxu0 0.0
    %441 = vmatpush1.msra.mxu0 0.0
    %442 = vmatprep.subr.mxu0 0.0
    %443 = vmatpush1.msra.mxu0 0.0
    %444 = vmatprep.subr.mxu0 0.0
    %445 = vmatpush1.msra.mxu0 0.0
    %446 = vmatprep.subr.mxu0 0.0
    %447 = vmatpush1.msra.mxu0 0.0
    %448 = vmatprep.subr.mxu0 0.0
    %449 = vmatpush1.msra.mxu0 0.0
    %450 = vmatprep.subr.mxu0 0.0
    %451 = vmatpush1.msra.mxu0 0.0
    %452 = vmatprep.mubr.f32.mxu0 0.0
    %453 = vmatmul.mubr.f32.gmra.mrb[0].mxu0 %v386
    %v454 = vpop.f32.mrb[0].mxu0
    %v455 = vadd.f32 %v384, %v454
    %v456 = vpop.f32.mrb[0].mxu0
    %457 = vdwg.mxu0
    %v458 = vxor.u32 %v455, 2147483648
    %v459 = vmul.f32 %v458, 1.442695
    %v460 = vpow.pop %v459
    %v461 = vadd.f32 %v460, 1.0
    %v462 = vrcp.pop %v461
    %v463 = vmul.f32 1.0, %v462
    %v464 = vld [vmem:[#allocation7 + $0x88] sm:$0xff]
    %v465 = vld [vmem:[#allocation7 + $0x90] sm:$0xff]
    %v466 = vld [vmem:[#allocation7 + $0x98] sm:$0xff]
    %v467 = vld [vmem:[#allocation7 + $0xa0] sm:$0xff]
    %v468 = vld [vmem:[#allocation7 + $0xd0] sm:$0x1]
    %v469 = vlaneseq
    %v470 = vshrl.u32 %v469, 7
    %v471 = vsub.s32 0, %v470
    %v472 = vrot.slane %v468, %v471
    %473 = vmatprep.subr.mxu0 0.0
    %474 = vmatpush1.msra.mxu0 %v464
    %475 = vmatprep.subr.mxu0 0.0
    %476 = vmatpush1.msra.mxu0 %v465
    %477 = vmatprep.subr.mxu0 0.0
    %478 = vmatpush1.msra.mxu0 %v466
    %479 = vmatprep.subr.mxu0 0.0
    %480 = vmatpush1.msra.mxu0 %v467
    %481 = vmatprep.subr.mxu0 0.0
    %482 = vmatpush1.msra.mxu0 0.0
    %483 = vmatprep.subr.mxu0 0.0
    %484 = vmatpush1.msra.mxu0 0.0
    %485 = vmatprep.subr.mxu0 0.0
    %486 = vmatpush1.msra.mxu0 0.0
    %487 = vmatprep.subr.mxu0 0.0
    %488 = vmatpush1.msra.mxu0 0.0
    %489 = vmatprep.subr.mxu0 0.0
    %490 = vmatpush1.msra.mxu0 0.0
    %491 = vmatprep.subr.mxu0 0.0
    %492 = vmatpush1.msra.mxu0 0.0
    %493 = vmatprep.subr.mxu0 0.0
    %494 = vmatpush1.msra.mxu0 0.0
    %495 = vmatprep.subr.mxu0 0.0
    %496 = vmatpush1.msra.mxu0 0.0
    %497 = vmatprep.subr.mxu0 0.0
    %498 = vmatpush1.msra.mxu0 0.0
    %499 = vmatprep.subr.mxu0 0.0
    %500 = vmatpush1.msra.mxu0 0.0
    %501 = vmatprep.subr.mxu0 0.0
    %502 = vmatpush1.msra.mxu0 0.0
    %503 = vmatprep.subr.mxu0 0.0
    %504 = vmatpush1.msra.mxu0 0.0
    %505 = vmatprep.subr.mxu0 0.0
    %506 = vmatpush1.msra.mxu0 0.0
    %507 = vmatprep.subr.mxu0 0.0
    %508 = vmatpush1.msra.mxu0 0.0
    %509 = vmatprep.subr.mxu0 0.0
    %510 = vmatpush1.msra.mxu0 0.0
    %511 = vmatprep.subr.mxu0 0.0
    %512 = vmatpush1.msra.mxu0 0.0
    %513 = vmatprep.subr.mxu0 0.0
    %514 = vmatpush1.msra.mxu0 0.0
    %515 = vmatprep.subr.mxu0 0.0
    %516 = vmatpush1.msra.mxu0 0.0
    %517 = vmatprep.subr.mxu0 0.0
    %518 = vmatpush1.msra.mxu0 0.0
    %519 = vmatprep.subr.mxu0 0.0
    %520 = vmatpush1.msra.mxu0 0.0
    %521 = vmatprep.subr.mxu0 0.0
    %522 = vmatpush1.msra.mxu0 0.0
    %523 = vmatprep.subr.mxu0 0.0
    %524 = vmatpush1.msra.mxu0 0.0
    %525 = vmatprep.subr.mxu0 0.0
    %526 = vmatpush1.msra.mxu0 0.0
    %527 = vmatprep.subr.mxu0 0.0
    %528 = vmatpush1.msra.mxu0 0.0
    %529 = vmatprep.subr.mxu0 0.0
    %530 = vmatpush1.msra.mxu0 0.0
    %531 = vmatprep.subr.mxu0 0.0
    %532 = vmatpush1.msra.mxu0 0.0
    %533 = vmatprep.subr.mxu0 0.0
    %534 = vmatpush1.msra.mxu0 0.0
    %535 = vmatprep.subr.mxu0 0.0
    %536 = vmatpush1.msra.mxu0 0.0
    %537 = vmatprep.mubr.f32.mxu0 0.0
    %538 = vmatmul.mubr.f32.gmra.mrb[0].mxu0 %v386
    %v539 = vpop.f32.mrb[0].mxu0
    %v540 = vadd.f32 %v472, %v539
    %v541 = vpop.f32.mrb[0].mxu0
    %542 = vdwg.mxu0
    %v543 = vtanh.pop %v540
    %v544 = vld [vmem:[#allocation7 + $0xa8] sm:$0xff]
    %v545 = vld [vmem:[#allocation7 + $0xb0] sm:$0xff]
    %v546 = vld [vmem:[#allocation7 + $0xb8] sm:$0xff]
    %v547 = vld [vmem:[#allocation7 + $0xc0] sm:$0xff]
    %v548 = vld [vmem:[#allocation7 + $0xd8] sm:$0x1]
    %v549 = vlaneseq
    %v550 = vshrl.u32 %v549, 7
    %v551 = vsub.s32 0, %v550
    %v552 = vrot.slane %v548, %v551
    %553 = vmatprep.subr.mxu0 0.0
    %554 = vmatpush1.msra.mxu0 %v544
    %555 = vmatprep.subr.mxu0 0.0
    %556 = vmatpush1.msra.mxu0 %v545
    %557 = vmatprep.subr.mxu0 0.0
    %558 = vmatpush1.msra.mxu0 %v546
    %559 = vmatprep.subr.mxu0 0.0
    %560 = vmatpush1.msra.mxu0 %v547
    %561 = vmatprep.subr.mxu0 0.0
    %562 = vmatpush1.msra.mxu0 0.0
    %563 = vmatprep.subr.mxu0 0.0
    %564 = vmatpush1.msra.mxu0 0.0
    %565 = vmatprep.subr.mxu0 0.0
    %566 = vmatpush1.msra.mxu0 0.0
    %567 = vmatprep.subr.mxu0 0.0
    %568 = vmatpush1.msra.mxu0 0.0
    %569 = vmatprep.subr.mxu0 0.0
    %570 = vmatpush1.msra.mxu0 0.0
    %571 = vmatprep.subr.mxu0 0.0
    %572 = vmatpush1.msra.mxu0 0.0
    %573 = vmatprep.subr.mxu0 0.0
    %574 = vmatpush1.msra.mxu0 0.0
    %575 = vmatprep.subr.mxu0 0.0
    %576 = vmatpush1.msra.mxu0 0.0
    %577 = vmatprep.subr.mxu0 0.0
    %578 = vmatpush1.msra.mxu0 0.0
    %579 = vmatprep.subr.mxu0 0.0
    %580 = vmatpush1.msra.mxu0 0.0
    %581 = vmatprep.subr.mxu0 0.0
    %582 = vmatpush1.msra.mxu0 0.0
    %583 = vmatprep.subr.mxu0 0.0
    %584 = vmatpush1.msra.mxu0 0.0
    %585 = vmatprep.subr.mxu0 0.0
    %586 = vmatpush1.msra.mxu0 0.0
    %587 = vmatprep.subr.mxu0 0.0
    %588 = vmatpush1.msra.mxu0 0.0
    %589 = vmatprep.subr.mxu0 0.0
    %590 = vmatpush1.msra.mxu0 0.0
    %591 = vmatprep.subr.mxu0 0.0
    %592 = vmatpush1.msra.mxu0 0.0
    %593 = vmatprep.subr.mxu0 0.0
    %594 = vmatpush1.msra.mxu0 0.0
    %595 = vmatprep.subr.mxu0 0.0
    %596 = vmatpush1.msra.mxu0 0.0
    %597 = vmatprep.subr.mxu0 0.0
    %598 = vmatpush1.msra.mxu0 0.0
    %599 = vmatprep.subr.mxu0 0.0
    %600 = vmatpush1.msra.mxu0 0.0
    %601 = vmatprep.subr.mxu0 0.0
    %602 = vmatpush1.msra.mxu0 0.0
    %603 = vmatprep.subr.mxu0 0.0
    %604 = vmatpush1.msra.mxu0 0.0
    %605 = vmatprep.subr.mxu0 0.0
    %606 = vmatpush1.msra.mxu0 0.0
    %607 = vmatprep.subr.mxu0 0.0
    %608 = vmatpush1.msra.mxu0 0.0
    %609 = vmatprep.subr.mxu0 0.0
    %610 = vmatpush1.msra.mxu0 0.0
    %611 = vmatprep.subr.mxu0 0.0
    %612 = vmatpush1.msra.mxu0 0.0
    %613 = vmatprep.subr.mxu0 0.0
    %614 = vmatpush1.msra.mxu0 0.0
    %615 = vmatprep.subr.mxu0 0.0
    %616 = vmatpush1.msra.mxu0 0.0
    %617 = vmatprep.mubr.f32.mxu0 0.0
    %618 = vmatmul.mubr.f32.gmra.mrb[0].mxu0 %v386
    %v619 = vpop.f32.mrb[0].mxu0
    %v620 = vadd.f32 %v552, %v619
    %v621 = vpop.f32.mrb[0].mxu0
    %622 = vdwg.mxu0
    %v623 = vxor.u32 %v620, 2147483648
    %v624 = vmul.f32 %v623, 1.442695
    %v625 = vpow.pop %v624
    %v626 = vadd.f32 %v625, 1.0
    %v627 = vrcp.pop %v626
    %v628 = vmul.f32 1.0, %v627
    %v629 = vmul.f32 %v463, %v543
    %v630 = vtanh.pop %v629
    %v631 = vmul.f32 %v628, %v630
    %v632 = vld [vmem:[#allocation7 + $0xe0] sm:$0xff]
    %v633 = vld [vmem:[#allocation7 + $0xe8] sm:$0xff]
    %v634 = vld [vmem:[#allocation7 + $0xf0] sm:$0xff]
    %v635 = vld [vmem:[#allocation7 + $0xf8] sm:$0xff]
    %v636 = vld [vmem:[#allocation7 + $0x100] sm:$0x1]
    %v637 = vlaneseq
    %v638 = vshrl.u32 %v637, 7
    %v639 = vsub.s32 0, %v638
    %v640 = vrot.slane %v636, %v639
    %v642 = vsel %vm64, %v631, 0
    %644 = vmatprep.subr.mxu0 0.0
    %645 = vmatpush1.msra.mxu0 %v632
    %646 = vmatprep.subr.mxu0 0.0
    %647 = vmatpush1.msra.mxu0 %v633
    %648 = vmatprep.subr.mxu0 0.0
    %649 = vmatpush1.msra.mxu0 %v634
    %650 = vmatprep.subr.mxu0 0.0
    %651 = vmatpush1.msra.mxu0 %v635
    %652 = vmatprep.subr.mxu0 0.0
    %653 = vmatpush1.msra.mxu0 0.0
    %654 = vmatprep.subr.mxu0 0.0
    %655 = vmatpush1.msra.mxu0 0.0
    %656 = vmatprep.subr.mxu0 0.0
    %657 = vmatpush1.msra.mxu0 0.0
    %658 = vmatprep.subr.mxu0 0.0
    %659 = vmatpush1.msra.mxu0 0.0
    %660 = vmatprep.subr.mxu0 0.0
    %661 = vmatpush1.msra.mxu0 0.0
    %662 = vmatprep.subr.mxu0 0.0
    %663 = vmatpush1.msra.mxu0 0.0
    %664 = vmatprep.subr.mxu0 0.0
    %665 = vmatpush1.msra.mxu0 0.0
    %666 = vmatprep.subr.mxu0 0.0
    %667 = vmatpush1.msra.mxu0 0.0
    %668 = vmatprep.subr.mxu0 0.0
    %669 = vmatpush1.msra.mxu0 0.0
    %670 = vmatprep.subr.mxu0 0.0
    %671 = vmatpush1.msra.mxu0 0.0
    %672 = vmatprep.subr.mxu0 0.0
    %673 = vmatpush1.msra.mxu0 0.0
    %674 = vmatprep.subr.mxu0 0.0
    %675 = vmatpush1.msra.mxu0 0.0
    %676 = vmatprep.subr.mxu0 0.0
    %677 = vmatpush1.msra.mxu0 0.0
    %678 = vmatprep.subr.mxu0 0.0
    %679 = vmatpush1.msra.mxu0 0.0
    %680 = vmatprep.subr.mxu0 0.0
    %681 = vmatpush1.msra.mxu0 0.0
    %682 = vmatprep.subr.mxu0 0.0
    %683 = vmatpush1.msra.mxu0 0.0
    %684 = vmatprep.subr.mxu0 0.0
    %685 = vmatpush1.msra.mxu0 0.0
    %686 = vmatprep.subr.mxu0 0.0
    %687 = vmatpush1.msra.mxu0 0.0
    %688 = vmatprep.subr.mxu0 0.0
    %689 = vmatpush1.msra.mxu0 0.0
    %690 = vmatprep.subr.mxu0 0.0
    %691 = vmatpush1.msra.mxu0 0.0
    %692 = vmatprep.subr.mxu0 0.0
    %693 = vmatpush1.msra.mxu0 0.0
    %694 = vmatprep.subr.mxu0 0.0
    %695 = vmatpush1.msra.mxu0 0.0
    %696 = vmatprep.subr.mxu0 0.0
    %697 = vmatpush1.msra.mxu0 0.0
    %698 = vmatprep.subr.mxu0 0.0
    %699 = vmatpush1.msra.mxu0 0.0
    %700 = vmatprep.subr.mxu0 0.0
    %701 = vmatpush1.msra.mxu0 0.0
    %702 = vmatprep.subr.mxu0 0.0
    %703 = vmatpush1.msra.mxu0 0.0
    %704 = vmatprep.subr.mxu0 0.0
    %705 = vmatpush1.msra.mxu0 0.0
    %706 = vmatprep.subr.mxu0 0.0
    %707 = vmatpush1.msra.mxu0 0.0
    %708 = vmatprep.mubr.f32.mxu0 0.0
    %709 = vmatmul.mubr.f32.gmra.mrb[0].mxu0 %v642
    %v710 = vpop.f32.mrb[0].mxu0
    %v711 = vadd.f32 %v640, %v710
    %v712 = vpop.f32.mrb[0].mxu0
    %713 = vdwg.mxu0
    %v714 = vmax.f32 %v711, 0.0
    %v715 = vld [vmem:[#allocation7 + $0x108] sm:$0xff]
    %v716 = vld [vmem:[#allocation7 + $0x110] sm:$0xff]
    %v717 = vld [vmem:[#allocation7 + $0x118] sm:$0x1]
    %v718 = vlaneseq
    %v719 = vshrl.u32 %v718, 7
    %v720 = vsub.s32 0, %v719
    %v721 = vrot.slane %v717, %v720
    %vm722 = vcmask 130048
    %v724 = vsel %vm722, %v714, 0
    %726 = vmatprep.subr.mxu0 0.0
    %727 = vmatpush1.msra.mxu0 %v715
    %728 = vmatprep.subr.mxu0 0.0
    %729 = vmatpush1.msra.mxu0 %v716
    %730 = vmatprep.subr.mxu0 0.0
    %731 = vmatpush1.msra.mxu0 0.0
    %732 = vmatprep.subr.mxu0 0.0
    %733 = vmatpush1.msra.mxu0 0.0
    %734 = vmatprep.subr.mxu0 0.0
    %735 = vmatpush1.msra.mxu0 0.0
    %736 = vmatprep.subr.mxu0 0.0
    %737 = vmatpush1.msra.mxu0 0.0
    %738 = vmatprep.subr.mxu0 0.0
    %739 = vmatpush1.msra.mxu0 0.0
    %740 = vmatprep.subr.mxu0 0.0
    %741 = vmatpush1.msra.mxu0 0.0
    %742 = vmatprep.subr.mxu0 0.0
    %743 = vmatpush1.msra.mxu0 0.0
    %744 = vmatprep.subr.mxu0 0.0
    %745 = vmatpush1.msra.mxu0 0.0
    %746 = vmatprep.subr.mxu0 0.0
    %747 = vmatpush1.msra.mxu0 0.0
    %748 = vmatprep.subr.mxu0 0.0
    %749 = vmatpush1.msra.mxu0 0.0
    %750 = vmatprep.subr.mxu0 0.0
    %751 = vmatpush1.msra.mxu0 0.0
    %752 = vmatprep.subr.mxu0 0.0
    %753 = vmatpush1.msra.mxu0 0.0
    %754 = vmatprep.subr.mxu0 0.0
    %755 = vmatpush1.msra.mxu0 0.0
    %756 = vmatprep.subr.mxu0 0.0
    %757 = vmatpush1.msra.mxu0 0.0
    %758 = vmatprep.subr.mxu0 0.0
    %759 = vmatpush1.msra.mxu0 0.0
    %760 = vmatprep.subr.mxu0 0.0
    %761 = vmatpush1.msra.mxu0 0.0
    %762 = vmatprep.subr.mxu0 0.0
    %763 = vmatpush1.msra.mxu0 0.0
    %764 = vmatprep.subr.mxu0 0.0
    %765 = vmatpush1.msra.mxu0 0.0
    %766 = vmatprep.subr.mxu0 0.0
    %767 = vmatpush1.msra.mxu0 0.0
    %768 = vmatprep.subr.mxu0 0.0
    %769 = vmatpush1.msra.mxu0 0.0
    %770 = vmatprep.subr.mxu0 0.0
    %771 = vmatpush1.msra.mxu0 0.0
    %772 = vmatprep.subr.mxu0 0.0
    %773 = vmatpush1.msra.mxu0 0.0
    %774 = vmatprep.subr.mxu0 0.0
    %775 = vmatpush1.msra.mxu0 0.0
    %776 = vmatprep.subr.mxu0 0.0
    %777 = vmatpush1.msra.mxu0 0.0
    %778 = vmatprep.subr.mxu0 0.0
    %779 = vmatpush1.msra.mxu0 0.0
    %780 = vmatprep.subr.mxu0 0.0
    %781 = vmatpush1.msra.mxu0 0.0
    %782 = vmatprep.subr.mxu0 0.0
    %783 = vmatpush1.msra.mxu0 0.0
    %784 = vmatprep.subr.mxu0 0.0
    %785 = vmatpush1.msra.mxu0 0.0
    %786 = vmatprep.subr.mxu0 0.0
    %787 = vmatpush1.msra.mxu0 0.0
    %788 = vmatprep.subr.mxu0 0.0
    %789 = vmatpush1.msra.mxu0 0.0
    %790 = vmatprep.mubr.f32.mxu0 0.0
    %791 = vmatmul.mubr.f32.gmra.mrb[0].mxu0 %v724
    %v792 = vpop.f32.mrb[0].mxu0
    %v793 = vadd.f32 %v721, %v792
    %v794 = vpop.f32.mrb[0].mxu0
    %795 = vdwg.mxu0
    %v796 = vmax.f32 %v793, 0.0
    %v797 = vld [vmem:[#allocation7 + $0x120] sm:$0xff]
    %v798 = vld [vmem:[#allocation7 + $0x128] sm:$0xff]
    %v799 = vld [vmem:[#allocation7 + $0x130] sm:$0x1]
    %v800 = vlaneseq
    %v801 = vshrl.u32 %v800, 7
    %v802 = vsub.s32 0, %v801
    %v803 = vrot.slane %v799, %v802
    %v805 = vsel %vm722, %v796, 0
    %807 = vmatprep.subr.mxu0 0.0
    %808 = vmatpush1.msra.mxu0 %v797
    %809 = vmatprep.subr.mxu0 0.0
    %810 = vmatpush1.msra.mxu0 %v798
    %811 = vmatprep.subr.mxu0 0.0
    %812 = vmatpush1.msra.mxu0 0.0
    %813 = vmatprep.subr.mxu0 0.0
    %814 = vmatpush1.msra.mxu0 0.0
    %815 = vmatprep.subr.mxu0 0.0
    %816 = vmatpush1.msra.mxu0 0.0
    %817 = vmatprep.subr.mxu0 0.0
    %818 = vmatpush1.msra.mxu0 0.0
    %819 = vmatprep.subr.mxu0 0.0
    %820 = vmatpush1.msra.mxu0 0.0
    %821 = vmatprep.subr.mxu0 0.0
    %822 = vmatpush1.msra.mxu0 0.0
    %823 = vmatprep.subr.mxu0 0.0
    %824 = vmatpush1.msra.mxu0 0.0
    %825 = vmatprep.subr.mxu0 0.0
    %826 = vmatpush1.msra.mxu0 0.0
    %827 = vmatprep.subr.mxu0 0.0
    %828 = vmatpush1.msra.mxu0 0.0
    %829 = vmatprep.subr.mxu0 0.0
    %830 = vmatpush1.msra.mxu0 0.0
    %831 = vmatprep.subr.mxu0 0.0
    %832 = vmatpush1.msra.mxu0 0.0
    %833 = vmatprep.subr.mxu0 0.0
    %834 = vmatpush1.msra.mxu0 0.0
    %835 = vmatprep.subr.mxu0 0.0
    %836 = vmatpush1.msra.mxu0 0.0
    %837 = vmatprep.subr.mxu0 0.0
    %838 = vmatpush1.msra.mxu0 0.0
    %839 = vmatprep.subr.mxu0 0.0
    %840 = vmatpush1.msra.mxu0 0.0
    %841 = vmatprep.subr.mxu0 0.0
    %842 = vmatpush1.msra.mxu0 0.0
    %843 = vmatprep.subr.mxu0 0.0
    %844 = vmatpush1.msra.mxu0 0.0
    %845 = vmatprep.subr.mxu0 0.0
    %846 = vmatpush1.msra.mxu0 0.0
    %847 = vmatprep.subr.mxu0 0.0
    %848 = vmatpush1.msra.mxu0 0.0
    %849 = vmatprep.subr.mxu0 0.0
    %850 = vmatpush1.msra.mxu0 0.0
    %851 = vmatprep.subr.mxu0 0.0
    %852 = vmatpush1.msra.mxu0 0.0
    %853 = vmatprep.subr.mxu0 0.0
    %854 = vmatpush1.msra.mxu0 0.0
    %855 = vmatprep.subr.mxu0 0.0
    %856 = vmatpush1.msra.mxu0 0.0
    %857 = vmatprep.subr.mxu0 0.0
    %858 = vmatpush1.msra.mxu0 0.0
    %859 = vmatprep.subr.mxu0 0.0
    %860 = vmatpush1.msra.mxu0 0.0
    %861 = vmatprep.subr.mxu0 0.0
    %862 = vmatpush1.msra.mxu0 0.0
    %863 = vmatprep.subr.mxu0 0.0
    %864 = vmatpush1.msra.mxu0 0.0
    %865 = vmatprep.subr.mxu0 0.0
    %866 = vmatpush1.msra.mxu0 0.0
    %867 = vmatprep.subr.mxu0 0.0
    %868 = vmatpush1.msra.mxu0 0.0
    %869 = vmatprep.subr.mxu0 0.0
    %870 = vmatpush1.msra.mxu0 0.0
    %871 = vmatprep.mubr.f32.mxu0 0.0
    %872 = vmatmul.mubr.f32.gmra.mrb[0].mxu0 %v805
    %v873 = vpop.f32.mrb[0].mxu0
    %v874 = vadd.f32 %v803, %v873
    %v875 = vpop.f32.mrb[0].mxu0
    %876 = vdwg.mxu0
    %v877 = vmax.f32 %v874, 0.0
    %v878 = vld [vmem:[#allocation7 + $0x198] sm:$0x1]
    %v879 = vld [vmem:[#allocation7 + $0x138] sm:$0xff]
    %v880 = vld [vmem:[#allocation7 + $0x140] sm:$0xff]
    %v881 = vld [vmem:[#allocation7 + $0x148] sm:$0xff]
    %v882 = vld [vmem:[#allocation7 + $0x150] sm:$0xff]
    %v883 = vlaneseq
    %v884 = vshrl.u32 %v883, 7
    %v885 = vsub.s32 0, %v884
    %v886 = vrot.slane %v878, %v885
    %v888 = vsel %vm64, %v877, 0
    %890 = vmatprep.subr.mxu0 0.0
    %891 = vmatpush1.msra.mxu0 %v879
    %892 = vmatprep.subr.mxu0 0.0
    %893 = vmatpush1.msra.mxu0 %v880
    %894 = vmatprep.subr.mxu0 0.0
    %895 = vmatpush1.msra.mxu0 %v881
    %896 = vmatprep.subr.mxu0 0.0
    %897 = vmatpush1.msra.mxu0 %v882
    %898 = vmatprep.subr.mxu0 0.0
    %899 = vmatpush1.msra.mxu0 0.0
    %900 = vmatprep.subr.mxu0 0.0
    %901 = vmatpush1.msra.mxu0 0.0
    %902 = vmatprep.subr.mxu0 0.0
    %903 = vmatpush1.msra.mxu0 0.0
    %904 = vmatprep.subr.mxu0 0.0
    %905 = vmatpush1.msra.mxu0 0.0
    %906 = vmatprep.subr.mxu0 0.0
    %907 = vmatpush1.msra.mxu0 0.0
    %908 = vmatprep.subr.mxu0 0.0
    %909 = vmatpush1.msra.mxu0 0.0
    %910 = vmatprep.subr.mxu0 0.0
    %911 = vmatpush1.msra.mxu0 0.0
    %912 = vmatprep.subr.mxu0 0.0
    %913 = vmatpush1.msra.mxu0 0.0
    %914 = vmatprep.subr.mxu0 0.0
    %915 = vmatpush1.msra.mxu0 0.0
    %916 = vmatprep.subr.mxu0 0.0
    %917 = vmatpush1.msra.mxu0 0.0
    %918 = vmatprep.subr.mxu0 0.0
    %919 = vmatpush1.msra.mxu0 0.0
    %920 = vmatprep.subr.mxu0 0.0
    %921 = vmatpush1.msra.mxu0 0.0
    %922 = vmatprep.subr.mxu0 0.0
    %923 = vmatpush1.msra.mxu0 0.0
    %924 = vmatprep.subr.mxu0 0.0
    %925 = vmatpush1.msra.mxu0 0.0
    %926 = vmatprep.subr.mxu0 0.0
    %927 = vmatpush1.msra.mxu0 0.0
    %928 = vmatprep.subr.mxu0 0.0
    %929 = vmatpush1.msra.mxu0 0.0
    %930 = vmatprep.subr.mxu0 0.0
    %931 = vmatpush1.msra.mxu0 0.0
    %932 = vmatprep.subr.mxu0 0.0
    %933 = vmatpush1.msra.mxu0 0.0
    %934 = vmatprep.subr.mxu0 0.0
    %935 = vmatpush1.msra.mxu0 0.0
    %936 = vmatprep.subr.mxu0 0.0
    %937 = vmatpush1.msra.mxu0 0.0
    %938 = vmatprep.subr.mxu0 0.0
    %939 = vmatpush1.msra.mxu0 0.0
    %940 = vmatprep.subr.mxu0 0.0
    %941 = vmatpush1.msra.mxu0 0.0
    %942 = vmatprep.subr.mxu0 0.0
    %943 = vmatpush1.msra.mxu0 0.0
    %944 = vmatprep.subr.mxu0 0.0
    %945 = vmatpush1.msra.mxu0 0.0
    %946 = vmatprep.subr.mxu0 0.0
    %947 = vmatpush1.msra.mxu0 0.0
    %948 = vmatprep.subr.mxu0 0.0
    %949 = vmatpush1.msra.mxu0 0.0
    %950 = vmatprep.subr.mxu0 0.0
    %951 = vmatpush1.msra.mxu0 0.0
    %952 = vmatprep.subr.mxu0 0.0
    %953 = vmatpush1.msra.mxu0 0.0
    %954 = vmatprep.mubr.f32.mxu0 0.0
    %955 = vmatmul.mubr.f32.gmra.mrb[0].mxu0 %v888
    %v956 = vpop.f32.mrb[0].mxu0
    %v957 = vadd.f32 %v886, %v956
    %v958 = vpop.f32.mrb[0].mxu0
    %959 = vdwg.mxu0
    %v960 = vmax.f32 %v957, 0.0
    %v961 = vld [vmem:[#allocation7 + $0x158] sm:$0xff]
    %v962 = vld [vmem:[#allocation7 + $0x160] sm:$0xff]
    %v963 = vld [vmem:[#allocation7 + $0x168] sm:$0xff]
    %v964 = vld [vmem:[#allocation7 + $0x170] sm:$0xff]
    %v965 = vld [vmem:[#allocation7 + $0x178] sm:$0xff]
    %v966 = vld [vmem:[#allocation7 + $0x180] sm:$0xff]
    %v967 = vld [vmem:[#allocation7 + $0x188] sm:$0xff]
    %v968 = vld [vmem:[#allocation7 + $0x190] sm:$0xff]
    %v970 = vsel %vm147, %v960, 0
    %972 = vmatprep.subr.mxu0 0.0
    %973 = vmatpush1.msra.mxu0 %v961
    %974 = vmatprep.subr.mxu0 0.0
    %975 = vmatpush1.msra.mxu0 %v962
    %976 = vmatprep.subr.mxu0 0.0
    %977 = vmatpush1.msra.mxu0 %v963
    %978 = vmatprep.subr.mxu0 0.0
    %979 = vmatpush1.msra.mxu0 %v964
    %980 = vmatprep.subr.mxu0 0.0
    %981 = vmatpush1.msra.mxu0 %v965
    %982 = vmatprep.subr.mxu0 0.0
    %983 = vmatpush1.msra.mxu0 %v966
    %984 = vmatprep.subr.mxu0 0.0
    %985 = vmatpush1.msra.mxu0 %v967
    %986 = vmatprep.subr.mxu0 0.0
    %987 = vmatpush1.msra.mxu0 %v968
    %988 = vmatprep.subr.mxu0 0.0
    %989 = vmatpush1.msra.mxu0 0.0
    %990 = vmatprep.subr.mxu0 0.0
    %991 = vmatpush1.msra.mxu0 0.0
    %992 = vmatprep.subr.mxu0 0.0
    %993 = vmatpush1.msra.mxu0 0.0
    %994 = vmatprep.subr.mxu0 0.0
    %995 = vmatpush1.msra.mxu0 0.0
    %996 = vmatprep.subr.mxu0 0.0
    %997 = vmatpush1.msra.mxu0 0.0
    %998 = vmatprep.subr.mxu0 0.0
    %999 = vmatpush1.msra.mxu0 0.0
    %1000 = vmatprep.subr.mxu0 0.0
    %1001 = vmatpush1.msra.mxu0 0.0
    %1002 = vmatprep.subr.mxu0 0.0
    %1003 = vmatpush1.msra.mxu0 0.0
    %1004 = vmatprep.subr.mxu0 0.0
    %1005 = vmatpush1.msra.mxu0 0.0
    %1006 = vmatprep.subr.mxu0 0.0
    %1007 = vmatpush1.msra.mxu0 0.0
    %1008 = vmatprep.subr.mxu0 0.0
    %1009 = vmatpush1.msra.mxu0 0.0
    %1010 = vmatprep.subr.mxu0 0.0
    %1011 = vmatpush1.msra.mxu0 0.0
    %1012 = vmatprep.subr.mxu0 0.0
    %1013 = vmatpush1.msra.mxu0 0.0
    %1014 = vmatprep.subr.mxu0 0.0
    %1015 = vmatpush1.msra.mxu0 0.0
    %1016 = vmatprep.subr.mxu0 0.0
    %1017 = vmatpush1.msra.mxu0 0.0
    %1018 = vmatprep.subr.mxu0 0.0
    %1019 = vmatpush1.msra.mxu0 0.0
    %1020 = vmatprep.subr.mxu0 0.0
    %1021 = vmatpush1.msra.mxu0 0.0
    %1022 = vmatprep.subr.mxu0 0.0
    %1023 = vmatpush1.msra.mxu0 0.0
    %1024 = vmatprep.subr.mxu0 0.0
    %1025 = vmatpush1.msra.mxu0 0.0
    %1026 = vmatprep.subr.mxu0 0.0
    %1027 = vmatpush1.msra.mxu0 0.0
    %1028 = vmatprep.subr.mxu0 0.0
    %1029 = vmatpush1.msra.mxu0 0.0
    %1030 = vmatprep.subr.mxu0 0.0
    %1031 = vmatpush1.msra.mxu0 0.0
    %1032 = vmatprep.subr.mxu0 0.0
    %1033 = vmatpush1.msra.mxu0 0.0
    %1034 = vmatprep.subr.mxu0 0.0
    %1035 = vmatpush1.msra.mxu0 0.0
    %1036 = vmatprep.mubr.f32.mxu0 0.0
    %1037 = vmatmul.mubr.f32.gmra.mrb[0].mxu0 %v970
    %v1038 = vpop.f32.mrb[0].mxu0
    %v1039 = vadd.f32 %v886, %v1038
    %v1040 = vpop.f32.mrb[0].mxu0
    %1041 = vdwg.mxu0
    %v1042 = vmax.f32 %v1039, 0.0
    %1044 = vrot.lane.b32.xlu0 %v1042, 96
    %v1045 = vpop.permute.xlu0 %1044
    %1047 = vmatprep.subr.mxu0 0.0
    %1048 = vmatpush1.msra.mxu0 %v1045
    %1049 = vmatprep.subr.mxu0 0.0
    %1050 = vmatpush1.msra.mxu0 0.0
    %1051 = vmatprep.subr.mxu0 0.0
    %1052 = vmatpush1.msra.mxu0 0.0
    %1053 = vmatprep.subr.mxu0 0.0
    %1054 = vmatpush1.msra.mxu0 0.0
    %1055 = vmatprep.subr.mxu0 0.0
    %1056 = vmatpush1.msra.mxu0 0.0
    %1057 = vmatprep.subr.mxu0 0.0
    %1058 = vmatpush1.msra.mxu0 0.0
    %1059 = vmatprep.subr.mxu0 0.0
    %1060 = vmatpush1.msra.mxu0 0.0
    %1061 = vmatprep.subr.mxu0 0.0
    %1062 = vmatpush1.msra.mxu0 0.0
    %1063 = vmatprep.subr.mxu0 0.0
    %1064 = vmatpush1.msra.mxu0 0.0
    %1065 = vmatprep.subr.mxu0 0.0
    %1066 = vmatpush1.msra.mxu0 0.0
    %1067 = vmatprep.subr.mxu0 0.0
    %1068 = vmatpush1.msra.mxu0 0.0
    %1069 = vmatprep.subr.mxu0 0.0
    %1070 = vmatpush1.msra.mxu0 0.0
    %1071 = vmatprep.subr.mxu0 0.0
    %1072 = vmatpush1.msra.mxu0 0.0
    %1073 = vmatprep.subr.mxu0 0.0
    %1074 = vmatpush1.msra.mxu0 0.0
    %1075 = vmatprep.subr.mxu0 0.0
    %1076 = vmatpush1.msra.mxu0 0.0
    %1077 = vmatprep.subr.mxu0 0.0
    %1078 = vmatpush1.msra.mxu0 0.0
    %1079 = vmatprep.subr.mxu0 0.0
    %1080 = vmatpush1.msra.mxu0 0.0
    %1081 = vmatprep.subr.mxu0 0.0
    %1082 = vmatpush1.msra.mxu0 0.0
    %1083 = vmatprep.subr.mxu0 0.0
    %1084 = vmatpush1.msra.mxu0 0.0
    %1085 = vmatprep.subr.mxu0 0.0
    %1086 = vmatpush1.msra.mxu0 0.0
    %1087 = vmatprep.subr.mxu0 0.0
    %1088 = vmatpush1.msra.mxu0 0.0
    %1089 = vmatprep.subr.mxu0 0.0
    %1090 = vmatpush1.msra.mxu0 0.0
    %1091 = vmatprep.subr.mxu0 0.0
    %1092 = vmatpush1.msra.mxu0 0.0
    %1093 = vmatprep.subr.mxu0 0.0
    %1094 = vmatpush1.msra.mxu0 0.0
    %1095 = vmatprep.subr.mxu0 0.0
    %1096 = vmatpush1.msra.mxu0 0.0
    %1097 = vmatprep.subr.mxu0 0.0
    %1098 = vmatpush1.msra.mxu0 0.0
    %1099 = vmatprep.subr.mxu0 0.0
    %1100 = vmatpush1.msra.mxu0 0.0
    %1101 = vmatprep.subr.mxu0 0.0
    %1102 = vmatpush1.msra.mxu0 0.0
    %1103 = vmatprep.subr.mxu0 0.0
    %1104 = vmatpush1.msra.mxu0 0.0
    %1105 = vmatprep.subr.mxu0 0.0
    %1106 = vmatpush1.msra.mxu0 0.0
    %1107 = vmatprep.subr.mxu0 0.0
    %1108 = vmatpush1.msra.mxu0 0.0
    %1109 = vmatprep.subr.mxu0 0.0
    %1110 = vmatpush1.msra.mxu0 0.0
    %1111 = vmatprep.mubr.f32.mxu0 0.0
    %1112 = vmatmul.mubr.f32.gmra.mrb[0].mxu0 %v231
    %v1113 = vpop.f32.mrb[0].mxu0
    %v1114 = vadd.f32 0.0, %v1113
    %v1115 = vpop.f32.mrb[0].mxu0
    %1116 = vdwg.mxu0
    %1117 = vmatprep.subr.mxu0 0.0
    %1118 = vmatpush1.msra.mxu0 %v1042
    %1119 = vmatprep.subr.mxu0 0.0
    %1120 = vmatpush1.msra.mxu0 0.0
    %1121 = vmatprep.subr.mxu0 0.0
    %1122 = vmatpush1.msra.mxu0 0.0
    %1123 = vmatprep.subr.mxu0 0.0
    %1124 = vmatpush1.msra.mxu0 0.0
    %1125 = vmatprep.subr.mxu0 0.0
    %1126 = vmatpush1.msra.mxu0 0.0
    %1127 = vmatprep.subr.mxu0 0.0
    %1128 = vmatpush1.msra.mxu0 0.0
    %1129 = vmatprep.subr.mxu0 0.0
    %1130 = vmatpush1.msra.mxu0 0.0
    %1131 = vmatprep.subr.mxu0 0.0
    %1132 = vmatpush1.msra.mxu0 0.0
    %1133 = vmatprep.subr.mxu0 0.0
    %1134 = vmatpush1.msra.mxu0 0.0
    %1135 = vmatprep.subr.mxu0 0.0
    %1136 = vmatpush1.msra.mxu0 0.0
    %1137 = vmatprep.subr.mxu0 0.0
    %1138 = vmatpush1.msra.mxu0 0.0
    %1139 = vmatprep.subr.mxu0 0.0
    %1140 = vmatpush1.msra.mxu0 0.0
    %1141 = vmatprep.subr.mxu0 0.0
    %1142 = vmatpush1.msra.mxu0 0.0
    %1143 = vmatprep.subr.mxu0 0.0
    %1144 = vmatpush1.msra.mxu0 0.0
    %1145 = vmatprep.subr.mxu0 0.0
    %1146 = vmatpush1.msra.mxu0 0.0
    %1147 = vmatprep.subr.mxu0 0.0
    %1148 = vmatpush1.msra.mxu0 0.0
    %1149 = vmatprep.subr.mxu0 0.0
    %1150 = vmatpush1.msra.mxu0 0.0
    %1151 = vmatprep.subr.mxu0 0.0
    %1152 = vmatpush1.msra.mxu0 0.0
    %1153 = vmatprep.subr.mxu0 0.0
    %1154 = vmatpush1.msra.mxu0 0.0
    %1155 = vmatprep.subr.mxu0 0.0
    %1156 = vmatpush1.msra.mxu0 0.0
    %1157 = vmatprep.subr.mxu0 0.0
    %1158 = vmatpush1.msra.mxu0 0.0
    %1159 = vmatprep.subr.mxu0 0.0
    %1160 = vmatpush1.msra.mxu0 0.0
    %1161 = vmatprep.subr.mxu0 0.0
    %1162 = vmatpush1.msra.mxu0 0.0
    %1163 = vmatprep.subr.mxu0 0.0
    %1164 = vmatpush1.msra.mxu0 0.0
    %1165 = vmatprep.subr.mxu0 0.0
    %1166 = vmatpush1.msra.mxu0 0.0
    %1167 = vmatprep.subr.mxu0 0.0
    %1168 = vmatpush1.msra.mxu0 0.0
    %1169 = vmatprep.subr.mxu0 0.0
    %1170 = vmatpush1.msra.mxu0 0.0
    %1171 = vmatprep.subr.mxu0 0.0
    %1172 = vmatpush1.msra.mxu0 0.0
    %1173 = vmatprep.subr.mxu0 0.0
    %1174 = vmatpush1.msra.mxu0 0.0
    %1175 = vmatprep.subr.mxu0 0.0
    %1176 = vmatpush1.msra.mxu0 0.0
    %1177 = vmatprep.subr.mxu0 0.0
    %1178 = vmatpush1.msra.mxu0 0.0
    %1179 = vmatprep.subr.mxu0 0.0
    %1180 = vmatpush1.msra.mxu0 0.0
    %1181 = vmatprep.mubr.f32.mxu0 0.0
    %1182 = vmatmul.mubr.f32.gmra.mrb[0].mxu0 %v304
    %v1183 = vpop.f32.mrb[0].mxu0
    %v1184 = vadd.f32 %v1114, %v1183
    %v1185 = vpop.f32.mrb[0].mxu0
    %1186 = vdwg.mxu0
    %v1187 = vld [vmem:[#allocation7 + $0x1a0] sm:$0xff]
    %v1188 = vld [vmem:[#allocation7 + $0x1a8] sm:$0xff]
    %v1189 = vld [vmem:[#allocation7 + $0x1b0] sm:$0xff]
    %v1190 = vld [vmem:[#allocation7 + $0x1b8] sm:$0xff]
    %v1191 = vld [vmem:[#allocation7 + $0x200] sm:$0x1]
    %v1192 = vlaneseq
    %v1193 = vshrl.u32 %v1192, 7
    %v1194 = vsub.s32 0, %v1193
    %v1195 = vrot.slane %v1191, %v1194
    %v1197 = vsel %vm64, %v1184, 0
    %1199 = vmatprep.subr.mxu0 0.0
    %1200 = vmatpush1.msra.mxu0 %v1187
    %1201 = vmatprep.subr.mxu0 0.0
    %1202 = vmatpush1.msra.mxu0 %v1188
    %1203 = vmatprep.subr.mxu0 0.0
    %1204 = vmatpush1.msra.mxu0 %v1189
    %1205 = vmatprep.subr.mxu0 0.0
    %1206 = vmatpush1.msra.mxu0 %v1190
    %1207 = vmatprep.subr.mxu0 0.0
    %1208 = vmatpush1.msra.mxu0 0.0
    %1209 = vmatprep.subr.mxu0 0.0
    %1210 = vmatpush1.msra.mxu0 0.0
    %1211 = vmatprep.subr.mxu0 0.0
    %1212 = vmatpush1.msra.mxu0 0.0
    %1213 = vmatprep.subr.mxu0 0.0
    %1214 = vmatpush1.msra.mxu0 0.0
    %1215 = vmatprep.subr.mxu0 0.0
    %1216 = vmatpush1.msra.mxu0 0.0
    %1217 = vmatprep.subr.mxu0 0.0
    %1218 = vmatpush1.msra.mxu0 0.0
    %1219 = vmatprep.subr.mxu0 0.0
    %1220 = vmatpush1.msra.mxu0 0.0
    %1221 = vmatprep.subr.mxu0 0.0
    %1222 = vmatpush1.msra.mxu0 0.0
    %1223 = vmatprep.subr.mxu0 0.0
    %1224 = vmatpush1.msra.mxu0 0.0
    %1225 = vmatprep.subr.mxu0 0.0
    %1226 = vmatpush1.msra.mxu0 0.0
    %1227 = vmatprep.subr.mxu0 0.0
    %1228 = vmatpush1.msra.mxu0 0.0
    %1229 = vmatprep.subr.mxu0 0.0
    %1230 = vmatpush1.msra.mxu0 0.0
    %1231 = vmatprep.subr.mxu0 0.0
    %1232 = vmatpush1.msra.mxu0 0.0
    %1233 = vmatprep.subr.mxu0 0.0
    %1234 = vmatpush1.msra.mxu0 0.0
    %1235 = vmatprep.subr.mxu0 0.0
    %1236 = vmatpush1.msra.mxu0 0.0
    %1237 = vmatprep.subr.mxu0 0.0
    %1238 = vmatpush1.msra.mxu0 0.0
    %1239 = vmatprep.subr.mxu0 0.0
    %1240 = vmatpush1.msra.mxu0 0.0
    %1241 = vmatprep.subr.mxu0 0.0
    %1242 = vmatpush1.msra.mxu0 0.0
    %1243 = vmatprep.subr.mxu0 0.0
    %1244 = vmatpush1.msra.mxu0 0.0
    %1245 = vmatprep.subr.mxu0 0.0
    %1246 = vmatpush1.msra.mxu0 0.0
    %1247 = vmatprep.subr.mxu0 0.0
    %1248 = vmatpush1.msra.mxu0 0.0
    %1249 = vmatprep.subr.mxu0 0.0
    %1250 = vmatpush1.msra.mxu0 0.0
    %1251 = vmatprep.subr.mxu0 0.0
    %1252 = vmatpush1.msra.mxu0 0.0
    %1253 = vmatprep.subr.mxu0 0.0
    %1254 = vmatpush1.msra.mxu0 0.0
    %1255 = vmatprep.subr.mxu0 0.0
    %1256 = vmatpush1.msra.mxu0 0.0
    %1257 = vmatprep.subr.mxu0 0.0
    %1258 = vmatpush1.msra.mxu0 0.0
    %1259 = vmatprep.subr.mxu0 0.0
    %1260 = vmatpush1.msra.mxu0 0.0
    %1261 = vmatprep.subr.mxu0 0.0
    %1262 = vmatpush1.msra.mxu0 0.0
    %1263 = vmatprep.mubr.f32.mxu0 0.0
    %1264 = vmatmul.mubr.f32.gmra.mrb[0].mxu0 %v1197
    %v1265 = vpop.f32.mrb[0].mxu0
    %v1266 = vadd.f32 %v1195, %v1265
    %v1267 = vpop.f32.mrb[0].mxu0
    %1268 = vdwg.mxu0
    %v1269 = vxor.u32 %v1266, 2147483648
    %v1270 = vmul.f32 %v1269, 1.442695
    %v1271 = vpow.pop %v1270
    %v1272 = vadd.f32 %v1271, 1.0
    %v1273 = vrcp.pop %v1272
    %v1274 = vmul.f32 1.0, %v1273
    %v1275 = vld [vmem:[#allocation7 + $0x1c0] sm:$0xff]
    %v1276 = vld [vmem:[#allocation7 + $0x1c8] sm:$0xff]
    %v1277 = vld [vmem:[#allocation7 + $0x1d0] sm:$0xff]
    %v1278 = vld [vmem:[#allocation7 + $0x1d8] sm:$0xff]
    %v1279 = vld [vmem:[#allocation7 + $0x208] sm:$0x1]
    %v1280 = vlaneseq
    %v1281 = vshrl.u32 %v1280, 7
    %v1282 = vsub.s32 0, %v1281
    %v1283 = vrot.slane %v1279, %v1282
    %1284 = vmatprep.subr.mxu0 0.0
    %1285 = vmatpush1.msra.mxu0 %v1275
    %1286 = vmatprep.subr.mxu0 0.0
    %1287 = vmatpush1.msra.mxu0 %v1276
    %1288 = vmatprep.subr.mxu0 0.0
    %1289 = vmatpush1.msra.mxu0 %v1277
    %1290 = vmatprep.subr.mxu0 0.0
    %1291 = vmatpush1.msra.mxu0 %v1278
    %1292 = vmatprep.subr.mxu0 0.0
    %1293 = vmatpush1.msra.mxu0 0.0
    %1294 = vmatprep.subr.mxu0 0.0
    %1295 = vmatpush1.msra.mxu0 0.0
    %1296 = vmatprep.subr.mxu0 0.0
    %1297 = vmatpush1.msra.mxu0 0.0
    %1298 = vmatprep.subr.mxu0 0.0
    %1299 = vmatpush1.msra.mxu0 0.0
    %1300 = vmatprep.subr.mxu0 0.0
    %1301 = vmatpush1.msra.mxu0 0.0
    %1302 = vmatprep.subr.mxu0 0.0
    %1303 = vmatpush1.msra.mxu0 0.0
    %1304 = vmatprep.subr.mxu0 0.0
    %1305 = vmatpush1.msra.mxu0 0.0
    %1306 = vmatprep.subr.mxu0 0.0
    %1307 = vmatpush1.msra.mxu0 0.0
    %1308 = vmatprep.subr.mxu0 0.0
    %1309 = vmatpush1.msra.mxu0 0.0
    %1310 = vmatprep.subr.mxu0 0.0
    %1311 = vmatpush1.msra.mxu0 0.0
    %1312 = vmatprep.subr.mxu0 0.0
    %1313 = vmatpush1.msra.mxu0 0.0
    %1314 = vmatprep.subr.mxu0 0.0
    %1315 = vmatpush1.msra.mxu0 0.0
    %1316 = vmatprep.subr.mxu0 0.0
    %1317 = vmatpush1.msra.mxu0 0.0
    %1318 = vmatprep.subr.mxu0 0.0
    %1319 = vmatpush1.msra.mxu0 0.0
    %1320 = vmatprep.subr.mxu0 0.0
    %1321 = vmatpush1.msra.mxu0 0.0
    %1322 = vmatprep.subr.mxu0 0.0
    %1323 = vmatpush1.msra.mxu0 0.0
    %1324 = vmatprep.subr.mxu0 0.0
    %1325 = vmatpush1.msra.mxu0 0.0
    %1326 = vmatprep.subr.mxu0 0.0
    %1327 = vmatpush1.msra.mxu0 0.0
    %1328 = vmatprep.subr.mxu0 0.0
    %1329 = vmatpush1.msra.mxu0 0.0
    %1330 = vmatprep.subr.mxu0 0.0
    %1331 = vmatpush1.msra.mxu0 0.0
    %1332 = vmatprep.subr.mxu0 0.0
    %1333 = vmatpush1.msra.mxu0 0.0
    %1334 = vmatprep.subr.mxu0 0.0
    %1335 = vmatpush1.msra.mxu0 0.0
    %1336 = vmatprep.subr.mxu0 0.0
    %1337 = vmatpush1.msra.mxu0 0.0
    %1338 = vmatprep.subr.mxu0 0.0
    %1339 = vmatpush1.msra.mxu0 0.0
    %1340 = vmatprep.subr.mxu0 0.0
    %1341 = vmatpush1.msra.mxu0 0.0
    %1342 = vmatprep.subr.mxu0 0.0
    %1343 = vmatpush1.msra.mxu0 0.0
    %1344 = vmatprep.subr.mxu0 0.0
    %1345 = vmatpush1.msra.mxu0 0.0
    %1346 = vmatprep.subr.mxu0 0.0
    %1347 = vmatpush1.msra.mxu0 0.0
    %1348 = vmatprep.mubr.f32.mxu0 0.0
    %1349 = vmatmul.mubr.f32.gmra.mrb[0].mxu0 %v1197
    %v1350 = vpop.f32.mrb[0].mxu0
    %v1351 = vadd.f32 %v1283, %v1350
    %v1352 = vpop.f32.mrb[0].mxu0
    %1353 = vdwg.mxu0
    %v1354 = vtanh.pop %v1351
    %v1355 = vld [vmem:[#allocation7 + $0x1e0] sm:$0xff]
    %v1356 = vld [vmem:[#allocation7 + $0x1e8] sm:$0xff]
    %v1357 = vld [vmem:[#allocation7 + $0x1f0] sm:$0xff]
    %v1358 = vld [vmem:[#allocation7 + $0x1f8] sm:$0xff]
    %v1359 = vld [vmem:[#allocation7 + $0x210] sm:$0x1]
    %v1360 = vlaneseq
    %v1361 = vshrl.u32 %v1360, 7
    %v1362 = vsub.s32 0, %v1361
    %v1363 = vrot.slane %v1359, %v1362
    %1364 = vmatprep.subr.mxu0 0.0
    %1365 = vmatpush1.msra.mxu0 %v1355
    %1366 = vmatprep.subr.mxu0 0.0
    %1367 = vmatpush1.msra.mxu0 %v1356
    %1368 = vmatprep.subr.mxu0 0.0
    %1369 = vmatpush1.msra.mxu0 %v1357
    %1370 = vmatprep.subr.mxu0 0.0
    %1371 = vmatpush1.msra.mxu0 %v1358
    %1372 = vmatprep.subr.mxu0 0.0
    %1373 = vmatpush1.msra.mxu0 0.0
    %1374 = vmatprep.subr.mxu0 0.0
    %1375 = vmatpush1.msra.mxu0 0.0
    %1376 = vmatprep.subr.mxu0 0.0
    %1377 = vmatpush1.msra.mxu0 0.0
    %1378 = vmatprep.subr.mxu0 0.0
    %1379 = vmatpush1.msra.mxu0 0.0
    %1380 = vmatprep.subr.mxu0 0.0
    %1381 = vmatpush1.msra.mxu0 0.0
    %1382 = vmatprep.subr.mxu0 0.0
    %1383 = vmatpush1.msra.mxu0 0.0
    %1384 = vmatprep.subr.mxu0 0.0
    %1385 = vmatpush1.msra.mxu0 0.0
    %1386 = vmatprep.subr.mxu0 0.0
    %1387 = vmatpush1.msra.mxu0 0.0
    %1388 = vmatprep.subr.mxu0 0.0
    %1389 = vmatpush1.msra.mxu0 0.0
    %1390 = vmatprep.subr.mxu0 0.0
    %1391 = vmatpush1.msra.mxu0 0.0
    %1392 = vmatprep.subr.mxu0 0.0
    %1393 = vmatpush1.msra.mxu0 0.0
    %1394 = vmatprep.subr.mxu0 0.0
    %1395 = vmatpush1.msra.mxu0 0.0
    %1396 = vmatprep.subr.mxu0 0.0
    %1397 = vmatpush1.msra.mxu0 0.0
    %1398 = vmatprep.subr.mxu0 0.0
    %1399 = vmatpush1.msra.mxu0 0.0
    %1400 = vmatprep.subr.mxu0 0.0
    %1401 = vmatpush1.msra.mxu0 0.0
    %1402 = vmatprep.subr.mxu0 0.0
    %1403 = vmatpush1.msra.mxu0 0.0
    %1404 = vmatprep.subr.mxu0 0.0
    %1405 = vmatpush1.msra.mxu0 0.0
    %1406 = vmatprep.subr.mxu0 0.0
    %1407 = vmatpush1.msra.mxu0 0.0
    %1408 = vmatprep.subr.mxu0 0.0
    %1409 = vmatpush1.msra.mxu0 0.0
    %1410 = vmatprep.subr.mxu0 0.0
    %1411 = vmatpush1.msra.mxu0 0.0
    %1412 = vmatprep.subr.mxu0 0.0
    %1413 = vmatpush1.msra.mxu0 0.0
    %1414 = vmatprep.subr.mxu0 0.0
    %1415 = vmatpush1.msra.mxu0 0.0
    %1416 = vmatprep.subr.mxu0 0.0
    %1417 = vmatpush1.msra.mxu0 0.0
    %1418 = vmatprep.subr.mxu0 0.0
    %1419 = vmatpush1.msra.mxu0 0.0
    %1420 = vmatprep.subr.mxu0 0.0
    %1421 = vmatpush1.msra.mxu0 0.0
    %1422 = vmatprep.subr.mxu0 0.0
    %1423 = vmatpush1.msra.mxu0 0.0
    %1424 = vmatprep.subr.mxu0 0.0
    %1425 = vmatpush1.msra.mxu0 0.0
    %1426 = vmatprep.subr.mxu0 0.0
    %1427 = vmatpush1.msra.mxu0 0.0
    %1428 = vmatprep.mubr.f32.mxu0 0.0
    %1429 = vmatmul.mubr.f32.gmra.mrb[0].mxu0 %v1197
    %v1430 = vpop.f32.mrb[0].mxu0
    %v1431 = vadd.f32 %v1363, %v1430
    %v1432 = vpop.f32.mrb[0].mxu0
    %1433 = vdwg.mxu0
    %v1434 = vxor.u32 %v1431, 2147483648
    %v1435 = vmul.f32 %v1434, 1.442695
    %v1436 = vpow.pop %v1435
    %v1437 = vadd.f32 %v1436, 1.0
    %v1438 = vrcp.pop %v1437
    %v1439 = vmul.f32 1.0, %v1438
    %v1440 = vmul.f32 %v1274, %v1354
    %v1441 = vtanh.pop %v1440
    %v1442 = vmul.f32 %v1439, %v1441
    %v1443 = vld [vmem:[#allocation7 + $0x218] sm:$0xff]
    %v1444 = vld [vmem:[#allocation7 + $0x220] sm:$0xff]
    %v1445 = vld [vmem:[#allocation7 + $0x228] sm:$0xff]
    %v1446 = vld [vmem:[#allocation7 + $0x230] sm:$0xff]
    %v1447 = vld [vmem:[#allocation7 + $0x238] sm:$0x1]
    %v1448 = vlaneseq
    %v1449 = vshrl.u32 %v1448, 7
    %v1450 = vsub.s32 0, %v1449
    %v1451 = vrot.slane %v1447, %v1450
    %v1453 = vsel %vm64, %v1442, 0
    %1455 = vmatprep.subr.mxu0 0.0
    %1456 = vmatpush1.msra.mxu0 %v1443
    %1457 = vmatprep.subr.mxu0 0.0
    %1458 = vmatpush1.msra.mxu0 %v1444
    %1459 = vmatprep.subr.mxu0 0.0
    %1460 = vmatpush1.msra.mxu0 %v1445
    %1461 = vmatprep.subr.mxu0 0.0
    %1462 = vmatpush1.msra.mxu0 %v1446
    %1463 = vmatprep.subr.mxu0 0.0
    %1464 = vmatpush1.msra.mxu0 0.0
    %1465 = vmatprep.subr.mxu0 0.0
    %1466 = vmatpush1.msra.mxu0 0.0
    %1467 = vmatprep.subr.mxu0 0.0
    %1468 = vmatpush1.msra.mxu0 0.0
    %1469 = vmatprep.subr.mxu0 0.0
    %1470 = vmatpush1.msra.mxu0 0.0
    %1471 = vmatprep.subr.mxu0 0.0
    %1472 = vmatpush1.msra.mxu0 0.0
    %1473 = vmatprep.subr.mxu0 0.0
    %1474 = vmatpush1.msra.mxu0 0.0
    %1475 = vmatprep.subr.mxu0 0.0
    %1476 = vmatpush1.msra.mxu0 0.0
    %1477 = vmatprep.subr.mxu0 0.0
    %1478 = vmatpush1.msra.mxu0 0.0
    %1479 = vmatprep.subr.mxu0 0.0
    %1480 = vmatpush1.msra.mxu0 0.0
    %1481 = vmatprep.subr.mxu0 0.0
    %1482 = vmatpush1.msra.mxu0 0.0
    %1483 = vmatprep.subr.mxu0 0.0
    %1484 = vmatpush1.msra.mxu0 0.0
    %1485 = vmatprep.subr.mxu0 0.0
    %1486 = vmatpush1.msra.mxu0 0.0
    %1487 = vmatprep.subr.mxu0 0.0
    %1488 = vmatpush1.msra.mxu0 0.0
    %1489 = vmatprep.subr.mxu0 0.0
    %1490 = vmatpush1.msra.mxu0 0.0
    %1491 = vmatprep.subr.mxu0 0.0
    %1492 = vmatpush1.msra.mxu0 0.0
    %1493 = vmatprep.subr.mxu0 0.0
    %1494 = vmatpush1.msra.mxu0 0.0
    %1495 = vmatprep.subr.mxu0 0.0
    %1496 = vmatpush1.msra.mxu0 0.0
    %1497 = vmatprep.subr.mxu0 0.0
    %1498 = vmatpush1.msra.mxu0 0.0
    %1499 = vmatprep.subr.mxu0 0.0
    %1500 = vmatpush1.msra.mxu0 0.0
    %1501 = vmatprep.subr.mxu0 0.0
    %1502 = vmatpush1.msra.mxu0 0.0
    %1503 = vmatprep.subr.mxu0 0.0
    %1504 = vmatpush1.msra.mxu0 0.0
    %1505 = vmatprep.subr.mxu0 0.0
    %1506 = vmatpush1.msra.mxu0 0.0
    %1507 = vmatprep.subr.mxu0 0.0
    %1508 = vmatpush1.msra.mxu0 0.0
    %1509 = vmatprep.subr.mxu0 0.0
    %1510 = vmatpush1.msra.mxu0 0.0
    %1511 = vmatprep.subr.mxu0 0.0
    %1512 = vmatpush1.msra.mxu0 0.0
    %1513 = vmatprep.subr.mxu0 0.0
    %1514 = vmatpush1.msra.mxu0 0.0
    %1515 = vmatprep.subr.mxu0 0.0
    %1516 = vmatpush1.msra.mxu0 0.0
    %1517 = vmatprep.subr.mxu0 0.0
    %1518 = vmatpush1.msra.mxu0 0.0
    %1519 = vmatprep.mubr.f32.mxu0 0.0
    %1520 = vmatmul.mubr.f32.gmra.mrb[0].mxu0 %v1453
    %v1521 = vpop.f32.mrb[0].mxu0
    %v1522 = vadd.f32 %v1451, %v1521
    %v1523 = vpop.f32.mrb[0].mxu0
    %1524 = vdwg.mxu0
    %v1525 = vmax.f32 %v1522, 0.0
    %v1526 = vld [vmem:[#allocation7 + $0x240] sm:$0xff]
    %v1527 = vld [vmem:[#allocation7 + $0x248] sm:$0xff]
    %v1528 = vld [vmem:[#allocation7 + $0x250] sm:$0x1]
    %v1529 = vlaneseq
    %v1530 = vshrl.u32 %v1529, 7
    %v1531 = vsub.s32 0, %v1530
    %v1532 = vrot.slane %v1528, %v1531
    %v1534 = vsel %vm722, %v1525, 0
    %1536 = vmatprep.subr.mxu0 0.0
    %1537 = vmatpush1.msra.mxu0 %v1526
    %1538 = vmatprep.subr.mxu0 0.0
    %1539 = vmatpush1.msra.mxu0 %v1527
    %1540 = vmatprep.subr.mxu0 0.0
    %1541 = vmatpush1.msra.mxu0 0.0
    %1542 = vmatprep.subr.mxu0 0.0
    %1543 = vmatpush1.msra.mxu0 0.0
    %1544 = vmatprep.subr.mxu0 0.0
    %1545 = vmatpush1.msra.mxu0 0.0
    %1546 = vmatprep.subr.mxu0 0.0
    %1547 = vmatpush1.msra.mxu0 0.0
    %1548 = vmatprep.subr.mxu0 0.0
    %1549 = vmatpush1.msra.mxu0 0.0
    %1550 = vmatprep.subr.mxu0 0.0
    %1551 = vmatpush1.msra.mxu0 0.0
    %1552 = vmatprep.subr.mxu0 0.0
    %1553 = vmatpush1.msra.mxu0 0.0
    %1554 = vmatprep.subr.mxu0 0.0
    %1555 = vmatpush1.msra.mxu0 0.0
    %1556 = vmatprep.subr.mxu0 0.0
    %1557 = vmatpush1.msra.mxu0 0.0
    %1558 = vmatprep.subr.mxu0 0.0
    %1559 = vmatpush1.msra.mxu0 0.0
    %1560 = vmatprep.subr.mxu0 0.0
    %1561 = vmatpush1.msra.mxu0 0.0
    %1562 = vmatprep.subr.mxu0 0.0
    %1563 = vmatpush1.msra.mxu0 0.0
    %1564 = vmatprep.subr.mxu0 0.0
    %1565 = vmatpush1.msra.mxu0 0.0
    %1566 = vmatprep.subr.mxu0 0.0
    %1567 = vmatpush1.msra.mxu0 0.0
    %1568 = vmatprep.subr.mxu0 0.0
    %1569 = vmatpush1.msra.mxu0 0.0
    %1570 = vmatprep.subr.mxu0 0.0
    %1571 = vmatpush1.msra.mxu0 0.0
    %1572 = vmatprep.subr.mxu0 0.0
    %1573 = vmatpush1.msra.mxu0 0.0
    %1574 = vmatprep.subr.mxu0 0.0
    %1575 = vmatpush1.msra.mxu0 0.0
    %1576 = vmatprep.subr.mxu0 0.0
    %1577 = vmatpush1.msra.mxu0 0.0
    %1578 = vmatprep.subr.mxu0 0.0
    %1579 = vmatpush1.msra.mxu0 0.0
    %1580 = vmatprep.subr.mxu0 0.0
    %1581 = vmatpush1.msra.mxu0 0.0
    %1582 = vmatprep.subr.mxu0 0.0
    %1583 = vmatpush1.msra.mxu0 0.0
    %1584 = vmatprep.subr.mxu0 0.0
    %1585 = vmatpush1.msra.mxu0 0.0
    %1586 = vmatprep.subr.mxu0 0.0
    %1587 = vmatpush1.msra.mxu0 0.0
    %1588 = vmatprep.subr.mxu0 0.0
    %1589 = vmatpush1.msra.mxu0 0.0
    %1590 = vmatprep.subr.mxu0 0.0
    %1591 = vmatpush1.msra.mxu0 0.0
    %1592 = vmatprep.subr.mxu0 0.0
    %1593 = vmatpush1.msra.mxu0 0.0
    %1594 = vmatprep.subr.mxu0 0.0
    %1595 = vmatpush1.msra.mxu0 0.0
    %1596 = vmatprep.subr.mxu0 0.0
    %1597 = vmatpush1.msra.mxu0 0.0
    %1598 = vmatprep.subr.mxu0 0.0
    %1599 = vmatpush1.msra.mxu0 0.0
    %1600 = vmatprep.mubr.f32.mxu0 0.0
    %1601 = vmatmul.mubr.f32.gmra.mrb[0].mxu0 %v1534
    %v1602 = vpop.f32.mrb[0].mxu0
    %v1603 = vadd.f32 %v1532, %v1602
    %v1604 = vpop.f32.mrb[0].mxu0
    %1605 = vdwg.mxu0
    %v1606 = vmax.f32 %v1603, 0.0
    %v1607 = vld [vmem:[#allocation7 + $0x258] sm:$0xff]
    %v1608 = vld [vmem:[#allocation7 + $0x260] sm:$0xff]
    %v1609 = vld [vmem:[#allocation7 + $0x268] sm:$0x1]
    %v1610 = vlaneseq
    %v1611 = vshrl.u32 %v1610, 7
    %v1612 = vsub.s32 0, %v1611
    %v1613 = vrot.slane %v1609, %v1612
    %v1615 = vsel %vm722, %v1606, 0
    %1617 = vmatprep.subr.mxu0 0.0
    %1618 = vmatpush1.msra.mxu0 %v1607
    %1619 = vmatprep.subr.mxu0 0.0
    %1620 = vmatpush1.msra.mxu0 %v1608
    %1621 = vmatprep.subr.mxu0 0.0
    %1622 = vmatpush1.msra.mxu0 0.0
    %1623 = vmatprep.subr.mxu0 0.0
    %1624 = vmatpush1.msra.mxu0 0.0
    %1625 = vmatprep.subr.mxu0 0.0
    %1626 = vmatpush1.msra.mxu0 0.0
    %1627 = vmatprep.subr.mxu0 0.0
    %1628 = vmatpush1.msra.mxu0 0.0
    %1629 = vmatprep.subr.mxu0 0.0
    %1630 = vmatpush1.msra.mxu0 0.0
    %1631 = vmatprep.subr.mxu0 0.0
    %1632 = vmatpush1.msra.mxu0 0.0
    %1633 = vmatprep.subr.mxu0 0.0
    %1634 = vmatpush1.msra.mxu0 0.0
    %1635 = vmatprep.subr.mxu0 0.0
    %1636 = vmatpush1.msra.mxu0 0.0
    %1637 = vmatprep.subr.mxu0 0.0
    %1638 = vmatpush1.msra.mxu0 0.0
    %1639 = vmatprep.subr.mxu0 0.0
    %1640 = vmatpush1.msra.mxu0 0.0
    %1641 = vmatprep.subr.mxu0 0.0
    %1642 = vmatpush1.msra.mxu0 0.0
    %1643 = vmatprep.subr.mxu0 0.0
    %1644 = vmatpush1.msra.mxu0 0.0
    %1645 = vmatprep.subr.mxu0 0.0
    %1646 = vmatpush1.msra.mxu0 0.0
    %1647 = vmatprep.subr.mxu0 0.0
    %1648 = vmatpush1.msra.mxu0 0.0
    %1649 = vmatprep.subr.mxu0 0.0
    %1650 = vmatpush1.msra.mxu0 0.0
    %1651 = vmatprep.subr.mxu0 0.0
    %1652 = vmatpush1.msra.mxu0 0.0
    %1653 = vmatprep.subr.mxu0 0.0
    %1654 = vmatpush1.msra.mxu0 0.0
    %1655 = vmatprep.subr.mxu0 0.0
    %1656 = vmatpush1.msra.mxu0 0.0
    %1657 = vmatprep.subr.mxu0 0.0
    %1658 = vmatpush1.msra.mxu0 0.0
    %1659 = vmatprep.subr.mxu0 0.0
    %1660 = vmatpush1.msra.mxu0 0.0
    %1661 = vmatprep.subr.mxu0 0.0
    %1662 = vmatpush1.msra.mxu0 0.0
    %1663 = vmatprep.subr.mxu0 0.0
    %1664 = vmatpush1.msra.mxu0 0.0
    %1665 = vmatprep.subr.mxu0 0.0
    %1666 = vmatpush1.msra.mxu0 0.0
    %1667 = vmatprep.subr.mxu0 0.0
    %1668 = vmatpush1.msra.mxu0 0.0
    %1669 = vmatprep.subr.mxu0 0.0
    %1670 = vmatpush1.msra.mxu0 0.0
    %1671 = vmatprep.subr.mxu0 0.0
    %1672 = vmatpush1.msra.mxu0 0.0
    %1673 = vmatprep.subr.mxu0 0.0
    %1674 = vmatpush1.msra.mxu0 0.0
    %1675 = vmatprep.subr.mxu0 0.0
    %1676 = vmatpush1.msra.mxu0 0.0
    %1677 = vmatprep.subr.mxu0 0.0
    %1678 = vmatpush1.msra.mxu0 0.0
    %1679 = vmatprep.subr.mxu0 0.0
    %1680 = vmatpush1.msra.mxu0 0.0
    %1681 = vmatprep.mubr.f32.mxu0 0.0
    %1682 = vmatmul.mubr.f32.gmra.mrb[0].mxu0 %v1615
    %v1683 = vpop.f32.mrb[0].mxu0
    %v1684 = vadd.f32 %v1613, %v1683
    %v1685 = vpop.f32.mrb[0].mxu0
    %1686 = vdwg.mxu0
    %v1687 = vmax.f32 %v1684, 0.0
    %v1689 = vsel %vm64, %v1687, 0
    %1691 = vmatprep.subr.mxu0 0.0
    %1692 = vmatpush1.msra.mxu0 %v879
    %1693 = vmatprep.subr.mxu0 0.0
    %1694 = vmatpush1.msra.mxu0 %v880
    %1695 = vmatprep.subr.mxu0 0.0
    %1696 = vmatpush1.msra.mxu0 %v881
    %1697 = vmatprep.subr.mxu0 0.0
    %1698 = vmatpush1.msra.mxu0 %v882
    %1699 = vmatprep.subr.mxu0 0.0
    %1700 = vmatpush1.msra.mxu0 0.0
    %1701 = vmatprep.subr.mxu0 0.0
    %1702 = vmatpush1.msra.mxu0 0.0
    %1703 = vmatprep.subr.mxu0 0.0
    %1704 = vmatpush1.msra.mxu0 0.0
    %1705 = vmatprep.subr.mxu0 0.0
    %1706 = vmatpush1.msra.mxu0 0.0
    %1707 = vmatprep.subr.mxu0 0.0
    %1708 = vmatpush1.msra.mxu0 0.0
    %1709 = vmatprep.subr.mxu0 0.0
    %1710 = vmatpush1.msra.mxu0 0.0
    %1711 = vmatprep.subr.mxu0 0.0
    %1712 = vmatpush1.msra.mxu0 0.0
    %1713 = vmatprep.subr.mxu0 0.0
    %1714 = vmatpush1.msra.mxu0 0.0
    %1715 = vmatprep.subr.mxu0 0.0
    %1716 = vmatpush1.msra.mxu0 0.0
    %1717 = vmatprep.subr.mxu0 0.0
    %1718 = vmatpush1.msra.mxu0 0.0
    %1719 = vmatprep.subr.mxu0 0.0
    %1720 = vmatpush1.msra.mxu0 0.0
    %1721 = vmatprep.subr.mxu0 0.0
    %1722 = vmatpush1.msra.mxu0 0.0
    %1723 = vmatprep.subr.mxu0 0.0
    %1724 = vmatpush1.msra.mxu0 0.0
    %1725 = vmatprep.subr.mxu0 0.0
    %1726 = vmatpush1.msra.mxu0 0.0
    %1727 = vmatprep.subr.mxu0 0.0
    %1728 = vmatpush1.msra.mxu0 0.0
    %1729 = vmatprep.subr.mxu0 0.0
    %1730 = vmatpush1.msra.mxu0 0.0
    %1731 = vmatprep.subr.mxu0 0.0
    %1732 = vmatpush1.msra.mxu0 0.0
    %1733 = vmatprep.subr.mxu0 0.0
    %1734 = vmatpush1.msra.mxu0 0.0
    %1735 = vmatprep.subr.mxu0 0.0
    %1736 = vmatpush1.msra.mxu0 0.0
    %1737 = vmatprep.subr.mxu0 0.0
    %1738 = vmatpush1.msra.mxu0 0.0
    %1739 = vmatprep.subr.mxu0 0.0
    %1740 = vmatpush1.msra.mxu0 0.0
    %1741 = vmatprep.subr.mxu0 0.0
    %1742 = vmatpush1.msra.mxu0 0.0
    %1743 = vmatprep.subr.mxu0 0.0
    %1744 = vmatpush1.msra.mxu0 0.0
    %1745 = vmatprep.subr.mxu0 0.0
    %1746 = vmatpush1.msra.mxu0 0.0
    %1747 = vmatprep.subr.mxu0 0.0
    %1748 = vmatpush1.msra.mxu0 0.0
    %1749 = vmatprep.subr.mxu0 0.0
    %1750 = vmatpush1.msra.mxu0 0.0
    %1751 = vmatprep.subr.mxu0 0.0
    %1752 = vmatpush1.msra.mxu0 0.0
    %1753 = vmatprep.subr.mxu0 0.0
    %1754 = vmatpush1.msra.mxu0 0.0
    %1755 = vmatprep.mubr.f32.mxu0 0.0
    %1756 = vmatmul.mubr.f32.gmra.mrb[0].mxu0 %v1689
    %v1757 = vpop.f32.mrb[0].mxu0
    %v1758 = vadd.f32 %v886, %v1757
    %v1759 = vpop.f32.mrb[0].mxu0
    %1760 = vdwg.mxu0
    %v1761 = vmax.f32 %v1758, 0.0
    %v1763 = vsel %vm147, %v1761, 0
    %1765 = vmatprep.subr.mxu0 0.0
    %1766 = vmatpush1.msra.mxu0 %v961
    %1767 = vmatprep.subr.mxu0 0.0
    %1768 = vmatpush1.msra.mxu0 %v962
    %1769 = vmatprep.subr.mxu0 0.0
    %1770 = vmatpush1.msra.mxu0 %v963
    %1771 = vmatprep.subr.mxu0 0.0
    %1772 = vmatpush1.msra.mxu0 %v964
    %1773 = vmatprep.subr.mxu0 0.0
    %1774 = vmatpush1.msra.mxu0 %v965
    %1775 = vmatprep.subr.mxu0 0.0
    %1776 = vmatpush1.msra.mxu0 %v966
    %1777 = vmatprep.subr.mxu0 0.0
    %1778 = vmatpush1.msra.mxu0 %v967
    %1779 = vmatprep.subr.mxu0 0.0
    %1780 = vmatpush1.msra.mxu0 %v968
    %1781 = vmatprep.subr.mxu0 0.0
    %1782 = vmatpush1.msra.mxu0 0.0
    %1783 = vmatprep.subr.mxu0 0.0
    %1784 = vmatpush1.msra.mxu0 0.0
    %1785 = vmatprep.subr.mxu0 0.0
    %1786 = vmatpush1.msra.mxu0 0.0
    %1787 = vmatprep.subr.mxu0 0.0
    %1788 = vmatpush1.msra.mxu0 0.0
    %1789 = vmatprep.subr.mxu0 0.0
    %1790 = vmatpush1.msra.mxu0 0.0
    %1791 = vmatprep.subr.mxu0 0.0
    %1792 = vmatpush1.msra.mxu0 0.0
    %1793 = vmatprep.subr.mxu0 0.0
    %1794 = vmatpush1.msra.mxu0 0.0
    %1795 = vmatprep.subr.mxu0 0.0
    %1796 = vmatpush1.msra.mxu0 0.0
    %1797 = vmatprep.subr.mxu0 0.0
    %1798 = vmatpush1.msra.mxu0 0.0
    %1799 = vmatprep.subr.mxu0 0.0
    %1800 = vmatpush1.msra.mxu0 0.0
    %1801 = vmatprep.subr.mxu0 0.0
    %1802 = vmatpush1.msra.mxu0 0.0
    %1803 = vmatprep.subr.mxu0 0.0
    %1804 = vmatpush1.msra.mxu0 0.0
    %1805 = vmatprep.subr.mxu0 0.0
    %1806 = vmatpush1.msra.mxu0 0.0
    %1807 = vmatprep.subr.mxu0 0.0
    %1808 = vmatpush1.msra.mxu0 0.0
    %1809 = vmatprep.subr.mxu0 0.0
    %1810 = vmatpush1.msra.mxu0 0.0
    %1811 = vmatprep.subr.mxu0 0.0
    %1812 = vmatpush1.msra.mxu0 0.0
    %1813 = vmatprep.subr.mxu0 0.0
    %1814 = vmatpush1.msra.mxu0 0.0
    %1815 = vmatprep.subr.mxu0 0.0
    %1816 = vmatpush1.msra.mxu0 0.0
    %1817 = vmatprep.subr.mxu0 0.0
    %1818 = vmatpush1.msra.mxu0 0.0
    %1819 = vmatprep.subr.mxu0 0.0
    %1820 = vmatpush1.msra.mxu0 0.0
    %1821 = vmatprep.subr.mxu0 0.0
    %1822 = vmatpush1.msra.mxu0 0.0
    %1823 = vmatprep.subr.mxu0 0.0
    %1824 = vmatpush1.msra.mxu0 0.0
    %1825 = vmatprep.subr.mxu0 0.0
    %1826 = vmatpush1.msra.mxu0 0.0
    %1827 = vmatprep.subr.mxu0 0.0
    %1828 = vmatpush1.msra.mxu0 0.0
    %1829 = vmatprep.mubr.f32.mxu0 0.0
    %1830 = vmatmul.mubr.f32.gmra.mrb[0].mxu0 %v1763
    %v1831 = vpop.f32.mrb[0].mxu0
    %v1832 = vadd.f32 %v886, %v1831
    %v1833 = vpop.f32.mrb[0].mxu0
    %1834 = vdwg.mxu0
    %v1835 = vmax.f32 %v1832, 0.0
    %1837 = vrot.lane.b32.xlu0 %v1835, 96
    %v1838 = vpop.permute.xlu0 %1837
    %1840 = vmatprep.subr.mxu0 0.0
    %1841 = vmatpush1.msra.mxu0 %v1838
    %1842 = vmatprep.subr.mxu0 0.0
    %1843 = vmatpush1.msra.mxu0 0.0
    %1844 = vmatprep.subr.mxu0 0.0
    %1845 = vmatpush1.msra.mxu0 0.0
    %1846 = vmatprep.subr.mxu0 0.0
    %1847 = vmatpush1.msra.mxu0 0.0
    %1848 = vmatprep.subr.mxu0 0.0
    %1849 = vmatpush1.msra.mxu0 0.0
    %1850 = vmatprep.subr.mxu0 0.0
    %1851 = vmatpush1.msra.mxu0 0.0
    %1852 = vmatprep.subr.mxu0 0.0
    %1853 = vmatpush1.msra.mxu0 0.0
    %1854 = vmatprep.subr.mxu0 0.0
    %1855 = vmatpush1.msra.mxu0 0.0
    %1856 = vmatprep.subr.mxu0 0.0
    %1857 = vmatpush1.msra.mxu0 0.0
    %1858 = vmatprep.subr.mxu0 0.0
    %1859 = vmatpush1.msra.mxu0 0.0
    %1860 = vmatprep.subr.mxu0 0.0
    %1861 = vmatpush1.msra.mxu0 0.0
    %1862 = vmatprep.subr.mxu0 0.0
    %1863 = vmatpush1.msra.mxu0 0.0
    %1864 = vmatprep.subr.mxu0 0.0
    %1865 = vmatpush1.msra.mxu0 0.0
    %1866 = vmatprep.subr.mxu0 0.0
    %1867 = vmatpush1.msra.mxu0 0.0
    %1868 = vmatprep.subr.mxu0 0.0
    %1869 = vmatpush1.msra.mxu0 0.0
    %1870 = vmatprep.subr.mxu0 0.0
    %1871 = vmatpush1.msra.mxu0 0.0
    %1872 = vmatprep.subr.mxu0 0.0
    %1873 = vmatpush1.msra.mxu0 0.0
    %1874 = vmatprep.subr.mxu0 0.0
    %1875 = vmatpush1.msra.mxu0 0.0
    %1876 = vmatprep.subr.mxu0 0.0
    %1877 = vmatpush1.msra.mxu0 0.0
    %1878 = vmatprep.subr.mxu0 0.0
    %1879 = vmatpush1.msra.mxu0 0.0
    %1880 = vmatprep.subr.mxu0 0.0
    %1881 = vmatpush1.msra.mxu0 0.0
    %1882 = vmatprep.subr.mxu0 0.0
    %1883 = vmatpush1.msra.mxu0 0.0
    %1884 = vmatprep.subr.mxu0 0.0
    %1885 = vmatpush1.msra.mxu0 0.0
    %1886 = vmatprep.subr.mxu0 0.0
    %1887 = vmatpush1.msra.mxu0 0.0
    %1888 = vmatprep.subr.mxu0 0.0
    %1889 = vmatpush1.msra.mxu0 0.0
    %1890 = vmatprep.subr.mxu0 0.0
    %1891 = vmatpush1.msra.mxu0 0.0
    %1892 = vmatprep.subr.mxu0 0.0
    %1893 = vmatpush1.msra.mxu0 0.0
    %1894 = vmatprep.subr.mxu0 0.0
    %1895 = vmatpush1.msra.mxu0 0.0
    %1896 = vmatprep.subr.mxu0 0.0
    %1897 = vmatpush1.msra.mxu0 0.0
    %1898 = vmatprep.subr.mxu0 0.0
    %1899 = vmatpush1.msra.mxu0 0.0
    %1900 = vmatprep.subr.mxu0 0.0
    %1901 = vmatpush1.msra.mxu0 0.0
    %1902 = vmatprep.subr.mxu0 0.0
    %1903 = vmatpush1.msra.mxu0 0.0
    %1904 = vmatprep.mubr.f32.mxu0 0.0
    %1905 = vmatmul.mubr.f32.gmra.mrb[0].mxu0 %v231
    %v1906 = vpop.f32.mrb[0].mxu0
    %v1907 = vadd.f32 0.0, %v1906
    %v1908 = vpop.f32.mrb[0].mxu0
    %1909 = vdwg.mxu0
    %1910 = vmatprep.subr.mxu0 0.0
    %1911 = vmatpush1.msra.mxu0 %v1835
    %1912 = vmatprep.subr.mxu0 0.0
    %1913 = vmatpush1.msra.mxu0 0.0
    %1914 = vmatprep.subr.mxu0 0.0
    %1915 = vmatpush1.msra.mxu0 0.0
    %1916 = vmatprep.subr.mxu0 0.0
    %1917 = vmatpush1.msra.mxu0 0.0
    %1918 = vmatprep.subr.mxu0 0.0
    %1919 = vmatpush1.msra.mxu0 0.0
    %1920 = vmatprep.subr.mxu0 0.0
    %1921 = vmatpush1.msra.mxu0 0.0
    %1922 = vmatprep.subr.mxu0 0.0
    %1923 = vmatpush1.msra.mxu0 0.0
    %1924 = vmatprep.subr.mxu0 0.0
    %1925 = vmatpush1.msra.mxu0 0.0
    %1926 = vmatprep.subr.mxu0 0.0
    %1927 = vmatpush1.msra.mxu0 0.0
    %1928 = vmatprep.subr.mxu0 0.0
    %1929 = vmatpush1.msra.mxu0 0.0
    %1930 = vmatprep.subr.mxu0 0.0
    %1931 = vmatpush1.msra.mxu0 0.0
    %1932 = vmatprep.subr.mxu0 0.0
    %1933 = vmatpush1.msra.mxu0 0.0
    %1934 = vmatprep.subr.mxu0 0.0
    %1935 = vmatpush1.msra.mxu0 0.0
    %1936 = vmatprep.subr.mxu0 0.0
    %1937 = vmatpush1.msra.mxu0 0.0
    %1938 = vmatprep.subr.mxu0 0.0
    %1939 = vmatpush1.msra.mxu0 0.0
    %1940 = vmatprep.subr.mxu0 0.0
    %1941 = vmatpush1.msra.mxu0 0.0
    %1942 = vmatprep.subr.mxu0 0.0
    %1943 = vmatpush1.msra.mxu0 0.0
    %1944 = vmatprep.subr.mxu0 0.0
    %1945 = vmatpush1.msra.mxu0 0.0
    %1946 = vmatprep.subr.mxu0 0.0
    %1947 = vmatpush1.msra.mxu0 0.0
    %1948 = vmatprep.subr.mxu0 0.0
    %1949 = vmatpush1.msra.mxu0 0.0
    %1950 = vmatprep.subr.mxu0 0.0
    %1951 = vmatpush1.msra.mxu0 0.0
    %1952 = vmatprep.subr.mxu0 0.0
    %1953 = vmatpush1.msra.mxu0 0.0
    %1954 = vmatprep.subr.mxu0 0.0
    %1955 = vmatpush1.msra.mxu0 0.0
    %1956 = vmatprep.subr.mxu0 0.0
    %1957 = vmatpush1.msra.mxu0 0.0
    %1958 = vmatprep.subr.mxu0 0.0
    %1959 = vmatpush1.msra.mxu0 0.0
    %1960 = vmatprep.subr.mxu0 0.0
    %1961 = vmatpush1.msra.mxu0 0.0
    %1962 = vmatprep.subr.mxu0 0.0
    %1963 = vmatpush1.msra.mxu0 0.0
    %1964 = vmatprep.subr.mxu0 0.0
    %1965 = vmatpush1.msra.mxu0 0.0
    %1966 = vmatprep.subr.mxu0 0.0
    %1967 = vmatpush1.msra.mxu0 0.0
    %1968 = vmatprep.subr.mxu0 0.0
    %1969 = vmatpush1.msra.mxu0 0.0
    %1970 = vmatprep.subr.mxu0 0.0
    %1971 = vmatpush1.msra.mxu0 0.0
    %1972 = vmatprep.subr.mxu0 0.0
    %1973 = vmatpush1.msra.mxu0 0.0
    %1974 = vmatprep.mubr.f32.mxu0 0.0
    %1975 = vmatmul.mubr.f32.gmra.mrb[0].mxu0 %v304
    %v1976 = vpop.f32.mrb[0].mxu0
    %v1977 = vadd.f32 %v1907, %v1976
    %v1978 = vpop.f32.mrb[0].mxu0
    %1979 = vdwg.mxu0
    %v1981 = vsel %vm64, %v1977, 0
    %1983 = vmatprep.subr.mxu0 0.0
    %1984 = vmatpush1.msra.mxu0 %v1187
    %1985 = vmatprep.subr.mxu0 0.0
    %1986 = vmatpush1.msra.mxu0 %v1188
    %1987 = vmatprep.subr.mxu0 0.0
    %1988 = vmatpush1.msra.mxu0 %v1189
    %1989 = vmatprep.subr.mxu0 0.0
    %1990 = vmatpush1.msra.mxu0 %v1190
    %1991 = vmatprep.subr.mxu0 0.0
    %1992 = vmatpush1.msra.mxu0 0.0
    %1993 = vmatprep.subr.mxu0 0.0
    %1994 = vmatpush1.msra.mxu0 0.0
    %1995 = vmatprep.subr.mxu0 0.0
    %1996 = vmatpush1.msra.mxu0 0.0
    %1997 = vmatprep.subr.mxu0 0.0
    %1998 = vmatpush1.msra.mxu0 0.0
    %1999 = vmatprep.subr.mxu0 0.0
    %2000 = vmatpush1.msra.mxu0 0.0
    %2001 = vmatprep.subr.mxu0 0.0
    %2002 = vmatpush1.msra.mxu0 0.0
    %2003 = vmatprep.subr.mxu0 0.0
    %2004 = vmatpush1.msra.mxu0 0.0
    %2005 = vmatprep.subr.mxu0 0.0
    %2006 = vmatpush1.msra.mxu0 0.0
    %2007 = vmatprep.subr.mxu0 0.0
    %2008 = vmatpush1.msra.mxu0 0.0
    %2009 = vmatprep.subr.mxu0 0.0
    %2010 = vmatpush1.msra.mxu0 0.0
    %2011 = vmatprep.subr.mxu0 0.0
    %2012 = vmatpush1.msra.mxu0 0.0
    %2013 = vmatprep.subr.mxu0 0.0
    %2014 = vmatpush1.msra.mxu0 0.0
    %2015 = vmatprep.subr.mxu0 0.0
    %2016 = vmatpush1.msra.mxu0 0.0
    %2017 = vmatprep.subr.mxu0 0.0
    %2018 = vmatpush1.msra.mxu0 0.0
    %2019 = vmatprep.subr.mxu0 0.0
    %2020 = vmatpush1.msra.mxu0 0.0
    %2021 = vmatprep.subr.mxu0 0.0
    %2022 = vmatpush1.msra.mxu0 0.0
    %2023 = vmatprep.subr.mxu0 0.0
    %2024 = vmatpush1.msra.mxu0 0.0
    %2025 = vmatprep.subr.mxu0 0.0
    %2026 = vmatpush1.msra.mxu0 0.0
    %2027 = vmatprep.subr.mxu0 0.0
    %2028 = vmatpush1.msra.mxu0 0.0
    %2029 = vmatprep.subr.mxu0 0.0
    %2030 = vmatpush1.msra.mxu0 0.0
    %2031 = vmatprep.subr.mxu0 0.0
    %2032 = vmatpush1.msra.mxu0 0.0
    %2033 = vmatprep.subr.mxu0 0.0
    %2034 = vmatpush1.msra.mxu0 0.0
    %2035 = vmatprep.subr.mxu0 0.0
    %2036 = vmatpush1.msra.mxu0 0.0
    %2037 = vmatprep.subr.mxu0 0.0
    %2038 = vmatpush1.msra.mxu0 0.0
    %2039 = vmatprep.subr.mxu0 0.0
    %2040 = vmatpush1.msra.mxu0 0.0
    %2041 = vmatprep.subr.mxu0 0.0
    %2042 = vmatpush1.msra.mxu0 0.0
    %2043 = vmatprep.subr.mxu0 0.0
    %2044 = vmatpush1.msra.mxu0 0.0
    %2045 = vmatprep.subr.mxu0 0.0
    %2046 = vmatpush1.msra.mxu0 0.0
    %2047 = vmatprep.mubr.f32.mxu0 0.0
    %2048 = vmatmul.mubr.f32.gmra.mrb[0].mxu0 %v1981
    %v2049 = vpop.f32.mrb[0].mxu0
    %v2050 = vadd.f32 %v1195, %v2049
    %v2051 = vpop.f32.mrb[0].mxu0
    %2052 = vdwg.mxu0
    %v2053 = vxor.u32 %v2050, 2147483648
    %v2054 = vmul.f32 %v2053, 1.442695
    %v2055 = vpow.pop %v2054
    %v2056 = vadd.f32 %v2055, 1.0
    %v2057 = vrcp.pop %v2056
    %v2058 = vmul.f32 1.0, %v2057
    %2059 = vmatprep.subr.mxu0 0.0
    %2060 = vmatpush1.msra.mxu0 %v1275
    %2061 = vmatprep.subr.mxu0 0.0
    %2062 = vmatpush1.msra.mxu0 %v1276
    %2063 = vmatprep.subr.mxu0 0.0
    %2064 = vmatpush1.msra.mxu0 %v1277
    %2065 = vmatprep.subr.mxu0 0.0
    %2066 = vmatpush1.msra.mxu0 %v1278
    %2067 = vmatprep.subr.mxu0 0.0
    %2068 = vmatpush1.msra.mxu0 0.0
    %2069 = vmatprep.subr.mxu0 0.0
    %2070 = vmatpush1.msra.mxu0 0.0
    %2071 = vmatprep.subr.mxu0 0.0
    %2072 = vmatpush1.msra.mxu0 0.0
    %2073 = vmatprep.subr.mxu0 0.0
    %2074 = vmatpush1.msra.mxu0 0.0
    %2075 = vmatprep.subr.mxu0 0.0
    %2076 = vmatpush1.msra.mxu0 0.0
    %2077 = vmatprep.subr.mxu0 0.0
    %2078 = vmatpush1.msra.mxu0 0.0
    %2079 = vmatprep.subr.mxu0 0.0
    %2080 = vmatpush1.msra.mxu0 0.0
    %2081 = vmatprep.subr.mxu0 0.0
    %2082 = vmatpush1.msra.mxu0 0.0
    %2083 = vmatprep.subr.mxu0 0.0
    %2084 = vmatpush1.msra.mxu0 0.0
    %2085 = vmatprep.subr.mxu0 0.0
    %2086 = vmatpush1.msra.mxu0 0.0
    %2087 = vmatprep.subr.mxu0 0.0
    %2088 = vmatpush1.msra.mxu0 0.0
    %2089 = vmatprep.subr.mxu0 0.0
    %2090 = vmatpush1.msra.mxu0 0.0
    %2091 = vmatprep.subr.mxu0 0.0
    %2092 = vmatpush1.msra.mxu0 0.0
    %2093 = vmatprep.subr.mxu0 0.0
    %2094 = vmatpush1.msra.mxu0 0.0
    %2095 = vmatprep.subr.mxu0 0.0
    %2096 = vmatpush1.msra.mxu0 0.0
    %2097 = vmatprep.subr.mxu0 0.0
    %2098 = vmatpush1.msra.mxu0 0.0
    %2099 = vmatprep.subr.mxu0 0.0
    %2100 = vmatpush1.msra.mxu0 0.0
    %2101 = vmatprep.subr.mxu0 0.0
    %2102 = vmatpush1.msra.mxu0 0.0
    %2103 = vmatprep.subr.mxu0 0.0
    %2104 = vmatpush1.msra.mxu0 0.0
    %2105 = vmatprep.subr.mxu0 0.0
    %2106 = vmatpush1.msra.mxu0 0.0
    %2107 = vmatprep.subr.mxu0 0.0
    %2108 = vmatpush1.msra.mxu0 0.0
    %2109 = vmatprep.subr.mxu0 0.0
    %2110 = vmatpush1.msra.mxu0 0.0
    %2111 = vmatprep.subr.mxu0 0.0
    %2112 = vmatpush1.msra.mxu0 0.0
    %2113 = vmatprep.subr.mxu0 0.0
    %2114 = vmatpush1.msra.mxu0 0.0
    %2115 = vmatprep.subr.mxu0 0.0
    %2116 = vmatpush1.msra.mxu0 0.0
    %2117 = vmatprep.subr.mxu0 0.0
    %2118 = vmatpush1.msra.mxu0 0.0
    %2119 = vmatprep.subr.mxu0 0.0
    %2120 = vmatpush1.msra.mxu0 0.0
    %2121 = vmatprep.subr.mxu0 0.0
    %2122 = vmatpush1.msra.mxu0 0.0
    %2123 = vmatprep.mubr.f32.mxu0 0.0
    %2124 = vmatmul.mubr.f32.gmra.mrb[0].mxu0 %v1981
    %v2125 = vpop.f32.mrb[0].mxu0
    %v2126 = vadd.f32 %v1283, %v2125
    %v2127 = vpop.f32.mrb[0].mxu0
    %2128 = vdwg.mxu0
    %v2129 = vtanh.pop %v2126
    %2130 = vmatprep.subr.mxu0 0.0
    %2131 = vmatpush1.msra.mxu0 %v1355
    %2132 = vmatprep.subr.mxu0 0.0
    %2133 = vmatpush1.msra.mxu0 %v1356
    %2134 = vmatprep.subr.mxu0 0.0
    %2135 = vmatpush1.msra.mxu0 %v1357
    %2136 = vmatprep.subr.mxu0 0.0
    %2137 = vmatpush1.msra.mxu0 %v1358
    %2138 = vmatprep.subr.mxu0 0.0
    %2139 = vmatpush1.msra.mxu0 0.0
    %2140 = vmatprep.subr.mxu0 0.0
    %2141 = vmatpush1.msra.mxu0 0.0
    %2142 = vmatprep.subr.mxu0 0.0
    %2143 = vmatpush1.msra.mxu0 0.0
    %2144 = vmatprep.subr.mxu0 0.0
    %2145 = vmatpush1.msra.mxu0 0.0
    %2146 = vmatprep.subr.mxu0 0.0
    %2147 = vmatpush1.msra.mxu0 0.0
    %2148 = vmatprep.subr.mxu0 0.0
    %2149 = vmatpush1.msra.mxu0 0.0
    %2150 = vmatprep.subr.mxu0 0.0
    %2151 = vmatpush1.msra.mxu0 0.0
    %2152 = vmatprep.subr.mxu0 0.0
    %2153 = vmatpush1.msra.mxu0 0.0
    %2154 = vmatprep.subr.mxu0 0.0
    %2155 = vmatpush1.msra.mxu0 0.0
    %2156 = vmatprep.subr.mxu0 0.0
    %2157 = vmatpush1.msra.mxu0 0.0
    %2158 = vmatprep.subr.mxu0 0.0
    %2159 = vmatpush1.msra.mxu0 0.0
    %2160 = vmatprep.subr.mxu0 0.0
    %2161 = vmatpush1.msra.mxu0 0.0
    %2162 = vmatprep.subr.mxu0 0.0
    %2163 = vmatpush1.msra.mxu0 0.0
    %2164 = vmatprep.subr.mxu0 0.0
    %2165 = vmatpush1.msra.mxu0 0.0
    %2166 = vmatprep.subr.mxu0 0.0
    %2167 = vmatpush1.msra.mxu0 0.0
    %2168 = vmatprep.subr.mxu0 0.0
    %2169 = vmatpush1.msra.mxu0 0.0
    %2170 = vmatprep.subr.mxu0 0.0
    %2171 = vmatpush1.msra.mxu0 0.0
    %2172 = vmatprep.subr.mxu0 0.0
    %2173 = vmatpush1.msra.mxu0 0.0
    %2174 = vmatprep.subr.mxu0 0.0
    %2175 = vmatpush1.msra.mxu0 0.0
    %2176 = vmatprep.subr.mxu0 0.0
    %2177 = vmatpush1.msra.mxu0 0.0
    %2178 = vmatprep.subr.mxu0 0.0
    %2179 = vmatpush1.msra.mxu0 0.0
    %2180 = vmatprep.subr.mxu0 0.0
    %2181 = vmatpush1.msra.mxu0 0.0
    %2182 = vmatprep.subr.mxu0 0.0
    %2183 = vmatpush1.msra.mxu0 0.0
    %2184 = vmatprep.subr.mxu0 0.0
    %2185 = vmatpush1.msra.mxu0 0.0
    %2186 = vmatprep.subr.mxu0 0.0
    %2187 = vmatpush1.msra.mxu0 0.0
    %2188 = vmatprep.subr.mxu0 0.0
    %2189 = vmatpush1.msra.mxu0 0.0
    %2190 = vmatprep.subr.mxu0 0.0
    %2191 = vmatpush1.msra.mxu0 0.0
    %2192 = vmatprep.subr.mxu0 0.0
    %2193 = vmatpush1.msra.mxu0 0.0
    %2194 = vmatprep.mubr.f32.mxu0 0.0
    %2195 = vmatmul.mubr.f32.gmra.mrb[0].mxu0 %v1981
    %v2196 = vpop.f32.mrb[0].mxu0
    %v2197 = vadd.f32 %v1363, %v2196
    %v2198 = vpop.f32.mrb[0].mxu0
    %2199 = vdwg.mxu0
    %v2200 = vxor.u32 %v2197, 2147483648
    %v2201 = vmul.f32 %v2200, 1.442695
    %v2202 = vpow.pop %v2201
    %v2203 = vadd.f32 %v2202, 1.0
    %v2204 = vrcp.pop %v2203
    %v2205 = vmul.f32 1.0, %v2204
    %v2206 = vmul.f32 %v2058, %v2129
    %v2207 = vtanh.pop %v2206
    %v2208 = vmul.f32 %v2205, %v2207
    %v2210 = vsel %vm64, %v2208, 0
    %2212 = vmatprep.subr.mxu0 0.0
    %2213 = vmatpush1.msra.mxu0 %v1443
    %2214 = vmatprep.subr.mxu0 0.0
    %2215 = vmatpush1.msra.mxu0 %v1444
    %2216 = vmatprep.subr.mxu0 0.0
    %2217 = vmatpush1.msra.mxu0 %v1445
    %2218 = vmatprep.subr.mxu0 0.0
    %2219 = vmatpush1.msra.mxu0 %v1446
    %2220 = vmatprep.subr.mxu0 0.0
    %2221 = vmatpush1.msra.mxu0 0.0
    %2222 = vmatprep.subr.mxu0 0.0
    %2223 = vmatpush1.msra.mxu0 0.0
    %2224 = vmatprep.subr.mxu0 0.0
    %2225 = vmatpush1.msra.mxu0 0.0
    %2226 = vmatprep.subr.mxu0 0.0
    %2227 = vmatpush1.msra.mxu0 0.0
    %2228 = vmatprep.subr.mxu0 0.0
    %2229 = vmatpush1.msra.mxu0 0.0
    %2230 = vmatprep.subr.mxu0 0.0
    %2231 = vmatpush1.msra.mxu0 0.0
    %2232 = vmatprep.subr.mxu0 0.0
    %2233 = vmatpush1.msra.mxu0 0.0
    %2234 = vmatprep.subr.mxu0 0.0
    %2235 = vmatpush1.msra.mxu0 0.0
    %2236 = vmatprep.subr.mxu0 0.0
    %2237 = vmatpush1.msra.mxu0 0.0
    %2238 = vmatprep.subr.mxu0 0.0
    %2239 = vmatpush1.msra.mxu0 0.0
    %2240 = vmatprep.subr.mxu0 0.0
    %2241 = vmatpush1.msra.mxu0 0.0
    %2242 = vmatprep.subr.mxu0 0.0
    %2243 = vmatpush1.msra.mxu0 0.0
    %2244 = vmatprep.subr.mxu0 0.0
    %2245 = vmatpush1.msra.mxu0 0.0
    %2246 = vmatprep.subr.mxu0 0.0
    %2247 = vmatpush1.msra.mxu0 0.0
    %2248 = vmatprep.subr.mxu0 0.0
    %2249 = vmatpush1.msra.mxu0 0.0
    %2250 = vmatprep.subr.mxu0 0.0
    %2251 = vmatpush1.msra.mxu0 0.0
    %2252 = vmatprep.subr.mxu0 0.0
    %2253 = vmatpush1.msra.mxu0 0.0
    %2254 = vmatprep.subr.mxu0 0.0
    %2255 = vmatpush1.msra.mxu0 0.0
    %2256 = vmatprep.subr.mxu0 0.0
    %2257 = vmatpush1.msra.mxu0 0.0
    %2258 = vmatprep.subr.mxu0 0.0
    %2259 = vmatpush1.msra.mxu0 0.0
    %2260 = vmatprep.subr.mxu0 0.0
    %2261 = vmatpush1.msra.mxu0 0.0
    %2262 = vmatprep.subr.mxu0 0.0
    %2263 = vmatpush1.msra.mxu0 0.0
    %2264 = vmatprep.subr.mxu0 0.0
    %2265 = vmatpush1.msra.mxu0 0.0
    %2266 = vmatprep.subr.mxu0 0.0
    %2267 = vmatpush1.msra.mxu0 0.0
    %2268 = vmatprep.subr.mxu0 0.0
    %2269 = vmatpush1.msra.mxu0 0.0
    %2270 = vmatprep.subr.mxu0 0.0
    %2271 = vmatpush1.msra.mxu0 0.0
    %2272 = vmatprep.subr.mxu0 0.0
    %2273 = vmatpush1.msra.mxu0 0.0
    %2274 = vmatprep.subr.mxu0 0.0
    %2275 = vmatpush1.msra.mxu0 0.0
    %2276 = vmatprep.mubr.f32.mxu0 0.0
    %2277 = vmatmul.mubr.f32.gmra.mrb[0].mxu0 %v2210
    %v2278 = vpop.f32.mrb[0].mxu0
    %v2279 = vadd.f32 %v1451, %v2278
    %v2280 = vpop.f32.mrb[0].mxu0
    %2281 = vdwg.mxu0
    %v2282 = vmax.f32 %v2279, 0.0
    %v2284 = vsel %vm722, %v2282, 0
    %2286 = vmatprep.subr.mxu0 0.0
    %2287 = vmatpush1.msra.mxu0 %v1526
    %2288 = vmatprep.subr.mxu0 0.0
    %2289 = vmatpush1.msra.mxu0 %v1527
    %2290 = vmatprep.subr.mxu0 0.0
    %2291 = vmatpush1.msra.mxu0 0.0
    %2292 = vmatprep.subr.mxu0 0.0
    %2293 = vmatpush1.msra.mxu0 0.0
    %2294 = vmatprep.subr.mxu0 0.0
    %2295 = vmatpush1.msra.mxu0 0.0
    %2296 = vmatprep.subr.mxu0 0.0
    %2297 = vmatpush1.msra.mxu0 0.0
    %2298 = vmatprep.subr.mxu0 0.0
    %2299 = vmatpush1.msra.mxu0 0.0
    %2300 = vmatprep.subr.mxu0 0.0
    %2301 = vmatpush1.msra.mxu0 0.0
    %2302 = vmatprep.subr.mxu0 0.0
    %2303 = vmatpush1.msra.mxu0 0.0
    %2304 = vmatprep.subr.mxu0 0.0
    %2305 = vmatpush1.msra.mxu0 0.0
    %2306 = vmatprep.subr.mxu0 0.0
    %2307 = vmatpush1.msra.mxu0 0.0
    %2308 = vmatprep.subr.mxu0 0.0
    %2309 = vmatpush1.msra.mxu0 0.0
    %2310 = vmatprep.subr.mxu0 0.0
    %2311 = vmatpush1.msra.mxu0 0.0
    %2312 = vmatprep.subr.mxu0 0.0
    %2313 = vmatpush1.msra.mxu0 0.0
    %2314 = vmatprep.subr.mxu0 0.0
    %2315 = vmatpush1.msra.mxu0 0.0
    %2316 = vmatprep.subr.mxu0 0.0
    %2317 = vmatpush1.msra.mxu0 0.0
    %2318 = vmatprep.subr.mxu0 0.0
    %2319 = vmatpush1.msra.mxu0 0.0
    %2320 = vmatprep.subr.mxu0 0.0
    %2321 = vmatpush1.msra.mxu0 0.0
    %2322 = vmatprep.subr.mxu0 0.0
    %2323 = vmatpush1.msra.mxu0 0.0
    %2324 = vmatprep.subr.mxu0 0.0
    %2325 = vmatpush1.msra.mxu0 0.0
    %2326 = vmatprep.subr.mxu0 0.0
    %2327 = vmatpush1.msra.mxu0 0.0
    %2328 = vmatprep.subr.mxu0 0.0
    %2329 = vmatpush1.msra.mxu0 0.0
    %2330 = vmatprep.subr.mxu0 0.0
    %2331 = vmatpush1.msra.mxu0 0.0
    %2332 = vmatprep.subr.mxu0 0.0
    %2333 = vmatpush1.msra.mxu0 0.0
    %2334 = vmatprep.subr.mxu0 0.0
    %2335 = vmatpush1.msra.mxu0 0.0
    %2336 = vmatprep.subr.mxu0 0.0
    %2337 = vmatpush1.msra.mxu0 0.0
    %2338 = vmatprep.subr.mxu0 0.0
    %2339 = vmatpush1.msra.mxu0 0.0
    %2340 = vmatprep.subr.mxu0 0.0
    %2341 = vmatpush1.msra.mxu0 0.0
    %2342 = vmatprep.subr.mxu0 0.0
    %2343 = vmatpush1.msra.mxu0 0.0
    %2344 = vmatprep.subr.mxu0 0.0
    %2345 = vmatpush1.msra.mxu0 0.0
    %2346 = vmatprep.subr.mxu0 0.0
    %2347 = vmatpush1.msra.mxu0 0.0
    %2348 = vmatprep.subr.mxu0 0.0
    %2349 = vmatpush1.msra.mxu0 0.0
    %2350 = vmatprep.mubr.f32.mxu0 0.0
    %2351 = vmatmul.mubr.f32.gmra.mrb[0].mxu0 %v2284
    %v2352 = vpop.f32.mrb[0].mxu0
    %v2353 = vadd.f32 %v1532, %v2352
    %v2354 = vpop.f32.mrb[0].mxu0
    %2355 = vdwg.mxu0
    %v2356 = vmax.f32 %v2353, 0.0
    %v2358 = vsel %vm722, %v2356, 0
    %2360 = vmatprep.subr.mxu0 0.0
    %2361 = vmatpush1.msra.mxu0 %v1607
    %2362 = vmatprep.subr.mxu0 0.0
    %2363 = vmatpush1.msra.mxu0 %v1608
    %2364 = vmatprep.subr.mxu0 0.0
    %2365 = vmatpush1.msra.mxu0 0.0
    %2366 = vmatprep.subr.mxu0 0.0
    %2367 = vmatpush1.msra.mxu0 0.0
    %2368 = vmatprep.subr.mxu0 0.0
    %2369 = vmatpush1.msra.mxu0 0.0
    %2370 = vmatprep.subr.mxu0 0.0
    %2371 = vmatpush1.msra.mxu0 0.0
    %2372 = vmatprep.subr.mxu0 0.0
    %2373 = vmatpush1.msra.mxu0 0.0
    %2374 = vmatprep.subr.mxu0 0.0
    %2375 = vmatpush1.msra.mxu0 0.0
    %2376 = vmatprep.subr.mxu0 0.0
    %2377 = vmatpush1.msra.mxu0 0.0
    %2378 = vmatprep.subr.mxu0 0.0
    %2379 = vmatpush1.msra.mxu0 0.0
    %2380 = vmatprep.subr.mxu0 0.0
    %2381 = vmatpush1.msra.mxu0 0.0
    %2382 = vmatprep.subr.mxu0 0.0
    %2383 = vmatpush1.msra.mxu0 0.0
    %2384 = vmatprep.subr.mxu0 0.0
    %2385 = vmatpush1.msra.mxu0 0.0
    %2386 = vmatprep.subr.mxu0 0.0
    %2387 = vmatpush1.msra.mxu0 0.0
    %2388 = vmatprep.subr.mxu0 0.0
    %2389 = vmatpush1.msra.mxu0 0.0
    %2390 = vmatprep.subr.mxu0 0.0
    %2391 = vmatpush1.msra.mxu0 0.0
    %2392 = vmatprep.subr.mxu0 0.0
    %2393 = vmatpush1.msra.mxu0 0.0
    %2394 = vmatprep.subr.mxu0 0.0
    %2395 = vmatpush1.msra.mxu0 0.0
    %2396 = vmatprep.subr.mxu0 0.0
    %2397 = vmatpush1.msra.mxu0 0.0
    %2398 = vmatprep.subr.mxu0 0.0
    %2399 = vmatpush1.msra.mxu0 0.0
    %2400 = vmatprep.subr.mxu0 0.0
    %2401 = vmatpush1.msra.mxu0 0.0
    %2402 = vmatprep.subr.mxu0 0.0
    %2403 = vmatpush1.msra.mxu0 0.0
    %2404 = vmatprep.subr.mxu0 0.0
    %2405 = vmatpush1.msra.mxu0 0.0
    %2406 = vmatprep.subr.mxu0 0.0
    %2407 = vmatpush1.msra.mxu0 0.0
    %2408 = vmatprep.subr.mxu0 0.0
    %2409 = vmatpush1.msra.mxu0 0.0
    %2410 = vmatprep.subr.mxu0 0.0
    %2411 = vmatpush1.msra.mxu0 0.0
    %2412 = vmatprep.subr.mxu0 0.0
    %2413 = vmatpush1.msra.mxu0 0.0
    %2414 = vmatprep.subr.mxu0 0.0
    %2415 = vmatpush1.msra.mxu0 0.0
    %2416 = vmatprep.subr.mxu0 0.0
    %2417 = vmatpush1.msra.mxu0 0.0
    %2418 = vmatprep.subr.mxu0 0.0
    %2419 = vmatpush1.msra.mxu0 0.0
    %2420 = vmatprep.subr.mxu0 0.0
    %2421 = vmatpush1.msra.mxu0 0.0
    %2422 = vmatprep.subr.mxu0 0.0
    %2423 = vmatpush1.msra.mxu0 0.0
    %2424 = vmatprep.mubr.f32.mxu0 0.0
    %2425 = vmatmul.mubr.f32.gmra.mrb[0].mxu0 %v2358
    %v2426 = vpop.f32.mrb[0].mxu0
    %v2427 = vadd.f32 %v1613, %v2426
    %v2428 = vpop.f32.mrb[0].mxu0
    %2429 = vdwg.mxu0
    %v2430 = vmax.f32 %v2427, 0.0
    %v2432 = vsel %vm64, %v2430, 0
    %2434 = vmatprep.subr.mxu0 0.0
    %2435 = vmatpush1.msra.mxu0 %v879
    %2436 = vmatprep.subr.mxu0 0.0
    %2437 = vmatpush1.msra.mxu0 %v880
    %2438 = vmatprep.subr.mxu0 0.0
    %2439 = vmatpush1.msra.mxu0 %v881
    %2440 = vmatprep.subr.mxu0 0.0
    %2441 = vmatpush1.msra.mxu0 %v882
    %2442 = vmatprep.subr.mxu0 0.0
    %2443 = vmatpush1.msra.mxu0 0.0
    %2444 = vmatprep.subr.mxu0 0.0
    %2445 = vmatpush1.msra.mxu0 0.0
    %2446 = vmatprep.subr.mxu0 0.0
    %2447 = vmatpush1.msra.mxu0 0.0
    %2448 = vmatprep.subr.mxu0 0.0
    %2449 = vmatpush1.msra.mxu0 0.0
    %2450 = vmatprep.subr.mxu0 0.0
    %2451 = vmatpush1.msra.mxu0 0.0
    %2452 = vmatprep.subr.mxu0 0.0
    %2453 = vmatpush1.msra.mxu0 0.0
    %2454 = vmatprep.subr.mxu0 0.0
    %2455 = vmatpush1.msra.mxu0 0.0
    %2456 = vmatprep.subr.mxu0 0.0
    %2457 = vmatpush1.msra.mxu0 0.0
    %2458 = vmatprep.subr.mxu0 0.0
    %2459 = vmatpush1.msra.mxu0 0.0
    %2460 = vmatprep.subr.mxu0 0.0
    %2461 = vmatpush1.msra.mxu0 0.0
    %2462 = vmatprep.subr.mxu0 0.0
    %2463 = vmatpush1.msra.mxu0 0.0
    %2464 = vmatprep.subr.mxu0 0.0
    %2465 = vmatpush1.msra.mxu0 0.0
    %2466 = vmatprep.subr.mxu0 0.0
    %2467 = vmatpush1.msra.mxu0 0.0
    %2468 = vmatprep.subr.mxu0 0.0
    %2469 = vmatpush1.msra.mxu0 0.0
    %2470 = vmatprep.subr.mxu0 0.0
    %2471 = vmatpush1.msra.mxu0 0.0
    %2472 = vmatprep.subr.mxu0 0.0
    %2473 = vmatpush1.msra.mxu0 0.0
    %2474 = vmatprep.subr.mxu0 0.0
    %2475 = vmatpush1.msra.mxu0 0.0
    %2476 = vmatprep.subr.mxu0 0.0
    %2477 = vmatpush1.msra.mxu0 0.0
    %2478 = vmatprep.subr.mxu0 0.0
    %2479 = vmatpush1.msra.mxu0 0.0
    %2480 = vmatprep.subr.mxu0 0.0
    %2481 = vmatpush1.msra.mxu0 0.0
    %2482 = vmatprep.subr.mxu0 0.0
    %2483 = vmatpush1.msra.mxu0 0.0
    %2484 = vmatprep.subr.mxu0 0.0
    %2485 = vmatpush1.msra.mxu0 0.0
    %2486 = vmatprep.subr.mxu0 0.0
    %2487 = vmatpush1.msra.mxu0 0.0
    %2488 = vmatprep.subr.mxu0 0.0
    %2489 = vmatpush1.msra.mxu0 0.0
    %2490 = vmatprep.subr.mxu0 0.0
    %2491 = vmatpush1.msra.mxu0 0.0
    %2492 = vmatprep.subr.mxu0 0.0
    %2493 = vmatpush1.msra.mxu0 0.0
    %2494 = vmatprep.subr.mxu0 0.0
    %2495 = vmatpush1.msra.mxu0 0.0
    %2496 = vmatprep.subr.mxu0 0.0
    %2497 = vmatpush1.msra.mxu0 0.0
    %2498 = vmatprep.mubr.f32.mxu0 0.0
    %2499 = vmatmul.mubr.f32.gmra.mrb[0].mxu0 %v2432
    %v2500 = vpop.f32.mrb[0].mxu0
    %v2501 = vadd.f32 %v886, %v2500
    %v2502 = vpop.f32.mrb[0].mxu0
    %2503 = vdwg.mxu0
    %v2504 = vmax.f32 %v2501, 0.0
    %v2506 = vsel %vm147, %v2504, 0
    %2508 = vmatprep.subr.mxu0 0.0
    %2509 = vmatpush1.msra.mxu0 %v961
    %2510 = vmatprep.subr.mxu0 0.0
    %2511 = vmatpush1.msra.mxu0 %v962
    %2512 = vmatprep.subr.mxu0 0.0
    %2513 = vmatpush1.msra.mxu0 %v963
    %2514 = vmatprep.subr.mxu0 0.0
    %2515 = vmatpush1.msra.mxu0 %v964
    %2516 = vmatprep.subr.mxu0 0.0
    %2517 = vmatpush1.msra.mxu0 %v965
    %2518 = vmatprep.subr.mxu0 0.0
    %2519 = vmatpush1.msra.mxu0 %v966
    %2520 = vmatprep.subr.mxu0 0.0
    %2521 = vmatpush1.msra.mxu0 %v967
    %2522 = vmatprep.subr.mxu0 0.0
    %2523 = vmatpush1.msra.mxu0 %v968
    %2524 = vmatprep.subr.mxu0 0.0
    %2525 = vmatpush1.msra.mxu0 0.0
    %2526 = vmatprep.subr.mxu0 0.0
    %2527 = vmatpush1.msra.mxu0 0.0
    %2528 = vmatprep.subr.mxu0 0.0
    %2529 = vmatpush1.msra.mxu0 0.0
    %2530 = vmatprep.subr.mxu0 0.0
    %2531 = vmatpush1.msra.mxu0 0.0
    %2532 = vmatprep.subr.mxu0 0.0
    %2533 = vmatpush1.msra.mxu0 0.0
    %2534 = vmatprep.subr.mxu0 0.0
    %2535 = vmatpush1.msra.mxu0 0.0
    %2536 = vmatprep.subr.mxu0 0.0
    %2537 = vmatpush1.msra.mxu0 0.0
    %2538 = vmatprep.subr.mxu0 0.0
    %2539 = vmatpush1.msra.mxu0 0.0
    %2540 = vmatprep.subr.mxu0 0.0
    %2541 = vmatpush1.msra.mxu0 0.0
    %2542 = vmatprep.subr.mxu0 0.0
    %2543 = vmatpush1.msra.mxu0 0.0
    %2544 = vmatprep.subr.mxu0 0.0
    %2545 = vmatpush1.msra.mxu0 0.0
    %2546 = vmatprep.subr.mxu0 0.0
    %2547 = vmatpush1.msra.mxu0 0.0
    %2548 = vmatprep.subr.mxu0 0.0
    %2549 = vmatpush1.msra.mxu0 0.0
    %2550 = vmatprep.subr.mxu0 0.0
    %2551 = vmatpush1.msra.mxu0 0.0
    %2552 = vmatprep.subr.mxu0 0.0
    %2553 = vmatpush1.msra.mxu0 0.0
    %2554 = vmatprep.subr.mxu0 0.0
    %2555 = vmatpush1.msra.mxu0 0.0
    %2556 = vmatprep.subr.mxu0 0.0
    %2557 = vmatpush1.msra.mxu0 0.0
    %2558 = vmatprep.subr.mxu0 0.0
    %2559 = vmatpush1.msra.mxu0 0.0
    %2560 = vmatprep.subr.mxu0 0.0
    %2561 = vmatpush1.msra.mxu0 0.0
    %2562 = vmatprep.subr.mxu0 0.0
    %2563 = vmatpush1.msra.mxu0 0.0
    %2564 = vmatprep.subr.mxu0 0.0
    %2565 = vmatpush1.msra.mxu0 0.0
    %2566 = vmatprep.subr.mxu0 0.0
    %2567 = vmatpush1.msra.mxu0 0.0
    %2568 = vmatprep.subr.mxu0 0.0
    %2569 = vmatpush1.msra.mxu0 0.0
    %2570 = vmatprep.subr.mxu0 0.0
    %2571 = vmatpush1.msra.mxu0 0.0
    %2572 = vmatprep.mubr.f32.mxu0 0.0
    %2573 = vmatmul.mubr.f32.gmra.mrb[0].mxu0 %v2506
    %v2574 = vpop.f32.mrb[0].mxu0
    %v2575 = vadd.f32 %v886, %v2574
    %v2576 = vpop.f32.mrb[0].mxu0
    %2577 = vdwg.mxu0
    %v2578 = vmax.f32 %v2575, 0.0
    %2580 = vrot.lane.b32.xlu0 %v2578, 96
    %v2581 = vpop.permute.xlu0 %2580
    %2583 = vmatprep.subr.mxu0 0.0
    %2584 = vmatpush1.msra.mxu0 %v2581
    %2585 = vmatprep.subr.mxu0 0.0
    %2586 = vmatpush1.msra.mxu0 0.0
    %2587 = vmatprep.subr.mxu0 0.0
    %2588 = vmatpush1.msra.mxu0 0.0
    %2589 = vmatprep.subr.mxu0 0.0
    %2590 = vmatpush1.msra.mxu0 0.0
    %2591 = vmatprep.subr.mxu0 0.0
    %2592 = vmatpush1.msra.mxu0 0.0
    %2593 = vmatprep.subr.mxu0 0.0
    %2594 = vmatpush1.msra.mxu0 0.0
    %2595 = vmatprep.subr.mxu0 0.0
    %2596 = vmatpush1.msra.mxu0 0.0
    %2597 = vmatprep.subr.mxu0 0.0
    %2598 = vmatpush1.msra.mxu0 0.0
    %2599 = vmatprep.subr.mxu0 0.0
    %2600 = vmatpush1.msra.mxu0 0.0
    %2601 = vmatprep.subr.mxu0 0.0
    %2602 = vmatpush1.msra.mxu0 0.0
    %2603 = vmatprep.subr.mxu0 0.0
    %2604 = vmatpush1.msra.mxu0 0.0
    %2605 = vmatprep.subr.mxu0 0.0
    %2606 = vmatpush1.msra.mxu0 0.0
    %2607 = vmatprep.subr.mxu0 0.0
    %2608 = vmatpush1.msra.mxu0 0.0
    %2609 = vmatprep.subr.mxu0 0.0
    %2610 = vmatpush1.msra.mxu0 0.0
    %2611 = vmatprep.subr.mxu0 0.0
    %2612 = vmatpush1.msra.mxu0 0.0
    %2613 = vmatprep.subr.mxu0 0.0
    %2614 = vmatpush1.msra.mxu0 0.0
    %2615 = vmatprep.subr.mxu0 0.0
    %2616 = vmatpush1.msra.mxu0 0.0
    %2617 = vmatprep.subr.mxu0 0.0
    %2618 = vmatpush1.msra.mxu0 0.0
    %2619 = vmatprep.subr.mxu0 0.0
    %2620 = vmatpush1.msra.mxu0 0.0
    %2621 = vmatprep.subr.mxu0 0.0
    %2622 = vmatpush1.msra.mxu0 0.0
    %2623 = vmatprep.subr.mxu0 0.0
    %2624 = vmatpush1.msra.mxu0 0.0
    %2625 = vmatprep.subr.mxu0 0.0
    %2626 = vmatpush1.msra.mxu0 0.0
    %2627 = vmatprep.subr.mxu0 0.0
    %2628 = vmatpush1.msra.mxu0 0.0
    %2629 = vmatprep.subr.mxu0 0.0
    %2630 = vmatpush1.msra.mxu0 0.0
    %2631 = vmatprep.subr.mxu0 0.0
    %2632 = vmatpush1.msra.mxu0 0.0
    %2633 = vmatprep.subr.mxu0 0.0
    %2634 = vmatpush1.msra.mxu0 0.0
    %2635 = vmatprep.subr.mxu0 0.0
    %2636 = vmatpush1.msra.mxu0 0.0
    %2637 = vmatprep.subr.mxu0 0.0
    %2638 = vmatpush1.msra.mxu0 0.0
    %2639 = vmatprep.subr.mxu0 0.0
    %2640 = vmatpush1.msra.mxu0 0.0
    %2641 = vmatprep.subr.mxu0 0.0
    %2642 = vmatpush1.msra.mxu0 0.0
    %2643 = vmatprep.subr.mxu0 0.0
    %2644 = vmatpush1.msra.mxu0 0.0
    %2645 = vmatprep.subr.mxu0 0.0
    %2646 = vmatpush1.msra.mxu0 0.0
    %2647 = vmatprep.mubr.f32.mxu0 0.0
    %2648 = vmatmul.mubr.f32.gmra.mrb[0].mxu0 %v231
    %v2649 = vpop.f32.mrb[0].mxu0
    %v2650 = vadd.f32 0.0, %v2649
    %v2651 = vpop.f32.mrb[0].mxu0
    %2652 = vdwg.mxu0
    %2653 = vmatprep.subr.mxu0 0.0
    %2654 = vmatpush1.msra.mxu0 %v2578
    %2655 = vmatprep.subr.mxu0 0.0
    %2656 = vmatpush1.msra.mxu0 0.0
    %2657 = vmatprep.subr.mxu0 0.0
    %2658 = vmatpush1.msra.mxu0 0.0
    %2659 = vmatprep.subr.mxu0 0.0
    %2660 = vmatpush1.msra.mxu0 0.0
    %2661 = vmatprep.subr.mxu0 0.0
    %2662 = vmatpush1.msra.mxu0 0.0
    %2663 = vmatprep.subr.mxu0 0.0
    %2664 = vmatpush1.msra.mxu0 0.0
    %2665 = vmatprep.subr.mxu0 0.0
    %2666 = vmatpush1.msra.mxu0 0.0
    %2667 = vmatprep.subr.mxu0 0.0
    %2668 = vmatpush1.msra.mxu0 0.0
    %2669 = vmatprep.subr.mxu0 0.0
    %2670 = vmatpush1.msra.mxu0 0.0
    %2671 = vmatprep.subr.mxu0 0.0
    %2672 = vmatpush1.msra.mxu0 0.0
    %2673 = vmatprep.subr.mxu0 0.0
    %2674 = vmatpush1.msra.mxu0 0.0
    %2675 = vmatprep.subr.mxu0 0.0
    %2676 = vmatpush1.msra.mxu0 0.0
    %2677 = vmatprep.subr.mxu0 0.0
    %2678 = vmatpush1.msra.mxu0 0.0
    %2679 = vmatprep.subr.mxu0 0.0
    %2680 = vmatpush1.msra.mxu0 0.0
    %2681 = vmatprep.subr.mxu0 0.0
    %2682 = vmatpush1.msra.mxu0 0.0
    %2683 = vmatprep.subr.mxu0 0.0
    %2684 = vmatpush1.msra.mxu0 0.0
    %2685 = vmatprep.subr.mxu0 0.0
    %2686 = vmatpush1.msra.mxu0 0.0
    %2687 = vmatprep.subr.mxu0 0.0
    %2688 = vmatpush1.msra.mxu0 0.0
    %2689 = vmatprep.subr.mxu0 0.0
    %2690 = vmatpush1.msra.mxu0 0.0
    %2691 = vmatprep.subr.mxu0 0.0
    %2692 = vmatpush1.msra.mxu0 0.0
    %2693 = vmatprep.subr.mxu0 0.0
    %2694 = vmatpush1.msra.mxu0 0.0
    %2695 = vmatprep.subr.mxu0 0.0
    %2696 = vmatpush1.msra.mxu0 0.0
    %2697 = vmatprep.subr.mxu0 0.0
    %2698 = vmatpush1.msra.mxu0 0.0
    %2699 = vmatprep.subr.mxu0 0.0
    %2700 = vmatpush1.msra.mxu0 0.0
    %2701 = vmatprep.subr.mxu0 0.0
    %2702 = vmatpush1.msra.mxu0 0.0
    %2703 = vmatprep.subr.mxu0 0.0
    %2704 = vmatpush1.msra.mxu0 0.0
    %2705 = vmatprep.subr.mxu0 0.0
    %2706 = vmatpush1.msra.mxu0 0.0
    %2707 = vmatprep.subr.mxu0 0.0
    %2708 = vmatpush1.msra.mxu0 0.0
    %2709 = vmatprep.subr.mxu0 0.0
    %2710 = vmatpush1.msra.mxu0 0.0
    %2711 = vmatprep.subr.mxu0 0.0
    %2712 = vmatpush1.msra.mxu0 0.0
    %2713 = vmatprep.subr.mxu0 0.0
    %2714 = vmatpush1.msra.mxu0 0.0
    %2715 = vmatprep.subr.mxu0 0.0
    %2716 = vmatpush1.msra.mxu0 0.0
    %2717 = vmatprep.mubr.f32.mxu0 0.0
    %2718 = vmatmul.mubr.f32.gmra.mrb[0].mxu0 %v304
    %v2719 = vpop.f32.mrb[0].mxu0
    %v2720 = vadd.f32 %v2650, %v2719
    %v2721 = vpop.f32.mrb[0].mxu0
    %2722 = vdwg.mxu0
    %v2724 = vsel %vm64, %v2720, 0
    %2726 = vmatprep.subr.mxu0 0.0
    %2727 = vmatpush1.msra.mxu0 %v1187
    %2728 = vmatprep.subr.mxu0 0.0
    %2729 = vmatpush1.msra.mxu0 %v1188
    %2730 = vmatprep.subr.mxu0 0.0
    %2731 = vmatpush1.msra.mxu0 %v1189
    %2732 = vmatprep.subr.mxu0 0.0
    %2733 = vmatpush1.msra.mxu0 %v1190
    %2734 = vmatprep.subr.mxu0 0.0
    %2735 = vmatpush1.msra.mxu0 0.0
    %2736 = vmatprep.subr.mxu0 0.0
    %2737 = vmatpush1.msra.mxu0 0.0
    %2738 = vmatprep.subr.mxu0 0.0
    %2739 = vmatpush1.msra.mxu0 0.0
    %2740 = vmatprep.subr.mxu0 0.0
    %2741 = vmatpush1.msra.mxu0 0.0
    %2742 = vmatprep.subr.mxu0 0.0
    %2743 = vmatpush1.msra.mxu0 0.0
    %2744 = vmatprep.subr.mxu0 0.0
    %2745 = vmatpush1.msra.mxu0 0.0
    %2746 = vmatprep.subr.mxu0 0.0
    %2747 = vmatpush1.msra.mxu0 0.0
    %2748 = vmatprep.subr.mxu0 0.0
    %2749 = vmatpush1.msra.mxu0 0.0
    %2750 = vmatprep.subr.mxu0 0.0
    %2751 = vmatpush1.msra.mxu0 0.0
    %2752 = vmatprep.subr.mxu0 0.0
    %2753 = vmatpush1.msra.mxu0 0.0
    %2754 = vmatprep.subr.mxu0 0.0
    %2755 = vmatpush1.msra.mxu0 0.0
    %2756 = vmatprep.subr.mxu0 0.0
    %2757 = vmatpush1.msra.mxu0 0.0
    %2758 = vmatprep.subr.mxu0 0.0
    %2759 = vmatpush1.msra.mxu0 0.0
    %2760 = vmatprep.subr.mxu0 0.0
    %2761 = vmatpush1.msra.mxu0 0.0
    %2762 = vmatprep.subr.mxu0 0.0
    %2763 = vmatpush1.msra.mxu0 0.0
    %2764 = vmatprep.subr.mxu0 0.0
    %2765 = vmatpush1.msra.mxu0 0.0
    %2766 = vmatprep.subr.mxu0 0.0
    %2767 = vmatpush1.msra.mxu0 0.0
    %2768 = vmatprep.subr.mxu0 0.0
    %2769 = vmatpush1.msra.mxu0 0.0
    %2770 = vmatprep.subr.mxu0 0.0
    %2771 = vmatpush1.msra.mxu0 0.0
    %2772 = vmatprep.subr.mxu0 0.0
    %2773 = vmatpush1.msra.mxu0 0.0
    %2774 = vmatprep.subr.mxu0 0.0
    %2775 = vmatpush1.msra.mxu0 0.0
    %2776 = vmatprep.subr.mxu0 0.0
    %2777 = vmatpush1.msra.mxu0 0.0
    %2778 = vmatprep.subr.mxu0 0.0
    %2779 = vmatpush1.msra.mxu0 0.0
    %2780 = vmatprep.subr.mxu0 0.0
    %2781 = vmatpush1.msra.mxu0 0.0
    %2782 = vmatprep.subr.mxu0 0.0
    %2783 = vmatpush1.msra.mxu0 0.0
    %2784 = vmatprep.subr.mxu0 0.0
    %2785 = vmatpush1.msra.mxu0 0.0
    %2786 = vmatprep.subr.mxu0 0.0
    %2787 = vmatpush1.msra.mxu0 0.0
    %2788 = vmatprep.subr.mxu0 0.0
    %2789 = vmatpush1.msra.mxu0 0.0
    %2790 = vmatprep.mubr.f32.mxu0 0.0
    %2791 = vmatmul.mubr.f32.gmra.mrb[0].mxu0 %v2724
    %v2792 = vpop.f32.mrb[0].mxu0
    %v2793 = vadd.f32 %v1195, %v2792
    %v2794 = vpop.f32.mrb[0].mxu0
    %2795 = vdwg.mxu0
    %v2796 = vxor.u32 %v2793, 2147483648
    %v2797 = vmul.f32 %v2796, 1.442695
    %v2798 = vpow.pop %v2797
    %v2799 = vadd.f32 %v2798, 1.0
    %v2800 = vrcp.pop %v2799
    %v2801 = vmul.f32 1.0, %v2800
    %2802 = vmatprep.subr.mxu0 0.0
    %2803 = vmatpush1.msra.mxu0 %v1275
    %2804 = vmatprep.subr.mxu0 0.0
    %2805 = vmatpush1.msra.mxu0 %v1276
    %2806 = vmatprep.subr.mxu0 0.0
    %2807 = vmatpush1.msra.mxu0 %v1277
    %2808 = vmatprep.subr.mxu0 0.0
    %2809 = vmatpush1.msra.mxu0 %v1278
    %2810 = vmatprep.subr.mxu0 0.0
    %2811 = vmatpush1.msra.mxu0 0.0
    %2812 = vmatprep.subr.mxu0 0.0
    %2813 = vmatpush1.msra.mxu0 0.0
    %2814 = vmatprep.subr.mxu0 0.0
    %2815 = vmatpush1.msra.mxu0 0.0
    %2816 = vmatprep.subr.mxu0 0.0
    %2817 = vmatpush1.msra.mxu0 0.0
    %2818 = vmatprep.subr.mxu0 0.0
    %2819 = vmatpush1.msra.mxu0 0.0
    %2820 = vmatprep.subr.mxu0 0.0
    %2821 = vmatpush1.msra.mxu0 0.0
    %2822 = vmatprep.subr.mxu0 0.0
    %2823 = vmatpush1.msra.mxu0 0.0
    %2824 = vmatprep.subr.mxu0 0.0
    %2825 = vmatpush1.msra.mxu0 0.0
    %2826 = vmatprep.subr.mxu0 0.0
    %2827 = vmatpush1.msra.mxu0 0.0
    %2828 = vmatprep.subr.mxu0 0.0
    %2829 = vmatpush1.msra.mxu0 0.0
    %2830 = vmatprep.subr.mxu0 0.0
    %2831 = vmatpush1.msra.mxu0 0.0
    %2832 = vmatprep.subr.mxu0 0.0
    %2833 = vmatpush1.msra.mxu0 0.0
    %2834 = vmatprep.subr.mxu0 0.0
    %2835 = vmatpush1.msra.mxu0 0.0
    %2836 = vmatprep.subr.mxu0 0.0
    %2837 = vmatpush1.msra.mxu0 0.0
    %2838 = vmatprep.subr.mxu0 0.0
    %2839 = vmatpush1.msra.mxu0 0.0
    %2840 = vmatprep.subr.mxu0 0.0
    %2841 = vmatpush1.msra.mxu0 0.0
    %2842 = vmatprep.subr.mxu0 0.0
    %2843 = vmatpush1.msra.mxu0 0.0
    %2844 = vmatprep.subr.mxu0 0.0
    %2845 = vmatpush1.msra.mxu0 0.0
    %2846 = vmatprep.subr.mxu0 0.0
    %2847 = vmatpush1.msra.mxu0 0.0
    %2848 = vmatprep.subr.mxu0 0.0
    %2849 = vmatpush1.msra.mxu0 0.0
    %2850 = vmatprep.subr.mxu0 0.0
    %2851 = vmatpush1.msra.mxu0 0.0
    %2852 = vmatprep.subr.mxu0 0.0
    %2853 = vmatpush1.msra.mxu0 0.0
    %2854 = vmatprep.subr.mxu0 0.0
    %2855 = vmatpush1.msra.mxu0 0.0
    %2856 = vmatprep.subr.mxu0 0.0
    %2857 = vmatpush1.msra.mxu0 0.0
    %2858 = vmatprep.subr.mxu0 0.0
    %2859 = vmatpush1.msra.mxu0 0.0
    %2860 = vmatprep.subr.mxu0 0.0
    %2861 = vmatpush1.msra.mxu0 0.0
    %2862 = vmatprep.subr.mxu0 0.0
    %2863 = vmatpush1.msra.mxu0 0.0
    %2864 = vmatprep.subr.mxu0 0.0
    %2865 = vmatpush1.msra.mxu0 0.0
    %2866 = vmatprep.mubr.f32.mxu0 0.0
    %2867 = vmatmul.mubr.f32.gmra.mrb[0].mxu0 %v2724
    %v2868 = vpop.f32.mrb[0].mxu0
    %v2869 = vadd.f32 %v1283, %v2868
    %v2870 = vpop.f32.mrb[0].mxu0
    %2871 = vdwg.mxu0
    %v2872 = vtanh.pop %v2869
    %2873 = vmatprep.subr.mxu0 0.0
    %2874 = vmatpush1.msra.mxu0 %v1355
    %2875 = vmatprep.subr.mxu0 0.0
    %2876 = vmatpush1.msra.mxu0 %v1356
    %2877 = vmatprep.subr.mxu0 0.0
    %2878 = vmatpush1.msra.mxu0 %v1357
    %2879 = vmatprep.subr.mxu0 0.0
    %2880 = vmatpush1.msra.mxu0 %v1358
    %2881 = vmatprep.subr.mxu0 0.0
    %2882 = vmatpush1.msra.mxu0 0.0
    %2883 = vmatprep.subr.mxu0 0.0
    %2884 = vmatpush1.msra.mxu0 0.0
    %2885 = vmatprep.subr.mxu0 0.0
    %2886 = vmatpush1.msra.mxu0 0.0
    %2887 = vmatprep.subr.mxu0 0.0
    %2888 = vmatpush1.msra.mxu0 0.0
    %2889 = vmatprep.subr.mxu0 0.0
    %2890 = vmatpush1.msra.mxu0 0.0
    %2891 = vmatprep.subr.mxu0 0.0
    %2892 = vmatpush1.msra.mxu0 0.0
    %2893 = vmatprep.subr.mxu0 0.0
    %2894 = vmatpush1.msra.mxu0 0.0
    %2895 = vmatprep.subr.mxu0 0.0
    %2896 = vmatpush1.msra.mxu0 0.0
    %2897 = vmatprep.subr.mxu0 0.0
    %2898 = vmatpush1.msra.mxu0 0.0
    %2899 = vmatprep.subr.mxu0 0.0
    %2900 = vmatpush1.msra.mxu0 0.0
    %2901 = vmatprep.subr.mxu0 0.0
    %2902 = vmatpush1.msra.mxu0 0.0
    %2903 = vmatprep.subr.mxu0 0.0
    %2904 = vmatpush1.msra.mxu0 0.0
    %2905 = vmatprep.subr.mxu0 0.0
    %2906 = vmatpush1.msra.mxu0 0.0
    %2907 = vmatprep.subr.mxu0 0.0
    %2908 = vmatpush1.msra.mxu0 0.0
    %2909 = vmatprep.subr.mxu0 0.0
    %2910 = vmatpush1.msra.mxu0 0.0
    %2911 = vmatprep.subr.mxu0 0.0
    %2912 = vmatpush1.msra.mxu0 0.0
    %2913 = vmatprep.subr.mxu0 0.0
    %2914 = vmatpush1.msra.mxu0 0.0
    %2915 = vmatprep.subr.mxu0 0.0
    %2916 = vmatpush1.msra.mxu0 0.0
    %2917 = vmatprep.subr.mxu0 0.0
    %2918 = vmatpush1.msra.mxu0 0.0
    %2919 = vmatprep.subr.mxu0 0.0
    %2920 = vmatpush1.msra.mxu0 0.0
    %2921 = vmatprep.subr.mxu0 0.0
    %2922 = vmatpush1.msra.mxu0 0.0
    %2923 = vmatprep.subr.mxu0 0.0
    %2924 = vmatpush1.msra.mxu0 0.0
    %2925 = vmatprep.subr.mxu0 0.0
    %2926 = vmatpush1.msra.mxu0 0.0
    %2927 = vmatprep.subr.mxu0 0.0
    %2928 = vmatpush1.msra.mxu0 0.0
    %2929 = vmatprep.subr.mxu0 0.0
    %2930 = vmatpush1.msra.mxu0 0.0
    %2931 = vmatprep.subr.mxu0 0.0
    %2932 = vmatpush1.msra.mxu0 0.0
    %2933 = vmatprep.subr.mxu0 0.0
    %2934 = vmatpush1.msra.mxu0 0.0
    %2935 = vmatprep.subr.mxu0 0.0
    %2936 = vmatpush1.msra.mxu0 0.0
    %2937 = vmatprep.mubr.f32.mxu0 0.0
    %2938 = vmatmul.mubr.f32.gmra.mrb[0].mxu0 %v2724
    %v2939 = vpop.f32.mrb[0].mxu0
    %v2940 = vadd.f32 %v1363, %v2939
    %v2941 = vpop.f32.mrb[0].mxu0
    %2942 = vdwg.mxu0
    %v2943 = vxor.u32 %v2940, 2147483648
    %v2944 = vmul.f32 %v2943, 1.442695
    %v2945 = vpow.pop %v2944
    %v2946 = vadd.f32 %v2945, 1.0
    %v2947 = vrcp.pop %v2946
    %v2948 = vmul.f32 1.0, %v2947
    %v2949 = vmul.f32 %v2801, %v2872
    %v2950 = vtanh.pop %v2949
    %v2951 = vmul.f32 %v2948, %v2950
    %v2953 = vsel %vm64, %v2951, 0
    %2955 = vmatprep.subr.mxu0 0.0
    %2956 = vmatpush1.msra.mxu0 %v1443
    %2957 = vmatprep.subr.mxu0 0.0
    %2958 = vmatpush1.msra.mxu0 %v1444
    %2959 = vmatprep.subr.mxu0 0.0
    %2960 = vmatpush1.msra.mxu0 %v1445
    %2961 = vmatprep.subr.mxu0 0.0
    %2962 = vmatpush1.msra.mxu0 %v1446
    %2963 = vmatprep.subr.mxu0 0.0
    %2964 = vmatpush1.msra.mxu0 0.0
    %2965 = vmatprep.subr.mxu0 0.0
    %2966 = vmatpush1.msra.mxu0 0.0
    %2967 = vmatprep.subr.mxu0 0.0
    %2968 = vmatpush1.msra.mxu0 0.0
    %2969 = vmatprep.subr.mxu0 0.0
    %2970 = vmatpush1.msra.mxu0 0.0
    %2971 = vmatprep.subr.mxu0 0.0
    %2972 = vmatpush1.msra.mxu0 0.0
    %2973 = vmatprep.subr.mxu0 0.0
    %2974 = vmatpush1.msra.mxu0 0.0
    %2975 = vmatprep.subr.mxu0 0.0
    %2976 = vmatpush1.msra.mxu0 0.0
    %2977 = vmatprep.subr.mxu0 0.0
    %2978 = vmatpush1.msra.mxu0 0.0
    %2979 = vmatprep.subr.mxu0 0.0
    %2980 = vmatpush1.msra.mxu0 0.0
    %2981 = vmatprep.subr.mxu0 0.0
    %2982 = vmatpush1.msra.mxu0 0.0
    %2983 = vmatprep.subr.mxu0 0.0
    %2984 = vmatpush1.msra.mxu0 0.0
    %2985 = vmatprep.subr.mxu0 0.0
    %2986 = vmatpush1.msra.mxu0 0.0
    %2987 = vmatprep.subr.mxu0 0.0
    %2988 = vmatpush1.msra.mxu0 0.0
    %2989 = vmatprep.subr.mxu0 0.0
    %2990 = vmatpush1.msra.mxu0 0.0
    %2991 = vmatprep.subr.mxu0 0.0
    %2992 = vmatpush1.msra.mxu0 0.0
    %2993 = vmatprep.subr.mxu0 0.0
    %2994 = vmatpush1.msra.mxu0 0.0
    %2995 = vmatprep.subr.mxu0 0.0
    %2996 = vmatpush1.msra.mxu0 0.0
    %2997 = vmatprep.subr.mxu0 0.0
    %2998 = vmatpush1.msra.mxu0 0.0
    %2999 = vmatprep.subr.mxu0 0.0
    %3000 = vmatpush1.msra.mxu0 0.0
    %3001 = vmatprep.subr.mxu0 0.0
    %3002 = vmatpush1.msra.mxu0 0.0
    %3003 = vmatprep.subr.mxu0 0.0
    %3004 = vmatpush1.msra.mxu0 0.0
    %3005 = vmatprep.subr.mxu0 0.0
    %3006 = vmatpush1.msra.mxu0 0.0
    %3007 = vmatprep.subr.mxu0 0.0
    %3008 = vmatpush1.msra.mxu0 0.0
    %3009 = vmatprep.subr.mxu0 0.0
    %3010 = vmatpush1.msra.mxu0 0.0
    %3011 = vmatprep.subr.mxu0 0.0
    %3012 = vmatpush1.msra.mxu0 0.0
    %3013 = vmatprep.subr.mxu0 0.0
    %3014 = vmatpush1.msra.mxu0 0.0
    %3015 = vmatprep.subr.mxu0 0.0
    %3016 = vmatpush1.msra.mxu0 0.0
    %3017 = vmatprep.subr.mxu0 0.0
    %3018 = vmatpush1.msra.mxu0 0.0
    %3019 = vmatprep.mubr.f32.mxu0 0.0
    %3020 = vmatmul.mubr.f32.gmra.mrb[0].mxu0 %v2953
    %v3021 = vpop.f32.mrb[0].mxu0
    %v3022 = vadd.f32 %v1451, %v3021
    %v3023 = vpop.f32.mrb[0].mxu0
    %3024 = vdwg.mxu0
    %v3025 = vmax.f32 %v3022, 0.0
    %v3027 = vsel %vm722, %v3025, 0
    %3029 = vmatprep.subr.mxu0 0.0
    %3030 = vmatpush1.msra.mxu0 %v1526
    %3031 = vmatprep.subr.mxu0 0.0
    %3032 = vmatpush1.msra.mxu0 %v1527
    %3033 = vmatprep.subr.mxu0 0.0
    %3034 = vmatpush1.msra.mxu0 0.0
    %3035 = vmatprep.subr.mxu0 0.0
    %3036 = vmatpush1.msra.mxu0 0.0
    %3037 = vmatprep.subr.mxu0 0.0
    %3038 = vmatpush1.msra.mxu0 0.0
    %3039 = vmatprep.subr.mxu0 0.0
    %3040 = vmatpush1.msra.mxu0 0.0
    %3041 = vmatprep.subr.mxu0 0.0
    %3042 = vmatpush1.msra.mxu0 0.0
    %3043 = vmatprep.subr.mxu0 0.0
    %3044 = vmatpush1.msra.mxu0 0.0
    %3045 = vmatprep.subr.mxu0 0.0
    %3046 = vmatpush1.msra.mxu0 0.0
    %3047 = vmatprep.subr.mxu0 0.0
    %3048 = vmatpush1.msra.mxu0 0.0
    %3049 = vmatprep.subr.mxu0 0.0
    %3050 = vmatpush1.msra.mxu0 0.0
    %3051 = vmatprep.subr.mxu0 0.0
    %3052 = vmatpush1.msra.mxu0 0.0
    %3053 = vmatprep.subr.mxu0 0.0
    %3054 = vmatpush1.msra.mxu0 0.0
    %3055 = vmatprep.subr.mxu0 0.0
    %3056 = vmatpush1.msra.mxu0 0.0
    %3057 = vmatprep.subr.mxu0 0.0
    %3058 = vmatpush1.msra.mxu0 0.0
    %3059 = vmatprep.subr.mxu0 0.0
    %3060 = vmatpush1.msra.mxu0 0.0
    %3061 = vmatprep.subr.mxu0 0.0
    %3062 = vmatpush1.msra.mxu0 0.0
    %3063 = vmatprep.subr.mxu0 0.0
    %3064 = vmatpush1.msra.mxu0 0.0
    %3065 = vmatprep.subr.mxu0 0.0
    %3066 = vmatpush1.msra.mxu0 0.0
    %3067 = vmatprep.subr.mxu0 0.0
    %3068 = vmatpush1.msra.mxu0 0.0
    %3069 = vmatprep.subr.mxu0 0.0
    %3070 = vmatpush1.msra.mxu0 0.0
    %3071 = vmatprep.subr.mxu0 0.0
    %3072 = vmatpush1.msra.mxu0 0.0
    %3073 = vmatprep.subr.mxu0 0.0
    %3074 = vmatpush1.msra.mxu0 0.0
    %3075 = vmatprep.subr.mxu0 0.0
    %3076 = vmatpush1.msra.mxu0 0.0
    %3077 = vmatprep.subr.mxu0 0.0
    %3078 = vmatpush1.msra.mxu0 0.0
    %3079 = vmatprep.subr.mxu0 0.0
    %3080 = vmatpush1.msra.mxu0 0.0
    %3081 = vmatprep.subr.mxu0 0.0
    %3082 = vmatpush1.msra.mxu0 0.0
    %3083 = vmatprep.subr.mxu0 0.0
    %3084 = vmatpush1.msra.mxu0 0.0
    %3085 = vmatprep.subr.mxu0 0.0
    %3086 = vmatpush1.msra.mxu0 0.0
    %3087 = vmatprep.subr.mxu0 0.0
    %3088 = vmatpush1.msra.mxu0 0.0
    %3089 = vmatprep.subr.mxu0 0.0
    %3090 = vmatpush1.msra.mxu0 0.0
    %3091 = vmatprep.subr.mxu0 0.0
    %3092 = vmatpush1.msra.mxu0 0.0
    %3093 = vmatprep.mubr.f32.mxu0 0.0
    %3094 = vmatmul.mubr.f32.gmra.mrb[0].mxu0 %v3027
    %v3095 = vpop.f32.mrb[0].mxu0
    %v3096 = vadd.f32 %v1532, %v3095
    %v3097 = vpop.f32.mrb[0].mxu0
    %3098 = vdwg.mxu0
    %v3099 = vmax.f32 %v3096, 0.0
    %v3101 = vsel %vm722, %v3099, 0
    %3103 = vmatprep.subr.mxu0 0.0
    %3104 = vmatpush1.msra.mxu0 %v1607
    %3105 = vmatprep.subr.mxu0 0.0
    %3106 = vmatpush1.msra.mxu0 %v1608
    %3107 = vmatprep.subr.mxu0 0.0
    %3108 = vmatpush1.msra.mxu0 0.0
    %3109 = vmatprep.subr.mxu0 0.0
    %3110 = vmatpush1.msra.mxu0 0.0
    %3111 = vmatprep.subr.mxu0 0.0
    %3112 = vmatpush1.msra.mxu0 0.0
    %3113 = vmatprep.subr.mxu0 0.0
    %3114 = vmatpush1.msra.mxu0 0.0
    %3115 = vmatprep.subr.mxu0 0.0
    %3116 = vmatpush1.msra.mxu0 0.0
    %3117 = vmatprep.subr.mxu0 0.0
    %3118 = vmatpush1.msra.mxu0 0.0
    %3119 = vmatprep.subr.mxu0 0.0
    %3120 = vmatpush1.msra.mxu0 0.0
    %3121 = vmatprep.subr.mxu0 0.0
    %3122 = vmatpush1.msra.mxu0 0.0
    %3123 = vmatprep.subr.mxu0 0.0
    %3124 = vmatpush1.msra.mxu0 0.0
    %3125 = vmatprep.subr.mxu0 0.0
    %3126 = vmatpush1.msra.mxu0 0.0
    %3127 = vmatprep.subr.mxu0 0.0
    %3128 = vmatpush1.msra.mxu0 0.0
    %3129 = vmatprep.subr.mxu0 0.0
    %3130 = vmatpush1.msra.mxu0 0.0
    %3131 = vmatprep.subr.mxu0 0.0
    %3132 = vmatpush1.msra.mxu0 0.0
    %3133 = vmatprep.subr.mxu0 0.0
    %3134 = vmatpush1.msra.mxu0 0.0
    %3135 = vmatprep.subr.mxu0 0.0
    %3136 = vmatpush1.msra.mxu0 0.0
    %3137 = vmatprep.subr.mxu0 0.0
    %3138 = vmatpush1.msra.mxu0 0.0
    %3139 = vmatprep.subr.mxu0 0.0
    %3140 = vmatpush1.msra.mxu0 0.0
    %3141 = vmatprep.subr.mxu0 0.0
    %3142 = vmatpush1.msra.mxu0 0.0
    %3143 = vmatprep.subr.mxu0 0.0
    %3144 = vmatpush1.msra.mxu0 0.0
    %3145 = vmatprep.subr.mxu0 0.0
    %3146 = vmatpush1.msra.mxu0 0.0
    %3147 = vmatprep.subr.mxu0 0.0
    %3148 = vmatpush1.msra.mxu0 0.0
    %3149 = vmatprep.subr.mxu0 0.0
    %3150 = vmatpush1.msra.mxu0 0.0
    %3151 = vmatprep.subr.mxu0 0.0
    %3152 = vmatpush1.msra.mxu0 0.0
    %3153 = vmatprep.subr.mxu0 0.0
    %3154 = vmatpush1.msra.mxu0 0.0
    %3155 = vmatprep.subr.mxu0 0.0
    %3156 = vmatpush1.msra.mxu0 0.0
    %3157 = vmatprep.subr.mxu0 0.0
    %3158 = vmatpush1.msra.mxu0 0.0
    %3159 = vmatprep.subr.mxu0 0.0
    %3160 = vmatpush1.msra.mxu0 0.0
    %3161 = vmatprep.subr.mxu0 0.0
    %3162 = vmatpush1.msra.mxu0 0.0
    %3163 = vmatprep.subr.mxu0 0.0
    %3164 = vmatpush1.msra.mxu0 0.0
    %3165 = vmatprep.subr.mxu0 0.0
    %3166 = vmatpush1.msra.mxu0 0.0
    %3167 = vmatprep.mubr.f32.mxu0 0.0
    %3168 = vmatmul.mubr.f32.gmra.mrb[0].mxu0 %v3101
    %v3169 = vpop.f32.mrb[0].mxu0
    %v3170 = vadd.f32 %v1613, %v3169
    %v3171 = vpop.f32.mrb[0].mxu0
    %3172 = vdwg.mxu0
    %v3173 = vmax.f32 %v3170, 0.0
    %v3174 = vld [vmem:[#allocation7 + $0x2d0] sm:$0x1]
    %v3175 = vld [vmem:[#allocation7 + $0x270] sm:$0xff]
    %v3176 = vld [vmem:[#allocation7 + $0x278] sm:$0xff]
    %v3177 = vld [vmem:[#allocation7 + $0x280] sm:$0xff]
    %v3178 = vld [vmem:[#allocation7 + $0x288] sm:$0xff]
    %v3179 = vlaneseq
    %v3180 = vshrl.u32 %v3179, 7
    %v3181 = vsub.s32 0, %v3180
    %v3182 = vrot.slane %v3174, %v3181
    %v3184 = vsel %vm64, %v3173, 0
    %3186 = vmatprep.subr.mxu0 0.0
    %3187 = vmatpush1.msra.mxu0 %v3175
    %3188 = vmatprep.subr.mxu0 0.0
    %3189 = vmatpush1.msra.mxu0 %v3176
    %3190 = vmatprep.subr.mxu0 0.0
    %3191 = vmatpush1.msra.mxu0 %v3177
    %3192 = vmatprep.subr.mxu0 0.0
    %3193 = vmatpush1.msra.mxu0 %v3178
    %3194 = vmatprep.subr.mxu0 0.0
    %3195 = vmatpush1.msra.mxu0 0.0
    %3196 = vmatprep.subr.mxu0 0.0
    %3197 = vmatpush1.msra.mxu0 0.0
    %3198 = vmatprep.subr.mxu0 0.0
    %3199 = vmatpush1.msra.mxu0 0.0
    %3200 = vmatprep.subr.mxu0 0.0
    %3201 = vmatpush1.msra.mxu0 0.0
    %3202 = vmatprep.subr.mxu0 0.0
    %3203 = vmatpush1.msra.mxu0 0.0
    %3204 = vmatprep.subr.mxu0 0.0
    %3205 = vmatpush1.msra.mxu0 0.0
    %3206 = vmatprep.subr.mxu0 0.0
    %3207 = vmatpush1.msra.mxu0 0.0
    %3208 = vmatprep.subr.mxu0 0.0
    %3209 = vmatpush1.msra.mxu0 0.0
    %3210 = vmatprep.subr.mxu0 0.0
    %3211 = vmatpush1.msra.mxu0 0.0
    %3212 = vmatprep.subr.mxu0 0.0
    %3213 = vmatpush1.msra.mxu0 0.0
    %3214 = vmatprep.subr.mxu0 0.0
    %3215 = vmatpush1.msra.mxu0 0.0
    %3216 = vmatprep.subr.mxu0 0.0
    %3217 = vmatpush1.msra.mxu0 0.0
    %3218 = vmatprep.subr.mxu0 0.0
    %3219 = vmatpush1.msra.mxu0 0.0
    %3220 = vmatprep.subr.mxu0 0.0
    %3221 = vmatpush1.msra.mxu0 0.0
    %3222 = vmatprep.subr.mxu0 0.0
    %3223 = vmatpush1.msra.mxu0 0.0
    %3224 = vmatprep.subr.mxu0 0.0
    %3225 = vmatpush1.msra.mxu0 0.0
    %3226 = vmatprep.subr.mxu0 0.0
    %3227 = vmatpush1.msra.mxu0 0.0
    %3228 = vmatprep.subr.mxu0 0.0
    %3229 = vmatpush1.msra.mxu0 0.0
    %3230 = vmatprep.subr.mxu0 0.0
    %3231 = vmatpush1.msra.mxu0 0.0
    %3232 = vmatprep.subr.mxu0 0.0
    %3233 = vmatpush1.msra.mxu0 0.0
    %3234 = vmatprep.subr.mxu0 0.0
    %3235 = vmatpush1.msra.mxu0 0.0
    %3236 = vmatprep.subr.mxu0 0.0
    %3237 = vmatpush1.msra.mxu0 0.0
    %3238 = vmatprep.subr.mxu0 0.0
    %3239 = vmatpush1.msra.mxu0 0.0
    %3240 = vmatprep.subr.mxu0 0.0
    %3241 = vmatpush1.msra.mxu0 0.0
    %3242 = vmatprep.subr.mxu0 0.0
    %3243 = vmatpush1.msra.mxu0 0.0
    %3244 = vmatprep.subr.mxu0 0.0
    %3245 = vmatpush1.msra.mxu0 0.0
    %3246 = vmatprep.subr.mxu0 0.0
    %3247 = vmatpush1.msra.mxu0 0.0
    %3248 = vmatprep.subr.mxu0 0.0
    %3249 = vmatpush1.msra.mxu0 0.0
    %3250 = vmatprep.mubr.f32.mxu0 0.0
    %3251 = vmatmul.mubr.f32.gmra.mrb[0].mxu0 %v3184
    %v3252 = vpop.f32.mrb[0].mxu0
    %v3253 = vadd.f32 %v3182, %v3252
    %v3254 = vpop.f32.mrb[0].mxu0
    %3255 = vdwg.mxu0
    %v3256 = vmax.f32 %v3253, 0.0
    %v3257 = vld [vmem:[#allocation7 + $0x290] sm:$0xff]
    %v3258 = vld [vmem:[#allocation7 + $0x298] sm:$0xff]
    %v3259 = vld [vmem:[#allocation7 + $0x2a0] sm:$0xff]
    %v3260 = vld [vmem:[#allocation7 + $0x2a8] sm:$0xff]
    %v3261 = vld [vmem:[#allocation7 + $0x2b0] sm:$0xff]
    %v3262 = vld [vmem:[#allocation7 + $0x2b8] sm:$0xff]
    %v3263 = vld [vmem:[#allocation7 + $0x2c0] sm:$0xff]
    %v3264 = vld [vmem:[#allocation7 + $0x2c8] sm:$0xff]
    %v3266 = vsel %vm147, %v3256, 0
    %3268 = vmatprep.subr.mxu0 0.0
    %3269 = vmatpush1.msra.mxu0 %v3257
    %3270 = vmatprep.subr.mxu0 0.0
    %3271 = vmatpush1.msra.mxu0 %v3258
    %3272 = vmatprep.subr.mxu0 0.0
    %3273 = vmatpush1.msra.mxu0 %v3259
    %3274 = vmatprep.subr.mxu0 0.0
    %3275 = vmatpush1.msra.mxu0 %v3260
    %3276 = vmatprep.subr.mxu0 0.0
    %3277 = vmatpush1.msra.mxu0 %v3261
    %3278 = vmatprep.subr.mxu0 0.0
    %3279 = vmatpush1.msra.mxu0 %v3262
    %3280 = vmatprep.subr.mxu0 0.0
    %3281 = vmatpush1.msra.mxu0 %v3263
    %3282 = vmatprep.subr.mxu0 0.0
    %3283 = vmatpush1.msra.mxu0 %v3264
    %3284 = vmatprep.subr.mxu0 0.0
    %3285 = vmatpush1.msra.mxu0 0.0
    %3286 = vmatprep.subr.mxu0 0.0
    %3287 = vmatpush1.msra.mxu0 0.0
    %3288 = vmatprep.subr.mxu0 0.0
    %3289 = vmatpush1.msra.mxu0 0.0
    %3290 = vmatprep.subr.mxu0 0.0
    %3291 = vmatpush1.msra.mxu0 0.0
    %3292 = vmatprep.subr.mxu0 0.0
    %3293 = vmatpush1.msra.mxu0 0.0
    %3294 = vmatprep.subr.mxu0 0.0
    %3295 = vmatpush1.msra.mxu0 0.0
    %3296 = vmatprep.subr.mxu0 0.0
    %3297 = vmatpush1.msra.mxu0 0.0
    %3298 = vmatprep.subr.mxu0 0.0
    %3299 = vmatpush1.msra.mxu0 0.0
    %3300 = vmatprep.subr.mxu0 0.0
    %3301 = vmatpush1.msra.mxu0 0.0
    %3302 = vmatprep.subr.mxu0 0.0
    %3303 = vmatpush1.msra.mxu0 0.0
    %3304 = vmatprep.subr.mxu0 0.0
    %3305 = vmatpush1.msra.mxu0 0.0
    %3306 = vmatprep.subr.mxu0 0.0
    %3307 = vmatpush1.msra.mxu0 0.0
    %3308 = vmatprep.subr.mxu0 0.0
    %3309 = vmatpush1.msra.mxu0 0.0
    %3310 = vmatprep.subr.mxu0 0.0
    %3311 = vmatpush1.msra.mxu0 0.0
    %3312 = vmatprep.subr.mxu0 0.0
    %3313 = vmatpush1.msra.mxu0 0.0
    %3314 = vmatprep.subr.mxu0 0.0
    %3315 = vmatpush1.msra.mxu0 0.0
    %3316 = vmatprep.subr.mxu0 0.0
    %3317 = vmatpush1.msra.mxu0 0.0
    %3318 = vmatprep.subr.mxu0 0.0
    %3319 = vmatpush1.msra.mxu0 0.0
    %3320 = vmatprep.subr.mxu0 0.0
    %3321 = vmatpush1.msra.mxu0 0.0
    %3322 = vmatprep.subr.mxu0 0.0
    %3323 = vmatpush1.msra.mxu0 0.0
    %3324 = vmatprep.subr.mxu0 0.0
    %3325 = vmatpush1.msra.mxu0 0.0
    %3326 = vmatprep.subr.mxu0 0.0
    %3327 = vmatpush1.msra.mxu0 0.0
    %3328 = vmatprep.subr.mxu0 0.0
    %3329 = vmatpush1.msra.mxu0 0.0
    %3330 = vmatprep.subr.mxu0 0.0
    %3331 = vmatpush1.msra.mxu0 0.0
    %3332 = vmatprep.mubr.f32.mxu0 0.0
    %3333 = vmatmul.mubr.f32.gmra.mrb[0].mxu0 %v3266
    %v3334 = vpop.f32.mrb[0].mxu0
    %v3335 = vadd.f32 %v3182, %v3334
    %v3336 = vpop.f32.mrb[0].mxu0
    %3337 = vdwg.mxu0
    %v3338 = vmax.f32 %v3335, 0.0
    %3340 = vrot.lane.b32.xlu0 %v3338, 96
    %v3341 = vpop.permute.xlu0 %3340
    %3343 = vmatprep.subr.mxu0 0.0
    %3344 = vmatpush1.msra.mxu0 %v3341
    %3345 = vmatprep.subr.mxu0 0.0
    %3346 = vmatpush1.msra.mxu0 0.0
    %3347 = vmatprep.subr.mxu0 0.0
    %3348 = vmatpush1.msra.mxu0 0.0
    %3349 = vmatprep.subr.mxu0 0.0
    %3350 = vmatpush1.msra.mxu0 0.0
    %3351 = vmatprep.subr.mxu0 0.0
    %3352 = vmatpush1.msra.mxu0 0.0
    %3353 = vmatprep.subr.mxu0 0.0
    %3354 = vmatpush1.msra.mxu0 0.0
    %3355 = vmatprep.subr.mxu0 0.0
    %3356 = vmatpush1.msra.mxu0 0.0
    %3357 = vmatprep.subr.mxu0 0.0
    %3358 = vmatpush1.msra.mxu0 0.0
    %3359 = vmatprep.subr.mxu0 0.0
    %3360 = vmatpush1.msra.mxu0 0.0
    %3361 = vmatprep.subr.mxu0 0.0
    %3362 = vmatpush1.msra.mxu0 0.0
    %3363 = vmatprep.subr.mxu0 0.0
    %3364 = vmatpush1.msra.mxu0 0.0
    %3365 = vmatprep.subr.mxu0 0.0
    %3366 = vmatpush1.msra.mxu0 0.0
    %3367 = vmatprep.subr.mxu0 0.0
    %3368 = vmatpush1.msra.mxu0 0.0
    %3369 = vmatprep.subr.mxu0 0.0
    %3370 = vmatpush1.msra.mxu0 0.0
    %3371 = vmatprep.subr.mxu0 0.0
    %3372 = vmatpush1.msra.mxu0 0.0
    %3373 = vmatprep.subr.mxu0 0.0
    %3374 = vmatpush1.msra.mxu0 0.0
    %3375 = vmatprep.subr.mxu0 0.0
    %3376 = vmatpush1.msra.mxu0 0.0
    %3377 = vmatprep.subr.mxu0 0.0
    %3378 = vmatpush1.msra.mxu0 0.0
    %3379 = vmatprep.subr.mxu0 0.0
    %3380 = vmatpush1.msra.mxu0 0.0
    %3381 = vmatprep.subr.mxu0 0.0
    %3382 = vmatpush1.msra.mxu0 0.0
    %3383 = vmatprep.subr.mxu0 0.0
    %3384 = vmatpush1.msra.mxu0 0.0
    %3385 = vmatprep.subr.mxu0 0.0
    %3386 = vmatpush1.msra.mxu0 0.0
    %3387 = vmatprep.subr.mxu0 0.0
    %3388 = vmatpush1.msra.mxu0 0.0
    %3389 = vmatprep.subr.mxu0 0.0
    %3390 = vmatpush1.msra.mxu0 0.0
    %3391 = vmatprep.subr.mxu0 0.0
    %3392 = vmatpush1.msra.mxu0 0.0
    %3393 = vmatprep.subr.mxu0 0.0
    %3394 = vmatpush1.msra.mxu0 0.0
    %3395 = vmatprep.subr.mxu0 0.0
    %3396 = vmatpush1.msra.mxu0 0.0
    %3397 = vmatprep.subr.mxu0 0.0
    %3398 = vmatpush1.msra.mxu0 0.0
    %3399 = vmatprep.subr.mxu0 0.0
    %3400 = vmatpush1.msra.mxu0 0.0
    %3401 = vmatprep.subr.mxu0 0.0
    %3402 = vmatpush1.msra.mxu0 0.0
    %3403 = vmatprep.subr.mxu0 0.0
    %3404 = vmatpush1.msra.mxu0 0.0
    %3405 = vmatprep.subr.mxu0 0.0
    %3406 = vmatpush1.msra.mxu0 0.0
    %3407 = vmatprep.mubr.f32.mxu0 0.0
    %3408 = vmatmul.mubr.f32.gmra.mrb[0].mxu0 %v231
    %v3409 = vpop.f32.mrb[0].mxu0
    %v3410 = vadd.f32 0.0, %v3409
    %v3411 = vpop.f32.mrb[0].mxu0
    %3412 = vdwg.mxu0
    %3413 = vmatprep.subr.mxu0 0.0
    %3414 = vmatpush1.msra.mxu0 %v3338
    %3415 = vmatprep.subr.mxu0 0.0
    %3416 = vmatpush1.msra.mxu0 0.0
    %3417 = vmatprep.subr.mxu0 0.0
    %3418 = vmatpush1.msra.mxu0 0.0
    %3419 = vmatprep.subr.mxu0 0.0
    %3420 = vmatpush1.msra.mxu0 0.0
    %3421 = vmatprep.subr.mxu0 0.0
    %3422 = vmatpush1.msra.mxu0 0.0
    %3423 = vmatprep.subr.mxu0 0.0
    %3424 = vmatpush1.msra.mxu0 0.0
    %3425 = vmatprep.subr.mxu0 0.0
    %3426 = vmatpush1.msra.mxu0 0.0
    %3427 = vmatprep.subr.mxu0 0.0
    %3428 = vmatpush1.msra.mxu0 0.0
    %3429 = vmatprep.subr.mxu0 0.0
    %3430 = vmatpush1.msra.mxu0 0.0
    %3431 = vmatprep.subr.mxu0 0.0
    %3432 = vmatpush1.msra.mxu0 0.0
    %3433 = vmatprep.subr.mxu0 0.0
    %3434 = vmatpush1.msra.mxu0 0.0
    %3435 = vmatprep.subr.mxu0 0.0
    %3436 = vmatpush1.msra.mxu0 0.0
    %3437 = vmatprep.subr.mxu0 0.0
    %3438 = vmatpush1.msra.mxu0 0.0
    %3439 = vmatprep.subr.mxu0 0.0
    %3440 = vmatpush1.msra.mxu0 0.0
    %3441 = vmatprep.subr.mxu0 0.0
    %3442 = vmatpush1.msra.mxu0 0.0
    %3443 = vmatprep.subr.mxu0 0.0
    %3444 = vmatpush1.msra.mxu0 0.0
    %3445 = vmatprep.subr.mxu0 0.0
    %3446 = vmatpush1.msra.mxu0 0.0
    %3447 = vmatprep.subr.mxu0 0.0
    %3448 = vmatpush1.msra.mxu0 0.0
    %3449 = vmatprep.subr.mxu0 0.0
    %3450 = vmatpush1.msra.mxu0 0.0
    %3451 = vmatprep.subr.mxu0 0.0
    %3452 = vmatpush1.msra.mxu0 0.0
    %3453 = vmatprep.subr.mxu0 0.0
    %3454 = vmatpush1.msra.mxu0 0.0
    %3455 = vmatprep.subr.mxu0 0.0
    %3456 = vmatpush1.msra.mxu0 0.0
    %3457 = vmatprep.subr.mxu0 0.0
    %3458 = vmatpush1.msra.mxu0 0.0
    %3459 = vmatprep.subr.mxu0 0.0
    %3460 = vmatpush1.msra.mxu0 0.0
    %3461 = vmatprep.subr.mxu0 0.0
    %3462 = vmatpush1.msra.mxu0 0.0
    %3463 = vmatprep.subr.mxu0 0.0
    %3464 = vmatpush1.msra.mxu0 0.0
    %3465 = vmatprep.subr.mxu0 0.0
    %3466 = vmatpush1.msra.mxu0 0.0
    %3467 = vmatprep.subr.mxu0 0.0
    %3468 = vmatpush1.msra.mxu0 0.0
    %3469 = vmatprep.subr.mxu0 0.0
    %3470 = vmatpush1.msra.mxu0 0.0
    %3471 = vmatprep.subr.mxu0 0.0
    %3472 = vmatpush1.msra.mxu0 0.0
    %3473 = vmatprep.subr.mxu0 0.0
    %3474 = vmatpush1.msra.mxu0 0.0
    %3475 = vmatprep.subr.mxu0 0.0
    %3476 = vmatpush1.msra.mxu0 0.0
    %3477 = vmatprep.mubr.f32.mxu0 0.0
    %3478 = vmatmul.mubr.f32.gmra.mrb[0].mxu0 %v304
    %v3479 = vpop.f32.mrb[0].mxu0
    %v3480 = vadd.f32 %v3410, %v3479
    %v3481 = vpop.f32.mrb[0].mxu0
    %3482 = vdwg.mxu0
    %v3483 = vld [vmem:[#allocation7 + $0x2d8] sm:$0xff]
    %v3484 = vld [vmem:[#allocation7 + $0x2e0] sm:$0xff]
    %v3485 = vld [vmem:[#allocation7 + $0x2e8] sm:$0xff]
    %v3486 = vld [vmem:[#allocation7 + $0x2f0] sm:$0xff]
    %v3487 = vld [vmem:[#allocation7 + $0x338] sm:$0x1]
    %v3488 = vlaneseq
    %v3489 = vshrl.u32 %v3488, 7
    %v3490 = vsub.s32 0, %v3489
    %v3491 = vrot.slane %v3487, %v3490
    %v3493 = vsel %vm64, %v3480, 0
    %3495 = vmatprep.subr.mxu0 0.0
    %3496 = vmatpush1.msra.mxu0 %v3483
    %3497 = vmatprep.subr.mxu0 0.0
    %3498 = vmatpush1.msra.mxu0 %v3484
    %3499 = vmatprep.subr.mxu0 0.0
    %3500 = vmatpush1.msra.mxu0 %v3485
    %3501 = vmatprep.subr.mxu0 0.0
    %3502 = vmatpush1.msra.mxu0 %v3486
    %3503 = vmatprep.subr.mxu0 0.0
    %3504 = vmatpush1.msra.mxu0 0.0
    %3505 = vmatprep.subr.mxu0 0.0
    %3506 = vmatpush1.msra.mxu0 0.0
    %3507 = vmatprep.subr.mxu0 0.0
    %3508 = vmatpush1.msra.mxu0 0.0
    %3509 = vmatprep.subr.mxu0 0.0
    %3510 = vmatpush1.msra.mxu0 0.0
    %3511 = vmatprep.subr.mxu0 0.0
    %3512 = vmatpush1.msra.mxu0 0.0
    %3513 = vmatprep.subr.mxu0 0.0
    %3514 = vmatpush1.msra.mxu0 0.0
    %3515 = vmatprep.subr.mxu0 0.0
    %3516 = vmatpush1.msra.mxu0 0.0
    %3517 = vmatprep.subr.mxu0 0.0
    %3518 = vmatpush1.msra.mxu0 0.0
    %3519 = vmatprep.subr.mxu0 0.0
    %3520 = vmatpush1.msra.mxu0 0.0
    %3521 = vmatprep.subr.mxu0 0.0
    %3522 = vmatpush1.msra.mxu0 0.0
    %3523 = vmatprep.subr.mxu0 0.0
    %3524 = vmatpush1.msra.mxu0 0.0
    %3525 = vmatprep.subr.mxu0 0.0
    %3526 = vmatpush1.msra.mxu0 0.0
    %3527 = vmatprep.subr.mxu0 0.0
    %3528 = vmatpush1.msra.mxu0 0.0
    %3529 = vmatprep.subr.mxu0 0.0
    %3530 = vmatpush1.msra.mxu0 0.0
    %3531 = vmatprep.subr.mxu0 0.0
    %3532 = vmatpush1.msra.mxu0 0.0
    %3533 = vmatprep.subr.mxu0 0.0
    %3534 = vmatpush1.msra.mxu0 0.0
    %3535 = vmatprep.subr.mxu0 0.0
    %3536 = vmatpush1.msra.mxu0 0.0
    %3537 = vmatprep.subr.mxu0 0.0
    %3538 = vmatpush1.msra.mxu0 0.0
    %3539 = vmatprep.subr.mxu0 0.0
    %3540 = vmatpush1.msra.mxu0 0.0
    %3541 = vmatprep.subr.mxu0 0.0
    %3542 = vmatpush1.msra.mxu0 0.0
    %3543 = vmatprep.subr.mxu0 0.0
    %3544 = vmatpush1.msra.mxu0 0.0
    %3545 = vmatprep.subr.mxu0 0.0
    %3546 = vmatpush1.msra.mxu0 0.0
    %3547 = vmatprep.subr.mxu0 0.0
    %3548 = vmatpush1.msra.mxu0 0.0
    %3549 = vmatprep.subr.mxu0 0.0
    %3550 = vmatpush1.msra.mxu0 0.0
    %3551 = vmatprep.subr.mxu0 0.0
    %3552 = vmatpush1.msra.mxu0 0.0
    %3553 = vmatprep.subr.mxu0 0.0
    %3554 = vmatpush1.msra.mxu0 0.0
    %3555 = vmatprep.subr.mxu0 0.0
    %3556 = vmatpush1.msra.mxu0 0.0
    %3557 = vmatprep.subr.mxu0 0.0
    %3558 = vmatpush1.msra.mxu0 0.0
    %3559 = vmatprep.mubr.f32.mxu0 0.0
    %3560 = vmatmul.mubr.f32.gmra.mrb[0].mxu0 %v3493
    %v3561 = vpop.f32.mrb[0].mxu0
    %v3562 = vadd.f32 %v3491, %v3561
    %v3563 = vpop.f32.mrb[0].mxu0
    %3564 = vdwg.mxu0
    %v3565 = vxor.u32 %v3562, 2147483648
    %v3566 = vmul.f32 %v3565, 1.442695
    %v3567 = vpow.pop %v3566
    %v3568 = vadd.f32 %v3567, 1.0
    %v3569 = vrcp.pop %v3568
    %v3570 = vmul.f32 1.0, %v3569
    %v3571 = vld [vmem:[#allocation7 + $0x2f8] sm:$0xff]
    %v3572 = vld [vmem:[#allocation7 + $0x300] sm:$0xff]
    %v3573 = vld [vmem:[#allocation7 + $0x308] sm:$0xff]
    %v3574 = vld [vmem:[#allocation7 + $0x310] sm:$0xff]
    %v3575 = vld [vmem:[#allocation7 + $0x340] sm:$0x1]
    %v3576 = vlaneseq
    %v3577 = vshrl.u32 %v3576, 7
    %v3578 = vsub.s32 0, %v3577
    %v3579 = vrot.slane %v3575, %v3578
    %3580 = vmatprep.subr.mxu0 0.0
    %3581 = vmatpush1.msra.mxu0 %v3571
    %3582 = vmatprep.subr.mxu0 0.0
    %3583 = vmatpush1.msra.mxu0 %v3572
    %3584 = vmatprep.subr.mxu0 0.0
    %3585 = vmatpush1.msra.mxu0 %v3573
    %3586 = vmatprep.subr.mxu0 0.0
    %3587 = vmatpush1.msra.mxu0 %v3574
    %3588 = vmatprep.subr.mxu0 0.0
    %3589 = vmatpush1.msra.mxu0 0.0
    %3590 = vmatprep.subr.mxu0 0.0
    %3591 = vmatpush1.msra.mxu0 0.0
    %3592 = vmatprep.subr.mxu0 0.0
    %3593 = vmatpush1.msra.mxu0 0.0
    %3594 = vmatprep.subr.mxu0 0.0
    %3595 = vmatpush1.msra.mxu0 0.0
    %3596 = vmatprep.subr.mxu0 0.0
    %3597 = vmatpush1.msra.mxu0 0.0
    %3598 = vmatprep.subr.mxu0 0.0
    %3599 = vmatpush1.msra.mxu0 0.0
    %3600 = vmatprep.subr.mxu0 0.0
    %3601 = vmatpush1.msra.mxu0 0.0
    %3602 = vmatprep.subr.mxu0 0.0
    %3603 = vmatpush1.msra.mxu0 0.0
    %3604 = vmatprep.subr.mxu0 0.0
    %3605 = vmatpush1.msra.mxu0 0.0
    %3606 = vmatprep.subr.mxu0 0.0
    %3607 = vmatpush1.msra.mxu0 0.0
    %3608 = vmatprep.subr.mxu0 0.0
    %3609 = vmatpush1.msra.mxu0 0.0
    %3610 = vmatprep.subr.mxu0 0.0
    %3611 = vmatpush1.msra.mxu0 0.0
    %3612 = vmatprep.subr.mxu0 0.0
    %3613 = vmatpush1.msra.mxu0 0.0
    %3614 = vmatprep.subr.mxu0 0.0
    %3615 = vmatpush1.msra.mxu0 0.0
    %3616 = vmatprep.subr.mxu0 0.0
    %3617 = vmatpush1.msra.mxu0 0.0
    %3618 = vmatprep.subr.mxu0 0.0
    %3619 = vmatpush1.msra.mxu0 0.0
    %3620 = vmatprep.subr.mxu0 0.0
    %3621 = vmatpush1.msra.mxu0 0.0
    %3622 = vmatprep.subr.mxu0 0.0
    %3623 = vmatpush1.msra.mxu0 0.0
    %3624 = vmatprep.subr.mxu0 0.0
    %3625 = vmatpush1.msra.mxu0 0.0
    %3626 = vmatprep.subr.mxu0 0.0
    %3627 = vmatpush1.msra.mxu0 0.0
    %3628 = vmatprep.subr.mxu0 0.0
    %3629 = vmatpush1.msra.mxu0 0.0
    %3630 = vmatprep.subr.mxu0 0.0
    %3631 = vmatpush1.msra.mxu0 0.0
    %3632 = vmatprep.subr.mxu0 0.0
    %3633 = vmatpush1.msra.mxu0 0.0
    %3634 = vmatprep.subr.mxu0 0.0
    %3635 = vmatpush1.msra.mxu0 0.0
    %3636 = vmatprep.subr.mxu0 0.0
    %3637 = vmatpush1.msra.mxu0 0.0
    %3638 = vmatprep.subr.mxu0 0.0
    %3639 = vmatpush1.msra.mxu0 0.0
    %3640 = vmatprep.subr.mxu0 0.0
    %3641 = vmatpush1.msra.mxu0 0.0
    %3642 = vmatprep.subr.mxu0 0.0
    %3643 = vmatpush1.msra.mxu0 0.0
    %3644 = vmatprep.mubr.f32.mxu0 0.0
    %3645 = vmatmul.mubr.f32.gmra.mrb[0].mxu0 %v3493
    %v3646 = vpop.f32.mrb[0].mxu0
    %v3647 = vadd.f32 %v3579, %v3646
    %v3648 = vpop.f32.mrb[0].mxu0
    %3649 = vdwg.mxu0
    %v3650 = vtanh.pop %v3647
    %v3651 = vld [vmem:[#allocation7 + $0x318] sm:$0xff]
    %v3652 = vld [vmem:[#allocation7 + $0x320] sm:$0xff]
    %v3653 = vld [vmem:[#allocation7 + $0x328] sm:$0xff]
    %v3654 = vld [vmem:[#allocation7 + $0x330] sm:$0xff]
    %v3655 = vld [vmem:[#allocation7 + $0x348] sm:$0x1]
    %v3656 = vlaneseq
    %v3657 = vshrl.u32 %v3656, 7
    %v3658 = vsub.s32 0, %v3657
    %v3659 = vrot.slane %v3655, %v3658
    %3660 = vmatprep.subr.mxu0 0.0
    %3661 = vmatpush1.msra.mxu0 %v3651
    %3662 = vmatprep.subr.mxu0 0.0
    %3663 = vmatpush1.msra.mxu0 %v3652
    %3664 = vmatprep.subr.mxu0 0.0
    %3665 = vmatpush1.msra.mxu0 %v3653
    %3666 = vmatprep.subr.mxu0 0.0
    %3667 = vmatpush1.msra.mxu0 %v3654
    %3668 = vmatprep.subr.mxu0 0.0
    %3669 = vmatpush1.msra.mxu0 0.0
    %3670 = vmatprep.subr.mxu0 0.0
    %3671 = vmatpush1.msra.mxu0 0.0
    %3672 = vmatprep.subr.mxu0 0.0
    %3673 = vmatpush1.msra.mxu0 0.0
    %3674 = vmatprep.subr.mxu0 0.0
    %3675 = vmatpush1.msra.mxu0 0.0
    %3676 = vmatprep.subr.mxu0 0.0
    %3677 = vmatpush1.msra.mxu0 0.0
    %3678 = vmatprep.subr.mxu0 0.0
    %3679 = vmatpush1.msra.mxu0 0.0
    %3680 = vmatprep.subr.mxu0 0.0
    %3681 = vmatpush1.msra.mxu0 0.0
    %3682 = vmatprep.subr.mxu0 0.0
    %3683 = vmatpush1.msra.mxu0 0.0
    %3684 = vmatprep.subr.mxu0 0.0
    %3685 = vmatpush1.msra.mxu0 0.0
    %3686 = vmatprep.subr.mxu0 0.0
    %3687 = vmatpush1.msra.mxu0 0.0
    %3688 = vmatprep.subr.mxu0 0.0
    %3689 = vmatpush1.msra.mxu0 0.0
    %3690 = vmatprep.subr.mxu0 0.0
    %3691 = vmatpush1.msra.mxu0 0.0
    %3692 = vmatprep.subr.mxu0 0.0
    %3693 = vmatpush1.msra.mxu0 0.0
    %3694 = vmatprep.subr.mxu0 0.0
    %3695 = vmatpush1.msra.mxu0 0.0
    %3696 = vmatprep.subr.mxu0 0.0
    %3697 = vmatpush1.msra.mxu0 0.0
    %3698 = vmatprep.subr.mxu0 0.0
    %3699 = vmatpush1.msra.mxu0 0.0
    %3700 = vmatprep.subr.mxu0 0.0
    %3701 = vmatpush1.msra.mxu0 0.0
    %3702 = vmatprep.subr.mxu0 0.0
    %3703 = vmatpush1.msra.mxu0 0.0
    %3704 = vmatprep.subr.mxu0 0.0
    %3705 = vmatpush1.msra.mxu0 0.0
    %3706 = vmatprep.subr.mxu0 0.0
    %3707 = vmatpush1.msra.mxu0 0.0
    %3708 = vmatprep.subr.mxu0 0.0
    %3709 = vmatpush1.msra.mxu0 0.0
    %3710 = vmatprep.subr.mxu0 0.0
    %3711 = vmatpush1.msra.mxu0 0.0
    %3712 = vmatprep.subr.mxu0 0.0
    %3713 = vmatpush1.msra.mxu0 0.0
    %3714 = vmatprep.subr.mxu0 0.0
    %3715 = vmatpush1.msra.mxu0 0.0
    %3716 = vmatprep.subr.mxu0 0.0
    %3717 = vmatpush1.msra.mxu0 0.0
    %3718 = vmatprep.subr.mxu0 0.0
    %3719 = vmatpush1.msra.mxu0 0.0
    %3720 = vmatprep.subr.mxu0 0.0
    %3721 = vmatpush1.msra.mxu0 0.0
    %3722 = vmatprep.subr.mxu0 0.0
    %3723 = vmatpush1.msra.mxu0 0.0
    %3724 = vmatprep.mubr.f32.mxu0 0.0
    %3725 = vmatmul.mubr.f32.gmra.mrb[0].mxu0 %v3493
    %v3726 = vpop.f32.mrb[0].mxu0
    %v3727 = vadd.f32 %v3659, %v3726
    %v3728 = vpop.f32.mrb[0].mxu0
    %3729 = vdwg.mxu0
    %v3730 = vxor.u32 %v3727, 2147483648
    %v3731 = vmul.f32 %v3730, 1.442695
    %v3732 = vpow.pop %v3731
    %v3733 = vadd.f32 %v3732, 1.0
    %v3734 = vrcp.pop %v3733
    %v3735 = vmul.f32 1.0, %v3734
    %v3736 = vmul.f32 %v3570, %v3650
    %v3737 = vtanh.pop %v3736
    %v3738 = vmul.f32 %v3735, %v3737
    %v3739 = vld [vmem:[#allocation7 + $0x350] sm:$0xff]
    %v3740 = vld [vmem:[#allocation7 + $0x358] sm:$0xff]
    %v3741 = vld [vmem:[#allocation7 + $0x360] sm:$0xff]
    %v3742 = vld [vmem:[#allocation7 + $0x368] sm:$0xff]
    %v3743 = vld [vmem:[#allocation7 + $0x370] sm:$0x1]
    %v3744 = vlaneseq
    %v3745 = vshrl.u32 %v3744, 7
    %v3746 = vsub.s32 0, %v3745
    %v3747 = vrot.slane %v3743, %v3746
    %v3749 = vsel %vm64, %v3738, 0
    %3751 = vmatprep.subr.mxu0 0.0
    %3752 = vmatpush1.msra.mxu0 %v3739
    %3753 = vmatprep.subr.mxu0 0.0
    %3754 = vmatpush1.msra.mxu0 %v3740
    %3755 = vmatprep.subr.mxu0 0.0
    %3756 = vmatpush1.msra.mxu0 %v3741
    %3757 = vmatprep.subr.mxu0 0.0
    %3758 = vmatpush1.msra.mxu0 %v3742
    %3759 = vmatprep.subr.mxu0 0.0
    %3760 = vmatpush1.msra.mxu0 0.0
    %3761 = vmatprep.subr.mxu0 0.0
    %3762 = vmatpush1.msra.mxu0 0.0
    %3763 = vmatprep.subr.mxu0 0.0
    %3764 = vmatpush1.msra.mxu0 0.0
    %3765 = vmatprep.subr.mxu0 0.0
    %3766 = vmatpush1.msra.mxu0 0.0
    %3767 = vmatprep.subr.mxu0 0.0
    %3768 = vmatpush1.msra.mxu0 0.0
    %3769 = vmatprep.subr.mxu0 0.0
    %3770 = vmatpush1.msra.mxu0 0.0
    %3771 = vmatprep.subr.mxu0 0.0
    %3772 = vmatpush1.msra.mxu0 0.0
    %3773 = vmatprep.subr.mxu0 0.0
    %3774 = vmatpush1.msra.mxu0 0.0
    %3775 = vmatprep.subr.mxu0 0.0
    %3776 = vmatpush1.msra.mxu0 0.0
    %3777 = vmatprep.subr.mxu0 0.0
    %3778 = vmatpush1.msra.mxu0 0.0
    %3779 = vmatprep.subr.mxu0 0.0
    %3780 = vmatpush1.msra.mxu0 0.0
    %3781 = vmatprep.subr.mxu0 0.0
    %3782 = vmatpush1.msra.mxu0 0.0
    %3783 = vmatprep.subr.mxu0 0.0
    %3784 = vmatpush1.msra.mxu0 0.0
    %3785 = vmatprep.subr.mxu0 0.0
    %3786 = vmatpush1.msra.mxu0 0.0
    %3787 = vmatprep.subr.mxu0 0.0
    %3788 = vmatpush1.msra.mxu0 0.0
    %3789 = vmatprep.subr.mxu0 0.0
    %3790 = vmatpush1.msra.mxu0 0.0
    %3791 = vmatprep.subr.mxu0 0.0
    %3792 = vmatpush1.msra.mxu0 0.0
    %3793 = vmatprep.subr.mxu0 0.0
    %3794 = vmatpush1.msra.mxu0 0.0
    %3795 = vmatprep.subr.mxu0 0.0
    %3796 = vmatpush1.msra.mxu0 0.0
    %3797 = vmatprep.subr.mxu0 0.0
    %3798 = vmatpush1.msra.mxu0 0.0
    %3799 = vmatprep.subr.mxu0 0.0
    %3800 = vmatpush1.msra.mxu0 0.0
    %3801 = vmatprep.subr.mxu0 0.0
    %3802 = vmatpush1.msra.mxu0 0.0
    %3803 = vmatprep.subr.mxu0 0.0
    %3804 = vmatpush1.msra.mxu0 0.0
    %3805 = vmatprep.subr.mxu0 0.0
    %3806 = vmatpush1.msra.mxu0 0.0
    %3807 = vmatprep.subr.mxu0 0.0
    %3808 = vmatpush1.msra.mxu0 0.0
    %3809 = vmatprep.subr.mxu0 0.0
    %3810 = vmatpush1.msra.mxu0 0.0
    %3811 = vmatprep.subr.mxu0 0.0
    %3812 = vmatpush1.msra.mxu0 0.0
    %3813 = vmatprep.subr.mxu0 0.0
    %3814 = vmatpush1.msra.mxu0 0.0
    %3815 = vmatprep.mubr.f32.mxu0 0.0
    %3816 = vmatmul.mubr.f32.gmra.mrb[0].mxu0 %v3749
    %v3817 = vpop.f32.mrb[0].mxu0
    %v3818 = vadd.f32 %v3747, %v3817
    %v3819 = vpop.f32.mrb[0].mxu0
    %3820 = vdwg.mxu0
    %v3821 = vmax.f32 %v3818, 0.0
    %v3822 = vld [vmem:[#allocation7 + $0x378] sm:$0xff]
    %v3823 = vld [vmem:[#allocation7 + $0x380] sm:$0xff]
    %v3824 = vld [vmem:[#allocation7 + $0x388] sm:$0x1]
    %v3825 = vlaneseq
    %v3826 = vshrl.u32 %v3825, 7
    %v3827 = vsub.s32 0, %v3826
    %v3828 = vrot.slane %v3824, %v3827
    %v3830 = vsel %vm722, %v3821, 0
    %3832 = vmatprep.subr.mxu0 0.0
    %3833 = vmatpush1.msra.mxu0 %v3822
    %3834 = vmatprep.subr.mxu0 0.0
    %3835 = vmatpush1.msra.mxu0 %v3823
    %3836 = vmatprep.subr.mxu0 0.0
    %3837 = vmatpush1.msra.mxu0 0.0
    %3838 = vmatprep.subr.mxu0 0.0
    %3839 = vmatpush1.msra.mxu0 0.0
    %3840 = vmatprep.subr.mxu0 0.0
    %3841 = vmatpush1.msra.mxu0 0.0
    %3842 = vmatprep.subr.mxu0 0.0
    %3843 = vmatpush1.msra.mxu0 0.0
    %3844 = vmatprep.subr.mxu0 0.0
    %3845 = vmatpush1.msra.mxu0 0.0
    %3846 = vmatprep.subr.mxu0 0.0
    %3847 = vmatpush1.msra.mxu0 0.0
    %3848 = vmatprep.subr.mxu0 0.0
    %3849 = vmatpush1.msra.mxu0 0.0
    %3850 = vmatprep.subr.mxu0 0.0
    %3851 = vmatpush1.msra.mxu0 0.0
    %3852 = vmatprep.subr.mxu0 0.0
    %3853 = vmatpush1.msra.mxu0 0.0
    %3854 = vmatprep.subr.mxu0 0.0
    %3855 = vmatpush1.msra.mxu0 0.0
    %3856 = vmatprep.subr.mxu0 0.0
    %3857 = vmatpush1.msra.mxu0 0.0
    %3858 = vmatprep.subr.mxu0 0.0
    %3859 = vmatpush1.msra.mxu0 0.0
    %3860 = vmatprep.subr.mxu0 0.0
    %3861 = vmatpush1.msra.mxu0 0.0
    %3862 = vmatprep.subr.mxu0 0.0
    %3863 = vmatpush1.msra.mxu0 0.0
    %3864 = vmatprep.subr.mxu0 0.0
    %3865 = vmatpush1.msra.mxu0 0.0
    %3866 = vmatprep.subr.mxu0 0.0
    %3867 = vmatpush1.msra.mxu0 0.0
    %3868 = vmatprep.subr.mxu0 0.0
    %3869 = vmatpush1.msra.mxu0 0.0
    %3870 = vmatprep.subr.mxu0 0.0
    %3871 = vmatpush1.msra.mxu0 0.0
    %3872 = vmatprep.subr.mxu0 0.0
    %3873 = vmatpush1.msra.mxu0 0.0
    %3874 = vmatprep.subr.mxu0 0.0
    %3875 = vmatpush1.msra.mxu0 0.0
    %3876 = vmatprep.subr.mxu0 0.0
    %3877 = vmatpush1.msra.mxu0 0.0
    %3878 = vmatprep.subr.mxu0 0.0
    %3879 = vmatpush1.msra.mxu0 0.0
    %3880 = vmatprep.subr.mxu0 0.0
    %3881 = vmatpush1.msra.mxu0 0.0
    %3882 = vmatprep.subr.mxu0 0.0
    %3883 = vmatpush1.msra.mxu0 0.0
    %3884 = vmatprep.subr.mxu0 0.0
    %3885 = vmatpush1.msra.mxu0 0.0
    %3886 = vmatprep.subr.mxu0 0.0
    %3887 = vmatpush1.msra.mxu0 0.0
    %3888 = vmatprep.subr.mxu0 0.0
    %3889 = vmatpush1.msra.mxu0 0.0
    %3890 = vmatprep.subr.mxu0 0.0
    %3891 = vmatpush1.msra.mxu0 0.0
    %3892 = vmatprep.subr.mxu0 0.0
    %3893 = vmatpush1.msra.mxu0 0.0
    %3894 = vmatprep.subr.mxu0 0.0
    %3895 = vmatpush1.msra.mxu0 0.0
    %3896 = vmatprep.mubr.f32.mxu0 0.0
    %3897 = vmatmul.mubr.f32.gmra.mrb[0].mxu0 %v3830
    %v3898 = vpop.f32.mrb[0].mxu0
    %v3899 = vadd.f32 %v3828, %v3898
    %v3900 = vpop.f32.mrb[0].mxu0
    %3901 = vdwg.mxu0
    %v3902 = vmax.f32 %v3899, 0.0
    %v3903 = vld [vmem:[#allocation7 + $0x390] sm:$0xff]
    %v3904 = vld [vmem:[#allocation7 + $0x398] sm:$0xff]
    %v3905 = vld [vmem:[#allocation7 + $0x3a0] sm:$0x1]
    %v3906 = vlaneseq
    %v3907 = vshrl.u32 %v3906, 7
    %v3908 = vsub.s32 0, %v3907
    %v3909 = vrot.slane %v3905, %v3908
    %v3911 = vsel %vm722, %v3902, 0
    %3913 = vmatprep.subr.mxu0 0.0
    %3914 = vmatpush1.msra.mxu0 %v3903
    %3915 = vmatprep.subr.mxu0 0.0
    %3916 = vmatpush1.msra.mxu0 %v3904
    %3917 = vmatprep.subr.mxu0 0.0
    %3918 = vmatpush1.msra.mxu0 0.0
    %3919 = vmatprep.subr.mxu0 0.0
    %3920 = vmatpush1.msra.mxu0 0.0
    %3921 = vmatprep.subr.mxu0 0.0
    %3922 = vmatpush1.msra.mxu0 0.0
    %3923 = vmatprep.subr.mxu0 0.0
    %3924 = vmatpush1.msra.mxu0 0.0
    %3925 = vmatprep.subr.mxu0 0.0
    %3926 = vmatpush1.msra.mxu0 0.0
    %3927 = vmatprep.subr.mxu0 0.0
    %3928 = vmatpush1.msra.mxu0 0.0
    %3929 = vmatprep.subr.mxu0 0.0
    %3930 = vmatpush1.msra.mxu0 0.0
    %3931 = vmatprep.subr.mxu0 0.0
    %3932 = vmatpush1.msra.mxu0 0.0
    %3933 = vmatprep.subr.mxu0 0.0
    %3934 = vmatpush1.msra.mxu0 0.0
    %3935 = vmatprep.subr.mxu0 0.0
    %3936 = vmatpush1.msra.mxu0 0.0
    %3937 = vmatprep.subr.mxu0 0.0
    %3938 = vmatpush1.msra.mxu0 0.0
    %3939 = vmatprep.subr.mxu0 0.0
    %3940 = vmatpush1.msra.mxu0 0.0
    %3941 = vmatprep.subr.mxu0 0.0
    %3942 = vmatpush1.msra.mxu0 0.0
    %3943 = vmatprep.subr.mxu0 0.0
    %3944 = vmatpush1.msra.mxu0 0.0
    %3945 = vmatprep.subr.mxu0 0.0
    %3946 = vmatpush1.msra.mxu0 0.0
    %3947 = vmatprep.subr.mxu0 0.0
    %3948 = vmatpush1.msra.mxu0 0.0
    %3949 = vmatprep.subr.mxu0 0.0
    %3950 = vmatpush1.msra.mxu0 0.0
    %3951 = vmatprep.subr.mxu0 0.0
    %3952 = vmatpush1.msra.mxu0 0.0
    %3953 = vmatprep.subr.mxu0 0.0
    %3954 = vmatpush1.msra.mxu0 0.0
    %3955 = vmatprep.subr.mxu0 0.0
    %3956 = vmatpush1.msra.mxu0 0.0
    %3957 = vmatprep.subr.mxu0 0.0
    %3958 = vmatpush1.msra.mxu0 0.0
    %3959 = vmatprep.subr.mxu0 0.0
    %3960 = vmatpush1.msra.mxu0 0.0
    %3961 = vmatprep.subr.mxu0 0.0
    %3962 = vmatpush1.msra.mxu0 0.0
    %3963 = vmatprep.subr.mxu0 0.0
    %3964 = vmatpush1.msra.mxu0 0.0
    %3965 = vmatprep.subr.mxu0 0.0
    %3966 = vmatpush1.msra.mxu0 0.0
    %3967 = vmatprep.subr.mxu0 0.0
    %3968 = vmatpush1.msra.mxu0 0.0
    %3969 = vmatprep.subr.mxu0 0.0
    %3970 = vmatpush1.msra.mxu0 0.0
    %3971 = vmatprep.subr.mxu0 0.0
    %3972 = vmatpush1.msra.mxu0 0.0
    %3973 = vmatprep.subr.mxu0 0.0
    %3974 = vmatpush1.msra.mxu0 0.0
    %3975 = vmatprep.subr.mxu0 0.0
    %3976 = vmatpush1.msra.mxu0 0.0
    %3977 = vmatprep.mubr.f32.mxu0 0.0
    %3978 = vmatmul.mubr.f32.gmra.mrb[0].mxu0 %v3911
    %v3979 = vpop.f32.mrb[0].mxu0
    %v3980 = vadd.f32 %v3909, %v3979
    %v3981 = vpop.f32.mrb[0].mxu0
    %3982 = vdwg.mxu0
    %v3983 = vmax.f32 %v3980, 0.0
    %v3984 = vld [vmem:[#allocation7 + $0x408] sm:$0x1]
    %v3985 = vld [vmem:[#allocation7 + $0x3a8] sm:$0xff]
    %v3986 = vld [vmem:[#allocation7 + $0x3b0] sm:$0xff]
    %v3987 = vld [vmem:[#allocation7 + $0x3b8] sm:$0xff]
    %v3988 = vld [vmem:[#allocation7 + $0x3c0] sm:$0xff]
    %v3989 = vlaneseq
    %v3990 = vshrl.u32 %v3989, 7
    %v3991 = vsub.s32 0, %v3990
    %v3992 = vrot.slane %v3984, %v3991
    %v3994 = vsel %vm64, %v3983, 0
    %3996 = vmatprep.subr.mxu0 0.0
    %3997 = vmatpush1.msra.mxu0 %v3985
    %3998 = vmatprep.subr.mxu0 0.0
    %3999 = vmatpush1.msra.mxu0 %v3986
    %4000 = vmatprep.subr.mxu0 0.0
    %4001 = vmatpush1.msra.mxu0 %v3987
    %4002 = vmatprep.subr.mxu0 0.0
    %4003 = vmatpush1.msra.mxu0 %v3988
    %4004 = vmatprep.subr.mxu0 0.0
    %4005 = vmatpush1.msra.mxu0 0.0
    %4006 = vmatprep.subr.mxu0 0.0
    %4007 = vmatpush1.msra.mxu0 0.0
    %4008 = vmatprep.subr.mxu0 0.0
    %4009 = vmatpush1.msra.mxu0 0.0
    %4010 = vmatprep.subr.mxu0 0.0
    %4011 = vmatpush1.msra.mxu0 0.0
    %4012 = vmatprep.subr.mxu0 0.0
    %4013 = vmatpush1.msra.mxu0 0.0
    %4014 = vmatprep.subr.mxu0 0.0
    %4015 = vmatpush1.msra.mxu0 0.0
    %4016 = vmatprep.subr.mxu0 0.0
    %4017 = vmatpush1.msra.mxu0 0.0
    %4018 = vmatprep.subr.mxu0 0.0
    %4019 = vmatpush1.msra.mxu0 0.0
    %4020 = vmatprep.subr.mxu0 0.0
    %4021 = vmatpush1.msra.mxu0 0.0
    %4022 = vmatprep.subr.mxu0 0.0
    %4023 = vmatpush1.msra.mxu0 0.0
    %4024 = vmatprep.subr.mxu0 0.0
    %4025 = vmatpush1.msra.mxu0 0.0
    %4026 = vmatprep.subr.mxu0 0.0
    %4027 = vmatpush1.msra.mxu0 0.0
    %4028 = vmatprep.subr.mxu0 0.0
    %4029 = vmatpush1.msra.mxu0 0.0
    %4030 = vmatprep.subr.mxu0 0.0
    %4031 = vmatpush1.msra.mxu0 0.0
    %4032 = vmatprep.subr.mxu0 0.0
    %4033 = vmatpush1.msra.mxu0 0.0
    %4034 = vmatprep.subr.mxu0 0.0
    %4035 = vmatpush1.msra.mxu0 0.0
    %4036 = vmatprep.subr.mxu0 0.0
    %4037 = vmatpush1.msra.mxu0 0.0
    %4038 = vmatprep.subr.mxu0 0.0
    %4039 = vmatpush1.msra.mxu0 0.0
    %4040 = vmatprep.subr.mxu0 0.0
    %4041 = vmatpush1.msra.mxu0 0.0
    %4042 = vmatprep.subr.mxu0 0.0
    %4043 = vmatpush1.msra.mxu0 0.0
    %4044 = vmatprep.subr.mxu0 0.0
    %4045 = vmatpush1.msra.mxu0 0.0
    %4046 = vmatprep.subr.mxu0 0.0
    %4047 = vmatpush1.msra.mxu0 0.0
    %4048 = vmatprep.subr.mxu0 0.0
    %4049 = vmatpush1.msra.mxu0 0.0
    %4050 = vmatprep.subr.mxu0 0.0
    %4051 = vmatpush1.msra.mxu0 0.0
    %4052 = vmatprep.subr.mxu0 0.0
    %4053 = vmatpush1.msra.mxu0 0.0
    %4054 = vmatprep.subr.mxu0 0.0
    %4055 = vmatpush1.msra.mxu0 0.0
    %4056 = vmatprep.subr.mxu0 0.0
    %4057 = vmatpush1.msra.mxu0 0.0
    %4058 = vmatprep.subr.mxu0 0.0
    %4059 = vmatpush1.msra.mxu0 0.0
    %4060 = vmatprep.mubr.f32.mxu0 0.0
    %4061 = vmatmul.mubr.f32.gmra.mrb[0].mxu0 %v3994
    %v4062 = vpop.f32.mrb[0].mxu0
    %v4063 = vadd.f32 %v3992, %v4062
    %v4064 = vpop.f32.mrb[0].mxu0
    %4065 = vdwg.mxu0
    %v4066 = vmax.f32 %v4063, 0.0
    %v4067 = vld [vmem:[#allocation7 + $0x3c8] sm:$0xff]
    %v4068 = vld [vmem:[#allocation7 + $0x3d0] sm:$0xff]
    %v4069 = vld [vmem:[#allocation7 + $0x3d8] sm:$0xff]
    %v4070 = vld [vmem:[#allocation7 + $0x3e0] sm:$0xff]
    %v4071 = vld [vmem:[#allocation7 + $0x3e8] sm:$0xff]
    %v4072 = vld [vmem:[#allocation7 + $0x3f0] sm:$0xff]
    %v4073 = vld [vmem:[#allocation7 + $0x3f8] sm:$0xff]
    %v4074 = vld [vmem:[#allocation7 + $0x400] sm:$0xff]
    %v4076 = vsel %vm147, %v4066, 0
    %4078 = vmatprep.subr.mxu0 0.0
    %4079 = vmatpush1.msra.mxu0 %v4067
    %4080 = vmatprep.subr.mxu0 0.0
    %4081 = vmatpush1.msra.mxu0 %v4068
    %4082 = vmatprep.subr.mxu0 0.0
    %4083 = vmatpush1.msra.mxu0 %v4069
    %4084 = vmatprep.subr.mxu0 0.0
    %4085 = vmatpush1.msra.mxu0 %v4070
    %4086 = vmatprep.subr.mxu0 0.0
    %4087 = vmatpush1.msra.mxu0 %v4071
    %4088 = vmatprep.subr.mxu0 0.0
    %4089 = vmatpush1.msra.mxu0 %v4072
    %4090 = vmatprep.subr.mxu0 0.0
    %4091 = vmatpush1.msra.mxu0 %v4073
    %4092 = vmatprep.subr.mxu0 0.0
    %4093 = vmatpush1.msra.mxu0 %v4074
    %4094 = vmatprep.subr.mxu0 0.0
    %4095 = vmatpush1.msra.mxu0 0.0
    %4096 = vmatprep.subr.mxu0 0.0
    %4097 = vmatpush1.msra.mxu0 0.0
    %4098 = vmatprep.subr.mxu0 0.0
    %4099 = vmatpush1.msra.mxu0 0.0
    %4100 = vmatprep.subr.mxu0 0.0
    %4101 = vmatpush1.msra.mxu0 0.0
    %4102 = vmatprep.subr.mxu0 0.0
    %4103 = vmatpush1.msra.mxu0 0.0
    %4104 = vmatprep.subr.mxu0 0.0
    %4105 = vmatpush1.msra.mxu0 0.0
    %4106 = vmatprep.subr.mxu0 0.0
    %4107 = vmatpush1.msra.mxu0 0.0
    %4108 = vmatprep.subr.mxu0 0.0
    %4109 = vmatpush1.msra.mxu0 0.0
    %4110 = vmatprep.subr.mxu0 0.0
    %4111 = vmatpush1.msra.mxu0 0.0
    %4112 = vmatprep.subr.mxu0 0.0
    %4113 = vmatpush1.msra.mxu0 0.0
    %4114 = vmatprep.subr.mxu0 0.0
    %4115 = vmatpush1.msra.mxu0 0.0
    %4116 = vmatprep.subr.mxu0 0.0
    %4117 = vmatpush1.msra.mxu0 0.0
    %4118 = vmatprep.subr.mxu0 0.0
    %4119 = vmatpush1.msra.mxu0 0.0
    %4120 = vmatprep.subr.mxu0 0.0
    %4121 = vmatpush1.msra.mxu0 0.0
    %4122 = vmatprep.subr.mxu0 0.0
    %4123 = vmatpush1.msra.mxu0 0.0
    %4124 = vmatprep.subr.mxu0 0.0
    %4125 = vmatpush1.msra.mxu0 0.0
    %4126 = vmatprep.subr.mxu0 0.0
    %4127 = vmatpush1.msra.mxu0 0.0
    %4128 = vmatprep.subr.mxu0 0.0
    %4129 = vmatpush1.msra.mxu0 0.0
    %4130 = vmatprep.subr.mxu0 0.0
    %4131 = vmatpush1.msra.mxu0 0.0
    %4132 = vmatprep.subr.mxu0 0.0
    %4133 = vmatpush1.msra.mxu0 0.0
    %4134 = vmatprep.subr.mxu0 0.0
    %4135 = vmatpush1.msra.mxu0 0.0
    %4136 = vmatprep.subr.mxu0 0.0
    %4137 = vmatpush1.msra.mxu0 0.0
    %4138 = vmatprep.subr.mxu0 0.0
    %4139 = vmatpush1.msra.mxu0 0.0
    %4140 = vmatprep.subr.mxu0 0.0
    %4141 = vmatpush1.msra.mxu0 0.0
    %4142 = vmatprep.mubr.f32.mxu0 0.0
    %4143 = vmatmul.mubr.f32.gmra.mrb[0].mxu0 %v4076
    %v4144 = vpop.f32.mrb[0].mxu0
    %v4145 = vadd.f32 %v3992, %v4144
    %v4146 = vpop.f32.mrb[0].mxu0
    %4147 = vdwg.mxu0
    %v4148 = vmax.f32 %v4145, 0.0
    %4150 = vrot.lane.b32.xlu0 %v4148, 96
    %v4151 = vpop.permute.xlu0 %4150
    %4153 = vmatprep.subr.mxu0 0.0
    %4154 = vmatpush1.msra.mxu0 %v4151
    %4155 = vmatprep.subr.mxu0 0.0
    %4156 = vmatpush1.msra.mxu0 0.0
    %4157 = vmatprep.subr.mxu0 0.0
    %4158 = vmatpush1.msra.mxu0 0.0
    %4159 = vmatprep.subr.mxu0 0.0
    %4160 = vmatpush1.msra.mxu0 0.0
    %4161 = vmatprep.subr.mxu0 0.0
    %4162 = vmatpush1.msra.mxu0 0.0
    %4163 = vmatprep.subr.mxu0 0.0
    %4164 = vmatpush1.msra.mxu0 0.0
    %4165 = vmatprep.subr.mxu0 0.0
    %4166 = vmatpush1.msra.mxu0 0.0
    %4167 = vmatprep.subr.mxu0 0.0
    %4168 = vmatpush1.msra.mxu0 0.0
    %4169 = vmatprep.subr.mxu0 0.0
    %4170 = vmatpush1.msra.mxu0 0.0
    %4171 = vmatprep.subr.mxu0 0.0
    %4172 = vmatpush1.msra.mxu0 0.0
    %4173 = vmatprep.subr.mxu0 0.0
    %4174 = vmatpush1.msra.mxu0 0.0
    %4175 = vmatprep.subr.mxu0 0.0
    %4176 = vmatpush1.msra.mxu0 0.0
    %4177 = vmatprep.subr.mxu0 0.0
    %4178 = vmatpush1.msra.mxu0 0.0
    %4179 = vmatprep.subr.mxu0 0.0
    %4180 = vmatpush1.msra.mxu0 0.0
    %4181 = vmatprep.subr.mxu0 0.0
    %4182 = vmatpush1.msra.mxu0 0.0
    %4183 = vmatprep.subr.mxu0 0.0
    %4184 = vmatpush1.msra.mxu0 0.0
    %4185 = vmatprep.subr.mxu0 0.0
    %4186 = vmatpush1.msra.mxu0 0.0
    %4187 = vmatprep.subr.mxu0 0.0
    %4188 = vmatpush1.msra.mxu0 0.0
    %4189 = vmatprep.subr.mxu0 0.0
    %4190 = vmatpush1.msra.mxu0 0.0
    %4191 = vmatprep.subr.mxu0 0.0
    %4192 = vmatpush1.msra.mxu0 0.0
    %4193 = vmatprep.subr.mxu0 0.0
    %4194 = vmatpush1.msra.mxu0 0.0
    %4195 = vmatprep.subr.mxu0 0.0
    %4196 = vmatpush1.msra.mxu0 0.0
    %4197 = vmatprep.subr.mxu0 0.0
    %4198 = vmatpush1.msra.mxu0 0.0
    %4199 = vmatprep.subr.mxu0 0.0
    %4200 = vmatpush1.msra.mxu0 0.0
    %4201 = vmatprep.subr.mxu0 0.0
    %4202 = vmatpush1.msra.mxu0 0.0
    %4203 = vmatprep.subr.mxu0 0.0
    %4204 = vmatpush1.msra.mxu0 0.0
    %4205 = vmatprep.subr.mxu0 0.0
    %4206 = vmatpush1.msra.mxu0 0.0
    %4207 = vmatprep.subr.mxu0 0.0
    %4208 = vmatpush1.msra.mxu0 0.0
    %4209 = vmatprep.subr.mxu0 0.0
    %4210 = vmatpush1.msra.mxu0 0.0
    %4211 = vmatprep.subr.mxu0 0.0
    %4212 = vmatpush1.msra.mxu0 0.0
    %4213 = vmatprep.subr.mxu0 0.0
    %4214 = vmatpush1.msra.mxu0 0.0
    %4215 = vmatprep.subr.mxu0 0.0
    %4216 = vmatpush1.msra.mxu0 0.0
    %4217 = vmatprep.mubr.f32.mxu0 0.0
    %4218 = vmatmul.mubr.f32.gmra.mrb[0].mxu0 %v231
    %v4219 = vpop.f32.mrb[0].mxu0
    %v4220 = vadd.f32 0.0, %v4219
    %v4221 = vpop.f32.mrb[0].mxu0
    %4222 = vdwg.mxu0
    %4223 = vmatprep.subr.mxu0 0.0
    %4224 = vmatpush1.msra.mxu0 %v4148
    %4225 = vmatprep.subr.mxu0 0.0
    %4226 = vmatpush1.msra.mxu0 0.0
    %4227 = vmatprep.subr.mxu0 0.0
    %4228 = vmatpush1.msra.mxu0 0.0
    %4229 = vmatprep.subr.mxu0 0.0
    %4230 = vmatpush1.msra.mxu0 0.0
    %4231 = vmatprep.subr.mxu0 0.0
    %4232 = vmatpush1.msra.mxu0 0.0
    %4233 = vmatprep.subr.mxu0 0.0
    %4234 = vmatpush1.msra.mxu0 0.0
    %4235 = vmatprep.subr.mxu0 0.0
    %4236 = vmatpush1.msra.mxu0 0.0
    %4237 = vmatprep.subr.mxu0 0.0
    %4238 = vmatpush1.msra.mxu0 0.0
    %4239 = vmatprep.subr.mxu0 0.0
    %4240 = vmatpush1.msra.mxu0 0.0
    %4241 = vmatprep.subr.mxu0 0.0
    %4242 = vmatpush1.msra.mxu0 0.0
    %4243 = vmatprep.subr.mxu0 0.0
    %4244 = vmatpush1.msra.mxu0 0.0
    %4245 = vmatprep.subr.mxu0 0.0
    %4246 = vmatpush1.msra.mxu0 0.0
    %4247 = vmatprep.subr.mxu0 0.0
    %4248 = vmatpush1.msra.mxu0 0.0
    %4249 = vmatprep.subr.mxu0 0.0
    %4250 = vmatpush1.msra.mxu0 0.0
    %4251 = vmatprep.subr.mxu0 0.0
    %4252 = vmatpush1.msra.mxu0 0.0
    %4253 = vmatprep.subr.mxu0 0.0
    %4254 = vmatpush1.msra.mxu0 0.0
    %4255 = vmatprep.subr.mxu0 0.0
    %4256 = vmatpush1.msra.mxu0 0.0
    %4257 = vmatprep.subr.mxu0 0.0
    %4258 = vmatpush1.msra.mxu0 0.0
    %4259 = vmatprep.subr.mxu0 0.0
    %4260 = vmatpush1.msra.mxu0 0.0
    %4261 = vmatprep.subr.mxu0 0.0
    %4262 = vmatpush1.msra.mxu0 0.0
    %4263 = vmatprep.subr.mxu0 0.0
    %4264 = vmatpush1.msra.mxu0 0.0
    %4265 = vmatprep.subr.mxu0 0.0
    %4266 = vmatpush1.msra.mxu0 0.0
    %4267 = vmatprep.subr.mxu0 0.0
    %4268 = vmatpush1.msra.mxu0 0.0
    %4269 = vmatprep.subr.mxu0 0.0
    %4270 = vmatpush1.msra.mxu0 0.0
    %4271 = vmatprep.subr.mxu0 0.0
    %4272 = vmatpush1.msra.mxu0 0.0
    %4273 = vmatprep.subr.mxu0 0.0
    %4274 = vmatpush1.msra.mxu0 0.0
    %4275 = vmatprep.subr.mxu0 0.0
    %4276 = vmatpush1.msra.mxu0 0.0
    %4277 = vmatprep.subr.mxu0 0.0
    %4278 = vmatpush1.msra.mxu0 0.0
    %4279 = vmatprep.subr.mxu0 0.0
    %4280 = vmatpush1.msra.mxu0 0.0
    %4281 = vmatprep.subr.mxu0 0.0
    %4282 = vmatpush1.msra.mxu0 0.0
    %4283 = vmatprep.subr.mxu0 0.0
    %4284 = vmatpush1.msra.mxu0 0.0
    %4285 = vmatprep.subr.mxu0 0.0
    %4286 = vmatpush1.msra.mxu0 0.0
    %4287 = vmatprep.mubr.f32.mxu0 0.0
    %4288 = vmatmul.mubr.f32.gmra.mrb[0].mxu0 %v304
    %v4289 = vpop.f32.mrb[0].mxu0
    %v4290 = vadd.f32 %v4220, %v4289
    %v4291 = vpop.f32.mrb[0].mxu0
    %4292 = vdwg.mxu0
    %v4293 = vld [vmem:[#allocation7 + $0x410] sm:$0xff]
    %v4294 = vld [vmem:[#allocation7 + $0x418] sm:$0xff]
    %v4295 = vld [vmem:[#allocation7 + $0x420] sm:$0xff]
    %v4296 = vld [vmem:[#allocation7 + $0x428] sm:$0xff]
    %v4297 = vld [vmem:[#allocation7 + $0x470] sm:$0x1]
    %v4298 = vlaneseq
    %v4299 = vshrl.u32 %v4298, 7
    %v4300 = vsub.s32 0, %v4299
    %v4301 = vrot.slane %v4297, %v4300
    %v4303 = vsel %vm64, %v4290, 0
    %4305 = vmatprep.subr.mxu0 0.0
    %4306 = vmatpush1.msra.mxu0 %v4293
    %4307 = vmatprep.subr.mxu0 0.0
    %4308 = vmatpush1.msra.mxu0 %v4294
    %4309 = vmatprep.subr.mxu0 0.0
    %4310 = vmatpush1.msra.mxu0 %v4295
    %4311 = vmatprep.subr.mxu0 0.0
    %4312 = vmatpush1.msra.mxu0 %v4296
    %4313 = vmatprep.subr.mxu0 0.0
    %4314 = vmatpush1.msra.mxu0 0.0
    %4315 = vmatprep.subr.mxu0 0.0
    %4316 = vmatpush1.msra.mxu0 0.0
    %4317 = vmatprep.subr.mxu0 0.0
    %4318 = vmatpush1.msra.mxu0 0.0
    %4319 = vmatprep.subr.mxu0 0.0
    %4320 = vmatpush1.msra.mxu0 0.0
    %4321 = vmatprep.subr.mxu0 0.0
    %4322 = vmatpush1.msra.mxu0 0.0
    %4323 = vmatprep.subr.mxu0 0.0
    %4324 = vmatpush1.msra.mxu0 0.0
    %4325 = vmatprep.subr.mxu0 0.0
    %4326 = vmatpush1.msra.mxu0 0.0
    %4327 = vmatprep.subr.mxu0 0.0
    %4328 = vmatpush1.msra.mxu0 0.0
    %4329 = vmatprep.subr.mxu0 0.0
    %4330 = vmatpush1.msra.mxu0 0.0
    %4331 = vmatprep.subr.mxu0 0.0
    %4332 = vmatpush1.msra.mxu0 0.0
    %4333 = vmatprep.subr.mxu0 0.0
    %4334 = vmatpush1.msra.mxu0 0.0
    %4335 = vmatprep.subr.mxu0 0.0
    %4336 = vmatpush1.msra.mxu0 0.0
    %4337 = vmatprep.subr.mxu0 0.0
    %4338 = vmatpush1.msra.mxu0 0.0
    %4339 = vmatprep.subr.mxu0 0.0
    %4340 = vmatpush1.msra.mxu0 0.0
    %4341 = vmatprep.subr.mxu0 0.0
    %4342 = vmatpush1.msra.mxu0 0.0
    %4343 = vmatprep.subr.mxu0 0.0
    %4344 = vmatpush1.msra.mxu0 0.0
    %4345 = vmatprep.subr.mxu0 0.0
    %4346 = vmatpush1.msra.mxu0 0.0
    %4347 = vmatprep.subr.mxu0 0.0
    %4348 = vmatpush1.msra.mxu0 0.0
    %4349 = vmatprep.subr.mxu0 0.0
    %4350 = vmatpush1.msra.mxu0 0.0
    %4351 = vmatprep.subr.mxu0 0.0
    %4352 = vmatpush1.msra.mxu0 0.0
    %4353 = vmatprep.subr.mxu0 0.0
    %4354 = vmatpush1.msra.mxu0 0.0
    %4355 = vmatprep.subr.mxu0 0.0
    %4356 = vmatpush1.msra.mxu0 0.0
    %4357 = vmatprep.subr.mxu0 0.0
    %4358 = vmatpush1.msra.mxu0 0.0
    %4359 = vmatprep.subr.mxu0 0.0
    %4360 = vmatpush1.msra.mxu0 0.0
    %4361 = vmatprep.subr.mxu0 0.0
    %4362 = vmatpush1.msra.mxu0 0.0
    %4363 = vmatprep.subr.mxu0 0.0
    %4364 = vmatpush1.msra.mxu0 0.0
    %4365 = vmatprep.subr.mxu0 0.0
    %4366 = vmatpush1.msra.mxu0 0.0
    %4367 = vmatprep.subr.mxu0 0.0
    %4368 = vmatpush1.msra.mxu0 0.0
    %4369 = vmatprep.mubr.f32.mxu0 0.0
    %4370 = vmatmul.mubr.f32.gmra.mrb[0].mxu0 %v4303
    %v4371 = vpop.f32.mrb[0].mxu0
    %v4372 = vadd.f32 %v4301, %v4371
    %v4373 = vpop.f32.mrb[0].mxu0
    %4374 = vdwg.mxu0
    %v4375 = vxor.u32 %v4372, 2147483648
    %v4376 = vmul.f32 %v4375, 1.442695
    %v4377 = vpow.pop %v4376
    %v4378 = vadd.f32 %v4377, 1.0
    %v4379 = vrcp.pop %v4378
    %v4380 = vmul.f32 1.0, %v4379
    %v4381 = vld [vmem:[#allocation7 + $0x430] sm:$0xff]
    %v4382 = vld [vmem:[#allocation7 + $0x438] sm:$0xff]
    %v4383 = vld [vmem:[#allocation7 + $0x440] sm:$0xff]
    %v4384 = vld [vmem:[#allocation7 + $0x448] sm:$0xff]
    %v4385 = vld [vmem:[#allocation7 + $0x478] sm:$0x1]
    %v4386 = vlaneseq
    %v4387 = vshrl.u32 %v4386, 7
    %v4388 = vsub.s32 0, %v4387
    %v4389 = vrot.slane %v4385, %v4388
    %4390 = vmatprep.subr.mxu0 0.0
    %4391 = vmatpush1.msra.mxu0 %v4381
    %4392 = vmatprep.subr.mxu0 0.0
    %4393 = vmatpush1.msra.mxu0 %v4382
    %4394 = vmatprep.subr.mxu0 0.0
    %4395 = vmatpush1.msra.mxu0 %v4383
    %4396 = vmatprep.subr.mxu0 0.0
    %4397 = vmatpush1.msra.mxu0 %v4384
    %4398 = vmatprep.subr.mxu0 0.0
    %4399 = vmatpush1.msra.mxu0 0.0
    %4400 = vmatprep.subr.mxu0 0.0
    %4401 = vmatpush1.msra.mxu0 0.0
    %4402 = vmatprep.subr.mxu0 0.0
    %4403 = vmatpush1.msra.mxu0 0.0
    %4404 = vmatprep.subr.mxu0 0.0
    %4405 = vmatpush1.msra.mxu0 0.0
    %4406 = vmatprep.subr.mxu0 0.0
    %4407 = vmatpush1.msra.mxu0 0.0
    %4408 = vmatprep.subr.mxu0 0.0
    %4409 = vmatpush1.msra.mxu0 0.0
    %4410 = vmatprep.subr.mxu0 0.0
    %4411 = vmatpush1.msra.mxu0 0.0
    %4412 = vmatprep.subr.mxu0 0.0
    %4413 = vmatpush1.msra.mxu0 0.0
    %4414 = vmatprep.subr.mxu0 0.0
    %4415 = vmatpush1.msra.mxu0 0.0
    %4416 = vmatprep.subr.mxu0 0.0
    %4417 = vmatpush1.msra.mxu0 0.0
    %4418 = vmatprep.subr.mxu0 0.0
    %4419 = vmatpush1.msra.mxu0 0.0
    %4420 = vmatprep.subr.mxu0 0.0
    %4421 = vmatpush1.msra.mxu0 0.0
    %4422 = vmatprep.subr.mxu0 0.0
    %4423 = vmatpush1.msra.mxu0 0.0
    %4424 = vmatprep.subr.mxu0 0.0
    %4425 = vmatpush1.msra.mxu0 0.0
    %4426 = vmatprep.subr.mxu0 0.0
    %4427 = vmatpush1.msra.mxu0 0.0
    %4428 = vmatprep.subr.mxu0 0.0
    %4429 = vmatpush1.msra.mxu0 0.0
    %4430 = vmatprep.subr.mxu0 0.0
    %4431 = vmatpush1.msra.mxu0 0.0
    %4432 = vmatprep.subr.mxu0 0.0
    %4433 = vmatpush1.msra.mxu0 0.0
    %4434 = vmatprep.subr.mxu0 0.0
    %4435 = vmatpush1.msra.mxu0 0.0
    %4436 = vmatprep.subr.mxu0 0.0
    %4437 = vmatpush1.msra.mxu0 0.0
    %4438 = vmatprep.subr.mxu0 0.0
    %4439 = vmatpush1.msra.mxu0 0.0
    %4440 = vmatprep.subr.mxu0 0.0
    %4441 = vmatpush1.msra.mxu0 0.0
    %4442 = vmatprep.subr.mxu0 0.0
    %4443 = vmatpush1.msra.mxu0 0.0
    %4444 = vmatprep.subr.mxu0 0.0
    %4445 = vmatpush1.msra.mxu0 0.0
    %4446 = vmatprep.subr.mxu0 0.0
    %4447 = vmatpush1.msra.mxu0 0.0
    %4448 = vmatprep.subr.mxu0 0.0
    %4449 = vmatpush1.msra.mxu0 0.0
    %4450 = vmatprep.subr.mxu0 0.0
    %4451 = vmatpush1.msra.mxu0 0.0
    %4452 = vmatprep.subr.mxu0 0.0
    %4453 = vmatpush1.msra.mxu0 0.0
    %4454 = vmatprep.mubr.f32.mxu0 0.0
    %4455 = vmatmul.mubr.f32.gmra.mrb[0].mxu0 %v4303
    %v4456 = vpop.f32.mrb[0].mxu0
    %v4457 = vadd.f32 %v4389, %v4456
    %v4458 = vpop.f32.mrb[0].mxu0
    %4459 = vdwg.mxu0
    %v4460 = vtanh.pop %v4457
    %v4461 = vld [vmem:[#allocation7 + $0x450] sm:$0xff]
    %v4462 = vld [vmem:[#allocation7 + $0x458] sm:$0xff]
    %v4463 = vld [vmem:[#allocation7 + $0x460] sm:$0xff]
    %v4464 = vld [vmem:[#allocation7 + $0x468] sm:$0xff]
    %v4465 = vld [vmem:[#allocation7 + $0x480] sm:$0x1]
    %v4466 = vlaneseq
    %v4467 = vshrl.u32 %v4466, 7
    %v4468 = vsub.s32 0, %v4467
    %v4469 = vrot.slane %v4465, %v4468
    %4470 = vmatprep.subr.mxu0 0.0
    %4471 = vmatpush1.msra.mxu0 %v4461
    %4472 = vmatprep.subr.mxu0 0.0
    %4473 = vmatpush1.msra.mxu0 %v4462
    %4474 = vmatprep.subr.mxu0 0.0
    %4475 = vmatpush1.msra.mxu0 %v4463
    %4476 = vmatprep.subr.mxu0 0.0
    %4477 = vmatpush1.msra.mxu0 %v4464
    %4478 = vmatprep.subr.mxu0 0.0
    %4479 = vmatpush1.msra.mxu0 0.0
    %4480 = vmatprep.subr.mxu0 0.0
    %4481 = vmatpush1.msra.mxu0 0.0
    %4482 = vmatprep.subr.mxu0 0.0
    %4483 = vmatpush1.msra.mxu0 0.0
    %4484 = vmatprep.subr.mxu0 0.0
    %4485 = vmatpush1.msra.mxu0 0.0
    %4486 = vmatprep.subr.mxu0 0.0
    %4487 = vmatpush1.msra.mxu0 0.0
    %4488 = vmatprep.subr.mxu0 0.0
    %4489 = vmatpush1.msra.mxu0 0.0
    %4490 = vmatprep.subr.mxu0 0.0
    %4491 = vmatpush1.msra.mxu0 0.0
    %4492 = vmatprep.subr.mxu0 0.0
    %4493 = vmatpush1.msra.mxu0 0.0
    %4494 = vmatprep.subr.mxu0 0.0
    %4495 = vmatpush1.msra.mxu0 0.0
    %4496 = vmatprep.subr.mxu0 0.0
    %4497 = vmatpush1.msra.mxu0 0.0
    %4498 = vmatprep.subr.mxu0 0.0
    %4499 = vmatpush1.msra.mxu0 0.0
    %4500 = vmatprep.subr.mxu0 0.0
    %4501 = vmatpush1.msra.mxu0 0.0
    %4502 = vmatprep.subr.mxu0 0.0
    %4503 = vmatpush1.msra.mxu0 0.0
    %4504 = vmatprep.subr.mxu0 0.0
    %4505 = vmatpush1.msra.mxu0 0.0
    %4506 = vmatprep.subr.mxu0 0.0
    %4507 = vmatpush1.msra.mxu0 0.0
    %4508 = vmatprep.subr.mxu0 0.0
    %4509 = vmatpush1.msra.mxu0 0.0
    %4510 = vmatprep.subr.mxu0 0.0
    %4511 = vmatpush1.msra.mxu0 0.0
    %4512 = vmatprep.subr.mxu0 0.0
    %4513 = vmatpush1.msra.mxu0 0.0
    %4514 = vmatprep.subr.mxu0 0.0
    %4515 = vmatpush1.msra.mxu0 0.0
    %4516 = vmatprep.subr.mxu0 0.0
    %4517 = vmatpush1.msra.mxu0 0.0
    %4518 = vmatprep.subr.mxu0 0.0
    %4519 = vmatpush1.msra.mxu0 0.0
    %4520 = vmatprep.subr.mxu0 0.0
    %4521 = vmatpush1.msra.mxu0 0.0
    %4522 = vmatprep.subr.mxu0 0.0
    %4523 = vmatpush1.msra.mxu0 0.0
    %4524 = vmatprep.subr.mxu0 0.0
    %4525 = vmatpush1.msra.mxu0 0.0
    %4526 = vmatprep.subr.mxu0 0.0
    %4527 = vmatpush1.msra.mxu0 0.0
    %4528 = vmatprep.subr.mxu0 0.0
    %4529 = vmatpush1.msra.mxu0 0.0
    %4530 = vmatprep.subr.mxu0 0.0
    %4531 = vmatpush1.msra.mxu0 0.0
    %4532 = vmatprep.subr.mxu0 0.0
    %4533 = vmatpush1.msra.mxu0 0.0
    %4534 = vmatprep.mubr.f32.mxu0 0.0
    %4535 = vmatmul.mubr.f32.gmra.mrb[0].mxu0 %v4303
    %v4536 = vpop.f32.mrb[0].mxu0
    %v4537 = vadd.f32 %v4469, %v4536
    %v4538 = vpop.f32.mrb[0].mxu0
    %4539 = vdwg.mxu0
    %v4540 = vxor.u32 %v4537, 2147483648
    %v4541 = vmul.f32 %v4540, 1.442695
    %v4542 = vpow.pop %v4541
    %v4543 = vadd.f32 %v4542, 1.0
    %v4544 = vrcp.pop %v4543
    %v4545 = vmul.f32 1.0, %v4544
    %v4546 = vmul.f32 %v4380, %v4460
    %v4547 = vtanh.pop %v4546
    %v4548 = vmul.f32 %v4545, %v4547
    %v4549 = vld [vmem:[#allocation7 + $0x488] sm:$0xff]
    %v4550 = vld [vmem:[#allocation7 + $0x490] sm:$0xff]
    %v4551 = vld [vmem:[#allocation7 + $0x498] sm:$0xff]
    %v4552 = vld [vmem:[#allocation7 + $0x4a0] sm:$0xff]
    %v4553 = vld [vmem:[#allocation7 + $0x4a8] sm:$0x1]
    %v4554 = vlaneseq
    %v4555 = vshrl.u32 %v4554, 7
    %v4556 = vsub.s32 0, %v4555
    %v4557 = vrot.slane %v4553, %v4556
    %v4559 = vsel %vm64, %v4548, 0
    %4561 = vmatprep.subr.mxu0 0.0
    %4562 = vmatpush1.msra.mxu0 %v4549
    %4563 = vmatprep.subr.mxu0 0.0
    %4564 = vmatpush1.msra.mxu0 %v4550
    %4565 = vmatprep.subr.mxu0 0.0
    %4566 = vmatpush1.msra.mxu0 %v4551
    %4567 = vmatprep.subr.mxu0 0.0
    %4568 = vmatpush1.msra.mxu0 %v4552
    %4569 = vmatprep.subr.mxu0 0.0
    %4570 = vmatpush1.msra.mxu0 0.0
    %4571 = vmatprep.subr.mxu0 0.0
    %4572 = vmatpush1.msra.mxu0 0.0
    %4573 = vmatprep.subr.mxu0 0.0
    %4574 = vmatpush1.msra.mxu0 0.0
    %4575 = vmatprep.subr.mxu0 0.0
    %4576 = vmatpush1.msra.mxu0 0.0
    %4577 = vmatprep.subr.mxu0 0.0
    %4578 = vmatpush1.msra.mxu0 0.0
    %4579 = vmatprep.subr.mxu0 0.0
    %4580 = vmatpush1.msra.mxu0 0.0
    %4581 = vmatprep.subr.mxu0 0.0
    %4582 = vmatpush1.msra.mxu0 0.0
    %4583 = vmatprep.subr.mxu0 0.0
    %4584 = vmatpush1.msra.mxu0 0.0
    %4585 = vmatprep.subr.mxu0 0.0
    %4586 = vmatpush1.msra.mxu0 0.0
    %4587 = vmatprep.subr.mxu0 0.0
    %4588 = vmatpush1.msra.mxu0 0.0
    %4589 = vmatprep.subr.mxu0 0.0
    %4590 = vmatpush1.msra.mxu0 0.0
    %4591 = vmatprep.subr.mxu0 0.0
    %4592 = vmatpush1.msra.mxu0 0.0
    %4593 = vmatprep.subr.mxu0 0.0
    %4594 = vmatpush1.msra.mxu0 0.0
    %4595 = vmatprep.subr.mxu0 0.0
    %4596 = vmatpush1.msra.mxu0 0.0
    %4597 = vmatprep.subr.mxu0 0.0
    %4598 = vmatpush1.msra.mxu0 0.0
    %4599 = vmatprep.subr.mxu0 0.0
    %4600 = vmatpush1.msra.mxu0 0.0
    %4601 = vmatprep.subr.mxu0 0.0
    %4602 = vmatpush1.msra.mxu0 0.0
    %4603 = vmatprep.subr.mxu0 0.0
    %4604 = vmatpush1.msra.mxu0 0.0
    %4605 = vmatprep.subr.mxu0 0.0
    %4606 = vmatpush1.msra.mxu0 0.0
    %4607 = vmatprep.subr.mxu0 0.0
    %4608 = vmatpush1.msra.mxu0 0.0
    %4609 = vmatprep.subr.mxu0 0.0
    %4610 = vmatpush1.msra.mxu0 0.0
    %4611 = vmatprep.subr.mxu0 0.0
    %4612 = vmatpush1.msra.mxu0 0.0
    %4613 = vmatprep.subr.mxu0 0.0
    %4614 = vmatpush1.msra.mxu0 0.0
    %4615 = vmatprep.subr.mxu0 0.0
    %4616 = vmatpush1.msra.mxu0 0.0
    %4617 = vmatprep.subr.mxu0 0.0
    %4618 = vmatpush1.msra.mxu0 0.0
    %4619 = vmatprep.subr.mxu0 0.0
    %4620 = vmatpush1.msra.mxu0 0.0
    %4621 = vmatprep.subr.mxu0 0.0
    %4622 = vmatpush1.msra.mxu0 0.0
    %4623 = vmatprep.subr.mxu0 0.0
    %4624 = vmatpush1.msra.mxu0 0.0
    %4625 = vmatprep.mubr.f32.mxu0 0.0
    %4626 = vmatmul.mubr.f32.gmra.mrb[0].mxu0 %v4559
    %v4627 = vpop.f32.mrb[0].mxu0
    %v4628 = vadd.f32 %v4557, %v4627
    %v4629 = vpop.f32.mrb[0].mxu0
    %4630 = vdwg.mxu0
    %v4631 = vmax.f32 %v4628, 0.0
    %v4632 = vld [vmem:[#allocation7 + $0x4b0] sm:$0xff]
    %v4633 = vld [vmem:[#allocation7 + $0x4b8] sm:$0xff]
    %v4634 = vld [vmem:[#allocation7 + $0x4c0] sm:$0x1]
    %v4635 = vlaneseq
    %v4636 = vshrl.u32 %v4635, 7
    %v4637 = vsub.s32 0, %v4636
    %v4638 = vrot.slane %v4634, %v4637
    %v4640 = vsel %vm722, %v4631, 0
    %4642 = vmatprep.subr.mxu0 0.0
    %4643 = vmatpush1.msra.mxu0 %v4632
    %4644 = vmatprep.subr.mxu0 0.0
    %4645 = vmatpush1.msra.mxu0 %v4633
    %4646 = vmatprep.subr.mxu0 0.0
    %4647 = vmatpush1.msra.mxu0 0.0
    %4648 = vmatprep.subr.mxu0 0.0
    %4649 = vmatpush1.msra.mxu0 0.0
    %4650 = vmatprep.subr.mxu0 0.0
    %4651 = vmatpush1.msra.mxu0 0.0
    %4652 = vmatprep.subr.mxu0 0.0
    %4653 = vmatpush1.msra.mxu0 0.0
    %4654 = vmatprep.subr.mxu0 0.0
    %4655 = vmatpush1.msra.mxu0 0.0
    %4656 = vmatprep.subr.mxu0 0.0
    %4657 = vmatpush1.msra.mxu0 0.0
    %4658 = vmatprep.subr.mxu0 0.0
    %4659 = vmatpush1.msra.mxu0 0.0
    %4660 = vmatprep.subr.mxu0 0.0
    %4661 = vmatpush1.msra.mxu0 0.0
    %4662 = vmatprep.subr.mxu0 0.0
    %4663 = vmatpush1.msra.mxu0 0.0
    %4664 = vmatprep.subr.mxu0 0.0
    %4665 = vmatpush1.msra.mxu0 0.0
    %4666 = vmatprep.subr.mxu0 0.0
    %4667 = vmatpush1.msra.mxu0 0.0
    %4668 = vmatprep.subr.mxu0 0.0
    %4669 = vmatpush1.msra.mxu0 0.0
    %4670 = vmatprep.subr.mxu0 0.0
    %4671 = vmatpush1.msra.mxu0 0.0
    %4672 = vmatprep.subr.mxu0 0.0
    %4673 = vmatpush1.msra.mxu0 0.0
    %4674 = vmatprep.subr.mxu0 0.0
    %4675 = vmatpush1.msra.mxu0 0.0
    %4676 = vmatprep.subr.mxu0 0.0
    %4677 = vmatpush1.msra.mxu0 0.0
    %4678 = vmatprep.subr.mxu0 0.0
    %4679 = vmatpush1.msra.mxu0 0.0
    %4680 = vmatprep.subr.mxu0 0.0
    %4681 = vmatpush1.msra.mxu0 0.0
    %4682 = vmatprep.subr.mxu0 0.0
    %4683 = vmatpush1.msra.mxu0 0.0
    %4684 = vmatprep.subr.mxu0 0.0
    %4685 = vmatpush1.msra.mxu0 0.0
    %4686 = vmatprep.subr.mxu0 0.0
    %4687 = vmatpush1.msra.mxu0 0.0
    %4688 = vmatprep.subr.mxu0 0.0
    %4689 = vmatpush1.msra.mxu0 0.0
    %4690 = vmatprep.subr.mxu0 0.0
    %4691 = vmatpush1.msra.mxu0 0.0
    %4692 = vmatprep.subr.mxu0 0.0
    %4693 = vmatpush1.msra.mxu0 0.0
    %4694 = vmatprep.subr.mxu0 0.0
    %4695 = vmatpush1.msra.mxu0 0.0
    %4696 = vmatprep.subr.mxu0 0.0
    %4697 = vmatpush1.msra.mxu0 0.0
    %4698 = vmatprep.subr.mxu0 0.0
    %4699 = vmatpush1.msra.mxu0 0.0
    %4700 = vmatprep.subr.mxu0 0.0
    %4701 = vmatpush1.msra.mxu0 0.0
    %4702 = vmatprep.subr.mxu0 0.0
    %4703 = vmatpush1.msra.mxu0 0.0
    %4704 = vmatprep.subr.mxu0 0.0
    %4705 = vmatpush1.msra.mxu0 0.0
    %4706 = vmatprep.mubr.f32.mxu0 0.0
    %4707 = vmatmul.mubr.f32.gmra.mrb[0].mxu0 %v4640
    %v4708 = vpop.f32.mrb[0].mxu0
    %v4709 = vadd.f32 %v4638, %v4708
    %v4710 = vpop.f32.mrb[0].mxu0
    %4711 = vdwg.mxu0
    %v4712 = vmax.f32 %v4709, 0.0
    %v4713 = vld [vmem:[#allocation7 + $0x4c8] sm:$0xff]
    %v4714 = vld [vmem:[#allocation7 + $0x4d0] sm:$0xff]
    %v4715 = vld [vmem:[#allocation7 + $0x4d8] sm:$0x1]
    %v4716 = vlaneseq
    %v4717 = vshrl.u32 %v4716, 7
    %v4718 = vsub.s32 0, %v4717
    %v4719 = vrot.slane %v4715, %v4718
    %v4721 = vsel %vm722, %v4712, 0
    %4723 = vmatprep.subr.mxu0 0.0
    %4724 = vmatpush1.msra.mxu0 %v4713
    %4725 = vmatprep.subr.mxu0 0.0
    %4726 = vmatpush1.msra.mxu0 %v4714
    %4727 = vmatprep.subr.mxu0 0.0
    %4728 = vmatpush1.msra.mxu0 0.0
    %4729 = vmatprep.subr.mxu0 0.0
    %4730 = vmatpush1.msra.mxu0 0.0
    %4731 = vmatprep.subr.mxu0 0.0
    %4732 = vmatpush1.msra.mxu0 0.0
    %4733 = vmatprep.subr.mxu0 0.0
    %4734 = vmatpush1.msra.mxu0 0.0
    %4735 = vmatprep.subr.mxu0 0.0
    %4736 = vmatpush1.msra.mxu0 0.0
    %4737 = vmatprep.subr.mxu0 0.0
    %4738 = vmatpush1.msra.mxu0 0.0
    %4739 = vmatprep.subr.mxu0 0.0
    %4740 = vmatpush1.msra.mxu0 0.0
    %4741 = vmatprep.subr.mxu0 0.0
    %4742 = vmatpush1.msra.mxu0 0.0
    %4743 = vmatprep.subr.mxu0 0.0
    %4744 = vmatpush1.msra.mxu0 0.0
    %4745 = vmatprep.subr.mxu0 0.0
    %4746 = vmatpush1.msra.mxu0 0.0
    %4747 = vmatprep.subr.mxu0 0.0
    %4748 = vmatpush1.msra.mxu0 0.0
    %4749 = vmatprep.subr.mxu0 0.0
    %4750 = vmatpush1.msra.mxu0 0.0
    %4751 = vmatprep.subr.mxu0 0.0
    %4752 = vmatpush1.msra.mxu0 0.0
    %4753 = vmatprep.subr.mxu0 0.0
    %4754 = vmatpush1.msra.mxu0 0.0
    %4755 = vmatprep.subr.mxu0 0.0
    %4756 = vmatpush1.msra.mxu0 0.0
    %4757 = vmatprep.subr.mxu0 0.0
    %4758 = vmatpush1.msra.mxu0 0.0
    %4759 = vmatprep.subr.mxu0 0.0
    %4760 = vmatpush1.msra.mxu0 0.0
    %4761 = vmatprep.subr.mxu0 0.0
    %4762 = vmatpush1.msra.mxu0 0.0
    %4763 = vmatprep.subr.mxu0 0.0
    %4764 = vmatpush1.msra.mxu0 0.0
    %4765 = vmatprep.subr.mxu0 0.0
    %4766 = vmatpush1.msra.mxu0 0.0
    %4767 = vmatprep.subr.mxu0 0.0
    %4768 = vmatpush1.msra.mxu0 0.0
    %4769 = vmatprep.subr.mxu0 0.0
    %4770 = vmatpush1.msra.mxu0 0.0
    %4771 = vmatprep.subr.mxu0 0.0
    %4772 = vmatpush1.msra.mxu0 0.0
    %4773 = vmatprep.subr.mxu0 0.0
    %4774 = vmatpush1.msra.mxu0 0.0
    %4775 = vmatprep.subr.mxu0 0.0
    %4776 = vmatpush1.msra.mxu0 0.0
    %4777 = vmatprep.subr.mxu0 0.0
    %4778 = vmatpush1.msra.mxu0 0.0
    %4779 = vmatprep.subr.mxu0 0.0
    %4780 = vmatpush1.msra.mxu0 0.0
    %4781 = vmatprep.subr.mxu0 0.0
    %4782 = vmatpush1.msra.mxu0 0.0
    %4783 = vmatprep.subr.mxu0 0.0
    %4784 = vmatpush1.msra.mxu0 0.0
    %4785 = vmatprep.subr.mxu0 0.0
    %4786 = vmatpush1.msra.mxu0 0.0
    %4787 = vmatprep.mubr.f32.mxu0 0.0
    %4788 = vmatmul.mubr.f32.gmra.mrb[0].mxu0 %v4721
    %v4789 = vpop.f32.mrb[0].mxu0
    %v4790 = vadd.f32 %v4719, %v4789
    %v4791 = vpop.f32.mrb[0].mxu0
    %4792 = vdwg.mxu0
    %v4793 = vmax.f32 %v4790, 0.0
    %v4794 = vld [vmem:[#allocation7 + $0x540] sm:$0x1]
    %v4795 = vld [vmem:[#allocation7 + $0x4e0] sm:$0xff]
    %v4796 = vld [vmem:[#allocation7 + $0x4e8] sm:$0xff]
    %v4797 = vld [vmem:[#allocation7 + $0x4f0] sm:$0xff]
    %v4798 = vld [vmem:[#allocation7 + $0x4f8] sm:$0xff]
    %v4799 = vlaneseq
    %v4800 = vshrl.u32 %v4799, 7
    %v4801 = vsub.s32 0, %v4800
    %v4802 = vrot.slane %v4794, %v4801
    %v4804 = vsel %vm64, %v4793, 0
    %4806 = vmatprep.subr.mxu0 0.0
    %4807 = vmatpush1.msra.mxu0 %v4795
    %4808 = vmatprep.subr.mxu0 0.0
    %4809 = vmatpush1.msra.mxu0 %v4796
    %4810 = vmatprep.subr.mxu0 0.0
    %4811 = vmatpush1.msra.mxu0 %v4797
    %4812 = vmatprep.subr.mxu0 0.0
    %4813 = vmatpush1.msra.mxu0 %v4798
    %4814 = vmatprep.subr.mxu0 0.0
    %4815 = vmatpush1.msra.mxu0 0.0
    %4816 = vmatprep.subr.mxu0 0.0
    %4817 = vmatpush1.msra.mxu0 0.0
    %4818 = vmatprep.subr.mxu0 0.0
    %4819 = vmatpush1.msra.mxu0 0.0
    %4820 = vmatprep.subr.mxu0 0.0
    %4821 = vmatpush1.msra.mxu0 0.0
    %4822 = vmatprep.subr.mxu0 0.0
    %4823 = vmatpush1.msra.mxu0 0.0
    %4824 = vmatprep.subr.mxu0 0.0
    %4825 = vmatpush1.msra.mxu0 0.0
    %4826 = vmatprep.subr.mxu0 0.0
    %4827 = vmatpush1.msra.mxu0 0.0
    %4828 = vmatprep.subr.mxu0 0.0
    %4829 = vmatpush1.msra.mxu0 0.0
    %4830 = vmatprep.subr.mxu0 0.0
    %4831 = vmatpush1.msra.mxu0 0.0
    %4832 = vmatprep.subr.mxu0 0.0
    %4833 = vmatpush1.msra.mxu0 0.0
    %4834 = vmatprep.subr.mxu0 0.0
    %4835 = vmatpush1.msra.mxu0 0.0
    %4836 = vmatprep.subr.mxu0 0.0
    %4837 = vmatpush1.msra.mxu0 0.0
    %4838 = vmatprep.subr.mxu0 0.0
    %4839 = vmatpush1.msra.mxu0 0.0
    %4840 = vmatprep.subr.mxu0 0.0
    %4841 = vmatpush1.msra.mxu0 0.0
    %4842 = vmatprep.subr.mxu0 0.0
    %4843 = vmatpush1.msra.mxu0 0.0
    %4844 = vmatprep.subr.mxu0 0.0
    %4845 = vmatpush1.msra.mxu0 0.0
    %4846 = vmatprep.subr.mxu0 0.0
    %4847 = vmatpush1.msra.mxu0 0.0
    %4848 = vmatprep.subr.mxu0 0.0
    %4849 = vmatpush1.msra.mxu0 0.0
    %4850 = vmatprep.subr.mxu0 0.0
    %4851 = vmatpush1.msra.mxu0 0.0
    %4852 = vmatprep.subr.mxu0 0.0
    %4853 = vmatpush1.msra.mxu0 0.0
    %4854 = vmatprep.subr.mxu0 0.0
    %4855 = vmatpush1.msra.mxu0 0.0
    %4856 = vmatprep.subr.mxu0 0.0
    %4857 = vmatpush1.msra.mxu0 0.0
    %4858 = vmatprep.subr.mxu0 0.0
    %4859 = vmatpush1.msra.mxu0 0.0
    %4860 = vmatprep.subr.mxu0 0.0
    %4861 = vmatpush1.msra.mxu0 0.0
    %4862 = vmatprep.subr.mxu0 0.0
    %4863 = vmatpush1.msra.mxu0 0.0
    %4864 = vmatprep.subr.mxu0 0.0
    %4865 = vmatpush1.msra.mxu0 0.0
    %4866 = vmatprep.subr.mxu0 0.0
    %4867 = vmatpush1.msra.mxu0 0.0
    %4868 = vmatprep.subr.mxu0 0.0
    %4869 = vmatpush1.msra.mxu0 0.0
    %4870 = vmatprep.mubr.f32.mxu0 0.0
    %4871 = vmatmul.mubr.f32.gmra.mrb[0].mxu0 %v4804
    %v4872 = vpop.f32.mrb[0].mxu0
    %v4873 = vadd.f32 %v4802, %v4872
    %v4874 = vpop.f32.mrb[0].mxu0
    %4875 = vdwg.mxu0
    %v4876 = vmax.f32 %v4873, 0.0
    %v4877 = vld [vmem:[#allocation7 + $0x500] sm:$0xff]
    %v4878 = vld [vmem:[#allocation7 + $0x508] sm:$0xff]
    %v4879 = vld [vmem:[#allocation7 + $0x510] sm:$0xff]
    %v4880 = vld [vmem:[#allocation7 + $0x518] sm:$0xff]
    %v4881 = vld [vmem:[#allocation7 + $0x520] sm:$0xff]
    %v4882 = vld [vmem:[#allocation7 + $0x528] sm:$0xff]
    %v4883 = vld [vmem:[#allocation7 + $0x530] sm:$0xff]
    %v4884 = vld [vmem:[#allocation7 + $0x538] sm:$0xff]
    %v4886 = vsel %vm147, %v4876, 0
    %4888 = vmatprep.subr.mxu0 0.0
    %4889 = vmatpush1.msra.mxu0 %v4877
    %4890 = vmatprep.subr.mxu0 0.0
    %4891 = vmatpush1.msra.mxu0 %v4878
    %4892 = vmatprep.subr.mxu0 0.0
    %4893 = vmatpush1.msra.mxu0 %v4879
    %4894 = vmatprep.subr.mxu0 0.0
    %4895 = vmatpush1.msra.mxu0 %v4880
    %4896 = vmatprep.subr.mxu0 0.0
    %4897 = vmatpush1.msra.mxu0 %v4881
    %4898 = vmatprep.subr.mxu0 0.0
    %4899 = vmatpush1.msra.mxu0 %v4882
    %4900 = vmatprep.subr.mxu0 0.0
    %4901 = vmatpush1.msra.mxu0 %v4883
    %4902 = vmatprep.subr.mxu0 0.0
    %4903 = vmatpush1.msra.mxu0 %v4884
    %4904 = vmatprep.subr.mxu0 0.0
    %4905 = vmatpush1.msra.mxu0 0.0
    %4906 = vmatprep.subr.mxu0 0.0
    %4907 = vmatpush1.msra.mxu0 0.0
    %4908 = vmatprep.subr.mxu0 0.0
    %4909 = vmatpush1.msra.mxu0 0.0
    %4910 = vmatprep.subr.mxu0 0.0
    %4911 = vmatpush1.msra.mxu0 0.0
    %4912 = vmatprep.subr.mxu0 0.0
    %4913 = vmatpush1.msra.mxu0 0.0
    %4914 = vmatprep.subr.mxu0 0.0
    %4915 = vmatpush1.msra.mxu0 0.0
    %4916 = vmatprep.subr.mxu0 0.0
    %4917 = vmatpush1.msra.mxu0 0.0
    %4918 = vmatprep.subr.mxu0 0.0
    %4919 = vmatpush1.msra.mxu0 0.0
    %4920 = vmatprep.subr.mxu0 0.0
    %4921 = vmatpush1.msra.mxu0 0.0
    %4922 = vmatprep.subr.mxu0 0.0
    %4923 = vmatpush1.msra.mxu0 0.0
    %4924 = vmatprep.subr.mxu0 0.0
    %4925 = vmatpush1.msra.mxu0 0.0
    %4926 = vmatprep.subr.mxu0 0.0
    %4927 = vmatpush1.msra.mxu0 0.0
    %4928 = vmatprep.subr.mxu0 0.0
    %4929 = vmatpush1.msra.mxu0 0.0
    %4930 = vmatprep.subr.mxu0 0.0
    %4931 = vmatpush1.msra.mxu0 0.0
    %4932 = vmatprep.subr.mxu0 0.0
    %4933 = vmatpush1.msra.mxu0 0.0
    %4934 = vmatprep.subr.mxu0 0.0
    %4935 = vmatpush1.msra.mxu0 0.0
    %4936 = vmatprep.subr.mxu0 0.0
    %4937 = vmatpush1.msra.mxu0 0.0
    %4938 = vmatprep.subr.mxu0 0.0
    %4939 = vmatpush1.msra.mxu0 0.0
    %4940 = vmatprep.subr.mxu0 0.0
    %4941 = vmatpush1.msra.mxu0 0.0
    %4942 = vmatprep.subr.mxu0 0.0
    %4943 = vmatpush1.msra.mxu0 0.0
    %4944 = vmatprep.subr.mxu0 0.0
    %4945 = vmatpush1.msra.mxu0 0.0
    %4946 = vmatprep.subr.mxu0 0.0
    %4947 = vmatpush1.msra.mxu0 0.0
    %4948 = vmatprep.subr.mxu0 0.0
    %4949 = vmatpush1.msra.mxu0 0.0
    %4950 = vmatprep.subr.mxu0 0.0
    %4951 = vmatpush1.msra.mxu0 0.0
    %4952 = vmatprep.mubr.f32.mxu0 0.0
    %4953 = vmatmul.mubr.f32.gmra.mrb[0].mxu0 %v4886
    %v4954 = vpop.f32.mrb[0].mxu0
    %v4955 = vadd.f32 %v4802, %v4954
    %v4956 = vpop.f32.mrb[0].mxu0
    %4957 = vdwg.mxu0
    %v4958 = vmax.f32 %v4955, 0.0
    %4960 = vrot.lane.b32.xlu0 %v4958, 96
    %v4961 = vpop.permute.xlu0 %4960
    %4963 = vmatprep.subr.mxu0 0.0
    %4964 = vmatpush1.msra.mxu0 %v4961
    %4965 = vmatprep.subr.mxu0 0.0
    %4966 = vmatpush1.msra.mxu0 0.0
    %4967 = vmatprep.subr.mxu0 0.0
    %4968 = vmatpush1.msra.mxu0 0.0
    %4969 = vmatprep.subr.mxu0 0.0
    %4970 = vmatpush1.msra.mxu0 0.0
    %4971 = vmatprep.subr.mxu0 0.0
    %4972 = vmatpush1.msra.mxu0 0.0
    %4973 = vmatprep.subr.mxu0 0.0
    %4974 = vmatpush1.msra.mxu0 0.0
    %4975 = vmatprep.subr.mxu0 0.0
    %4976 = vmatpush1.msra.mxu0 0.0
    %4977 = vmatprep.subr.mxu0 0.0
    %4978 = vmatpush1.msra.mxu0 0.0
    %4979 = vmatprep.subr.mxu0 0.0
    %4980 = vmatpush1.msra.mxu0 0.0
    %4981 = vmatprep.subr.mxu0 0.0
    %4982 = vmatpush1.msra.mxu0 0.0
    %4983 = vmatprep.subr.mxu0 0.0
    %4984 = vmatpush1.msra.mxu0 0.0
    %4985 = vmatprep.subr.mxu0 0.0
    %4986 = vmatpush1.msra.mxu0 0.0
    %4987 = vmatprep.subr.mxu0 0.0
    %4988 = vmatpush1.msra.mxu0 0.0
    %4989 = vmatprep.subr.mxu0 0.0
    %4990 = vmatpush1.msra.mxu0 0.0
    %4991 = vmatprep.subr.mxu0 0.0
    %4992 = vmatpush1.msra.mxu0 0.0
    %4993 = vmatprep.subr.mxu0 0.0
    %4994 = vmatpush1.msra.mxu0 0.0
    %4995 = vmatprep.subr.mxu0 0.0
    %4996 = vmatpush1.msra.mxu0 0.0
    %4997 = vmatprep.subr.mxu0 0.0
    %4998 = vmatpush1.msra.mxu0 0.0
    %4999 = vmatprep.subr.mxu0 0.0
    %5000 = vmatpush1.msra.mxu0 0.0
    %5001 = vmatprep.subr.mxu0 0.0
    %5002 = vmatpush1.msra.mxu0 0.0
    %5003 = vmatprep.subr.mxu0 0.0
    %5004 = vmatpush1.msra.mxu0 0.0
    %5005 = vmatprep.subr.mxu0 0.0
    %5006 = vmatpush1.msra.mxu0 0.0
    %5007 = vmatprep.subr.mxu0 0.0
    %5008 = vmatpush1.msra.mxu0 0.0
    %5009 = vmatprep.subr.mxu0 0.0
    %5010 = vmatpush1.msra.mxu0 0.0
    %5011 = vmatprep.subr.mxu0 0.0
    %5012 = vmatpush1.msra.mxu0 0.0
    %5013 = vmatprep.subr.mxu0 0.0
    %5014 = vmatpush1.msra.mxu0 0.0
    %5015 = vmatprep.subr.mxu0 0.0
    %5016 = vmatpush1.msra.mxu0 0.0
    %5017 = vmatprep.subr.mxu0 0.0
    %5018 = vmatpush1.msra.mxu0 0.0
    %5019 = vmatprep.subr.mxu0 0.0
    %5020 = vmatpush1.msra.mxu0 0.0
    %5021 = vmatprep.subr.mxu0 0.0
    %5022 = vmatpush1.msra.mxu0 0.0
    %5023 = vmatprep.subr.mxu0 0.0
    %5024 = vmatpush1.msra.mxu0 0.0
    %5025 = vmatprep.subr.mxu0 0.0
    %5026 = vmatpush1.msra.mxu0 0.0
    %5027 = vmatprep.mubr.f32.mxu0 0.0
    %5028 = vmatmul.mubr.f32.gmra.mrb[0].mxu0 %v231
    %v5029 = vpop.f32.mrb[0].mxu0
    %v5030 = vadd.f32 0.0, %v5029
    %v5031 = vpop.f32.mrb[0].mxu0
    %5032 = vdwg.mxu0
    %5033 = vmatprep.subr.mxu0 0.0
    %5034 = vmatpush1.msra.mxu0 %v4958
    %5035 = vmatprep.subr.mxu0 0.0
    %5036 = vmatpush1.msra.mxu0 0.0
    %5037 = vmatprep.subr.mxu0 0.0
    %5038 = vmatpush1.msra.mxu0 0.0
    %5039 = vmatprep.subr.mxu0 0.0
    %5040 = vmatpush1.msra.mxu0 0.0
    %5041 = vmatprep.subr.mxu0 0.0
    %5042 = vmatpush1.msra.mxu0 0.0
    %5043 = vmatprep.subr.mxu0 0.0
    %5044 = vmatpush1.msra.mxu0 0.0
    %5045 = vmatprep.subr.mxu0 0.0
    %5046 = vmatpush1.msra.mxu0 0.0
    %5047 = vmatprep.subr.mxu0 0.0
    %5048 = vmatpush1.msra.mxu0 0.0
    %5049 = vmatprep.subr.mxu0 0.0
    %5050 = vmatpush1.msra.mxu0 0.0
    %5051 = vmatprep.subr.mxu0 0.0
    %5052 = vmatpush1.msra.mxu0 0.0
    %5053 = vmatprep.subr.mxu0 0.0
    %5054 = vmatpush1.msra.mxu0 0.0
    %5055 = vmatprep.subr.mxu0 0.0
    %5056 = vmatpush1.msra.mxu0 0.0
    %5057 = vmatprep.subr.mxu0 0.0
    %5058 = vmatpush1.msra.mxu0 0.0
    %5059 = vmatprep.subr.mxu0 0.0
    %5060 = vmatpush1.msra.mxu0 0.0
    %5061 = vmatprep.subr.mxu0 0.0
    %5062 = vmatpush1.msra.mxu0 0.0
    %5063 = vmatprep.subr.mxu0 0.0
    %5064 = vmatpush1.msra.mxu0 0.0
    %5065 = vmatprep.subr.mxu0 0.0
    %5066 = vmatpush1.msra.mxu0 0.0
    %5067 = vmatprep.subr.mxu0 0.0
    %5068 = vmatpush1.msra.mxu0 0.0
    %5069 = vmatprep.subr.mxu0 0.0
    %5070 = vmatpush1.msra.mxu0 0.0
    %5071 = vmatprep.subr.mxu0 0.0
    %5072 = vmatpush1.msra.mxu0 0.0
    %5073 = vmatprep.subr.mxu0 0.0
    %5074 = vmatpush1.msra.mxu0 0.0
    %5075 = vmatprep.subr.mxu0 0.0
    %5076 = vmatpush1.msra.mxu0 0.0
    %5077 = vmatprep.subr.mxu0 0.0
    %5078 = vmatpush1.msra.mxu0 0.0
    %5079 = vmatprep.subr.mxu0 0.0
    %5080 = vmatpush1.msra.mxu0 0.0
    %5081 = vmatprep.subr.mxu0 0.0
    %5082 = vmatpush1.msra.mxu0 0.0
    %5083 = vmatprep.subr.mxu0 0.0
    %5084 = vmatpush1.msra.mxu0 0.0
    %5085 = vmatprep.subr.mxu0 0.0
    %5086 = vmatpush1.msra.mxu0 0.0
    %5087 = vmatprep.subr.mxu0 0.0
    %5088 = vmatpush1.msra.mxu0 0.0
    %5089 = vmatprep.subr.mxu0 0.0
    %5090 = vmatpush1.msra.mxu0 0.0
    %5091 = vmatprep.subr.mxu0 0.0
    %5092 = vmatpush1.msra.mxu0 0.0
    %5093 = vmatprep.subr.mxu0 0.0
    %5094 = vmatpush1.msra.mxu0 0.0
    %5095 = vmatprep.subr.mxu0 0.0
    %5096 = vmatpush1.msra.mxu0 0.0
    %5097 = vmatprep.mubr.f32.mxu0 0.0
    %5098 = vmatmul.mubr.f32.gmra.mrb[0].mxu0 %v304
    %v5099 = vpop.f32.mrb[0].mxu0
    %v5100 = vadd.f32 %v5030, %v5099
    %v5101 = vpop.f32.mrb[0].mxu0
    %5102 = vdwg.mxu0
    %v5103 = vld [vmem:[#allocation7 + $0x548] sm:$0xff]
    %v5104 = vld [vmem:[#allocation7 + $0x550] sm:$0xff]
    %v5105 = vld [vmem:[#allocation7 + $0x558] sm:$0xff]
    %v5106 = vld [vmem:[#allocation7 + $0x560] sm:$0xff]
    %v5107 = vld [vmem:[#allocation7 + $0x5a8] sm:$0x1]
    %v5108 = vlaneseq
    %v5109 = vshrl.u32 %v5108, 7
    %v5110 = vsub.s32 0, %v5109
    %v5111 = vrot.slane %v5107, %v5110
    %v5113 = vsel %vm64, %v5100, 0
    %5115 = vmatprep.subr.mxu0 0.0
    %5116 = vmatpush1.msra.mxu0 %v5103
    %5117 = vmatprep.subr.mxu0 0.0
    %5118 = vmatpush1.msra.mxu0 %v5104
    %5119 = vmatprep.subr.mxu0 0.0
    %5120 = vmatpush1.msra.mxu0 %v5105
    %5121 = vmatprep.subr.mxu0 0.0
    %5122 = vmatpush1.msra.mxu0 %v5106
    %5123 = vmatprep.subr.mxu0 0.0
    %5124 = vmatpush1.msra.mxu0 0.0
    %5125 = vmatprep.subr.mxu0 0.0
    %5126 = vmatpush1.msra.mxu0 0.0
    %5127 = vmatprep.subr.mxu0 0.0
    %5128 = vmatpush1.msra.mxu0 0.0
    %5129 = vmatprep.subr.mxu0 0.0
    %5130 = vmatpush1.msra.mxu0 0.0
    %5131 = vmatprep.subr.mxu0 0.0
    %5132 = vmatpush1.msra.mxu0 0.0
    %5133 = vmatprep.subr.mxu0 0.0
    %5134 = vmatpush1.msra.mxu0 0.0
    %5135 = vmatprep.subr.mxu0 0.0
    %5136 = vmatpush1.msra.mxu0 0.0
    %5137 = vmatprep.subr.mxu0 0.0
    %5138 = vmatpush1.msra.mxu0 0.0
    %5139 = vmatprep.subr.mxu0 0.0
    %5140 = vmatpush1.msra.mxu0 0.0
    %5141 = vmatprep.subr.mxu0 0.0
    %5142 = vmatpush1.msra.mxu0 0.0
    %5143 = vmatprep.subr.mxu0 0.0
    %5144 = vmatpush1.msra.mxu0 0.0
    %5145 = vmatprep.subr.mxu0 0.0
    %5146 = vmatpush1.msra.mxu0 0.0
    %5147 = vmatprep.subr.mxu0 0.0
    %5148 = vmatpush1.msra.mxu0 0.0
    %5149 = vmatprep.subr.mxu0 0.0
    %5150 = vmatpush1.msra.mxu0 0.0
    %5151 = vmatprep.subr.mxu0 0.0
    %5152 = vmatpush1.msra.mxu0 0.0
    %5153 = vmatprep.subr.mxu0 0.0
    %5154 = vmatpush1.msra.mxu0 0.0
    %5155 = vmatprep.subr.mxu0 0.0
    %5156 = vmatpush1.msra.mxu0 0.0
    %5157 = vmatprep.subr.mxu0 0.0
    %5158 = vmatpush1.msra.mxu0 0.0
    %5159 = vmatprep.subr.mxu0 0.0
    %5160 = vmatpush1.msra.mxu0 0.0
    %5161 = vmatprep.subr.mxu0 0.0
    %5162 = vmatpush1.msra.mxu0 0.0
    %5163 = vmatprep.subr.mxu0 0.0
    %5164 = vmatpush1.msra.mxu0 0.0
    %5165 = vmatprep.subr.mxu0 0.0
    %5166 = vmatpush1.msra.mxu0 0.0
    %5167 = vmatprep.subr.mxu0 0.0
    %5168 = vmatpush1.msra.mxu0 0.0
    %5169 = vmatprep.subr.mxu0 0.0
    %5170 = vmatpush1.msra.mxu0 0.0
    %5171 = vmatprep.subr.mxu0 0.0
    %5172 = vmatpush1.msra.mxu0 0.0
    %5173 = vmatprep.subr.mxu0 0.0
    %5174 = vmatpush1.msra.mxu0 0.0
    %5175 = vmatprep.subr.mxu0 0.0
    %5176 = vmatpush1.msra.mxu0 0.0
    %5177 = vmatprep.subr.mxu0 0.0
    %5178 = vmatpush1.msra.mxu0 0.0
    %5179 = vmatprep.mubr.f32.mxu0 0.0
    %5180 = vmatmul.mubr.f32.gmra.mrb[0].mxu0 %v5113
    %v5181 = vpop.f32.mrb[0].mxu0
    %v5182 = vadd.f32 %v5111, %v5181
    %v5183 = vpop.f32.mrb[0].mxu0
    %5184 = vdwg.mxu0
    %v5185 = vxor.u32 %v5182, 2147483648
    %v5186 = vmul.f32 %v5185, 1.442695
    %v5187 = vpow.pop %v5186
    %v5188 = vadd.f32 %v5187, 1.0
    %v5189 = vrcp.pop %v5188
    %v5190 = vmul.f32 1.0, %v5189
    %v5191 = vld [vmem:[#allocation7 + $0x568] sm:$0xff]
    %v5192 = vld [vmem:[#allocation7 + $0x570] sm:$0xff]
    %v5193 = vld [vmem:[#allocation7 + $0x578] sm:$0xff]
    %v5194 = vld [vmem:[#allocation7 + $0x580] sm:$0xff]
    %v5195 = vld [vmem:[#allocation7 + $0x5b0] sm:$0x1]
    %v5196 = vlaneseq
    %v5197 = vshrl.u32 %v5196, 7
    %v5198 = vsub.s32 0, %v5197
    %v5199 = vrot.slane %v5195, %v5198
    %5200 = vmatprep.subr.mxu0 0.0
    %5201 = vmatpush1.msra.mxu0 %v5191
    %5202 = vmatprep.subr.mxu0 0.0
    %5203 = vmatpush1.msra.mxu0 %v5192
    %5204 = vmatprep.subr.mxu0 0.0
    %5205 = vmatpush1.msra.mxu0 %v5193
    %5206 = vmatprep.subr.mxu0 0.0
    %5207 = vmatpush1.msra.mxu0 %v5194
    %5208 = vmatprep.subr.mxu0 0.0
    %5209 = vmatpush1.msra.mxu0 0.0
    %5210 = vmatprep.subr.mxu0 0.0
    %5211 = vmatpush1.msra.mxu0 0.0
    %5212 = vmatprep.subr.mxu0 0.0
    %5213 = vmatpush1.msra.mxu0 0.0
    %5214 = vmatprep.subr.mxu0 0.0
    %5215 = vmatpush1.msra.mxu0 0.0
    %5216 = vmatprep.subr.mxu0 0.0
    %5217 = vmatpush1.msra.mxu0 0.0
    %5218 = vmatprep.subr.mxu0 0.0
    %5219 = vmatpush1.msra.mxu0 0.0
    %5220 = vmatprep.subr.mxu0 0.0
    %5221 = vmatpush1.msra.mxu0 0.0
    %5222 = vmatprep.subr.mxu0 0.0
    %5223 = vmatpush1.msra.mxu0 0.0
    %5224 = vmatprep.subr.mxu0 0.0
    %5225 = vmatpush1.msra.mxu0 0.0
    %5226 = vmatprep.subr.mxu0 0.0
    %5227 = vmatpush1.msra.mxu0 0.0
    %5228 = vmatprep.subr.mxu0 0.0
    %5229 = vmatpush1.msra.mxu0 0.0
    %5230 = vmatprep.subr.mxu0 0.0
    %5231 = vmatpush1.msra.mxu0 0.0
    %5232 = vmatprep.subr.mxu0 0.0
    %5233 = vmatpush1.msra.mxu0 0.0
    %5234 = vmatprep.subr.mxu0 0.0
    %5235 = vmatpush1.msra.mxu0 0.0
    %5236 = vmatprep.subr.mxu0 0.0
    %5237 = vmatpush1.msra.mxu0 0.0
    %5238 = vmatprep.subr.mxu0 0.0
    %5239 = vmatpush1.msra.mxu0 0.0
    %5240 = vmatprep.subr.mxu0 0.0
    %5241 = vmatpush1.msra.mxu0 0.0
    %5242 = vmatprep.subr.mxu0 0.0
    %5243 = vmatpush1.msra.mxu0 0.0
    %5244 = vmatprep.subr.mxu0 0.0
    %5245 = vmatpush1.msra.mxu0 0.0
    %5246 = vmatprep.subr.mxu0 0.0
    %5247 = vmatpush1.msra.mxu0 0.0
    %5248 = vmatprep.subr.mxu0 0.0
    %5249 = vmatpush1.msra.mxu0 0.0
    %5250 = vmatprep.subr.mxu0 0.0
    %5251 = vmatpush1.msra.mxu0 0.0
    %5252 = vmatprep.subr.mxu0 0.0
    %5253 = vmatpush1.msra.mxu0 0.0
    %5254 = vmatprep.subr.mxu0 0.0
    %5255 = vmatpush1.msra.mxu0 0.0
    %5256 = vmatprep.subr.mxu0 0.0
    %5257 = vmatpush1.msra.mxu0 0.0
    %5258 = vmatprep.subr.mxu0 0.0
    %5259 = vmatpush1.msra.mxu0 0.0
    %5260 = vmatprep.subr.mxu0 0.0
    %5261 = vmatpush1.msra.mxu0 0.0
    %5262 = vmatprep.subr.mxu0 0.0
    %5263 = vmatpush1.msra.mxu0 0.0
    %5264 = vmatprep.mubr.f32.mxu0 0.0
    %5265 = vmatmul.mubr.f32.gmra.mrb[0].mxu0 %v5113
    %v5266 = vpop.f32.mrb[0].mxu0
    %v5267 = vadd.f32 %v5199, %v5266
    %v5268 = vpop.f32.mrb[0].mxu0
    %5269 = vdwg.mxu0
    %v5270 = vtanh.pop %v5267
    %v5271 = vld [vmem:[#allocation7 + $0x588] sm:$0xff]
    %v5272 = vld [vmem:[#allocation7 + $0x590] sm:$0xff]
    %v5273 = vld [vmem:[#allocation7 + $0x598] sm:$0xff]
    %v5274 = vld [vmem:[#allocation7 + $0x5a0] sm:$0xff]
    %v5275 = vld [vmem:[#allocation7 + $0x5b8] sm:$0x1]
    %v5276 = vlaneseq
    %v5277 = vshrl.u32 %v5276, 7
    %v5278 = vsub.s32 0, %v5277
    %v5279 = vrot.slane %v5275, %v5278
    %5280 = vmatprep.subr.mxu0 0.0
    %5281 = vmatpush1.msra.mxu0 %v5271
    %5282 = vmatprep.subr.mxu0 0.0
    %5283 = vmatpush1.msra.mxu0 %v5272
    %5284 = vmatprep.subr.mxu0 0.0
    %5285 = vmatpush1.msra.mxu0 %v5273
    %5286 = vmatprep.subr.mxu0 0.0
    %5287 = vmatpush1.msra.mxu0 %v5274
    %5288 = vmatprep.subr.mxu0 0.0
    %5289 = vmatpush1.msra.mxu0 0.0
    %5290 = vmatprep.subr.mxu0 0.0
    %5291 = vmatpush1.msra.mxu0 0.0
    %5292 = vmatprep.subr.mxu0 0.0
    %5293 = vmatpush1.msra.mxu0 0.0
    %5294 = vmatprep.subr.mxu0 0.0
    %5295 = vmatpush1.msra.mxu0 0.0
    %5296 = vmatprep.subr.mxu0 0.0
    %5297 = vmatpush1.msra.mxu0 0.0
    %5298 = vmatprep.subr.mxu0 0.0
    %5299 = vmatpush1.msra.mxu0 0.0
    %5300 = vmatprep.subr.mxu0 0.0
    %5301 = vmatpush1.msra.mxu0 0.0
    %5302 = vmatprep.subr.mxu0 0.0
    %5303 = vmatpush1.msra.mxu0 0.0
    %5304 = vmatprep.subr.mxu0 0.0
    %5305 = vmatpush1.msra.mxu0 0.0
    %5306 = vmatprep.subr.mxu0 0.0
    %5307 = vmatpush1.msra.mxu0 0.0
    %5308 = vmatprep.subr.mxu0 0.0
    %5309 = vmatpush1.msra.mxu0 0.0
    %5310 = vmatprep.subr.mxu0 0.0
    %5311 = vmatpush1.msra.mxu0 0.0
    %5312 = vmatprep.subr.mxu0 0.0
    %5313 = vmatpush1.msra.mxu0 0.0
    %5314 = vmatprep.subr.mxu0 0.0
    %5315 = vmatpush1.msra.mxu0 0.0
    %5316 = vmatprep.subr.mxu0 0.0
    %5317 = vmatpush1.msra.mxu0 0.0
    %5318 = vmatprep.subr.mxu0 0.0
    %5319 = vmatpush1.msra.mxu0 0.0
    %5320 = vmatprep.subr.mxu0 0.0
    %5321 = vmatpush1.msra.mxu0 0.0
    %5322 = vmatprep.subr.mxu0 0.0
    %5323 = vmatpush1.msra.mxu0 0.0
    %5324 = vmatprep.subr.mxu0 0.0
    %5325 = vmatpush1.msra.mxu0 0.0
    %5326 = vmatprep.subr.mxu0 0.0
    %5327 = vmatpush1.msra.mxu0 0.0
    %5328 = vmatprep.subr.mxu0 0.0
    %5329 = vmatpush1.msra.mxu0 0.0
    %5330 = vmatprep.subr.mxu0 0.0
    %5331 = vmatpush1.msra.mxu0 0.0
    %5332 = vmatprep.subr.mxu0 0.0
    %5333 = vmatpush1.msra.mxu0 0.0
    %5334 = vmatprep.subr.mxu0 0.0
    %5335 = vmatpush1.msra.mxu0 0.0
    %5336 = vmatprep.subr.mxu0 0.0
    %5337 = vmatpush1.msra.mxu0 0.0
    %5338 = vmatprep.subr.mxu0 0.0
    %5339 = vmatpush1.msra.mxu0 0.0
    %5340 = vmatprep.subr.mxu0 0.0
    %5341 = vmatpush1.msra.mxu0 0.0
    %5342 = vmatprep.subr.mxu0 0.0
    %5343 = vmatpush1.msra.mxu0 0.0
    %5344 = vmatprep.mubr.f32.mxu0 0.0
    %5345 = vmatmul.mubr.f32.gmra.mrb[0].mxu0 %v5113
    %v5346 = vpop.f32.mrb[0].mxu0
    %v5347 = vadd.f32 %v5279, %v5346
    %v5348 = vpop.f32.mrb[0].mxu0
    %5349 = vdwg.mxu0
    %v5350 = vxor.u32 %v5347, 2147483648
    %v5351 = vmul.f32 %v5350, 1.442695
    %v5352 = vpow.pop %v5351
    %v5353 = vadd.f32 %v5352, 1.0
    %v5354 = vrcp.pop %v5353
    %v5355 = vmul.f32 1.0, %v5354
    %v5356 = vmul.f32 %v5190, %v5270
    %v5357 = vtanh.pop %v5356
    %v5358 = vmul.f32 %v5355, %v5357
    %v5359 = vld [vmem:[#allocation7 + $0x5c0] sm:$0xff]
    %v5360 = vld [vmem:[#allocation7 + $0x5c8] sm:$0xff]
    %v5361 = vld [vmem:[#allocation7 + $0x5d0] sm:$0xff]
    %v5362 = vld [vmem:[#allocation7 + $0x5d8] sm:$0xff]
    %v5363 = vld [vmem:[#allocation7 + $0x5e0] sm:$0x1]
    %v5364 = vlaneseq
    %v5365 = vshrl.u32 %v5364, 7
    %v5366 = vsub.s32 0, %v5365
    %v5367 = vrot.slane %v5363, %v5366
    %v5369 = vsel %vm64, %v5358, 0
    %5371 = vmatprep.subr.mxu0 0.0
    %5372 = vmatpush1.msra.mxu0 %v5359
    %5373 = vmatprep.subr.mxu0 0.0
    %5374 = vmatpush1.msra.mxu0 %v5360
    %5375 = vmatprep.subr.mxu0 0.0
    %5376 = vmatpush1.msra.mxu0 %v5361
    %5377 = vmatprep.subr.mxu0 0.0
    %5378 = vmatpush1.msra.mxu0 %v5362
    %5379 = vmatprep.subr.mxu0 0.0
    %5380 = vmatpush1.msra.mxu0 0.0
    %5381 = vmatprep.subr.mxu0 0.0
    %5382 = vmatpush1.msra.mxu0 0.0
    %5383 = vmatprep.subr.mxu0 0.0
    %5384 = vmatpush1.msra.mxu0 0.0
    %5385 = vmatprep.subr.mxu0 0.0
    %5386 = vmatpush1.msra.mxu0 0.0
    %5387 = vmatprep.subr.mxu0 0.0
    %5388 = vmatpush1.msra.mxu0 0.0
    %5389 = vmatprep.subr.mxu0 0.0
    %5390 = vmatpush1.msra.mxu0 0.0
    %5391 = vmatprep.subr.mxu0 0.0
    %5392 = vmatpush1.msra.mxu0 0.0
    %5393 = vmatprep.subr.mxu0 0.0
    %5394 = vmatpush1.msra.mxu0 0.0
    %5395 = vmatprep.subr.mxu0 0.0
    %5396 = vmatpush1.msra.mxu0 0.0
    %5397 = vmatprep.subr.mxu0 0.0
    %5398 = vmatpush1.msra.mxu0 0.0
    %5399 = vmatprep.subr.mxu0 0.0
    %5400 = vmatpush1.msra.mxu0 0.0
    %5401 = vmatprep.subr.mxu0 0.0
    %5402 = vmatpush1.msra.mxu0 0.0
    %5403 = vmatprep.subr.mxu0 0.0
    %5404 = vmatpush1.msra.mxu0 0.0
    %5405 = vmatprep.subr.mxu0 0.0
    %5406 = vmatpush1.msra.mxu0 0.0
    %5407 = vmatprep.subr.mxu0 0.0
    %5408 = vmatpush1.msra.mxu0 0.0
    %5409 = vmatprep.subr.mxu0 0.0
    %5410 = vmatpush1.msra.mxu0 0.0
    %5411 = vmatprep.subr.mxu0 0.0
    %5412 = vmatpush1.msra.mxu0 0.0
    %5413 = vmatprep.subr.mxu0 0.0
    %5414 = vmatpush1.msra.mxu0 0.0
    %5415 = vmatprep.subr.mxu0 0.0
    %5416 = vmatpush1.msra.mxu0 0.0
    %5417 = vmatprep.subr.mxu0 0.0
    %5418 = vmatpush1.msra.mxu0 0.0
    %5419 = vmatprep.subr.mxu0 0.0
    %5420 = vmatpush1.msra.mxu0 0.0
    %5421 = vmatprep.subr.mxu0 0.0
    %5422 = vmatpush1.msra.mxu0 0.0
    %5423 = vmatprep.subr.mxu0 0.0
    %5424 = vmatpush1.msra.mxu0 0.0
    %5425 = vmatprep.subr.mxu0 0.0
    %5426 = vmatpush1.msra.mxu0 0.0
    %5427 = vmatprep.subr.mxu0 0.0
    %5428 = vmatpush1.msra.mxu0 0.0
    %5429 = vmatprep.subr.mxu0 0.0
    %5430 = vmatpush1.msra.mxu0 0.0
    %5431 = vmatprep.subr.mxu0 0.0
    %5432 = vmatpush1.msra.mxu0 0.0
    %5433 = vmatprep.subr.mxu0 0.0
    %5434 = vmatpush1.msra.mxu0 0.0
    %5435 = vmatprep.mubr.f32.mxu0 0.0
    %5436 = vmatmul.mubr.f32.gmra.mrb[0].mxu0 %v5369
    %v5437 = vpop.f32.mrb[0].mxu0
    %v5438 = vadd.f32 %v5367, %v5437
    %v5439 = vpop.f32.mrb[0].mxu0
    %5440 = vdwg.mxu0
    %v5441 = vmax.f32 %v5438, 0.0
    %v5442 = vld [vmem:[#allocation7 + $0x5e8] sm:$0xff]
    %v5443 = vld [vmem:[#allocation7 + $0x5f0] sm:$0xff]
    %v5444 = vld [vmem:[#allocation7 + $0x5f8] sm:$0x1]
    %v5445 = vlaneseq
    %v5446 = vshrl.u32 %v5445, 7
    %v5447 = vsub.s32 0, %v5446
    %v5448 = vrot.slane %v5444, %v5447
    %v5450 = vsel %vm722, %v5441, 0
    %5452 = vmatprep.subr.mxu0 0.0
    %5453 = vmatpush1.msra.mxu0 %v5442
    %5454 = vmatprep.subr.mxu0 0.0
    %5455 = vmatpush1.msra.mxu0 %v5443
    %5456 = vmatprep.subr.mxu0 0.0
    %5457 = vmatpush1.msra.mxu0 0.0
    %5458 = vmatprep.subr.mxu0 0.0
    %5459 = vmatpush1.msra.mxu0 0.0
    %5460 = vmatprep.subr.mxu0 0.0
    %5461 = vmatpush1.msra.mxu0 0.0
    %5462 = vmatprep.subr.mxu0 0.0
    %5463 = vmatpush1.msra.mxu0 0.0
    %5464 = vmatprep.subr.mxu0 0.0
    %5465 = vmatpush1.msra.mxu0 0.0
    %5466 = vmatprep.subr.mxu0 0.0
    %5467 = vmatpush1.msra.mxu0 0.0
    %5468 = vmatprep.subr.mxu0 0.0
    %5469 = vmatpush1.msra.mxu0 0.0
    %5470 = vmatprep.subr.mxu0 0.0
    %5471 = vmatpush1.msra.mxu0 0.0
    %5472 = vmatprep.subr.mxu0 0.0
    %5473 = vmatpush1.msra.mxu0 0.0
    %5474 = vmatprep.subr.mxu0 0.0
    %5475 = vmatpush1.msra.mxu0 0.0
    %5476 = vmatprep.subr.mxu0 0.0
    %5477 = vmatpush1.msra.mxu0 0.0
    %5478 = vmatprep.subr.mxu0 0.0
    %5479 = vmatpush1.msra.mxu0 0.0
    %5480 = vmatprep.subr.mxu0 0.0
    %5481 = vmatpush1.msra.mxu0 0.0
    %5482 = vmatprep.subr.mxu0 0.0
    %5483 = vmatpush1.msra.mxu0 0.0
    %5484 = vmatprep.subr.mxu0 0.0
    %5485 = vmatpush1.msra.mxu0 0.0
    %5486 = vmatprep.subr.mxu0 0.0
    %5487 = vmatpush1.msra.mxu0 0.0
    %5488 = vmatprep.subr.mxu0 0.0
    %5489 = vmatpush1.msra.mxu0 0.0
    %5490 = vmatprep.subr.mxu0 0.0
    %5491 = vmatpush1.msra.mxu0 0.0
    %5492 = vmatprep.subr.mxu0 0.0
    %5493 = vmatpush1.msra.mxu0 0.0
    %5494 = vmatprep.subr.mxu0 0.0
    %5495 = vmatpush1.msra.mxu0 0.0
    %5496 = vmatprep.subr.mxu0 0.0
    %5497 = vmatpush1.msra.mxu0 0.0
    %5498 = vmatprep.subr.mxu0 0.0
    %5499 = vmatpush1.msra.mxu0 0.0
    %5500 = vmatprep.subr.mxu0 0.0
    %5501 = vmatpush1.msra.mxu0 0.0
    %5502 = vmatprep.subr.mxu0 0.0
    %5503 = vmatpush1.msra.mxu0 0.0
    %5504 = vmatprep.subr.mxu0 0.0
    %5505 = vmatpush1.msra.mxu0 0.0
    %5506 = vmatprep.subr.mxu0 0.0
    %5507 = vmatpush1.msra.mxu0 0.0
    %5508 = vmatprep.subr.mxu0 0.0
    %5509 = vmatpush1.msra.mxu0 0.0
    %5510 = vmatprep.subr.mxu0 0.0
    %5511 = vmatpush1.msra.mxu0 0.0
    %5512 = vmatprep.subr.mxu0 0.0
    %5513 = vmatpush1.msra.mxu0 0.0
    %5514 = vmatprep.subr.mxu0 0.0
    %5515 = vmatpush1.msra.mxu0 0.0
    %5516 = vmatprep.mubr.f32.mxu0 0.0
    %5517 = vmatmul.mubr.f32.gmra.mrb[0].mxu0 %v5450
    %v5518 = vpop.f32.mrb[0].mxu0
    %v5519 = vadd.f32 %v5448, %v5518
    %v5520 = vpop.f32.mrb[0].mxu0
    %5521 = vdwg.mxu0
    %v5522 = vmax.f32 %v5519, 0.0
    %v5523 = vld [vmem:[#allocation7 + $0x600] sm:$0xff]
    %v5524 = vld [vmem:[#allocation7 + $0x608] sm:$0xff]
    %v5525 = vld [vmem:[#allocation7 + $0x610] sm:$0x1]
    %v5526 = vlaneseq
    %v5527 = vshrl.u32 %v5526, 7
    %v5528 = vsub.s32 0, %v5527
    %v5529 = vrot.slane %v5525, %v5528
    %v5531 = vsel %vm722, %v5522, 0
    %5533 = vmatprep.subr.mxu0 0.0
    %5534 = vmatpush1.msra.mxu0 %v5523
    %5535 = vmatprep.subr.mxu0 0.0
    %5536 = vmatpush1.msra.mxu0 %v5524
    %5537 = vmatprep.subr.mxu0 0.0
    %5538 = vmatpush1.msra.mxu0 0.0
    %5539 = vmatprep.subr.mxu0 0.0
    %5540 = vmatpush1.msra.mxu0 0.0
    %5541 = vmatprep.subr.mxu0 0.0
    %5542 = vmatpush1.msra.mxu0 0.0
    %5543 = vmatprep.subr.mxu0 0.0
    %5544 = vmatpush1.msra.mxu0 0.0
    %5545 = vmatprep.subr.mxu0 0.0
    %5546 = vmatpush1.msra.mxu0 0.0
    %5547 = vmatprep.subr.mxu0 0.0
    %5548 = vmatpush1.msra.mxu0 0.0
    %5549 = vmatprep.subr.mxu0 0.0
    %5550 = vmatpush1.msra.mxu0 0.0
    %5551 = vmatprep.subr.mxu0 0.0
    %5552 = vmatpush1.msra.mxu0 0.0
    %5553 = vmatprep.subr.mxu0 0.0
    %5554 = vmatpush1.msra.mxu0 0.0
    %5555 = vmatprep.subr.mxu0 0.0
    %5556 = vmatpush1.msra.mxu0 0.0
    %5557 = vmatprep.subr.mxu0 0.0
    %5558 = vmatpush1.msra.mxu0 0.0
    %5559 = vmatprep.subr.mxu0 0.0
    %5560 = vmatpush1.msra.mxu0 0.0
    %5561 = vmatprep.subr.mxu0 0.0
    %5562 = vmatpush1.msra.mxu0 0.0
    %5563 = vmatprep.subr.mxu0 0.0
    %5564 = vmatpush1.msra.mxu0 0.0
    %5565 = vmatprep.subr.mxu0 0.0
    %5566 = vmatpush1.msra.mxu0 0.0
    %5567 = vmatprep.subr.mxu0 0.0
    %5568 = vmatpush1.msra.mxu0 0.0
    %5569 = vmatprep.subr.mxu0 0.0
    %5570 = vmatpush1.msra.mxu0 0.0
    %5571 = vmatprep.subr.mxu0 0.0
    %5572 = vmatpush1.msra.mxu0 0.0
    %5573 = vmatprep.subr.mxu0 0.0
    %5574 = vmatpush1.msra.mxu0 0.0
    %5575 = vmatprep.subr.mxu0 0.0
    %5576 = vmatpush1.msra.mxu0 0.0
    %5577 = vmatprep.subr.mxu0 0.0
    %5578 = vmatpush1.msra.mxu0 0.0
    %5579 = vmatprep.subr.mxu0 0.0
    %5580 = vmatpush1.msra.mxu0 0.0
    %5581 = vmatprep.subr.mxu0 0.0
    %5582 = vmatpush1.msra.mxu0 0.0
    %5583 = vmatprep.subr.mxu0 0.0
    %5584 = vmatpush1.msra.mxu0 0.0
    %5585 = vmatprep.subr.mxu0 0.0
    %5586 = vmatpush1.msra.mxu0 0.0
    %5587 = vmatprep.subr.mxu0 0.0
    %5588 = vmatpush1.msra.mxu0 0.0
    %5589 = vmatprep.subr.mxu0 0.0
    %5590 = vmatpush1.msra.mxu0 0.0
    %5591 = vmatprep.subr.mxu0 0.0
    %5592 = vmatpush1.msra.mxu0 0.0
    %5593 = vmatprep.subr.mxu0 0.0
    %5594 = vmatpush1.msra.mxu0 0.0
    %5595 = vmatprep.subr.mxu0 0.0
    %5596 = vmatpush1.msra.mxu0 0.0
    %5597 = vmatprep.mubr.f32.mxu0 0.0
    %5598 = vmatmul.mubr.f32.gmra.mrb[0].mxu0 %v5531
    %v5599 = vpop.f32.mrb[0].mxu0
    %v5600 = vadd.f32 %v5529, %v5599
    %v5601 = vpop.f32.mrb[0].mxu0
    %5602 = vdwg.mxu0
    %5603 = vst.msk [vmem:[#allocation8] sm:$0xff] %vm64, %v5600
    // Predicated region
    $region26: #{tpu_custom_call.1} parent=1 // pred_check
      _
    $region27: #{tpu_custom_call.1} parent=1 // pred_check_branch
      %5605 = sbr.rel (0) target = $region29
    $region28: #{tpu_custom_call.1} parent=1 // pred_region
      %s5607 = ssub.s32 128, 128
      %5608 = vsyncadd [#allocation4], %s5607
      %s5610 = sshll.u32 [#allocation8], 4
      %s5611 = int_to_ptr.vmem [resolvable:$true] %s5610
      %5613 = dma.vmem_to_hbm [thread:$0]  %s5611, 128, %s3, [#allocation4]
    $region29: #{tpu_custom_call.1} parent=1 // pred_fallthru
      _
    // Predicated region
    $region30: #{tpu_custom_call.1} parent=1 // pred_check
      _
    $region31: #{tpu_custom_call.1} parent=1 // pred_check_branch
      %5615 = sbr.rel (0) target = $region33
    $region32: #{tpu_custom_call.1} parent=1 // pred_region
      %5616 = dma.done [#allocation4], 128
    $region33: #{tpu_custom_call.1} parent=1 // pred_fallthru
      _
    %5617 = vsyncpa [#allocation3], 1
    %5618 = vsyncpa [#allocation6], 1
    %5619 = vsyncpa [#allocation4], 1

</llo_original>
